<compile_context>
chip_gen: v7x
topology: tpu7x:2x2x1
jax: 0.10.0
libtpu: 0.0.40
codegen_flags: <defaults>
</compile_context>

<pallas_src>
import math

import jax
import jax.numpy as jnp
from jax import lax
from jax.experimental import pallas as pl
from jax.experimental.pallas import tpu as pltpu

MXU_DTYPE = jnp.bfloat16      # matmul operand / seq-scratch dtype (accum stays f32)
LANE = 128
SUB = 16                      # bf16 sublane packing -> pad batch & weight rows to 16


def _round_up(x, m):
    return ((x + m - 1) // m) * m


# --------------------------------------------------------------------------
# In-kernel LSTM building blocks
# --------------------------------------------------------------------------
def _cell_step(gx, h, c, whh, H):
    """One LSTM cell step.  gx: (B,4H) f32 pre-projected gates (order i,f,o,g).
    h, c: (B,H) f32.  whh: (H,4H) bf16 value (loaded once per layer)."""
    gates = gx + jnp.dot(h.astype(whh.dtype), whh,
                         preferred_element_type=jnp.float32)
    sig = jax.nn.sigmoid(gates[:, :3 * H])        # i, f, o in one EUP pass
    i_g = sig[:, 0:H]
    f_g = sig[:, H:2 * H]
    o_g = sig[:, 2 * H:3 * H]
    g_g = jnp.tanh(gates[:, 3 * H:])
    c_new = f_g * c + i_g * g_g
    h_new = o_g * jnp.tanh(c_new)
    return h_new, c_new


def _bilstm_layer(gx_ref, whh_f, whh_b, seq_f, seq_b, T, B, H, unroll):
    """Fused fwd+bwd recurrence over one encoder layer.
    gx_ref: (T*B, 8H) f32 (fwd gates in cols 0:4H, bwd in 4H:8H).
    seq_f/seq_b: (T*B, H) bf16 output buffers.  Returns final states."""
    zeros = jnp.zeros((B, H), jnp.float32)

    def step(s, carry):
        h_f, c_f, h_b, c_b = carry
        row_f = pl.multiple_of(s * B, B)
        row_b = pl.multiple_of((T - 1 - s) * B, B)
        gx_f = gx_ref[pl.ds(row_f, B), 0:4 * H]
        gx_b = gx_ref[pl.ds(row_b, B), 4 * H:8 * H]
        # Two independent chains inside one iteration -> they interleave and
        # the dependent path is T steps instead of 2T.
        h_f, c_f = _cell_step(gx_f, h_f, c_f, whh_f, H)
        h_b, c_b = _cell_step(gx_b, h_b, c_b, whh_b, H)
        seq_f[pl.ds(row_f, B), :] = h_f.astype(seq_f.dtype)
        seq_b[pl.ds(row_b, B), :] = h_b.astype(seq_b.dtype)
        return h_f, c_f, h_b, c_b

    return lax.fori_loop(0, T, step, (zeros, zeros, zeros, zeros),
                         unroll=unroll)


def _lstm_layer(gx_ref, whh, h0, c0, seq_out, T, B, H, unroll):
    """Unidirectional recurrence (decoder layers)."""
    def step(t, carry):
        h, c = carry
        row = pl.multiple_of(t * B, B)
        h, c = _cell_step(gx_ref[pl.ds(row, B), :], h, c, whh, H)
        seq_out[pl.ds(row, B), :] = h.astype(seq_out.dtype)
        return h, c

    return lax.fori_loop(0, T, step, (h0, c0), unroll=unroll)


# --------------------------------------------------------------------------
# Fully fused seq2seq kernel
# --------------------------------------------------------------------------
def _make_seq2seq_kernel(cfg, w_off, b_off):
    num_layers = cfg["num_layers"]
    H = cfg["hidden"]
    T_enc, T_dec = cfg["T_enc"], cfg["T_dec"]
    B = cfg["B_pad"]
    n_dec = 2 * num_layers
    u_enc = True if T_enc <= 16 else 8
    u_dec = True if T_dec <= 16 else 8

    def kernel(x_ref, y_ref, w_ref, b_ref, out_ref,
               gx_enc, gx_d0, gx_d1,
               ef0, eb0, ef1, eb1, ds0, ds1):

        f32 = jnp.float32

        def W(name):                              # packed bf16 weight slice
            off, r, c = w_off[name]
            return w_ref[off:off + r, 0:c]

        def Bvec(name):                           # packed f32 bias row
            off, c = b_off[name]
            return b_ref[off:off + 1, 0:c]

        # ---- decoder layer-0 input projection issued up front: depends only
        #      on y, so its MXU work can hide under the encoder recurrences.
        gx_d0[...] = (jnp.dot(y_ref[...], W("dec0_wih"),
                              preferred_element_type=f32) + Bvec("dec0_b"))

        # -------------------- encoder (bidirectional) ---------------------
        enc_seqs = ((ef0, eb0), (ef1, eb1))
        dec_init = []                 # [(h0, c0)] in PyTorch h_n layer order
        prev = None
        for l in range(num_layers):
            seq_f, seq_b = enc_seqs[l % 2]
            if l == 0:
                gx_enc[...] = (jnp.dot(x_ref[...], W("enc0_wih"),
                                       preferred_element_type=f32)
                               + Bvec("enc0_b"))
            else:
                pf, pb = prev
                gx_enc[...] = (jnp.dot(pf[...], W(f"enc{l}_wih_f"),
                                       preferred_element_type=f32)
                               + jnp.dot(pb[...], W(f"enc{l}_wih_b"),
                                         preferred_element_type=f32)
                               + Bvec(f"enc{l}_b"))
            h_f, c_f, h_b, c_b = _bilstm_layer(
                gx_enc, W(f"enc{l}_whh_f"), W(f"enc{l}_whh_b"),
                seq_f, seq_b, T_enc, B, H, u_enc)
            dec_init += [(h_f, c_f), (h_b, c_b)]   # [l0f, l0b, l1f, l1b, ...]
            prev = (seq_f, seq_b)

        # -------------------- decoder (unidirectional) --------------------
        gxd = (gx_d0, gx_d1)
        dseqs = (ds0, ds1)
        for l in range(n_dec):
            gx = gxd[l % 2]
            if l > 0:
                gx[...] = (jnp.dot(dseqs[(l - 1) % 2][...], W(f"dec{l}_wih"),
                                   preferred_element_type=f32)
                           + Bvec(f"dec{l}_b"))
            h0, c0 = dec_init[l]
            _lstm_layer(gx, W(f"dec{l}_whh"), h0, c0,
                        dseqs[l % 2], T_dec, B, H, u_dec)

        # -------------------- fused MLP head -------------------------------
        pred = jnp.maximum(dseqs[(n_dec - 1) % 2][...], 0).astype(MXU_DTYPE)
        h1 = (jnp.dot(pred, W("fc1_w"), preferred_element_type=f32)
              + Bvec("fc1_b"))
        h1 = jnp.maximum(h1, 0.0).astype(MXU_DTYPE)
        out_ref[...] = (jnp.dot(h1, W("fc2_w"), preferred_element_type=f32)
                        + Bvec("fc2_b"))

    return kernel


# --------------------------------------------------------------------------
# Parameter construction / preparation
# --------------------------------------------------------------------------
def init_params(key, enc_size, dec_size, hidden, num_layers):
    """Raw PyTorch-layout parameters (uniform init, gate order i,f,g,o)."""
    k = 1.0 / math.sqrt(hidden)

    def unif(key, shape):
        return jax.random.uniform(key, shape, jnp.float32, -k, k)

    params = {"enc": [], "dec": []}
    keys = iter(jax.random.split(key, 8 * num_layers + 8 * num_layers + 4))

    for layer in range(num_layers):
        d_in = enc_size if layer == 0 else 2 * hidden
        layer_p = {}
        for direction in ("fwd", "bwd"):
            layer_p[direction] = {
                "w_ih": unif(next(keys), (4 * hidden, d_in)),
                "w_hh": unif(next(keys), (4 * hidden, hidden)),
                "b_ih": unif(next(keys), (4 * hidden,)),
                "b_hh": unif(next(keys), (4 * hidden,)),
            }
        params["enc"].append(layer_p)

    for layer in range(num_layers * 2):
        d_in = dec_size if layer == 0 else hidden
        params["dec"].append({
            "w_ih": unif(next(keys), (4 * hidden, d_in)),
            "w_hh": unif(next(keys), (4 * hidden, hidden)),
            "b_ih": unif(next(keys), (4 * hidden,)),
            "b_hh": unif(next(keys), (4 * hidden,)),
        })

    params["fc1_w"] = unif(next(keys), (hidden, hidden))
    params["fc1_b"] = unif(next(keys), (hidden,))
    params["fc2_w"] = unif(next(keys), (dec_size, hidden))
    params["fc2_b"] = unif(next(keys), (dec_size,))
    return params


def _reorder_gates(w, H):
    """PyTorch gate order (i, f, g, o) -> kernel order (i, f, o, g) on axis 0."""
    return jnp.concatenate([w[0:2 * H], w[3 * H:4 * H], w[2 * H:3 * H]], axis=0)


def _prep_cell(cell, H):
    wih = jnp.transpose(_reorder_gates(cell["w_ih"], H))     # (d_in, 4H)
    whh = jnp.transpose(_reorder_gates(cell["w_hh"], H))     # (H, 4H)
    b = _reorder_gates(cell["b_ih"] + cell["b_hh"], H)       # (4H,)
    return wih, whh, b


def prepare_params(params, hidden, enc_size, dec_size, num_layers):
    """One-time: transpose/reorder/combine weights, pad, and pack everything
    into ONE bf16 weight array + ONE f32 bias array (static in-kernel offsets)."""
    H = hidden
    ENC_IN = _round_up(enc_size, SUB)
    DEC_IN = _round_up(dec_size, SUB)
    P = _round_up(dec_size, LANE)
    COLS = _round_up(max(8 * H, 4 * H, P, H), LANE)

    w_blocks, b_blocks = [], []

    # ---- encoder ----
    for l, layer_p in enumerate(params["enc"]):
        wih_f, whh_f, b_f = _prep_cell(layer_p["fwd"], H)
        wih_b, whh_b, b_b = _prep_cell(layer_p["bwd"], H)
        if l == 0:
            cat = jnp.concatenate([wih_f, wih_b], axis=1)         # (enc, 8H)
            cat = jnp.zeros((ENC_IN, 8 * H), jnp.float32).at[:enc_size].set(cat)
            w_blocks.append(("enc0_wih", cat))
        else:
            cat = jnp.concatenate([wih_f, wih_b], axis=1)         # (2H, 8H)
            w_blocks.append((f"enc{l}_wih_f", cat[:H]))            # * prev fwd seq
            w_blocks.append((f"enc{l}_wih_b", cat[H:]))            # * prev bwd seq
        w_blocks.append((f"enc{l}_whh_f", whh_f))
        w_blocks.append((f"enc{l}_whh_b", whh_b))
        b_blocks.append((f"enc{l}_b", jnp.concatenate([b_f, b_b])))   # (8H,)

    # ---- decoder ----
    for l, p in enumerate(params["dec"]):
        wih, whh, b = _prep_cell(p, H)
        if l == 0:
            wih = jnp.zeros((DEC_IN, 4 * H), jnp.float32).at[:dec_size].set(wih)
        w_blocks.append((f"dec{l}_wih", wih))
        w_blocks.append((f"dec{l}_whh", whh))
        b_blocks.append((f"dec{l}_b", b))

    # ---- fc head ----
    w_blocks.append(("fc1_w", jnp.transpose(params["fc1_w"])))        # (H, H)
    w2 = jnp.zeros((H, P), jnp.float32).at[:, :dec_size].set(
        jnp.transpose(params["fc2_w"]))
    w_blocks.append(("fc2_w", w2))                                    # (H, P)
    b_blocks.append(("fc1_b", params["fc1_b"]))
    b2 = jnp.zeros((P,), jnp.float32).at[:dec_size].set(params["fc2_b"])
    b_blocks.append(("fc2_b", b2))

    # ---- pack weights: bf16, each block's row start aligned to 16 ----
    w_off, parts, off = {}, [], 0
    for name, arr in w_blocks:
        r, c = arr.shape
        rp = _round_up(r, SUB)
        blk = jnp.zeros((rp, COLS), MXU_DTYPE).at[:r, :c].set(arr.astype(MXU_DTYPE))
        w_off[name] = (off, r, c)
        parts.append(blk)
        off += rp
    wpack = jnp.concatenate(parts, axis=0)

    # ---- pack biases: f32, one row each, 8-row aligned blocks ----
    b_off, bparts, boff = {}, [], 0
    for name, vec in b_blocks:
        c = vec.shape[0]
        blk = jnp.zeros((8, COLS), jnp.float32).at[0, :c].set(vec)
        b_off[name] = (boff, c)
        bparts.append(blk)
        boff += 8
    bpack = jnp.concatenate(bparts, axis=0)

    meta = dict(hidden=H, num_layers=num_layers,
                enc_size=enc_size, dec_size=dec_size,
                enc_in_pad=ENC_IN, dec_in_pad=DEC_IN, out_pad=P,
                w_off=w_off, b_off=b_off)
    return wpack, bpack, meta


# --------------------------------------------------------------------------
# Forward pass (test=False path of seq2seq.forward)
# --------------------------------------------------------------------------
def make_forward(meta):
    """Build a jitted forward(wpack, bpack, x, y) -> (T_dec, B, dec_size).
    Static packing offsets are captured by closure (never traced)."""
    H = meta["hidden"]
    num_layers = meta["num_layers"]
    dec_size = meta["dec_size"]
    ENC_IN, DEC_IN, P = meta["enc_in_pad"], meta["dec_in_pad"], meta["out_pad"]
    w_off, b_off = meta["w_off"], meta["b_off"]

    def forward(wpack, bpack, x, y):
        B = x.shape[0]
        T_enc, T_dec = x.shape[1], y.shape[1]
        B_pad = _round_up(max(B, SUB), SUB)

        def prep(a, d_pad):                       # (B,T,D) -> (T*B_pad, d_pad) bf16
            a = jnp.transpose(a, (1, 0, 2))
            a = jnp.pad(a, ((0, 0), (0, B_pad - a.shape[1]),
                            (0, d_pad - a.shape[2])))
            return a.reshape(a.shape[0] * B_pad, d_pad).astype(MXU_DTYPE)

        x2d = prep(x, ENC_IN)
        y2d = prep(y, DEC_IN)

        cfg = dict(hidden=H, num_layers=num_layers,
                   T_enc=T_enc, T_dec=T_dec, B_pad=B_pad)
        kernel = _make_seq2seq_kernel(cfg, w_off, b_off)

        vmem = pl.BlockSpec(memory_space=pltpu.MemorySpace.VMEM)
        out2d = pl.pallas_call(
            kernel,
            out_shape=jax.ShapeDtypeStruct((T_dec * B_pad, P), jnp.float32),
            in_specs=[vmem] * 4,
            out_specs=vmem,
            scratch_shapes=[
                pltpu.VMEM((T_enc * B_pad, 8 * H), jnp.float32),   # gx encoder
                pltpu.VMEM((T_dec * B_pad, 4 * H), jnp.float32),   # gx decoder ping
                pltpu.VMEM((T_dec * B_pad, 4 * H), jnp.float32),   # gx decoder pong
                pltpu.VMEM((T_enc * B_pad, H), MXU_DTYPE),         # enc fwd seq ping
                pltpu.VMEM((T_enc * B_pad, H), MXU_DTYPE),         # enc bwd seq ping
                pltpu.VMEM((T_enc * B_pad, H), MXU_DTYPE),         # enc fwd seq pong
                pltpu.VMEM((T_enc * B_pad, H), MXU_DTYPE),         # enc bwd seq pong
                pltpu.VMEM((T_dec * B_pad, H), MXU_DTYPE),         # dec seq ping
                pltpu.VMEM((T_dec * B_pad, H), MXU_DTYPE),         # dec seq pong
            ],
            compiler_params=pltpu.CompilerParams(
                vmem_limit_bytes=32 * 1024 * 1024),
        )(x2d, y2d, wpack, bpack)

        return out2d.reshape(T_dec, B_pad, P)[:, :B, :dec_size]

    return jax.jit(forward)


# --------------------------------------------------------------------------
if __name__ == "__main__":
    BATCH = 2
    ENC_SIZE = 8
    DEC_SIZE = 8
    HIDDEN = 32
    NUM_LAYERS = 2
    SEQ_ENC = 8
    SEQ_DEC = 8

    root = jax.random.PRNGKey(0)
    k_p, k_x, k_y = jax.random.split(root, 3)

    raw_params = init_params(k_p, ENC_SIZE, DEC_SIZE, HIDDEN, NUM_LAYERS)
    wpack, bpack, meta = prepare_params(raw_params, HIDDEN, ENC_SIZE, DEC_SIZE,
                                        NUM_LAYERS)

    x = jax.random.normal(k_x, (BATCH, SEQ_ENC, ENC_SIZE), jnp.float32)
    y = jax.random.normal(k_y, (BATCH, SEQ_DEC, DEC_SIZE), jnp.float32)

    fwd = make_forward(meta)
    predict = jax.block_until_ready(fwd(wpack, bpack, x, y))

    assert predict.shape == (SEQ_DEC, BATCH, DEC_SIZE)
    assert bool(jnp.all(jnp.isfinite(predict)))
    print("KERNEL_OK")
</pallas_src>

<mosaic_0001>
module attributes {stable_mosaic.version = 11 : i64} {
  func.func @kernel(%arg0: memref<128x16xbf16, #tpu.memory_space<vmem>>, %arg1: memref<128x16xbf16, #tpu.memory_space<vmem>>, %arg2: memref<512x256xbf16, #tpu.memory_space<vmem>>, %arg3: memref<64x256xf32, #tpu.memory_space<vmem>>, %arg4: memref<128x128xf32, #tpu.memory_space<vmem>>, %arg5: memref<128x256xf32, #tpu.memory_space<vmem>>, %arg6: memref<128x128xf32, #tpu.memory_space<vmem>>, %arg7: memref<128x128xf32, #tpu.memory_space<vmem>>, %arg8: memref<128x32xbf16, #tpu.memory_space<vmem>>, %arg9: memref<128x32xbf16, #tpu.memory_space<vmem>>, %arg10: memref<128x32xbf16, #tpu.memory_space<vmem>>, %arg11: memref<128x32xbf16, #tpu.memory_space<vmem>>, %arg12: memref<128x32xbf16, #tpu.memory_space<vmem>>, %arg13: memref<128x32xbf16, #tpu.memory_space<vmem>>) attributes {dimension_semantics = [], scalar_prefetch = 0 : i64, scratch_operands = 9 : i64, tpu.core_type = #tpu.core_type<tc>} {
    %c0 = arith.constant 0 : index
    %c0_0 = arith.constant 0 : index
    %0 = vector.load %arg1[%c0, %c0_0] : memref<128x16xbf16, #tpu.memory_space<vmem>>, vector<128x16xbf16>
    %c208 = arith.constant 208 : index
    %c0_1 = arith.constant 0 : index
    %1 = vector.load %arg2[%c208, %c0_1] : memref<512x256xbf16, #tpu.memory_space<vmem>>, vector<16x128xbf16>
    %cst = arith.constant dense<0.000000e+00> : vector<128x128xf32>
    %2 = tpu.matmul %0, %1, %cst {dimension_numbers = #tpu.dot_dimension_numbers<[1], [0], [0], [1], [0, 0, 1, 1], [], []>} : vector<128x16xbf16>, vector<16x128xbf16>, vector<128x128xf32> -> vector<128x128xf32>
    %c16 = arith.constant 16 : index
    %c0_2 = arith.constant 0 : index
    %3 = vector.load %arg3[%c16, %c0_2] : memref<64x256xf32, #tpu.memory_space<vmem>>, vector<1x128xf32>
    %4 = vector.broadcast %3 : vector<1x128xf32> to vector<128x128xf32>
    %5 = arith.addf %2, %4 : vector<128x128xf32>
    %c0_3 = arith.constant 0 : index
    %c0_4 = arith.constant 0 : index
    %6 = vector.load %arg6[%c0_3, %c0_4] : memref<128x128xf32, #tpu.memory_space<vmem>>, vector<128x128xf32>
    tpu.vector_store %arg6[%c0_3, %c0_4], %5 {strides = array<i32>} : memref<128x128xf32, #tpu.memory_space<vmem>>, vector<128x128xf32>,
    %c0_5 = arith.constant 0 : index
    %c0_6 = arith.constant 0 : index
    %7 = vector.load %arg0[%c0_5, %c0_6] : memref<128x16xbf16, #tpu.memory_space<vmem>>, vector<128x16xbf16>
    %c0_7 = arith.constant 0 : index
    %c0_8 = arith.constant 0 : index
    %8 = vector.load %arg2[%c0_7, %c0_8] : memref<512x256xbf16, #tpu.memory_space<vmem>>, vector<16x256xbf16>
    %cst_9 = arith.constant dense<0.000000e+00> : vector<128x256xf32>
    %9 = tpu.matmul %7, %8, %cst_9 {dimension_numbers = #tpu.dot_dimension_numbers<[1], [0], [0], [1], [0, 0, 1, 1], [], []>} : vector<128x16xbf16>, vector<16x256xbf16>, vector<128x256xf32> -> vector<128x256xf32>
    %c0_10 = arith.constant 0 : index
    %c0_11 = arith.constant 0 : index
    %10 = vector.load %arg3[%c0_10, %c0_11] : memref<64x256xf32, #tpu.memory_space<vmem>>, vector<1x256xf32>
    %11 = vector.broadcast %10 : vector<1x256xf32> to vector<128x256xf32>
    %12 = arith.addf %9, %11 : vector<128x256xf32>
    %c0_12 = arith.constant 0 : index
    %c0_13 = arith.constant 0 : index
    %13 = vector.load %arg5[%c0_12, %c0_13] : memref<128x256xf32, #tpu.memory_space<vmem>>, vector<128x256xf32>
    tpu.vector_store %arg5[%c0_12, %c0_13], %12 {strides = array<i32>} : memref<128x256xf32, #tpu.memory_space<vmem>>, vector<128x256xf32>,
    %c16_14 = arith.constant 16 : index
    %c0_15 = arith.constant 0 : index
    %14 = vector.load %arg2[%c16_14, %c0_15] : memref<512x256xbf16, #tpu.memory_space<vmem>>, vector<32x128xbf16>
    %c48 = arith.constant 48 : index
    %c0_16 = arith.constant 0 : index
    %15 = vector.load %arg2[%c48, %c0_16] : memref<512x256xbf16, #tpu.memory_space<vmem>>, vector<32x128xbf16>
    %cst_17 = arith.constant 0.000000e+00 : f32
    %16 = vector.broadcast %cst_17 : f32 to vector<16x32xf32>
    %c0_i32 = arith.constant 0 : i32
    %c16_i32 = arith.constant 16 : i32
    %17 = arith.muli %c0_i32, %c16_i32 : i32
    %18 = tpu.assume_multiple %17, 16 : i32
    %c7_i32 = arith.constant 7 : i32
    %19 = arith.subi %c7_i32, %c0_i32 : i32
    %c16_i32_18 = arith.constant 16 : i32
    %20 = arith.muli %19, %c16_i32_18 : i32
    %21 = tpu.assume_multiple %20, 16 : i32
    %22 = arith.index_cast %18 : i32 to index
    %c0_19 = arith.constant 0 : index
    %23 = vector.load %arg5[%22, %c0_19] : memref<128x256xf32, #tpu.memory_space<vmem>>, vector<16x128xf32>
    %24 = arith.index_cast %21 : i32 to index
    %c128 = arith.constant 128 : index
    %25 = vector.load %arg5[%24, %c128] : memref<128x256xf32, #tpu.memory_space<vmem>>, vector<16x128xf32>
    %26 = arith.truncf %16 : vector<16x32xf32> to vector<16x32xbf16>
    %cst_20 = arith.constant dense<0.000000e+00> : vector<16x128xf32>
    %27 = tpu.matmul %26, %14, %cst_20 {dimension_numbers = #tpu.dot_dimension_numbers<[1], [0], [0], [1], [0, 0, 1, 1], [], []>} : vector<16x32xbf16>, vector<32x128xbf16>, vector<16x128xf32> -> vector<16x128xf32>
    %28 = arith.addf %23, %27 : vector<16x128xf32>
    %29 = vector.extract_strided_slice %28 {offsets = [0, 0], sizes = [16, 96], strides = [1, 1]} : vector<16x128xf32> to vector<16x96xf32>
    %30 = arith.negf %29 : vector<16x96xf32>
    %31 = math.exp %30 : vector<16x96xf32>
    %cst_21 = arith.constant 1.000000e+00 : f32
    %32 = vector.broadcast %cst_21 : f32 to vector<16x96xf32>
    %33 = arith.addf %32, %31 : vector<16x96xf32>
    %34 = arith.divf %32, %33 : vector<16x96xf32>
    %35 = vector.extract_strided_slice %34 {offsets = [0, 0], sizes = [16, 32], strides = [1, 1]} : vector<16x96xf32> to vector<16x32xf32>
    %36 = vector.extract_strided_slice %34 {offsets = [0, 32], sizes = [16, 32], strides = [1, 1]} : vector<16x96xf32> to vector<16x32xf32>
    %37 = vector.extract_strided_slice %34 {offsets = [0, 64], sizes = [16, 32], strides = [1, 1]} : vector<16x96xf32> to vector<16x32xf32>
    %38 = vector.extract_strided_slice %28 {offsets = [0, 96], sizes = [16, 32], strides = [1, 1]} : vector<16x128xf32> to vector<16x32xf32>
    %39 = math.tanh %38 : vector<16x32xf32>
    %40 = arith.mulf %36, %16 : vector<16x32xf32>
    %41 = arith.mulf %35, %39 : vector<16x32xf32>
    %42 = arith.addf %40, %41 : vector<16x32xf32>
    %43 = math.tanh %42 : vector<16x32xf32>
    %44 = arith.mulf %37, %43 : vector<16x32xf32>
    %45 = arith.truncf %16 : vector<16x32xf32> to vector<16x32xbf16>
    %cst_22 = arith.constant dense<0.000000e+00> : vector<16x128xf32>
    %46 = tpu.matmul %45, %15, %cst_22 {dimension_numbers = #tpu.dot_dimension_numbers<[1], [0], [0], [1], [0, 0, 1, 1], [], []>} : vector<16x32xbf16>, vector<32x128xbf16>, vector<16x128xf32> -> vector<16x128xf32>
    %47 = arith.addf %25, %46 : vector<16x128xf32>
    %48 = vector.extract_strided_slice %47 {offsets = [0, 0], sizes = [16, 96], strides = [1, 1]} : vector<16x128xf32> to vector<16x96xf32>
    %49 = arith.negf %48 : vector<16x96xf32>
    %50 = math.exp %49 : vector<16x96xf32>
    %cst_23 = arith.constant 1.000000e+00 : f32
    %51 = vector.broadcast %cst_23 : f32 to vector<16x96xf32>
    %52 = arith.addf %51, %50 : vector<16x96xf32>
    %53 = arith.divf %51, %52 : vector<16x96xf32>
    %54 = vector.extract_strided_slice %53 {offsets = [0, 0], sizes = [16, 32], strides = [1, 1]} : vector<16x96xf32> to vector<16x32xf32>
    %55 = vector.extract_strided_slice %53 {offsets = [0, 32], sizes = [16, 32], strides = [1, 1]} : vector<16x96xf32> to vector<16x32xf32>
    %56 = vector.extract_strided_slice %53 {offsets = [0, 64], sizes = [16, 32], strides = [1, 1]} : vector<16x96xf32> to vector<16x32xf32>
    %57 = vector.extract_strided_slice %47 {offsets = [0, 96], sizes = [16, 32], strides = [1, 1]} : vector<16x128xf32> to vector<16x32xf32>
    %58 = math.tanh %57 : vector<16x32xf32>
    %59 = arith.mulf %55, %16 : vector<16x32xf32>
    %60 = arith.mulf %54, %58 : vector<16x32xf32>
    %61 = arith.addf %59, %60 : vector<16x32xf32>
    %62 = math.tanh %61 : vector<16x32xf32>
    %63 = arith.mulf %56, %62 : vector<16x32xf32>
    %64 = arith.truncf %44 : vector<16x32xf32> to vector<16x32xbf16>
    %65 = arith.index_cast %18 : i32 to index
    %c0_24 = arith.constant 0 : index
    %66 = vector.load %arg8[%65, %c0_24] : memref<128x32xbf16, #tpu.memory_space<vmem>>, vector<16x32xbf16>
    tpu.vector_store %arg8[%65, %c0_24], %64 {strides = array<i32>} : memref<128x32xbf16, #tpu.memory_space<vmem>>, vector<16x32xbf16>,
    %67 = arith.truncf %63 : vector<16x32xf32> to vector<16x32xbf16>
    %68 = arith.index_cast %21 : i32 to index
    %c0_25 = arith.constant 0 : index
    %69 = vector.load %arg9[%68, %c0_25] : memref<128x32xbf16, #tpu.memory_space<vmem>>, vector<16x32xbf16>
    tpu.vector_store %arg9[%68, %c0_25], %67 {strides = array<i32>} : memref<128x32xbf16, #tpu.memory_space<vmem>>, vector<16x32xbf16>,
    %c1_i32 = arith.constant 1 : i32
    %c16_i32_26 = arith.constant 16 : i32
    %70 = arith.muli %c1_i32, %c16_i32_26 : i32
    %71 = tpu.assume_multiple %70, 16 : i32
    %c7_i32_27 = arith.constant 7 : i32
    %72 = arith.subi %c7_i32_27, %c1_i32 : i32
    %c16_i32_28 = arith.constant 16 : i32
    %73 = arith.muli %72, %c16_i32_28 : i32
    %74 = tpu.assume_multiple %73, 16 : i32
    %75 = arith.index_cast %71 : i32 to index
    %c0_29 = arith.constant 0 : index
    %76 = vector.load %arg5[%75, %c0_29] : memref<128x256xf32, #tpu.memory_space<vmem>>, vector<16x128xf32>
    %77 = arith.index_cast %74 : i32 to index
    %c128_30 = arith.constant 128 : index
    %78 = vector.load %arg5[%77, %c128_30] : memref<128x256xf32, #tpu.memory_space<vmem>>, vector<16x128xf32>
    %79 = arith.truncf %44 : vector<16x32xf32> to vector<16x32xbf16>
    %cst_31 = arith.constant dense<0.000000e+00> : vector<16x128xf32>
    %80 = tpu.matmul %79, %14, %cst_31 {dimension_numbers = #tpu.dot_dimension_numbers<[1], [0], [0], [1], [0, 0, 1, 1], [], []>} : vector<16x32xbf16>, vector<32x128xbf16>, vector<16x128xf32> -> vector<16x128xf32>
    %81 = arith.addf %76, %80 : vector<16x128xf32>
    %82 = vector.extract_strided_slice %81 {offsets = [0, 0], sizes = [16, 96], strides = [1, 1]} : vector<16x128xf32> to vector<16x96xf32>
    %83 = arith.negf %82 : vector<16x96xf32>
    %84 = math.exp %83 : vector<16x96xf32>
    %cst_32 = arith.constant 1.000000e+00 : f32
    %85 = vector.broadcast %cst_32 : f32 to vector<16x96xf32>
    %86 = arith.addf %85, %84 : vector<16x96xf32>
    %87 = arith.divf %85, %86 : vector<16x96xf32>
    %88 = vector.extract_strided_slice %87 {offsets = [0, 0], sizes = [16, 32], strides = [1, 1]} : vector<16x96xf32> to vector<16x32xf32>
    %89 = vector.extract_strided_slice %87 {offsets = [0, 32], sizes = [16, 32], strides = [1, 1]} : vector<16x96xf32> to vector<16x32xf32>
    %90 = vector.extract_strided_slice %87 {offsets = [0, 64], sizes = [16, 32], strides = [1, 1]} : vector<16x96xf32> to vector<16x32xf32>
    %91 = vector.extract_strided_slice %81 {offsets = [0, 96], sizes = [16, 32], strides = [1, 1]} : vector<16x128xf32> to vector<16x32xf32>
    %92 = math.tanh %91 : vector<16x32xf32>
    %93 = arith.mulf %89, %42 : vector<16x32xf32>
    %94 = arith.mulf %88, %92 : vector<16x32xf32>
    %95 = arith.addf %93, %94 : vector<16x32xf32>
    %96 = math.tanh %95 : vector<16x32xf32>
    %97 = arith.mulf %90, %96 : vector<16x32xf32>
    %98 = arith.truncf %63 : vector<16x32xf32> to vector<16x32xbf16>
    %cst_33 = arith.constant dense<0.000000e+00> : vector<16x128xf32>
    %99 = tpu.matmul %98, %15, %cst_33 {dimension_numbers = #tpu.dot_dimension_numbers<[1], [0], [0], [1], [0, 0, 1, 1], [], []>} : vector<16x32xbf16>, vector<32x128xbf16>, vector<16x128xf32> -> vector<16x128xf32>
    %100 = arith.addf %78, %99 : vector<16x128xf32>
    %101 = vector.extract_strided_slice %100 {offsets = [0, 0], sizes = [16, 96], strides = [1, 1]} : vector<16x128xf32> to vector<16x96xf32>
    %102 = arith.negf %101 : vector<16x96xf32>
    %103 = math.exp %102 : vector<16x96xf32>
    %cst_34 = arith.constant 1.000000e+00 : f32
    %104 = vector.broadcast %cst_34 : f32 to vector<16x96xf32>
    %105 = arith.addf %104, %103 : vector<16x96xf32>
    %106 = arith.divf %104, %105 : vector<16x96xf32>
    %107 = vector.extract_strided_slice %106 {offsets = [0, 0], sizes = [16, 32], strides = [1, 1]} : vector<16x96xf32> to vector<16x32xf32>
    %108 = vector.extract_strided_slice %106 {offsets = [0, 32], sizes = [16, 32], strides = [1, 1]} : vector<16x96xf32> to vector<16x32xf32>
    %109 = vector.extract_strided_slice %106 {offsets = [0, 64], sizes = [16, 32], strides = [1, 1]} : vector<16x96xf32> to vector<16x32xf32>
    %110 = vector.extract_strided_slice %100 {offsets = [0, 96], sizes = [16, 32], strides = [1, 1]} : vector<16x128xf32> to vector<16x32xf32>
    %111 = math.tanh %110 : vector<16x32xf32>
    %112 = arith.mulf %108, %61 : vector<16x32xf32>
    %113 = arith.mulf %107, %111 : vector<16x32xf32>
    %114 = arith.addf %112, %113 : vector<16x32xf32>
    %115 = math.tanh %114 : vector<16x32xf32>
    %116 = arith.mulf %109, %115 : vector<16x32xf32>
    %117 = arith.truncf %97 : vector<16x32xf32> to vector<16x32xbf16>
    %118 = arith.index_cast %71 : i32 to index
    %c0_35 = arith.constant 0 : index
    %119 = vector.load %arg8[%118, %c0_35] : memref<128x32xbf16, #tpu.memory_space<vmem>>, vector<16x32xbf16>
    tpu.vector_store %arg8[%118, %c0_35], %117 {strides = array<i32>} : memref<128x32xbf16, #tpu.memory_space<vmem>>, vector<16x32xbf16>,
    %120 = arith.truncf %116 : vector<16x32xf32> to vector<16x32xbf16>
    %121 = arith.index_cast %74 : i32 to index
    %c0_36 = arith.constant 0 : index
    %122 = vector.load %arg9[%121, %c0_36] : memref<128x32xbf16, #tpu.memory_space<vmem>>, vector<16x32xbf16>
    tpu.vector_store %arg9[%121, %c0_36], %120 {strides = array<i32>} : memref<128x32xbf16, #tpu.memory_space<vmem>>, vector<16x32xbf16>,
    %c2_i32 = arith.constant 2 : i32
    %c16_i32_37 = arith.constant 16 : i32
    %123 = arith.muli %c2_i32, %c16_i32_37 : i32
    %124 = tpu.assume_multiple %123, 16 : i32
    %c7_i32_38 = arith.constant 7 : i32
    %125 = arith.subi %c7_i32_38, %c2_i32 : i32
    %c16_i32_39 = arith.constant 16 : i32
    %126 = arith.muli %125, %c16_i32_39 : i32
    %127 = tpu.assume_multiple %126, 16 : i32
    %128 = arith.index_cast %124 : i32 to index
    %c0_40 = arith.constant 0 : index
    %129 = vector.load %arg5[%128, %c0_40] : memref<128x256xf32, #tpu.memory_space<vmem>>, vector<16x128xf32>
    %130 = arith.index_cast %127 : i32 to index
    %c128_41 = arith.constant 128 : index
    %131 = vector.load %arg5[%130, %c128_41] : memref<128x256xf32, #tpu.memory_space<vmem>>, vector<16x128xf32>
    %132 = arith.truncf %97 : vector<16x32xf32> to vector<16x32xbf16>
    %cst_42 = arith.constant dense<0.000000e+00> : vector<16x128xf32>
    %133 = tpu.matmul %132, %14, %cst_42 {dimension_numbers = #tpu.dot_dimension_numbers<[1], [0], [0], [1], [0, 0, 1, 1], [], []>} : vector<16x32xbf16>, vector<32x128xbf16>, vector<16x128xf32> -> vector<16x128xf32>
    %134 = arith.addf %129, %133 : vector<16x128xf32>
    %135 = vector.extract_strided_slice %134 {offsets = [0, 0], sizes = [16, 96], strides = [1, 1]} : vector<16x128xf32> to vector<16x96xf32>
    %136 = arith.negf %135 : vector<16x96xf32>
    %137 = math.exp %136 : vector<16x96xf32>
    %cst_43 = arith.constant 1.000000e+00 : f32
    %138 = vector.broadcast %cst_43 : f32 to vector<16x96xf32>
    %139 = arith.addf %138, %137 : vector<16x96xf32>
    %140 = arith.divf %138, %139 : vector<16x96xf32>
    %141 = vector.extract_strided_slice %140 {offsets = [0, 0], sizes = [16, 32], strides = [1, 1]} : vector<16x96xf32> to vector<16x32xf32>
    %142 = vector.extract_strided_slice %140 {offsets = [0, 32], sizes = [16, 32], strides = [1, 1]} : vector<16x96xf32> to vector<16x32xf32>
    %143 = vector.extract_strided_slice %140 {offsets = [0, 64], sizes = [16, 32], strides = [1, 1]} : vector<16x96xf32> to vector<16x32xf32>
    %144 = vector.extract_strided_slice %134 {offsets = [0, 96], sizes = [16, 32], strides = [1, 1]} : vector<16x128xf32> to vector<16x32xf32>
    %145 = math.tanh %144 : vector<16x32xf32>
    %146 = arith.mulf %142, %95 : vector<16x32xf32>
    %147 = arith.mulf %141, %145 : vector<16x32xf32>
    %148 = arith.addf %146, %147 : vector<16x32xf32>
    %149 = math.tanh %148 : vector<16x32xf32>
    %150 = arith.mulf %143, %149 : vector<16x32xf32>
    %151 = arith.truncf %116 : vector<16x32xf32> to vector<16x32xbf16>
    %cst_44 = arith.constant dense<0.000000e+00> : vector<16x128xf32>
    %152 = tpu.matmul %151, %15, %cst_44 {dimension_numbers = #tpu.dot_dimension_numbers<[1], [0], [0], [1], [0, 0, 1, 1], [], []>} : vector<16x32xbf16>, vector<32x128xbf16>, vector<16x128xf32> -> vector<16x128xf32>
    %153 = arith.addf %131, %152 : vector<16x128xf32>
    %154 = vector.extract_strided_slice %153 {offsets = [0, 0], sizes = [16, 96], strides = [1, 1]} : vector<16x128xf32> to vector<16x96xf32>
    %155 = arith.negf %154 : vector<16x96xf32>
    %156 = math.exp %155 : vector<16x96xf32>
    %cst_45 = arith.constant 1.000000e+00 : f32
    %157 = vector.broadcast %cst_45 : f32 to vector<16x96xf32>
    %158 = arith.addf %157, %156 : vector<16x96xf32>
    %159 = arith.divf %157, %158 : vector<16x96xf32>
    %160 = vector.extract_strided_slice %159 {offsets = [0, 0], sizes = [16, 32], strides = [1, 1]} : vector<16x96xf32> to vector<16x32xf32>
    %161 = vector.extract_strided_slice %159 {offsets = [0, 32], sizes = [16, 32], strides = [1, 1]} : vector<16x96xf32> to vector<16x32xf32>
    %162 = vector.extract_strided_slice %159 {offsets = [0, 64], sizes = [16, 32], strides = [1, 1]} : vector<16x96xf32> to vector<16x32xf32>
    %163 = vector.extract_strided_slice %153 {offsets = [0, 96], sizes = [16, 32], strides = [1, 1]} : vector<16x128xf32> to vector<16x32xf32>
    %164 = math.tanh %163 : vector<16x32xf32>
    %165 = arith.mulf %161, %114 : vector<16x32xf32>
    %166 = arith.mulf %160, %164 : vector<16x32xf32>
    %167 = arith.addf %165, %166 : vector<16x32xf32>
    %168 = math.tanh %167 : vector<16x32xf32>
    %169 = arith.mulf %162, %168 : vector<16x32xf32>
    %170 = arith.truncf %150 : vector<16x32xf32> to vector<16x32xbf16>
    %171 = arith.index_cast %124 : i32 to index
    %c0_46 = arith.constant 0 : index
    %172 = vector.load %arg8[%171, %c0_46] : memref<128x32xbf16, #tpu.memory_space<vmem>>, vector<16x32xbf16>
    tpu.vector_store %arg8[%171, %c0_46], %170 {strides = array<i32>} : memref<128x32xbf16, #tpu.memory_space<vmem>>, vector<16x32xbf16>,
    %173 = arith.truncf %169 : vector<16x32xf32> to vector<16x32xbf16>
    %174 = arith.index_cast %127 : i32 to index
    %c0_47 = arith.constant 0 : index
    %175 = vector.load %arg9[%174, %c0_47] : memref<128x32xbf16, #tpu.memory_space<vmem>>, vector<16x32xbf16>
    tpu.vector_store %arg9[%174, %c0_47], %173 {strides = array<i32>} : memref<128x32xbf16, #tpu.memory_space<vmem>>, vector<16x32xbf16>,
    %c3_i32 = arith.constant 3 : i32
    %c16_i32_48 = arith.constant 16 : i32
    %176 = arith.muli %c3_i32, %c16_i32_48 : i32
    %177 = tpu.assume_multiple %176, 16 : i32
    %c7_i32_49 = arith.constant 7 : i32
    %178 = arith.subi %c7_i32_49, %c3_i32 : i32
    %c16_i32_50 = arith.constant 16 : i32
    %179 = arith.muli %178, %c16_i32_50 : i32
    %180 = tpu.assume_multiple %179, 16 : i32
    %181 = arith.index_cast %177 : i32 to index
    %c0_51 = arith.constant 0 : index
    %182 = vector.load %arg5[%181, %c0_51] : memref<128x256xf32, #tpu.memory_space<vmem>>, vector<16x128xf32>
    %183 = arith.index_cast %180 : i32 to index
    %c128_52 = arith.constant 128 : index
    %184 = vector.load %arg5[%183, %c128_52] : memref<128x256xf32, #tpu.memory_space<vmem>>, vector<16x128xf32>
    %185 = arith.truncf %150 : vector<16x32xf32> to vector<16x32xbf16>
    %cst_53 = arith.constant dense<0.000000e+00> : vector<16x128xf32>
    %186 = tpu.matmul %185, %14, %cst_53 {dimension_numbers = #tpu.dot_dimension_numbers<[1], [0], [0], [1], [0, 0, 1, 1], [], []>} : vector<16x32xbf16>, vector<32x128xbf16>, vector<16x128xf32> -> vector<16x128xf32>
    %187 = arith.addf %182, %186 : vector<16x128xf32>
    %188 = vector.extract_strided_slice %187 {offsets = [0, 0], sizes = [16, 96], strides = [1, 1]} : vector<16x128xf32> to vector<16x96xf32>
    %189 = arith.negf %188 : vector<16x96xf32>
    %190 = math.exp %189 : vector<16x96xf32>
    %cst_54 = arith.constant 1.000000e+00 : f32
    %191 = vector.broadcast %cst_54 : f32 to vector<16x96xf32>
    %192 = arith.addf %191, %190 : vector<16x96xf32>
    %193 = arith.divf %191, %192 : vector<16x96xf32>
    %194 = vector.extract_strided_slice %193 {offsets = [0, 0], sizes = [16, 32], strides = [1, 1]} : vector<16x96xf32> to vector<16x32xf32>
    %195 = vector.extract_strided_slice %193 {offsets = [0, 32], sizes = [16, 32], strides = [1, 1]} : vector<16x96xf32> to vector<16x32xf32>
    %196 = vector.extract_strided_slice %193 {offsets = [0, 64], sizes = [16, 32], strides = [1, 1]} : vector<16x96xf32> to vector<16x32xf32>
    %197 = vector.extract_strided_slice %187 {offsets = [0, 96], sizes = [16, 32], strides = [1, 1]} : vector<16x128xf32> to vector<16x32xf32>
    %198 = math.tanh %197 : vector<16x32xf32>
    %199 = arith.mulf %195, %148 : vector<16x32xf32>
    %200 = arith.mulf %194, %198 : vector<16x32xf32>
    %201 = arith.addf %199, %200 : vector<16x32xf32>
    %202 = math.tanh %201 : vector<16x32xf32>
    %203 = arith.mulf %196, %202 : vector<16x32xf32>
    %204 = arith.truncf %169 : vector<16x32xf32> to vector<16x32xbf16>
    %cst_55 = arith.constant dense<0.000000e+00> : vector<16x128xf32>
    %205 = tpu.matmul %204, %15, %cst_55 {dimension_numbers = #tpu.dot_dimension_numbers<[1], [0], [0], [1], [0, 0, 1, 1], [], []>} : vector<16x32xbf16>, vector<32x128xbf16>, vector<16x128xf32> -> vector<16x128xf32>
    %206 = arith.addf %184, %205 : vector<16x128xf32>
    %207 = vector.extract_strided_slice %206 {offsets = [0, 0], sizes = [16, 96], strides = [1, 1]} : vector<16x128xf32> to vector<16x96xf32>
    %208 = arith.negf %207 : vector<16x96xf32>
    %209 = math.exp %208 : vector<16x96xf32>
    %cst_56 = arith.constant 1.000000e+00 : f32
    %210 = vector.broadcast %cst_56 : f32 to vector<16x96xf32>
    %211 = arith.addf %210, %209 : vector<16x96xf32>
    %212 = arith.divf %210, %211 : vector<16x96xf32>
    %213 = vector.extract_strided_slice %212 {offsets = [0, 0], sizes = [16, 32], strides = [1, 1]} : vector<16x96xf32> to vector<16x32xf32>
    %214 = vector.extract_strided_slice %212 {offsets = [0, 32], sizes = [16, 32], strides = [1, 1]} : vector<16x96xf32> to vector<16x32xf32>
    %215 = vector.extract_strided_slice %212 {offsets = [0, 64], sizes = [16, 32], strides = [1, 1]} : vector<16x96xf32> to vector<16x32xf32>
    %216 = vector.extract_strided_slice %206 {offsets = [0, 96], sizes = [16, 32], strides = [1, 1]} : vector<16x128xf32> to vector<16x32xf32>
    %217 = math.tanh %216 : vector<16x32xf32>
    %218 = arith.mulf %214, %167 : vector<16x32xf32>
    %219 = arith.mulf %213, %217 : vector<16x32xf32>
    %220 = arith.addf %218, %219 : vector<16x32xf32>
    %221 = math.tanh %220 : vector<16x32xf32>
    %222 = arith.mulf %215, %221 : vector<16x32xf32>
    %223 = arith.truncf %203 : vector<16x32xf32> to vector<16x32xbf16>
    %224 = arith.index_cast %177 : i32 to index
    %c0_57 = arith.constant 0 : index
    %225 = vector.load %arg8[%224, %c0_57] : memref<128x32xbf16, #tpu.memory_space<vmem>>, vector<16x32xbf16>
    tpu.vector_store %arg8[%224, %c0_57], %223 {strides = array<i32>} : memref<128x32xbf16, #tpu.memory_space<vmem>>, vector<16x32xbf16>,
    %226 = arith.truncf %222 : vector<16x32xf32> to vector<16x32xbf16>
    %227 = arith.index_cast %180 : i32 to index
    %c0_58 = arith.constant 0 : index
    %228 = vector.load %arg9[%227, %c0_58] : memref<128x32xbf16, #tpu.memory_space<vmem>>, vector<16x32xbf16>
    tpu.vector_store %arg9[%227, %c0_58], %226 {strides = array<i32>} : memref<128x32xbf16, #tpu.memory_space<vmem>>, vector<16x32xbf16>,
    %c4_i32 = arith.constant 4 : i32
    %c16_i32_59 = arith.constant 16 : i32
    %229 = arith.muli %c4_i32, %c16_i32_59 : i32
    %230 = tpu.assume_multiple %229, 16 : i32
    %c7_i32_60 = arith.constant 7 : i32
    %231 = arith.subi %c7_i32_60, %c4_i32 : i32
    %c16_i32_61 = arith.constant 16 : i32
    %232 = arith.muli %231, %c16_i32_61 : i32
    %233 = tpu.assume_multiple %232, 16 : i32
    %234 = arith.index_cast %230 : i32 to index
    %c0_62 = arith.constant 0 : index
    %235 = vector.load %arg5[%234, %c0_62] : memref<128x256xf32, #tpu.memory_space<vmem>>, vector<16x128xf32>
    %236 = arith.index_cast %233 : i32 to index
    %c128_63 = arith.constant 128 : index
    %237 = vector.load %arg5[%236, %c128_63] : memref<128x256xf32, #tpu.memory_space<vmem>>, vector<16x128xf32>
    %238 = arith.truncf %203 : vector<16x32xf32> to vector<16x32xbf16>
    %cst_64 = arith.constant dense<0.000000e+00> : vector<16x128xf32>
    %239 = tpu.matmul %238, %14, %cst_64 {dimension_numbers = #tpu.dot_dimension_numbers<[1], [0], [0], [1], [0, 0, 1, 1], [], []>} : vector<16x32xbf16>, vector<32x128xbf16>, vector<16x128xf32> -> vector<16x128xf32>
    %240 = arith.addf %235, %239 : vector<16x128xf32>
    %241 = vector.extract_strided_slice %240 {offsets = [0, 0], sizes = [16, 96], strides = [1, 1]} : vector<16x128xf32> to vector<16x96xf32>
    %242 = arith.negf %241 : vector<16x96xf32>
    %243 = math.exp %242 : vector<16x96xf32>
    %cst_65 = arith.constant 1.000000e+00 : f32
    %244 = vector.broadcast %cst_65 : f32 to vector<16x96xf32>
    %245 = arith.addf %244, %243 : vector<16x96xf32>
    %246 = arith.divf %244, %245 : vector<16x96xf32>
    %247 = vector.extract_strided_slice %246 {offsets = [0, 0], sizes = [16, 32], strides = [1, 1]} : vector<16x96xf32> to vector<16x32xf32>
    %248 = vector.extract_strided_slice %246 {offsets = [0, 32], sizes = [16, 32], strides = [1, 1]} : vector<16x96xf32> to vector<16x32xf32>
    %249 = vector.extract_strided_slice %246 {offsets = [0, 64], sizes = [16, 32], strides = [1, 1]} : vector<16x96xf32> to vector<16x32xf32>
    %250 = vector.extract_strided_slice %240 {offsets = [0, 96], sizes = [16, 32], strides = [1, 1]} : vector<16x128xf32> to vector<16x32xf32>
    %251 = math.tanh %250 : vector<16x32xf32>
    %252 = arith.mulf %248, %201 : vector<16x32xf32>
    %253 = arith.mulf %247, %251 : vector<16x32xf32>
    %254 = arith.addf %252, %253 : vector<16x32xf32>
    %255 = math.tanh %254 : vector<16x32xf32>
    %256 = arith.mulf %249, %255 : vector<16x32xf32>
    %257 = arith.truncf %222 : vector<16x32xf32> to vector<16x32xbf16>
    %cst_66 = arith.constant dense<0.000000e+00> : vector<16x128xf32>
    %258 = tpu.matmul %257, %15, %cst_66 {dimension_numbers = #tpu.dot_dimension_numbers<[1], [0], [0], [1], [0, 0, 1, 1], [], []>} : vector<16x32xbf16>, vector<32x128xbf16>, vector<16x128xf32> -> vector<16x128xf32>
    %259 = arith.addf %237, %258 : vector<16x128xf32>
    %260 = vector.extract_strided_slice %259 {offsets = [0, 0], sizes = [16, 96], strides = [1, 1]} : vector<16x128xf32> to vector<16x96xf32>
    %261 = arith.negf %260 : vector<16x96xf32>
    %262 = math.exp %261 : vector<16x96xf32>
    %cst_67 = arith.constant 1.000000e+00 : f32
    %263 = vector.broadcast %cst_67 : f32 to vector<16x96xf32>
    %264 = arith.addf %263, %262 : vector<16x96xf32>
    %265 = arith.divf %263, %264 : vector<16x96xf32>
    %266 = vector.extract_strided_slice %265 {offsets = [0, 0], sizes = [16, 32], strides = [1, 1]} : vector<16x96xf32> to vector<16x32xf32>
    %267 = vector.extract_strided_slice %265 {offsets = [0, 32], sizes = [16, 32], strides = [1, 1]} : vector<16x96xf32> to vector<16x32xf32>
    %268 = vector.extract_strided_slice %265 {offsets = [0, 64], sizes = [16, 32], strides = [1, 1]} : vector<16x96xf32> to vector<16x32xf32>
    %269 = vector.extract_strided_slice %259 {offsets = [0, 96], sizes = [16, 32], strides = [1, 1]} : vector<16x128xf32> to vector<16x32xf32>
    %270 = math.tanh %269 : vector<16x32xf32>
    %271 = arith.mulf %267, %220 : vector<16x32xf32>
    %272 = arith.mulf %266, %270 : vector<16x32xf32>
    %273 = arith.addf %271, %272 : vector<16x32xf32>
    %274 = math.tanh %273 : vector<16x32xf32>
    %275 = arith.mulf %268, %274 : vector<16x32xf32>
    %276 = arith.truncf %256 : vector<16x32xf32> to vector<16x32xbf16>
    %277 = arith.index_cast %230 : i32 to index
    %c0_68 = arith.constant 0 : index
    %278 = vector.load %arg8[%277, %c0_68] : memref<128x32xbf16, #tpu.memory_space<vmem>>, vector<16x32xbf16>
    tpu.vector_store %arg8[%277, %c0_68], %276 {strides = array<i32>} : memref<128x32xbf16, #tpu.memory_space<vmem>>, vector<16x32xbf16>,
    %279 = arith.truncf %275 : vector<16x32xf32> to vector<16x32xbf16>
    %280 = arith.index_cast %233 : i32 to index
    %c0_69 = arith.constant 0 : index
    %281 = vector.load %arg9[%280, %c0_69] : memref<128x32xbf16, #tpu.memory_space<vmem>>, vector<16x32xbf16>
    tpu.vector_store %arg9[%280, %c0_69], %279 {strides = array<i32>} : memref<128x32xbf16, #tpu.memory_space<vmem>>, vector<16x32xbf16>,
    %c5_i32 = arith.constant 5 : i32
    %c16_i32_70 = arith.constant 16 : i32
    %282 = arith.muli %c5_i32, %c16_i32_70 : i32
    %283 = tpu.assume_multiple %282, 16 : i32
    %c7_i32_71 = arith.constant 7 : i32
    %284 = arith.subi %c7_i32_71, %c5_i32 : i32
    %c16_i32_72 = arith.constant 16 : i32
    %285 = arith.muli %284, %c16_i32_72 : i32
    %286 = tpu.assume_multiple %285, 16 : i32
    %287 = arith.index_cast %283 : i32 to index
    %c0_73 = arith.constant 0 : index
    %288 = vector.load %arg5[%287, %c0_73] : memref<128x256xf32, #tpu.memory_space<vmem>>, vector<16x128xf32>
    %289 = arith.index_cast %286 : i32 to index
    %c128_74 = arith.constant 128 : index
    %290 = vector.load %arg5[%289, %c128_74] : memref<128x256xf32, #tpu.memory_space<vmem>>, vector<16x128xf32>
    %291 = arith.truncf %256 : vector<16x32xf32> to vector<16x32xbf16>
    %cst_75 = arith.constant dense<0.000000e+00> : vector<16x128xf32>
    %292 = tpu.matmul %291, %14, %cst_75 {dimension_numbers = #tpu.dot_dimension_numbers<[1], [0], [0], [1], [0, 0, 1, 1], [], []>} : vector<16x32xbf16>, vector<32x128xbf16>, vector<16x128xf32> -> vector<16x128xf32>
    %293 = arith.addf %288, %292 : vector<16x128xf32>
    %294 = vector.extract_strided_slice %293 {offsets = [0, 0], sizes = [16, 96], strides = [1, 1]} : vector<16x128xf32> to vector<16x96xf32>
    %295 = arith.negf %294 : vector<16x96xf32>
    %296 = math.exp %295 : vector<16x96xf32>
    %cst_76 = arith.constant 1.000000e+00 : f32
    %297 = vector.broadcast %cst_76 : f32 to vector<16x96xf32>
    %298 = arith.addf %297, %296 : vector<16x96xf32>
    %299 = arith.divf %297, %298 : vector<16x96xf32>
    %300 = vector.extract_strided_slice %299 {offsets = [0, 0], sizes = [16, 32], strides = [1, 1]} : vector<16x96xf32> to vector<16x32xf32>
    %301 = vector.extract_strided_slice %299 {offsets = [0, 32], sizes = [16, 32], strides = [1, 1]} : vector<16x96xf32> to vector<16x32xf32>
    %302 = vector.extract_strided_slice %299 {offsets = [0, 64], sizes = [16, 32], strides = [1, 1]} : vector<16x96xf32> to vector<16x32xf32>
    %303 = vector.extract_strided_slice %293 {offsets = [0, 96], sizes = [16, 32], strides = [1, 1]} : vector<16x128xf32> to vector<16x32xf32>
    %304 = math.tanh %303 : vector<16x32xf32>
    %305 = arith.mulf %301, %254 : vector<16x32xf32>
    %306 = arith.mulf %300, %304 : vector<16x32xf32>
    %307 = arith.addf %305, %306 : vector<16x32xf32>
    %308 = math.tanh %307 : vector<16x32xf32>
    %309 = arith.mulf %302, %308 : vector<16x32xf32>
    %310 = arith.truncf %275 : vector<16x32xf32> to vector<16x32xbf16>
    %cst_77 = arith.constant dense<0.000000e+00> : vector<16x128xf32>
    %311 = tpu.matmul %310, %15, %cst_77 {dimension_numbers = #tpu.dot_dimension_numbers<[1], [0], [0], [1], [0, 0, 1, 1], [], []>} : vector<16x32xbf16>, vector<32x128xbf16>, vector<16x128xf32> -> vector<16x128xf32>
    %312 = arith.addf %290, %311 : vector<16x128xf32>
    %313 = vector.extract_strided_slice %312 {offsets = [0, 0], sizes = [16, 96], strides = [1, 1]} : vector<16x128xf32> to vector<16x96xf32>
    %314 = arith.negf %313 : vector<16x96xf32>
    %315 = math.exp %314 : vector<16x96xf32>
    %cst_78 = arith.constant 1.000000e+00 : f32
    %316 = vector.broadcast %cst_78 : f32 to vector<16x96xf32>
    %317 = arith.addf %316, %315 : vector<16x96xf32>
    %318 = arith.divf %316, %317 : vector<16x96xf32>
    %319 = vector.extract_strided_slice %318 {offsets = [0, 0], sizes = [16, 32], strides = [1, 1]} : vector<16x96xf32> to vector<16x32xf32>
    %320 = vector.extract_strided_slice %318 {offsets = [0, 32], sizes = [16, 32], strides = [1, 1]} : vector<16x96xf32> to vector<16x32xf32>
    %321 = vector.extract_strided_slice %318 {offsets = [0, 64], sizes = [16, 32], strides = [1, 1]} : vector<16x96xf32> to vector<16x32xf32>
    %322 = vector.extract_strided_slice %312 {offsets = [0, 96], sizes = [16, 32], strides = [1, 1]} : vector<16x128xf32> to vector<16x32xf32>
    %323 = math.tanh %322 : vector<16x32xf32>
    %324 = arith.mulf %320, %273 : vector<16x32xf32>
    %325 = arith.mulf %319, %323 : vector<16x32xf32>
    %326 = arith.addf %324, %325 : vector<16x32xf32>
    %327 = math.tanh %326 : vector<16x32xf32>
    %328 = arith.mulf %321, %327 : vector<16x32xf32>
    %329 = arith.truncf %309 : vector<16x32xf32> to vector<16x32xbf16>
    %330 = arith.index_cast %283 : i32 to index
    %c0_79 = arith.constant 0 : index
    %331 = vector.load %arg8[%330, %c0_79] : memref<128x32xbf16, #tpu.memory_space<vmem>>, vector<16x32xbf16>
    tpu.vector_store %arg8[%330, %c0_79], %329 {strides = array<i32>} : memref<128x32xbf16, #tpu.memory_space<vmem>>, vector<16x32xbf16>,
    %332 = arith.truncf %328 : vector<16x32xf32> to vector<16x32xbf16>
    %333 = arith.index_cast %286 : i32 to index
    %c0_80 = arith.constant 0 : index
    %334 = vector.load %arg9[%333, %c0_80] : memref<128x32xbf16, #tpu.memory_space<vmem>>, vector<16x32xbf16>
    tpu.vector_store %arg9[%333, %c0_80], %332 {strides = array<i32>} : memref<128x32xbf16, #tpu.memory_space<vmem>>, vector<16x32xbf16>,
    %c6_i32 = arith.constant 6 : i32
    %c16_i32_81 = arith.constant 16 : i32
    %335 = arith.muli %c6_i32, %c16_i32_81 : i32
    %336 = tpu.assume_multiple %335, 16 : i32
    %c7_i32_82 = arith.constant 7 : i32
    %337 = arith.subi %c7_i32_82, %c6_i32 : i32
    %c16_i32_83 = arith.constant 16 : i32
    %338 = arith.muli %337, %c16_i32_83 : i32
    %339 = tpu.assume_multiple %338, 16 : i32
    %340 = arith.index_cast %336 : i32 to index
    %c0_84 = arith.constant 0 : index
    %341 = vector.load %arg5[%340, %c0_84] : memref<128x256xf32, #tpu.memory_space<vmem>>, vector<16x128xf32>
    %342 = arith.index_cast %339 : i32 to index
    %c128_85 = arith.constant 128 : index
    %343 = vector.load %arg5[%342, %c128_85] : memref<128x256xf32, #tpu.memory_space<vmem>>, vector<16x128xf32>
    %344 = arith.truncf %309 : vector<16x32xf32> to vector<16x32xbf16>
    %cst_86 = arith.constant dense<0.000000e+00> : vector<16x128xf32>
    %345 = tpu.matmul %344, %14, %cst_86 {dimension_numbers = #tpu.dot_dimension_numbers<[1], [0], [0], [1], [0, 0, 1, 1], [], []>} : vector<16x32xbf16>, vector<32x128xbf16>, vector<16x128xf32> -> vector<16x128xf32>
    %346 = arith.addf %341, %345 : vector<16x128xf32>
    %347 = vector.extract_strided_slice %346 {offsets = [0, 0], sizes = [16, 96], strides = [1, 1]} : vector<16x128xf32> to vector<16x96xf32>
    %348 = arith.negf %347 : vector<16x96xf32>
    %349 = math.exp %348 : vector<16x96xf32>
    %cst_87 = arith.constant 1.000000e+00 : f32
    %350 = vector.broadcast %cst_87 : f32 to vector<16x96xf32>
    %351 = arith.addf %350, %349 : vector<16x96xf32>
    %352 = arith.divf %350, %351 : vector<16x96xf32>
    %353 = vector.extract_strided_slice %352 {offsets = [0, 0], sizes = [16, 32], strides = [1, 1]} : vector<16x96xf32> to vector<16x32xf32>
    %354 = vector.extract_strided_slice %352 {offsets = [0, 32], sizes = [16, 32], strides = [1, 1]} : vector<16x96xf32> to vector<16x32xf32>
    %355 = vector.extract_strided_slice %352 {offsets = [0, 64], sizes = [16, 32], strides = [1, 1]} : vector<16x96xf32> to vector<16x32xf32>
    %356 = vector.extract_strided_slice %346 {offsets = [0, 96], sizes = [16, 32], strides = [1, 1]} : vector<16x128xf32> to vector<16x32xf32>
    %357 = math.tanh %356 : vector<16x32xf32>
    %358 = arith.mulf %354, %307 : vector<16x32xf32>
    %359 = arith.mulf %353, %357 : vector<16x32xf32>
    %360 = arith.addf %358, %359 : vector<16x32xf32>
    %361 = math.tanh %360 : vector<16x32xf32>
    %362 = arith.mulf %355, %361 : vector<16x32xf32>
    %363 = arith.truncf %328 : vector<16x32xf32> to vector<16x32xbf16>
    %cst_88 = arith.constant dense<0.000000e+00> : vector<16x128xf32>
    %364 = tpu.matmul %363, %15, %cst_88 {dimension_numbers = #tpu.dot_dimension_numbers<[1], [0], [0], [1], [0, 0, 1, 1], [], []>} : vector<16x32xbf16>, vector<32x128xbf16>, vector<16x128xf32> -> vector<16x128xf32>
    %365 = arith.addf %343, %364 : vector<16x128xf32>
    %366 = vector.extract_strided_slice %365 {offsets = [0, 0], sizes = [16, 96], strides = [1, 1]} : vector<16x128xf32> to vector<16x96xf32>
    %367 = arith.negf %366 : vector<16x96xf32>
    %368 = math.exp %367 : vector<16x96xf32>
    %cst_89 = arith.constant 1.000000e+00 : f32
    %369 = vector.broadcast %cst_89 : f32 to vector<16x96xf32>
    %370 = arith.addf %369, %368 : vector<16x96xf32>
    %371 = arith.divf %369, %370 : vector<16x96xf32>
    %372 = vector.extract_strided_slice %371 {offsets = [0, 0], sizes = [16, 32], strides = [1, 1]} : vector<16x96xf32> to vector<16x32xf32>
    %373 = vector.extract_strided_slice %371 {offsets = [0, 32], sizes = [16, 32], strides = [1, 1]} : vector<16x96xf32> to vector<16x32xf32>
    %374 = vector.extract_strided_slice %371 {offsets = [0, 64], sizes = [16, 32], strides = [1, 1]} : vector<16x96xf32> to vector<16x32xf32>
    %375 = vector.extract_strided_slice %365 {offsets = [0, 96], sizes = [16, 32], strides = [1, 1]} : vector<16x128xf32> to vector<16x32xf32>
    %376 = math.tanh %375 : vector<16x32xf32>
    %377 = arith.mulf %373, %326 : vector<16x32xf32>
    %378 = arith.mulf %372, %376 : vector<16x32xf32>
    %379 = arith.addf %377, %378 : vector<16x32xf32>
    %380 = math.tanh %379 : vector<16x32xf32>
    %381 = arith.mulf %374, %380 : vector<16x32xf32>
    %382 = arith.truncf %362 : vector<16x32xf32> to vector<16x32xbf16>
    %383 = arith.index_cast %336 : i32 to index
    %c0_90 = arith.constant 0 : index
    %384 = vector.load %arg8[%383, %c0_90] : memref<128x32xbf16, #tpu.memory_space<vmem>>, vector<16x32xbf16>
    tpu.vector_store %arg8[%383, %c0_90], %382 {strides = array<i32>} : memref<128x32xbf16, #tpu.memory_space<vmem>>, vector<16x32xbf16>,
    %385 = arith.truncf %381 : vector<16x32xf32> to vector<16x32xbf16>
    %386 = arith.index_cast %339 : i32 to index
    %c0_91 = arith.constant 0 : index
    %387 = vector.load %arg9[%386, %c0_91] : memref<128x32xbf16, #tpu.memory_space<vmem>>, vector<16x32xbf16>
    tpu.vector_store %arg9[%386, %c0_91], %385 {strides = array<i32>} : memref<128x32xbf16, #tpu.memory_space<vmem>>, vector<16x32xbf16>,
    %c7_i32_92 = arith.constant 7 : i32
    %c16_i32_93 = arith.constant 16 : i32
    %388 = arith.muli %c7_i32_92, %c16_i32_93 : i32
    %389 = tpu.assume_multiple %388, 16 : i32
    %c7_i32_94 = arith.constant 7 : i32
    %390 = arith.subi %c7_i32_94, %c7_i32_92 : i32
    %c16_i32_95 = arith.constant 16 : i32
    %391 = arith.muli %390, %c16_i32_95 : i32
    %392 = tpu.assume_multiple %391, 16 : i32
    %393 = arith.index_cast %389 : i32 to index
    %c0_96 = arith.constant 0 : index
    %394 = vector.load %arg5[%393, %c0_96] : memref<128x256xf32, #tpu.memory_space<vmem>>, vector<16x128xf32>
    %395 = arith.index_cast %392 : i32 to index
    %c128_97 = arith.constant 128 : index
    %396 = vector.load %arg5[%395, %c128_97] : memref<128x256xf32, #tpu.memory_space<vmem>>, vector<16x128xf32>
    %397 = arith.truncf %362 : vector<16x32xf32> to vector<16x32xbf16>
    %cst_98 = arith.constant dense<0.000000e+00> : vector<16x128xf32>
    %398 = tpu.matmul %397, %14, %cst_98 {dimension_numbers = #tpu.dot_dimension_numbers<[1], [0], [0], [1], [0, 0, 1, 1], [], []>} : vector<16x32xbf16>, vector<32x128xbf16>, vector<16x128xf32> -> vector<16x128xf32>
    %399 = arith.addf %394, %398 : vector<16x128xf32>
    %400 = vector.extract_strided_slice %399 {offsets = [0, 0], sizes = [16, 96], strides = [1, 1]} : vector<16x128xf32> to vector<16x96xf32>
    %401 = arith.negf %400 : vector<16x96xf32>
    %402 = math.exp %401 : vector<16x96xf32>
    %cst_99 = arith.constant 1.000000e+00 : f32
    %403 = vector.broadcast %cst_99 : f32 to vector<16x96xf32>
    %404 = arith.addf %403, %402 : vector<16x96xf32>
    %405 = arith.divf %403, %404 : vector<16x96xf32>
    %406 = vector.extract_strided_slice %405 {offsets = [0, 0], sizes = [16, 32], strides = [1, 1]} : vector<16x96xf32> to vector<16x32xf32>
    %407 = vector.extract_strided_slice %405 {offsets = [0, 32], sizes = [16, 32], strides = [1, 1]} : vector<16x96xf32> to vector<16x32xf32>
    %408 = vector.extract_strided_slice %405 {offsets = [0, 64], sizes = [16, 32], strides = [1, 1]} : vector<16x96xf32> to vector<16x32xf32>
    %409 = vector.extract_strided_slice %399 {offsets = [0, 96], sizes = [16, 32], strides = [1, 1]} : vector<16x128xf32> to vector<16x32xf32>
    %410 = math.tanh %409 : vector<16x32xf32>
    %411 = arith.mulf %407, %360 : vector<16x32xf32>
    %412 = arith.mulf %406, %410 : vector<16x32xf32>
    %413 = arith.addf %411, %412 : vector<16x32xf32>
    %414 = math.tanh %413 : vector<16x32xf32>
    %415 = arith.mulf %408, %414 : vector<16x32xf32>
    %416 = arith.truncf %381 : vector<16x32xf32> to vector<16x32xbf16>
    %cst_100 = arith.constant dense<0.000000e+00> : vector<16x128xf32>
    %417 = tpu.matmul %416, %15, %cst_100 {dimension_numbers = #tpu.dot_dimension_numbers<[1], [0], [0], [1], [0, 0, 1, 1], [], []>} : vector<16x32xbf16>, vector<32x128xbf16>, vector<16x128xf32> -> vector<16x128xf32>
    %418 = arith.addf %396, %417 : vector<16x128xf32>
    %419 = vector.extract_strided_slice %418 {offsets = [0, 0], sizes = [16, 96], strides = [1, 1]} : vector<16x128xf32> to vector<16x96xf32>
    %420 = arith.negf %419 : vector<16x96xf32>
    %421 = math.exp %420 : vector<16x96xf32>
    %cst_101 = arith.constant 1.000000e+00 : f32
    %422 = vector.broadcast %cst_101 : f32 to vector<16x96xf32>
    %423 = arith.addf %422, %421 : vector<16x96xf32>
    %424 = arith.divf %422, %423 : vector<16x96xf32>
    %425 = vector.extract_strided_slice %424 {offsets = [0, 0], sizes = [16, 32], strides = [1, 1]} : vector<16x96xf32> to vector<16x32xf32>
    %426 = vector.extract_strided_slice %424 {offsets = [0, 32], sizes = [16, 32], strides = [1, 1]} : vector<16x96xf32> to vector<16x32xf32>
    %427 = vector.extract_strided_slice %424 {offsets = [0, 64], sizes = [16, 32], strides = [1, 1]} : vector<16x96xf32> to vector<16x32xf32>
    %428 = vector.extract_strided_slice %418 {offsets = [0, 96], sizes = [16, 32], strides = [1, 1]} : vector<16x128xf32> to vector<16x32xf32>
    %429 = math.tanh %428 : vector<16x32xf32>
    %430 = arith.mulf %426, %379 : vector<16x32xf32>
    %431 = arith.mulf %425, %429 : vector<16x32xf32>
    %432 = arith.addf %430, %431 : vector<16x32xf32>
    %433 = math.tanh %432 : vector<16x32xf32>
    %434 = arith.mulf %427, %433 : vector<16x32xf32>
    %435 = arith.truncf %415 : vector<16x32xf32> to vector<16x32xbf16>
    %436 = arith.index_cast %389 : i32 to index
    %c0_102 = arith.constant 0 : index
    %437 = vector.load %arg8[%436, %c0_102] : memref<128x32xbf16, #tpu.memory_space<vmem>>, vector<16x32xbf16>
    tpu.vector_store %arg8[%436, %c0_102], %435 {strides = array<i32>} : memref<128x32xbf16, #tpu.memory_space<vmem>>, vector<16x32xbf16>,
    %438 = arith.truncf %434 : vector<16x32xf32> to vector<16x32xbf16>
    %439 = arith.index_cast %392 : i32 to index
    %c0_103 = arith.constant 0 : index
    %440 = vector.load %arg9[%439, %c0_103] : memref<128x32xbf16, #tpu.memory_space<vmem>>, vector<16x32xbf16>
    tpu.vector_store %arg9[%439, %c0_103], %438 {strides = array<i32>} : memref<128x32xbf16, #tpu.memory_space<vmem>>, vector<16x32xbf16>,
    %c8_i32 = arith.constant 8 : i32
    %c0_104 = arith.constant 0 : index
    %c0_105 = arith.constant 0 : index
    %441 = vector.load %arg8[%c0_104, %c0_105] : memref<128x32xbf16, #tpu.memory_space<vmem>>, vector<128x32xbf16>
    %c80 = arith.constant 80 : index
    %c0_106 = arith.constant 0 : index
    %442 = vector.load %arg2[%c80, %c0_106] : memref<512x256xbf16, #tpu.memory_space<vmem>>, vector<32x256xbf16>
    %cst_107 = arith.constant dense<0.000000e+00> : vector<128x256xf32>
    %443 = tpu.matmul %441, %442, %cst_107 {dimension_numbers = #tpu.dot_dimension_numbers<[1], [0], [0], [1], [0, 0, 1, 1], [], []>} : vector<128x32xbf16>, vector<32x256xbf16>, vector<128x256xf32> -> vector<128x256xf32>
    %c0_108 = arith.constant 0 : index
    %c0_109 = arith.constant 0 : index
    %444 = vector.load %arg9[%c0_108, %c0_109] : memref<128x32xbf16, #tpu.memory_space<vmem>>, vector<128x32xbf16>
    %c112 = arith.constant 112 : index
    %c0_110 = arith.constant 0 : index
    %445 = vector.load %arg2[%c112, %c0_110] : memref<512x256xbf16, #tpu.memory_space<vmem>>, vector<32x256xbf16>
    %cst_111 = arith.constant dense<0.000000e+00> : vector<128x256xf32>
    %446 = tpu.matmul %444, %445, %cst_111 {dimension_numbers = #tpu.dot_dimension_numbers<[1], [0], [0], [1], [0, 0, 1, 1], [], []>} : vector<128x32xbf16>, vector<32x256xbf16>, vector<128x256xf32> -> vector<128x256xf32>
    %447 = arith.addf %443, %446 : vector<128x256xf32>
    %c8 = arith.constant 8 : index
    %c0_112 = arith.constant 0 : index
    %448 = vector.load %arg3[%c8, %c0_112] : memref<64x256xf32, #tpu.memory_space<vmem>>, vector<1x256xf32>
    %449 = vector.broadcast %448 : vector<1x256xf32> to vector<128x256xf32>
    %450 = arith.addf %447, %449 : vector<128x256xf32>
    %c0_113 = arith.constant 0 : index
    %c0_114 = arith.constant 0 : index
    %451 = vector.load %arg5[%c0_113, %c0_114] : memref<128x256xf32, #tpu.memory_space<vmem>>, vector<128x256xf32>
    tpu.vector_store %arg5[%c0_113, %c0_114], %450 {strides = array<i32>} : memref<128x256xf32, #tpu.memory_space<vmem>>, vector<128x256xf32>,
    %c144 = arith.constant 144 : index
    %c0_115 = arith.constant 0 : index
    %452 = vector.load %arg2[%c144, %c0_115] : memref<512x256xbf16, #tpu.memory_space<vmem>>, vector<32x128xbf16>
    %c176 = arith.constant 176 : index
    %c0_116 = arith.constant 0 : index
    %453 = vector.load %arg2[%c176, %c0_116] : memref<512x256xbf16, #tpu.memory_space<vmem>>, vector<32x128xbf16>
    %cst_117 = arith.constant 0.000000e+00 : f32
    %454 = vector.broadcast %cst_117 : f32 to vector<16x32xf32>
    %c0_i32_118 = arith.constant 0 : i32
    %c16_i32_119 = arith.constant 16 : i32
    %455 = arith.muli %c0_i32_118, %c16_i32_119 : i32
    %456 = tpu.assume_multiple %455, 16 : i32
    %c7_i32_120 = arith.constant 7 : i32
    %457 = arith.subi %c7_i32_120, %c0_i32_118 : i32
    %c16_i32_121 = arith.constant 16 : i32
    %458 = arith.muli %457, %c16_i32_121 : i32
    %459 = tpu.assume_multiple %458, 16 : i32
    %460 = arith.index_cast %456 : i32 to index
    %c0_122 = arith.constant 0 : index
    %461 = vector.load %arg5[%460, %c0_122] : memref<128x256xf32, #tpu.memory_space<vmem>>, vector<16x128xf32>
    %462 = arith.index_cast %459 : i32 to index
    %c128_123 = arith.constant 128 : index
    %463 = vector.load %arg5[%462, %c128_123] : memref<128x256xf32, #tpu.memory_space<vmem>>, vector<16x128xf32>
    %464 = arith.truncf %454 : vector<16x32xf32> to vector<16x32xbf16>
    %cst_124 = arith.constant dense<0.000000e+00> : vector<16x128xf32>
    %465 = tpu.matmul %464, %452, %cst_124 {dimension_numbers = #tpu.dot_dimension_numbers<[1], [0], [0], [1], [0, 0, 1, 1], [], []>} : vector<16x32xbf16>, vector<32x128xbf16>, vector<16x128xf32> -> vector<16x128xf32>
    %466 = arith.addf %461, %465 : vector<16x128xf32>
    %467 = vector.extract_strided_slice %466 {offsets = [0, 0], sizes = [16, 96], strides = [1, 1]} : vector<16x128xf32> to vector<16x96xf32>
    %468 = arith.negf %467 : vector<16x96xf32>
    %469 = math.exp %468 : vector<16x96xf32>
    %cst_125 = arith.constant 1.000000e+00 : f32
    %470 = vector.broadcast %cst_125 : f32 to vector<16x96xf32>
    %471 = arith.addf %470, %469 : vector<16x96xf32>
    %472 = arith.divf %470, %471 : vector<16x96xf32>
    %473 = vector.extract_strided_slice %472 {offsets = [0, 0], sizes = [16, 32], strides = [1, 1]} : vector<16x96xf32> to vector<16x32xf32>
    %474 = vector.extract_strided_slice %472 {offsets = [0, 32], sizes = [16, 32], strides = [1, 1]} : vector<16x96xf32> to vector<16x32xf32>
    %475 = vector.extract_strided_slice %472 {offsets = [0, 64], sizes = [16, 32], strides = [1, 1]} : vector<16x96xf32> to vector<16x32xf32>
    %476 = vector.extract_strided_slice %466 {offsets = [0, 96], sizes = [16, 32], strides = [1, 1]} : vector<16x128xf32> to vector<16x32xf32>
    %477 = math.tanh %476 : vector<16x32xf32>
    %478 = arith.mulf %474, %454 : vector<16x32xf32>
    %479 = arith.mulf %473, %477 : vector<16x32xf32>
    %480 = arith.addf %478, %479 : vector<16x32xf32>
    %481 = math.tanh %480 : vector<16x32xf32>
    %482 = arith.mulf %475, %481 : vector<16x32xf32>
    %483 = arith.truncf %454 : vector<16x32xf32> to vector<16x32xbf16>
    %cst_126 = arith.constant dense<0.000000e+00> : vector<16x128xf32>
    %484 = tpu.matmul %483, %453, %cst_126 {dimension_numbers = #tpu.dot_dimension_numbers<[1], [0], [0], [1], [0, 0, 1, 1], [], []>} : vector<16x32xbf16>, vector<32x128xbf16>, vector<16x128xf32> -> vector<16x128xf32>
    %485 = arith.addf %463, %484 : vector<16x128xf32>
    %486 = vector.extract_strided_slice %485 {offsets = [0, 0], sizes = [16, 96], strides = [1, 1]} : vector<16x128xf32> to vector<16x96xf32>
    %487 = arith.negf %486 : vector<16x96xf32>
    %488 = math.exp %487 : vector<16x96xf32>
    %cst_127 = arith.constant 1.000000e+00 : f32
    %489 = vector.broadcast %cst_127 : f32 to vector<16x96xf32>
    %490 = arith.addf %489, %488 : vector<16x96xf32>
    %491 = arith.divf %489, %490 : vector<16x96xf32>
    %492 = vector.extract_strided_slice %491 {offsets = [0, 0], sizes = [16, 32], strides = [1, 1]} : vector<16x96xf32> to vector<16x32xf32>
    %493 = vector.extract_strided_slice %491 {offsets = [0, 32], sizes = [16, 32], strides = [1, 1]} : vector<16x96xf32> to vector<16x32xf32>
    %494 = vector.extract_strided_slice %491 {offsets = [0, 64], sizes = [16, 32], strides = [1, 1]} : vector<16x96xf32> to vector<16x32xf32>
    %495 = vector.extract_strided_slice %485 {offsets = [0, 96], sizes = [16, 32], strides = [1, 1]} : vector<16x128xf32> to vector<16x32xf32>
    %496 = math.tanh %495 : vector<16x32xf32>
    %497 = arith.mulf %493, %454 : vector<16x32xf32>
    %498 = arith.mulf %492, %496 : vector<16x32xf32>
    %499 = arith.addf %497, %498 : vector<16x32xf32>
    %500 = math.tanh %499 : vector<16x32xf32>
    %501 = arith.mulf %494, %500 : vector<16x32xf32>
    %502 = arith.truncf %482 : vector<16x32xf32> to vector<16x32xbf16>
    %503 = arith.index_cast %456 : i32 to index
    %c0_128 = arith.constant 0 : index
    %504 = vector.load %arg10[%503, %c0_128] : memref<128x32xbf16, #tpu.memory_space<vmem>>, vector<16x32xbf16>
    tpu.vector_store %arg10[%503, %c0_128], %502 {strides = array<i32>} : memref<128x32xbf16, #tpu.memory_space<vmem>>, vector<16x32xbf16>,
    %505 = arith.truncf %501 : vector<16x32xf32> to vector<16x32xbf16>
    %506 = arith.index_cast %459 : i32 to index
    %c0_129 = arith.constant 0 : index
    %507 = vector.load %arg11[%506, %c0_129] : memref<128x32xbf16, #tpu.memory_space<vmem>>, vector<16x32xbf16>
    tpu.vector_store %arg11[%506, %c0_129], %505 {strides = array<i32>} : memref<128x32xbf16, #tpu.memory_space<vmem>>, vector<16x32xbf16>,
    %c1_i32_130 = arith.constant 1 : i32
    %c16_i32_131 = arith.constant 16 : i32
    %508 = arith.muli %c1_i32_130, %c16_i32_131 : i32
    %509 = tpu.assume_multiple %508, 16 : i32
    %c7_i32_132 = arith.constant 7 : i32
    %510 = arith.subi %c7_i32_132, %c1_i32_130 : i32
    %c16_i32_133 = arith.constant 16 : i32
    %511 = arith.muli %510, %c16_i32_133 : i32
    %512 = tpu.assume_multiple %511, 16 : i32
    %513 = arith.index_cast %509 : i32 to index
    %c0_134 = arith.constant 0 : index
    %514 = vector.load %arg5[%513, %c0_134] : memref<128x256xf32, #tpu.memory_space<vmem>>, vector<16x128xf32>
    %515 = arith.index_cast %512 : i32 to index
    %c128_135 = arith.constant 128 : index
    %516 = vector.load %arg5[%515, %c128_135] : memref<128x256xf32, #tpu.memory_space<vmem>>, vector<16x128xf32>
    %517 = arith.truncf %482 : vector<16x32xf32> to vector<16x32xbf16>
    %cst_136 = arith.constant dense<0.000000e+00> : vector<16x128xf32>
    %518 = tpu.matmul %517, %452, %cst_136 {dimension_numbers = #tpu.dot_dimension_numbers<[1], [0], [0], [1], [0, 0, 1, 1], [], []>} : vector<16x32xbf16>, vector<32x128xbf16>, vector<16x128xf32> -> vector<16x128xf32>
    %519 = arith.addf %514, %518 : vector<16x128xf32>
    %520 = vector.extract_strided_slice %519 {offsets = [0, 0], sizes = [16, 96], strides = [1, 1]} : vector<16x128xf32> to vector<16x96xf32>
    %521 = arith.negf %520 : vector<16x96xf32>
    %522 = math.exp %521 : vector<16x96xf32>
    %cst_137 = arith.constant 1.000000e+00 : f32
    %523 = vector.broadcast %cst_137 : f32 to vector<16x96xf32>
    %524 = arith.addf %523, %522 : vector<16x96xf32>
    %525 = arith.divf %523, %524 : vector<16x96xf32>
    %526 = vector.extract_strided_slice %525 {offsets = [0, 0], sizes = [16, 32], strides = [1, 1]} : vector<16x96xf32> to vector<16x32xf32>
    %527 = vector.extract_strided_slice %525 {offsets = [0, 32], sizes = [16, 32], strides = [1, 1]} : vector<16x96xf32> to vector<16x32xf32>
    %528 = vector.extract_strided_slice %525 {offsets = [0, 64], sizes = [16, 32], strides = [1, 1]} : vector<16x96xf32> to vector<16x32xf32>
    %529 = vector.extract_strided_slice %519 {offsets = [0, 96], sizes = [16, 32], strides = [1, 1]} : vector<16x128xf32> to vector<16x32xf32>
    %530 = math.tanh %529 : vector<16x32xf32>
    %531 = arith.mulf %527, %480 : vector<16x32xf32>
    %532 = arith.mulf %526, %530 : vector<16x32xf32>
    %533 = arith.addf %531, %532 : vector<16x32xf32>
    %534 = math.tanh %533 : vector<16x32xf32>
    %535 = arith.mulf %528, %534 : vector<16x32xf32>
    %536 = arith.truncf %501 : vector<16x32xf32> to vector<16x32xbf16>
    %cst_138 = arith.constant dense<0.000000e+00> : vector<16x128xf32>
    %537 = tpu.matmul %536, %453, %cst_138 {dimension_numbers = #tpu.dot_dimension_numbers<[1], [0], [0], [1], [0, 0, 1, 1], [], []>} : vector<16x32xbf16>, vector<32x128xbf16>, vector<16x128xf32> -> vector<16x128xf32>
    %538 = arith.addf %516, %537 : vector<16x128xf32>
    %539 = vector.extract_strided_slice %538 {offsets = [0, 0], sizes = [16, 96], strides = [1, 1]} : vector<16x128xf32> to vector<16x96xf32>
    %540 = arith.negf %539 : vector<16x96xf32>
    %541 = math.exp %540 : vector<16x96xf32>
    %cst_139 = arith.constant 1.000000e+00 : f32
    %542 = vector.broadcast %cst_139 : f32 to vector<16x96xf32>
    %543 = arith.addf %542, %541 : vector<16x96xf32>
    %544 = arith.divf %542, %543 : vector<16x96xf32>
    %545 = vector.extract_strided_slice %544 {offsets = [0, 0], sizes = [16, 32], strides = [1, 1]} : vector<16x96xf32> to vector<16x32xf32>
    %546 = vector.extract_strided_slice %544 {offsets = [0, 32], sizes = [16, 32], strides = [1, 1]} : vector<16x96xf32> to vector<16x32xf32>
    %547 = vector.extract_strided_slice %544 {offsets = [0, 64], sizes = [16, 32], strides = [1, 1]} : vector<16x96xf32> to vector<16x32xf32>
    %548 = vector.extract_strided_slice %538 {offsets = [0, 96], sizes = [16, 32], strides = [1, 1]} : vector<16x128xf32> to vector<16x32xf32>
    %549 = math.tanh %548 : vector<16x32xf32>
    %550 = arith.mulf %546, %499 : vector<16x32xf32>
    %551 = arith.mulf %545, %549 : vector<16x32xf32>
    %552 = arith.addf %550, %551 : vector<16x32xf32>
    %553 = math.tanh %552 : vector<16x32xf32>
    %554 = arith.mulf %547, %553 : vector<16x32xf32>
    %555 = arith.truncf %535 : vector<16x32xf32> to vector<16x32xbf16>
    %556 = arith.index_cast %509 : i32 to index
    %c0_140 = arith.constant 0 : index
    %557 = vector.load %arg10[%556, %c0_140] : memref<128x32xbf16, #tpu.memory_space<vmem>>, vector<16x32xbf16>
    tpu.vector_store %arg10[%556, %c0_140], %555 {strides = array<i32>} : memref<128x32xbf16, #tpu.memory_space<vmem>>, vector<16x32xbf16>,
    %558 = arith.truncf %554 : vector<16x32xf32> to vector<16x32xbf16>
    %559 = arith.index_cast %512 : i32 to index
    %c0_141 = arith.constant 0 : index
    %560 = vector.load %arg11[%559, %c0_141] : memref<128x32xbf16, #tpu.memory_space<vmem>>, vector<16x32xbf16>
    tpu.vector_store %arg11[%559, %c0_141], %558 {strides = array<i32>} : memref<128x32xbf16, #tpu.memory_space<vmem>>, vector<16x32xbf16>,
    %c2_i32_142 = arith.constant 2 : i32
    %c16_i32_143 = arith.constant 16 : i32
    %561 = arith.muli %c2_i32_142, %c16_i32_143 : i32
    %562 = tpu.assume_multiple %561, 16 : i32
    %c7_i32_144 = arith.constant 7 : i32
    %563 = arith.subi %c7_i32_144, %c2_i32_142 : i32
    %c16_i32_145 = arith.constant 16 : i32
    %564 = arith.muli %563, %c16_i32_145 : i32
    %565 = tpu.assume_multiple %564, 16 : i32
    %566 = arith.index_cast %562 : i32 to index
    %c0_146 = arith.constant 0 : index
    %567 = vector.load %arg5[%566, %c0_146] : memref<128x256xf32, #tpu.memory_space<vmem>>, vector<16x128xf32>
    %568 = arith.index_cast %565 : i32 to index
    %c128_147 = arith.constant 128 : index
    %569 = vector.load %arg5[%568, %c128_147] : memref<128x256xf32, #tpu.memory_space<vmem>>, vector<16x128xf32>
    %570 = arith.truncf %535 : vector<16x32xf32> to vector<16x32xbf16>
    %cst_148 = arith.constant dense<0.000000e+00> : vector<16x128xf32>
    %571 = tpu.matmul %570, %452, %cst_148 {dimension_numbers = #tpu.dot_dimension_numbers<[1], [0], [0], [1], [0, 0, 1, 1], [], []>} : vector<16x32xbf16>, vector<32x128xbf16>, vector<16x128xf32> -> vector<16x128xf32>
    %572 = arith.addf %567, %571 : vector<16x128xf32>
    %573 = vector.extract_strided_slice %572 {offsets = [0, 0], sizes = [16, 96], strides = [1, 1]} : vector<16x128xf32> to vector<16x96xf32>
    %574 = arith.negf %573 : vector<16x96xf32>
    %575 = math.exp %574 : vector<16x96xf32>
    %cst_149 = arith.constant 1.000000e+00 : f32
    %576 = vector.broadcast %cst_149 : f32 to vector<16x96xf32>
    %577 = arith.addf %576, %575 : vector<16x96xf32>
    %578 = arith.divf %576, %577 : vector<16x96xf32>
    %579 = vector.extract_strided_slice %578 {offsets = [0, 0], sizes = [16, 32], strides = [1, 1]} : vector<16x96xf32> to vector<16x32xf32>
    %580 = vector.extract_strided_slice %578 {offsets = [0, 32], sizes = [16, 32], strides = [1, 1]} : vector<16x96xf32> to vector<16x32xf32>
    %581 = vector.extract_strided_slice %578 {offsets = [0, 64], sizes = [16, 32], strides = [1, 1]} : vector<16x96xf32> to vector<16x32xf32>
    %582 = vector.extract_strided_slice %572 {offsets = [0, 96], sizes = [16, 32], strides = [1, 1]} : vector<16x128xf32> to vector<16x32xf32>
    %583 = math.tanh %582 : vector<16x32xf32>
    %584 = arith.mulf %580, %533 : vector<16x32xf32>
    %585 = arith.mulf %579, %583 : vector<16x32xf32>
    %586 = arith.addf %584, %585 : vector<16x32xf32>
    %587 = math.tanh %586 : vector<16x32xf32>
    %588 = arith.mulf %581, %587 : vector<16x32xf32>
    %589 = arith.truncf %554 : vector<16x32xf32> to vector<16x32xbf16>
    %cst_150 = arith.constant dense<0.000000e+00> : vector<16x128xf32>
    %590 = tpu.matmul %589, %453, %cst_150 {dimension_numbers = #tpu.dot_dimension_numbers<[1], [0], [0], [1], [0, 0, 1, 1], [], []>} : vector<16x32xbf16>, vector<32x128xbf16>, vector<16x128xf32> -> vector<16x128xf32>
    %591 = arith.addf %569, %590 : vector<16x128xf32>
    %592 = vector.extract_strided_slice %591 {offsets = [0, 0], sizes = [16, 96], strides = [1, 1]} : vector<16x128xf32> to vector<16x96xf32>
    %593 = arith.negf %592 : vector<16x96xf32>
    %594 = math.exp %593 : vector<16x96xf32>
    %cst_151 = arith.constant 1.000000e+00 : f32
    %595 = vector.broadcast %cst_151 : f32 to vector<16x96xf32>
    %596 = arith.addf %595, %594 : vector<16x96xf32>
    %597 = arith.divf %595, %596 : vector<16x96xf32>
    %598 = vector.extract_strided_slice %597 {offsets = [0, 0], sizes = [16, 32], strides = [1, 1]} : vector<16x96xf32> to vector<16x32xf32>
    %599 = vector.extract_strided_slice %597 {offsets = [0, 32], sizes = [16, 32], strides = [1, 1]} : vector<16x96xf32> to vector<16x32xf32>
    %600 = vector.extract_strided_slice %597 {offsets = [0, 64], sizes = [16, 32], strides = [1, 1]} : vector<16x96xf32> to vector<16x32xf32>
    %601 = vector.extract_strided_slice %591 {offsets = [0, 96], sizes = [16, 32], strides = [1, 1]} : vector<16x128xf32> to vector<16x32xf32>
    %602 = math.tanh %601 : vector<16x32xf32>
    %603 = arith.mulf %599, %552 : vector<16x32xf32>
    %604 = arith.mulf %598, %602 : vector<16x32xf32>
    %605 = arith.addf %603, %604 : vector<16x32xf32>
    %606 = math.tanh %605 : vector<16x32xf32>
    %607 = arith.mulf %600, %606 : vector<16x32xf32>
    %608 = arith.truncf %588 : vector<16x32xf32> to vector<16x32xbf16>
    %609 = arith.index_cast %562 : i32 to index
    %c0_152 = arith.constant 0 : index
    %610 = vector.load %arg10[%609, %c0_152] : memref<128x32xbf16, #tpu.memory_space<vmem>>, vector<16x32xbf16>
    tpu.vector_store %arg10[%609, %c0_152], %608 {strides = array<i32>} : memref<128x32xbf16, #tpu.memory_space<vmem>>, vector<16x32xbf16>,
    %611 = arith.truncf %607 : vector<16x32xf32> to vector<16x32xbf16>
    %612 = arith.index_cast %565 : i32 to index
    %c0_153 = arith.constant 0 : index
    %613 = vector.load %arg11[%612, %c0_153] : memref<128x32xbf16, #tpu.memory_space<vmem>>, vector<16x32xbf16>
    tpu.vector_store %arg11[%612, %c0_153], %611 {strides = array<i32>} : memref<128x32xbf16, #tpu.memory_space<vmem>>, vector<16x32xbf16>,
    %c3_i32_154 = arith.constant 3 : i32
    %c16_i32_155 = arith.constant 16 : i32
    %614 = arith.muli %c3_i32_154, %c16_i32_155 : i32
    %615 = tpu.assume_multiple %614, 16 : i32
    %c7_i32_156 = arith.constant 7 : i32
    %616 = arith.subi %c7_i32_156, %c3_i32_154 : i32
    %c16_i32_157 = arith.constant 16 : i32
    %617 = arith.muli %616, %c16_i32_157 : i32
    %618 = tpu.assume_multiple %617, 16 : i32
    %619 = arith.index_cast %615 : i32 to index
    %c0_158 = arith.constant 0 : index
    %620 = vector.load %arg5[%619, %c0_158] : memref<128x256xf32, #tpu.memory_space<vmem>>, vector<16x128xf32>
    %621 = arith.index_cast %618 : i32 to index
    %c128_159 = arith.constant 128 : index
    %622 = vector.load %arg5[%621, %c128_159] : memref<128x256xf32, #tpu.memory_space<vmem>>, vector<16x128xf32>
    %623 = arith.truncf %588 : vector<16x32xf32> to vector<16x32xbf16>
    %cst_160 = arith.constant dense<0.000000e+00> : vector<16x128xf32>
    %624 = tpu.matmul %623, %452, %cst_160 {dimension_numbers = #tpu.dot_dimension_numbers<[1], [0], [0], [1], [0, 0, 1, 1], [], []>} : vector<16x32xbf16>, vector<32x128xbf16>, vector<16x128xf32> -> vector<16x128xf32>
    %625 = arith.addf %620, %624 : vector<16x128xf32>
    %626 = vector.extract_strided_slice %625 {offsets = [0, 0], sizes = [16, 96], strides = [1, 1]} : vector<16x128xf32> to vector<16x96xf32>
    %627 = arith.negf %626 : vector<16x96xf32>
    %628 = math.exp %627 : vector<16x96xf32>
    %cst_161 = arith.constant 1.000000e+00 : f32
    %629 = vector.broadcast %cst_161 : f32 to vector<16x96xf32>
    %630 = arith.addf %629, %628 : vector<16x96xf32>
    %631 = arith.divf %629, %630 : vector<16x96xf32>
    %632 = vector.extract_strided_slice %631 {offsets = [0, 0], sizes = [16, 32], strides = [1, 1]} : vector<16x96xf32> to vector<16x32xf32>
    %633 = vector.extract_strided_slice %631 {offsets = [0, 32], sizes = [16, 32], strides = [1, 1]} : vector<16x96xf32> to vector<16x32xf32>
    %634 = vector.extract_strided_slice %631 {offsets = [0, 64], sizes = [16, 32], strides = [1, 1]} : vector<16x96xf32> to vector<16x32xf32>
    %635 = vector.extract_strided_slice %625 {offsets = [0, 96], sizes = [16, 32], strides = [1, 1]} : vector<16x128xf32> to vector<16x32xf32>
    %636 = math.tanh %635 : vector<16x32xf32>
    %637 = arith.mulf %633, %586 : vector<16x32xf32>
    %638 = arith.mulf %632, %636 : vector<16x32xf32>
    %639 = arith.addf %637, %638 : vector<16x32xf32>
    %640 = math.tanh %639 : vector<16x32xf32>
    %641 = arith.mulf %634, %640 : vector<16x32xf32>
    %642 = arith.truncf %607 : vector<16x32xf32> to vector<16x32xbf16>
    %cst_162 = arith.constant dense<0.000000e+00> : vector<16x128xf32>
    %643 = tpu.matmul %642, %453, %cst_162 {dimension_numbers = #tpu.dot_dimension_numbers<[1], [0], [0], [1], [0, 0, 1, 1], [], []>} : vector<16x32xbf16>, vector<32x128xbf16>, vector<16x128xf32> -> vector<16x128xf32>
    %644 = arith.addf %622, %643 : vector<16x128xf32>
    %645 = vector.extract_strided_slice %644 {offsets = [0, 0], sizes = [16, 96], strides = [1, 1]} : vector<16x128xf32> to vector<16x96xf32>
    %646 = arith.negf %645 : vector<16x96xf32>
    %647 = math.exp %646 : vector<16x96xf32>
    %cst_163 = arith.constant 1.000000e+00 : f32
    %648 = vector.broadcast %cst_163 : f32 to vector<16x96xf32>
    %649 = arith.addf %648, %647 : vector<16x96xf32>
    %650 = arith.divf %648, %649 : vector<16x96xf32>
    %651 = vector.extract_strided_slice %650 {offsets = [0, 0], sizes = [16, 32], strides = [1, 1]} : vector<16x96xf32> to vector<16x32xf32>
    %652 = vector.extract_strided_slice %650 {offsets = [0, 32], sizes = [16, 32], strides = [1, 1]} : vector<16x96xf32> to vector<16x32xf32>
    %653 = vector.extract_strided_slice %650 {offsets = [0, 64], sizes = [16, 32], strides = [1, 1]} : vector<16x96xf32> to vector<16x32xf32>
    %654 = vector.extract_strided_slice %644 {offsets = [0, 96], sizes = [16, 32], strides = [1, 1]} : vector<16x128xf32> to vector<16x32xf32>
    %655 = math.tanh %654 : vector<16x32xf32>
    %656 = arith.mulf %652, %605 : vector<16x32xf32>
    %657 = arith.mulf %651, %655 : vector<16x32xf32>
    %658 = arith.addf %656, %657 : vector<16x32xf32>
    %659 = math.tanh %658 : vector<16x32xf32>
    %660 = arith.mulf %653, %659 : vector<16x32xf32>
    %661 = arith.truncf %641 : vector<16x32xf32> to vector<16x32xbf16>
    %662 = arith.index_cast %615 : i32 to index
    %c0_164 = arith.constant 0 : index
    %663 = vector.load %arg10[%662, %c0_164] : memref<128x32xbf16, #tpu.memory_space<vmem>>, vector<16x32xbf16>
    tpu.vector_store %arg10[%662, %c0_164], %661 {strides = array<i32>} : memref<128x32xbf16, #tpu.memory_space<vmem>>, vector<16x32xbf16>,
    %664 = arith.truncf %660 : vector<16x32xf32> to vector<16x32xbf16>
    %665 = arith.index_cast %618 : i32 to index
    %c0_165 = arith.constant 0 : index
    %666 = vector.load %arg11[%665, %c0_165] : memref<128x32xbf16, #tpu.memory_space<vmem>>, vector<16x32xbf16>
    tpu.vector_store %arg11[%665, %c0_165], %664 {strides = array<i32>} : memref<128x32xbf16, #tpu.memory_space<vmem>>, vector<16x32xbf16>,
    %c4_i32_166 = arith.constant 4 : i32
    %c16_i32_167 = arith.constant 16 : i32
    %667 = arith.muli %c4_i32_166, %c16_i32_167 : i32
    %668 = tpu.assume_multiple %667, 16 : i32
    %c7_i32_168 = arith.constant 7 : i32
    %669 = arith.subi %c7_i32_168, %c4_i32_166 : i32
    %c16_i32_169 = arith.constant 16 : i32
    %670 = arith.muli %669, %c16_i32_169 : i32
    %671 = tpu.assume_multiple %670, 16 : i32
    %672 = arith.index_cast %668 : i32 to index
    %c0_170 = arith.constant 0 : index
    %673 = vector.load %arg5[%672, %c0_170] : memref<128x256xf32, #tpu.memory_space<vmem>>, vector<16x128xf32>
    %674 = arith.index_cast %671 : i32 to index
    %c128_171 = arith.constant 128 : index
    %675 = vector.load %arg5[%674, %c128_171] : memref<128x256xf32, #tpu.memory_space<vmem>>, vector<16x128xf32>
    %676 = arith.truncf %641 : vector<16x32xf32> to vector<16x32xbf16>
    %cst_172 = arith.constant dense<0.000000e+00> : vector<16x128xf32>
    %677 = tpu.matmul %676, %452, %cst_172 {dimension_numbers = #tpu.dot_dimension_numbers<[1], [0], [0], [1], [0, 0, 1, 1], [], []>} : vector<16x32xbf16>, vector<32x128xbf16>, vector<16x128xf32> -> vector<16x128xf32>
    %678 = arith.addf %673, %677 : vector<16x128xf32>
    %679 = vector.extract_strided_slice %678 {offsets = [0, 0], sizes = [16, 96], strides = [1, 1]} : vector<16x128xf32> to vector<16x96xf32>
    %680 = arith.negf %679 : vector<16x96xf32>
    %681 = math.exp %680 : vector<16x96xf32>
    %cst_173 = arith.constant 1.000000e+00 : f32
    %682 = vector.broadcast %cst_173 : f32 to vector<16x96xf32>
    %683 = arith.addf %682, %681 : vector<16x96xf32>
    %684 = arith.divf %682, %683 : vector<16x96xf32>
    %685 = vector.extract_strided_slice %684 {offsets = [0, 0], sizes = [16, 32], strides = [1, 1]} : vector<16x96xf32> to vector<16x32xf32>
    %686 = vector.extract_strided_slice %684 {offsets = [0, 32], sizes = [16, 32], strides = [1, 1]} : vector<16x96xf32> to vector<16x32xf32>
    %687 = vector.extract_strided_slice %684 {offsets = [0, 64], sizes = [16, 32], strides = [1, 1]} : vector<16x96xf32> to vector<16x32xf32>
    %688 = vector.extract_strided_slice %678 {offsets = [0, 96], sizes = [16, 32], strides = [1, 1]} : vector<16x128xf32> to vector<16x32xf32>
    %689 = math.tanh %688 : vector<16x32xf32>
    %690 = arith.mulf %686, %639 : vector<16x32xf32>
    %691 = arith.mulf %685, %689 : vector<16x32xf32>
    %692 = arith.addf %690, %691 : vector<16x32xf32>
    %693 = math.tanh %692 : vector<16x32xf32>
    %694 = arith.mulf %687, %693 : vector<16x32xf32>
    %695 = arith.truncf %660 : vector<16x32xf32> to vector<16x32xbf16>
    %cst_174 = arith.constant dense<0.000000e+00> : vector<16x128xf32>
    %696 = tpu.matmul %695, %453, %cst_174 {dimension_numbers = #tpu.dot_dimension_numbers<[1], [0], [0], [1], [0, 0, 1, 1], [], []>} : vector<16x32xbf16>, vector<32x128xbf16>, vector<16x128xf32> -> vector<16x128xf32>
    %697 = arith.addf %675, %696 : vector<16x128xf32>
    %698 = vector.extract_strided_slice %697 {offsets = [0, 0], sizes = [16, 96], strides = [1, 1]} : vector<16x128xf32> to vector<16x96xf32>
    %699 = arith.negf %698 : vector<16x96xf32>
    %700 = math.exp %699 : vector<16x96xf32>
    %cst_175 = arith.constant 1.000000e+00 : f32
    %701 = vector.broadcast %cst_175 : f32 to vector<16x96xf32>
    %702 = arith.addf %701, %700 : vector<16x96xf32>
    %703 = arith.divf %701, %702 : vector<16x96xf32>
    %704 = vector.extract_strided_slice %703 {offsets = [0, 0], sizes = [16, 32], strides = [1, 1]} : vector<16x96xf32> to vector<16x32xf32>
    %705 = vector.extract_strided_slice %703 {offsets = [0, 32], sizes = [16, 32], strides = [1, 1]} : vector<16x96xf32> to vector<16x32xf32>
    %706 = vector.extract_strided_slice %703 {offsets = [0, 64], sizes = [16, 32], strides = [1, 1]} : vector<16x96xf32> to vector<16x32xf32>
    %707 = vector.extract_strided_slice %697 {offsets = [0, 96], sizes = [16, 32], strides = [1, 1]} : vector<16x128xf32> to vector<16x32xf32>
    %708 = math.tanh %707 : vector<16x32xf32>
    %709 = arith.mulf %705, %658 : vector<16x32xf32>
    %710 = arith.mulf %704, %708 : vector<16x32xf32>
    %711 = arith.addf %709, %710 : vector<16x32xf32>
    %712 = math.tanh %711 : vector<16x32xf32>
    %713 = arith.mulf %706, %712 : vector<16x32xf32>
    %714 = arith.truncf %694 : vector<16x32xf32> to vector<16x32xbf16>
    %715 = arith.index_cast %668 : i32 to index
    %c0_176 = arith.constant 0 : index
    %716 = vector.load %arg10[%715, %c0_176] : memref<128x32xbf16, #tpu.memory_space<vmem>>, vector<16x32xbf16>
    tpu.vector_store %arg10[%715, %c0_176], %714 {strides = array<i32>} : memref<128x32xbf16, #tpu.memory_space<vmem>>, vector<16x32xbf16>,
    %717 = arith.truncf %713 : vector<16x32xf32> to vector<16x32xbf16>
    %718 = arith.index_cast %671 : i32 to index
    %c0_177 = arith.constant 0 : index
    %719 = vector.load %arg11[%718, %c0_177] : memref<128x32xbf16, #tpu.memory_space<vmem>>, vector<16x32xbf16>
    tpu.vector_store %arg11[%718, %c0_177], %717 {strides = array<i32>} : memref<128x32xbf16, #tpu.memory_space<vmem>>, vector<16x32xbf16>,
    %c5_i32_178 = arith.constant 5 : i32
    %c16_i32_179 = arith.constant 16 : i32
    %720 = arith.muli %c5_i32_178, %c16_i32_179 : i32
    %721 = tpu.assume_multiple %720, 16 : i32
    %c7_i32_180 = arith.constant 7 : i32
    %722 = arith.subi %c7_i32_180, %c5_i32_178 : i32
    %c16_i32_181 = arith.constant 16 : i32
    %723 = arith.muli %722, %c16_i32_181 : i32
    %724 = tpu.assume_multiple %723, 16 : i32
    %725 = arith.index_cast %721 : i32 to index
    %c0_182 = arith.constant 0 : index
    %726 = vector.load %arg5[%725, %c0_182] : memref<128x256xf32, #tpu.memory_space<vmem>>, vector<16x128xf32>
    %727 = arith.index_cast %724 : i32 to index
    %c128_183 = arith.constant 128 : index
    %728 = vector.load %arg5[%727, %c128_183] : memref<128x256xf32, #tpu.memory_space<vmem>>, vector<16x128xf32>
    %729 = arith.truncf %694 : vector<16x32xf32> to vector<16x32xbf16>
    %cst_184 = arith.constant dense<0.000000e+00> : vector<16x128xf32>
    %730 = tpu.matmul %729, %452, %cst_184 {dimension_numbers = #tpu.dot_dimension_numbers<[1], [0], [0], [1], [0, 0, 1, 1], [], []>} : vector<16x32xbf16>, vector<32x128xbf16>, vector<16x128xf32> -> vector<16x128xf32>
    %731 = arith.addf %726, %730 : vector<16x128xf32>
    %732 = vector.extract_strided_slice %731 {offsets = [0, 0], sizes = [16, 96], strides = [1, 1]} : vector<16x128xf32> to vector<16x96xf32>
    %733 = arith.negf %732 : vector<16x96xf32>
    %734 = math.exp %733 : vector<16x96xf32>
    %cst_185 = arith.constant 1.000000e+00 : f32
    %735 = vector.broadcast %cst_185 : f32 to vector<16x96xf32>
    %736 = arith.addf %735, %734 : vector<16x96xf32>
    %737 = arith.divf %735, %736 : vector<16x96xf32>
    %738 = vector.extract_strided_slice %737 {offsets = [0, 0], sizes = [16, 32], strides = [1, 1]} : vector<16x96xf32> to vector<16x32xf32>
    %739 = vector.extract_strided_slice %737 {offsets = [0, 32], sizes = [16, 32], strides = [1, 1]} : vector<16x96xf32> to vector<16x32xf32>
    %740 = vector.extract_strided_slice %737 {offsets = [0, 64], sizes = [16, 32], strides = [1, 1]} : vector<16x96xf32> to vector<16x32xf32>
    %741 = vector.extract_strided_slice %731 {offsets = [0, 96], sizes = [16, 32], strides = [1, 1]} : vector<16x128xf32> to vector<16x32xf32>
    %742 = math.tanh %741 : vector<16x32xf32>
    %743 = arith.mulf %739, %692 : vector<16x32xf32>
    %744 = arith.mulf %738, %742 : vector<16x32xf32>
    %745 = arith.addf %743, %744 : vector<16x32xf32>
    %746 = math.tanh %745 : vector<16x32xf32>
    %747 = arith.mulf %740, %746 : vector<16x32xf32>
    %748 = arith.truncf %713 : vector<16x32xf32> to vector<16x32xbf16>
    %cst_186 = arith.constant dense<0.000000e+00> : vector<16x128xf32>
    %749 = tpu.matmul %748, %453, %cst_186 {dimension_numbers = #tpu.dot_dimension_numbers<[1], [0], [0], [1], [0, 0, 1, 1], [], []>} : vector<16x32xbf16>, vector<32x128xbf16>, vector<16x128xf32> -> vector<16x128xf32>
    %750 = arith.addf %728, %749 : vector<16x128xf32>
    %751 = vector.extract_strided_slice %750 {offsets = [0, 0], sizes = [16, 96], strides = [1, 1]} : vector<16x128xf32> to vector<16x96xf32>
    %752 = arith.negf %751 : vector<16x96xf32>
    %753 = math.exp %752 : vector<16x96xf32>
    %cst_187 = arith.constant 1.000000e+00 : f32
    %754 = vector.broadcast %cst_187 : f32 to vector<16x96xf32>
    %755 = arith.addf %754, %753 : vector<16x96xf32>
    %756 = arith.divf %754, %755 : vector<16x96xf32>
    %757 = vector.extract_strided_slice %756 {offsets = [0, 0], sizes = [16, 32], strides = [1, 1]} : vector<16x96xf32> to vector<16x32xf32>
    %758 = vector.extract_strided_slice %756 {offsets = [0, 32], sizes = [16, 32], strides = [1, 1]} : vector<16x96xf32> to vector<16x32xf32>
    %759 = vector.extract_strided_slice %756 {offsets = [0, 64], sizes = [16, 32], strides = [1, 1]} : vector<16x96xf32> to vector<16x32xf32>
    %760 = vector.extract_strided_slice %750 {offsets = [0, 96], sizes = [16, 32], strides = [1, 1]} : vector<16x128xf32> to vector<16x32xf32>
    %761 = math.tanh %760 : vector<16x32xf32>
    %762 = arith.mulf %758, %711 : vector<16x32xf32>
    %763 = arith.mulf %757, %761 : vector<16x32xf32>
    %764 = arith.addf %762, %763 : vector<16x32xf32>
    %765 = math.tanh %764 : vector<16x32xf32>
    %766 = arith.mulf %759, %765 : vector<16x32xf32>
    %767 = arith.truncf %747 : vector<16x32xf32> to vector<16x32xbf16>
    %768 = arith.index_cast %721 : i32 to index
    %c0_188 = arith.constant 0 : index
    %769 = vector.load %arg10[%768, %c0_188] : memref<128x32xbf16, #tpu.memory_space<vmem>>, vector<16x32xbf16>
    tpu.vector_store %arg10[%768, %c0_188], %767 {strides = array<i32>} : memref<128x32xbf16, #tpu.memory_space<vmem>>, vector<16x32xbf16>,
    %770 = arith.truncf %766 : vector<16x32xf32> to vector<16x32xbf16>
    %771 = arith.index_cast %724 : i32 to index
    %c0_189 = arith.constant 0 : index
    %772 = vector.load %arg11[%771, %c0_189] : memref<128x32xbf16, #tpu.memory_space<vmem>>, vector<16x32xbf16>
    tpu.vector_store %arg11[%771, %c0_189], %770 {strides = array<i32>} : memref<128x32xbf16, #tpu.memory_space<vmem>>, vector<16x32xbf16>,
    %c6_i32_190 = arith.constant 6 : i32
    %c16_i32_191 = arith.constant 16 : i32
    %773 = arith.muli %c6_i32_190, %c16_i32_191 : i32
    %774 = tpu.assume_multiple %773, 16 : i32
    %c7_i32_192 = arith.constant 7 : i32
    %775 = arith.subi %c7_i32_192, %c6_i32_190 : i32
    %c16_i32_193 = arith.constant 16 : i32
    %776 = arith.muli %775, %c16_i32_193 : i32
    %777 = tpu.assume_multiple %776, 16 : i32
    %778 = arith.index_cast %774 : i32 to index
    %c0_194 = arith.constant 0 : index
    %779 = vector.load %arg5[%778, %c0_194] : memref<128x256xf32, #tpu.memory_space<vmem>>, vector<16x128xf32>
    %780 = arith.index_cast %777 : i32 to index
    %c128_195 = arith.constant 128 : index
    %781 = vector.load %arg5[%780, %c128_195] : memref<128x256xf32, #tpu.memory_space<vmem>>, vector<16x128xf32>
    %782 = arith.truncf %747 : vector<16x32xf32> to vector<16x32xbf16>
    %cst_196 = arith.constant dense<0.000000e+00> : vector<16x128xf32>
    %783 = tpu.matmul %782, %452, %cst_196 {dimension_numbers = #tpu.dot_dimension_numbers<[1], [0], [0], [1], [0, 0, 1, 1], [], []>} : vector<16x32xbf16>, vector<32x128xbf16>, vector<16x128xf32> -> vector<16x128xf32>
    %784 = arith.addf %779, %783 : vector<16x128xf32>
    %785 = vector.extract_strided_slice %784 {offsets = [0, 0], sizes = [16, 96], strides = [1, 1]} : vector<16x128xf32> to vector<16x96xf32>
    %786 = arith.negf %785 : vector<16x96xf32>
    %787 = math.exp %786 : vector<16x96xf32>
    %cst_197 = arith.constant 1.000000e+00 : f32
    %788 = vector.broadcast %cst_197 : f32 to vector<16x96xf32>
    %789 = arith.addf %788, %787 : vector<16x96xf32>
    %790 = arith.divf %788, %789 : vector<16x96xf32>
    %791 = vector.extract_strided_slice %790 {offsets = [0, 0], sizes = [16, 32], strides = [1, 1]} : vector<16x96xf32> to vector<16x32xf32>
    %792 = vector.extract_strided_slice %790 {offsets = [0, 32], sizes = [16, 32], strides = [1, 1]} : vector<16x96xf32> to vector<16x32xf32>
    %793 = vector.extract_strided_slice %790 {offsets = [0, 64], sizes = [16, 32], strides = [1, 1]} : vector<16x96xf32> to vector<16x32xf32>
    %794 = vector.extract_strided_slice %784 {offsets = [0, 96], sizes = [16, 32], strides = [1, 1]} : vector<16x128xf32> to vector<16x32xf32>
    %795 = math.tanh %794 : vector<16x32xf32>
    %796 = arith.mulf %792, %745 : vector<16x32xf32>
    %797 = arith.mulf %791, %795 : vector<16x32xf32>
    %798 = arith.addf %796, %797 : vector<16x32xf32>
    %799 = math.tanh %798 : vector<16x32xf32>
    %800 = arith.mulf %793, %799 : vector<16x32xf32>
    %801 = arith.truncf %766 : vector<16x32xf32> to vector<16x32xbf16>
    %cst_198 = arith.constant dense<0.000000e+00> : vector<16x128xf32>
    %802 = tpu.matmul %801, %453, %cst_198 {dimension_numbers = #tpu.dot_dimension_numbers<[1], [0], [0], [1], [0, 0, 1, 1], [], []>} : vector<16x32xbf16>, vector<32x128xbf16>, vector<16x128xf32> -> vector<16x128xf32>
    %803 = arith.addf %781, %802 : vector<16x128xf32>
    %804 = vector.extract_strided_slice %803 {offsets = [0, 0], sizes = [16, 96], strides = [1, 1]} : vector<16x128xf32> to vector<16x96xf32>
    %805 = arith.negf %804 : vector<16x96xf32>
    %806 = math.exp %805 : vector<16x96xf32>
    %cst_199 = arith.constant 1.000000e+00 : f32
    %807 = vector.broadcast %cst_199 : f32 to vector<16x96xf32>
    %808 = arith.addf %807, %806 : vector<16x96xf32>
    %809 = arith.divf %807, %808 : vector<16x96xf32>
    %810 = vector.extract_strided_slice %809 {offsets = [0, 0], sizes = [16, 32], strides = [1, 1]} : vector<16x96xf32> to vector<16x32xf32>
    %811 = vector.extract_strided_slice %809 {offsets = [0, 32], sizes = [16, 32], strides = [1, 1]} : vector<16x96xf32> to vector<16x32xf32>
    %812 = vector.extract_strided_slice %809 {offsets = [0, 64], sizes = [16, 32], strides = [1, 1]} : vector<16x96xf32> to vector<16x32xf32>
    %813 = vector.extract_strided_slice %803 {offsets = [0, 96], sizes = [16, 32], strides = [1, 1]} : vector<16x128xf32> to vector<16x32xf32>
    %814 = math.tanh %813 : vector<16x32xf32>
    %815 = arith.mulf %811, %764 : vector<16x32xf32>
    %816 = arith.mulf %810, %814 : vector<16x32xf32>
    %817 = arith.addf %815, %816 : vector<16x32xf32>
    %818 = math.tanh %817 : vector<16x32xf32>
    %819 = arith.mulf %812, %818 : vector<16x32xf32>
    %820 = arith.truncf %800 : vector<16x32xf32> to vector<16x32xbf16>
    %821 = arith.index_cast %774 : i32 to index
    %c0_200 = arith.constant 0 : index
    %822 = vector.load %arg10[%821, %c0_200] : memref<128x32xbf16, #tpu.memory_space<vmem>>, vector<16x32xbf16>
    tpu.vector_store %arg10[%821, %c0_200], %820 {strides = array<i32>} : memref<128x32xbf16, #tpu.memory_space<vmem>>, vector<16x32xbf16>,
    %823 = arith.truncf %819 : vector<16x32xf32> to vector<16x32xbf16>
    %824 = arith.index_cast %777 : i32 to index
    %c0_201 = arith.constant 0 : index
    %825 = vector.load %arg11[%824, %c0_201] : memref<128x32xbf16, #tpu.memory_space<vmem>>, vector<16x32xbf16>
    tpu.vector_store %arg11[%824, %c0_201], %823 {strides = array<i32>} : memref<128x32xbf16, #tpu.memory_space<vmem>>, vector<16x32xbf16>,
    %c7_i32_202 = arith.constant 7 : i32
    %c16_i32_203 = arith.constant 16 : i32
    %826 = arith.muli %c7_i32_202, %c16_i32_203 : i32
    %827 = tpu.assume_multiple %826, 16 : i32
    %c7_i32_204 = arith.constant 7 : i32
    %828 = arith.subi %c7_i32_204, %c7_i32_202 : i32
    %c16_i32_205 = arith.constant 16 : i32
    %829 = arith.muli %828, %c16_i32_205 : i32
    %830 = tpu.assume_multiple %829, 16 : i32
    %831 = arith.index_cast %827 : i32 to index
    %c0_206 = arith.constant 0 : index
    %832 = vector.load %arg5[%831, %c0_206] : memref<128x256xf32, #tpu.memory_space<vmem>>, vector<16x128xf32>
    %833 = arith.index_cast %830 : i32 to index
    %c128_207 = arith.constant 128 : index
    %834 = vector.load %arg5[%833, %c128_207] : memref<128x256xf32, #tpu.memory_space<vmem>>, vector<16x128xf32>
    %835 = arith.truncf %800 : vector<16x32xf32> to vector<16x32xbf16>
    %cst_208 = arith.constant dense<0.000000e+00> : vector<16x128xf32>
    %836 = tpu.matmul %835, %452, %cst_208 {dimension_numbers = #tpu.dot_dimension_numbers<[1], [0], [0], [1], [0, 0, 1, 1], [], []>} : vector<16x32xbf16>, vector<32x128xbf16>, vector<16x128xf32> -> vector<16x128xf32>
    %837 = arith.addf %832, %836 : vector<16x128xf32>
    %838 = vector.extract_strided_slice %837 {offsets = [0, 0], sizes = [16, 96], strides = [1, 1]} : vector<16x128xf32> to vector<16x96xf32>
    %839 = arith.negf %838 : vector<16x96xf32>
    %840 = math.exp %839 : vector<16x96xf32>
    %cst_209 = arith.constant 1.000000e+00 : f32
    %841 = vector.broadcast %cst_209 : f32 to vector<16x96xf32>
    %842 = arith.addf %841, %840 : vector<16x96xf32>
    %843 = arith.divf %841, %842 : vector<16x96xf32>
    %844 = vector.extract_strided_slice %843 {offsets = [0, 0], sizes = [16, 32], strides = [1, 1]} : vector<16x96xf32> to vector<16x32xf32>
    %845 = vector.extract_strided_slice %843 {offsets = [0, 32], sizes = [16, 32], strides = [1, 1]} : vector<16x96xf32> to vector<16x32xf32>
    %846 = vector.extract_strided_slice %843 {offsets = [0, 64], sizes = [16, 32], strides = [1, 1]} : vector<16x96xf32> to vector<16x32xf32>
    %847 = vector.extract_strided_slice %837 {offsets = [0, 96], sizes = [16, 32], strides = [1, 1]} : vector<16x128xf32> to vector<16x32xf32>
    %848 = math.tanh %847 : vector<16x32xf32>
    %849 = arith.mulf %845, %798 : vector<16x32xf32>
    %850 = arith.mulf %844, %848 : vector<16x32xf32>
    %851 = arith.addf %849, %850 : vector<16x32xf32>
    %852 = math.tanh %851 : vector<16x32xf32>
    %853 = arith.mulf %846, %852 : vector<16x32xf32>
    %854 = arith.truncf %819 : vector<16x32xf32> to vector<16x32xbf16>
    %cst_210 = arith.constant dense<0.000000e+00> : vector<16x128xf32>
    %855 = tpu.matmul %854, %453, %cst_210 {dimension_numbers = #tpu.dot_dimension_numbers<[1], [0], [0], [1], [0, 0, 1, 1], [], []>} : vector<16x32xbf16>, vector<32x128xbf16>, vector<16x128xf32> -> vector<16x128xf32>
    %856 = arith.addf %834, %855 : vector<16x128xf32>
    %857 = vector.extract_strided_slice %856 {offsets = [0, 0], sizes = [16, 96], strides = [1, 1]} : vector<16x128xf32> to vector<16x96xf32>
    %858 = arith.negf %857 : vector<16x96xf32>
    %859 = math.exp %858 : vector<16x96xf32>
    %cst_211 = arith.constant 1.000000e+00 : f32
    %860 = vector.broadcast %cst_211 : f32 to vector<16x96xf32>
    %861 = arith.addf %860, %859 : vector<16x96xf32>
    %862 = arith.divf %860, %861 : vector<16x96xf32>
    %863 = vector.extract_strided_slice %862 {offsets = [0, 0], sizes = [16, 32], strides = [1, 1]} : vector<16x96xf32> to vector<16x32xf32>
    %864 = vector.extract_strided_slice %862 {offsets = [0, 32], sizes = [16, 32], strides = [1, 1]} : vector<16x96xf32> to vector<16x32xf32>
    %865 = vector.extract_strided_slice %862 {offsets = [0, 64], sizes = [16, 32], strides = [1, 1]} : vector<16x96xf32> to vector<16x32xf32>
    %866 = vector.extract_strided_slice %856 {offsets = [0, 96], sizes = [16, 32], strides = [1, 1]} : vector<16x128xf32> to vector<16x32xf32>
    %867 = math.tanh %866 : vector<16x32xf32>
    %868 = arith.mulf %864, %817 : vector<16x32xf32>
    %869 = arith.mulf %863, %867 : vector<16x32xf32>
    %870 = arith.addf %868, %869 : vector<16x32xf32>
    %871 = math.tanh %870 : vector<16x32xf32>
    %872 = arith.mulf %865, %871 : vector<16x32xf32>
    %873 = arith.truncf %853 : vector<16x32xf32> to vector<16x32xbf16>
    %874 = arith.index_cast %827 : i32 to index
    %c0_212 = arith.constant 0 : index
    %875 = vector.load %arg10[%874, %c0_212] : memref<128x32xbf16, #tpu.memory_space<vmem>>, vector<16x32xbf16>
    tpu.vector_store %arg10[%874, %c0_212], %873 {strides = array<i32>} : memref<128x32xbf16, #tpu.memory_space<vmem>>, vector<16x32xbf16>,
    %876 = arith.truncf %872 : vector<16x32xf32> to vector<16x32xbf16>
    %877 = arith.index_cast %830 : i32 to index
    %c0_213 = arith.constant 0 : index
    %878 = vector.load %arg11[%877, %c0_213] : memref<128x32xbf16, #tpu.memory_space<vmem>>, vector<16x32xbf16>
    tpu.vector_store %arg11[%877, %c0_213], %876 {strides = array<i32>} : memref<128x32xbf16, #tpu.memory_space<vmem>>, vector<16x32xbf16>,
    %c8_i32_214 = arith.constant 8 : i32
    %c224 = arith.constant 224 : index
    %c0_215 = arith.constant 0 : index
    %879 = vector.load %arg2[%c224, %c0_215] : memref<512x256xbf16, #tpu.memory_space<vmem>>, vector<32x128xbf16>
    %c0_i32_216 = arith.constant 0 : i32
    %c16_i32_217 = arith.constant 16 : i32
    %880 = arith.muli %c0_i32_216, %c16_i32_217 : i32
    %881 = tpu.assume_multiple %880, 16 : i32
    %882 = arith.index_cast %881 : i32 to index
    %c0_218 = arith.constant 0 : index
    %883 = vector.load %arg6[%882, %c0_218] : memref<128x128xf32, #tpu.memory_space<vmem>>, vector<16x128xf32>
    %884 = arith.truncf %415 : vector<16x32xf32> to vector<16x32xbf16>
    %cst_219 = arith.constant dense<0.000000e+00> : vector<16x128xf32>
    %885 = tpu.matmul %884, %879, %cst_219 {dimension_numbers = #tpu.dot_dimension_numbers<[1], [0], [0], [1], [0, 0, 1, 1], [], []>} : vector<16x32xbf16>, vector<32x128xbf16>, vector<16x128xf32> -> vector<16x128xf32>
    %886 = arith.addf %883, %885 : vector<16x128xf32>
    %887 = vector.extract_strided_slice %886 {offsets = [0, 0], sizes = [16, 96], strides = [1, 1]} : vector<16x128xf32> to vector<16x96xf32>
    %888 = arith.negf %887 : vector<16x96xf32>
    %889 = math.exp %888 : vector<16x96xf32>
    %cst_220 = arith.constant 1.000000e+00 : f32
    %890 = vector.broadcast %cst_220 : f32 to vector<16x96xf32>
    %891 = arith.addf %890, %889 : vector<16x96xf32>
    %892 = arith.divf %890, %891 : vector<16x96xf32>
    %893 = vector.extract_strided_slice %892 {offsets = [0, 0], sizes = [16, 32], strides = [1, 1]} : vector<16x96xf32> to vector<16x32xf32>
    %894 = vector.extract_strided_slice %892 {offsets = [0, 32], sizes = [16, 32], strides = [1, 1]} : vector<16x96xf32> to vector<16x32xf32>
    %895 = vector.extract_strided_slice %892 {offsets = [0, 64], sizes = [16, 32], strides = [1, 1]} : vector<16x96xf32> to vector<16x32xf32>
    %896 = vector.extract_strided_slice %886 {offsets = [0, 96], sizes = [16, 32], strides = [1, 1]} : vector<16x128xf32> to vector<16x32xf32>
    %897 = math.tanh %896 : vector<16x32xf32>
    %898 = arith.mulf %894, %413 : vector<16x32xf32>
    %899 = arith.mulf %893, %897 : vector<16x32xf32>
    %900 = arith.addf %898, %899 : vector<16x32xf32>
    %901 = math.tanh %900 : vector<16x32xf32>
    %902 = arith.mulf %895, %901 : vector<16x32xf32>
    %903 = arith.truncf %902 : vector<16x32xf32> to vector<16x32xbf16>
    %904 = arith.index_cast %881 : i32 to index
    %c0_221 = arith.constant 0 : index
    %905 = vector.load %arg12[%904, %c0_221] : memref<128x32xbf16, #tpu.memory_space<vmem>>, vector<16x32xbf16>
    tpu.vector_store %arg12[%904, %c0_221], %903 {strides = array<i32>} : memref<128x32xbf16, #tpu.memory_space<vmem>>, vector<16x32xbf16>,
    %c1_i32_222 = arith.constant 1 : i32
    %c16_i32_223 = arith.constant 16 : i32
    %906 = arith.muli %c1_i32_222, %c16_i32_223 : i32
    %907 = tpu.assume_multiple %906, 16 : i32
    %908 = arith.index_cast %907 : i32 to index
    %c0_224 = arith.constant 0 : index
    %909 = vector.load %arg6[%908, %c0_224] : memref<128x128xf32, #tpu.memory_space<vmem>>, vector<16x128xf32>
    %910 = arith.truncf %902 : vector<16x32xf32> to vector<16x32xbf16>
    %cst_225 = arith.constant dense<0.000000e+00> : vector<16x128xf32>
    %911 = tpu.matmul %910, %879, %cst_225 {dimension_numbers = #tpu.dot_dimension_numbers<[1], [0], [0], [1], [0, 0, 1, 1], [], []>} : vector<16x32xbf16>, vector<32x128xbf16>, vector<16x128xf32> -> vector<16x128xf32>
    %912 = arith.addf %909, %911 : vector<16x128xf32>
    %913 = vector.extract_strided_slice %912 {offsets = [0, 0], sizes = [16, 96], strides = [1, 1]} : vector<16x128xf32> to vector<16x96xf32>
    %914 = arith.negf %913 : vector<16x96xf32>
    %915 = math.exp %914 : vector<16x96xf32>
    %cst_226 = arith.constant 1.000000e+00 : f32
    %916 = vector.broadcast %cst_226 : f32 to vector<16x96xf32>
    %917 = arith.addf %916, %915 : vector<16x96xf32>
    %918 = arith.divf %916, %917 : vector<16x96xf32>
    %919 = vector.extract_strided_slice %918 {offsets = [0, 0], sizes = [16, 32], strides = [1, 1]} : vector<16x96xf32> to vector<16x32xf32>
    %920 = vector.extract_strided_slice %918 {offsets = [0, 32], sizes = [16, 32], strides = [1, 1]} : vector<16x96xf32> to vector<16x32xf32>
    %921 = vector.extract_strided_slice %918 {offsets = [0, 64], sizes = [16, 32], strides = [1, 1]} : vector<16x96xf32> to vector<16x32xf32>
    %922 = vector.extract_strided_slice %912 {offsets = [0, 96], sizes = [16, 32], strides = [1, 1]} : vector<16x128xf32> to vector<16x32xf32>
    %923 = math.tanh %922 : vector<16x32xf32>
    %924 = arith.mulf %920, %900 : vector<16x32xf32>
    %925 = arith.mulf %919, %923 : vector<16x32xf32>
    %926 = arith.addf %924, %925 : vector<16x32xf32>
    %927 = math.tanh %926 : vector<16x32xf32>
    %928 = arith.mulf %921, %927 : vector<16x32xf32>
    %929 = arith.truncf %928 : vector<16x32xf32> to vector<16x32xbf16>
    %930 = arith.index_cast %907 : i32 to index
    %c0_227 = arith.constant 0 : index
    %931 = vector.load %arg12[%930, %c0_227] : memref<128x32xbf16, #tpu.memory_space<vmem>>, vector<16x32xbf16>
    tpu.vector_store %arg12[%930, %c0_227], %929 {strides = array<i32>} : memref<128x32xbf16, #tpu.memory_space<vmem>>, vector<16x32xbf16>,
    %c2_i32_228 = arith.constant 2 : i32
    %c16_i32_229 = arith.constant 16 : i32
    %932 = arith.muli %c2_i32_228, %c16_i32_229 : i32
    %933 = tpu.assume_multiple %932, 16 : i32
    %934 = arith.index_cast %933 : i32 to index
    %c0_230 = arith.constant 0 : index
    %935 = vector.load %arg6[%934, %c0_230] : memref<128x128xf32, #tpu.memory_space<vmem>>, vector<16x128xf32>
    %936 = arith.truncf %928 : vector<16x32xf32> to vector<16x32xbf16>
    %cst_231 = arith.constant dense<0.000000e+00> : vector<16x128xf32>
    %937 = tpu.matmul %936, %879, %cst_231 {dimension_numbers = #tpu.dot_dimension_numbers<[1], [0], [0], [1], [0, 0, 1, 1], [], []>} : vector<16x32xbf16>, vector<32x128xbf16>, vector<16x128xf32> -> vector<16x128xf32>
    %938 = arith.addf %935, %937 : vector<16x128xf32>
    %939 = vector.extract_strided_slice %938 {offsets = [0, 0], sizes = [16, 96], strides = [1, 1]} : vector<16x128xf32> to vector<16x96xf32>
    %940 = arith.negf %939 : vector<16x96xf32>
    %941 = math.exp %940 : vector<16x96xf32>
    %cst_232 = arith.constant 1.000000e+00 : f32
    %942 = vector.broadcast %cst_232 : f32 to vector<16x96xf32>
    %943 = arith.addf %942, %941 : vector<16x96xf32>
    %944 = arith.divf %942, %943 : vector<16x96xf32>
    %945 = vector.extract_strided_slice %944 {offsets = [0, 0], sizes = [16, 32], strides = [1, 1]} : vector<16x96xf32> to vector<16x32xf32>
    %946 = vector.extract_strided_slice %944 {offsets = [0, 32], sizes = [16, 32], strides = [1, 1]} : vector<16x96xf32> to vector<16x32xf32>
    %947 = vector.extract_strided_slice %944 {offsets = [0, 64], sizes = [16, 32], strides = [1, 1]} : vector<16x96xf32> to vector<16x32xf32>
    %948 = vector.extract_strided_slice %938 {offsets = [0, 96], sizes = [16, 32], strides = [1, 1]} : vector<16x128xf32> to vector<16x32xf32>
    %949 = math.tanh %948 : vector<16x32xf32>
    %950 = arith.mulf %946, %926 : vector<16x32xf32>
    %951 = arith.mulf %945, %949 : vector<16x32xf32>
    %952 = arith.addf %950, %951 : vector<16x32xf32>
    %953 = math.tanh %952 : vector<16x32xf32>
    %954 = arith.mulf %947, %953 : vector<16x32xf32>
    %955 = arith.truncf %954 : vector<16x32xf32> to vector<16x32xbf16>
    %956 = arith.index_cast %933 : i32 to index
    %c0_233 = arith.constant 0 : index
    %957 = vector.load %arg12[%956, %c0_233] : memref<128x32xbf16, #tpu.memory_space<vmem>>, vector<16x32xbf16>
    tpu.vector_store %arg12[%956, %c0_233], %955 {strides = array<i32>} : memref<128x32xbf16, #tpu.memory_space<vmem>>, vector<16x32xbf16>,
    %c3_i32_234 = arith.constant 3 : i32
    %c16_i32_235 = arith.constant 16 : i32
    %958 = arith.muli %c3_i32_234, %c16_i32_235 : i32
    %959 = tpu.assume_multiple %958, 16 : i32
    %960 = arith.index_cast %959 : i32 to index
    %c0_236 = arith.constant 0 : index
    %961 = vector.load %arg6[%960, %c0_236] : memref<128x128xf32, #tpu.memory_space<vmem>>, vector<16x128xf32>
    %962 = arith.truncf %954 : vector<16x32xf32> to vector<16x32xbf16>
    %cst_237 = arith.constant dense<0.000000e+00> : vector<16x128xf32>
    %963 = tpu.matmul %962, %879, %cst_237 {dimension_numbers = #tpu.dot_dimension_numbers<[1], [0], [0], [1], [0, 0, 1, 1], [], []>} : vector<16x32xbf16>, vector<32x128xbf16>, vector<16x128xf32> -> vector<16x128xf32>
    %964 = arith.addf %961, %963 : vector<16x128xf32>
    %965 = vector.extract_strided_slice %964 {offsets = [0, 0], sizes = [16, 96], strides = [1, 1]} : vector<16x128xf32> to vector<16x96xf32>
    %966 = arith.negf %965 : vector<16x96xf32>
    %967 = math.exp %966 : vector<16x96xf32>
    %cst_238 = arith.constant 1.000000e+00 : f32
    %968 = vector.broadcast %cst_238 : f32 to vector<16x96xf32>
    %969 = arith.addf %968, %967 : vector<16x96xf32>
    %970 = arith.divf %968, %969 : vector<16x96xf32>
    %971 = vector.extract_strided_slice %970 {offsets = [0, 0], sizes = [16, 32], strides = [1, 1]} : vector<16x96xf32> to vector<16x32xf32>
    %972 = vector.extract_strided_slice %970 {offsets = [0, 32], sizes = [16, 32], strides = [1, 1]} : vector<16x96xf32> to vector<16x32xf32>
    %973 = vector.extract_strided_slice %970 {offsets = [0, 64], sizes = [16, 32], strides = [1, 1]} : vector<16x96xf32> to vector<16x32xf32>
    %974 = vector.extract_strided_slice %964 {offsets = [0, 96], sizes = [16, 32], strides = [1, 1]} : vector<16x128xf32> to vector<16x32xf32>
    %975 = math.tanh %974 : vector<16x32xf32>
    %976 = arith.mulf %972, %952 : vector<16x32xf32>
    %977 = arith.mulf %971, %975 : vector<16x32xf32>
    %978 = arith.addf %976, %977 : vector<16x32xf32>
    %979 = math.tanh %978 : vector<16x32xf32>
    %980 = arith.mulf %973, %979 : vector<16x32xf32>
    %981 = arith.truncf %980 : vector<16x32xf32> to vector<16x32xbf16>
    %982 = arith.index_cast %959 : i32 to index
    %c0_239 = arith.constant 0 : index
    %983 = vector.load %arg12[%982, %c0_239] : memref<128x32xbf16, #tpu.memory_space<vmem>>, vector<16x32xbf16>
    tpu.vector_store %arg12[%982, %c0_239], %981 {strides = array<i32>} : memref<128x32xbf16, #tpu.memory_space<vmem>>, vector<16x32xbf16>,
    %c4_i32_240 = arith.constant 4 : i32
    %c16_i32_241 = arith.constant 16 : i32
    %984 = arith.muli %c4_i32_240, %c16_i32_241 : i32
    %985 = tpu.assume_multiple %984, 16 : i32
    %986 = arith.index_cast %985 : i32 to index
    %c0_242 = arith.constant 0 : index
    %987 = vector.load %arg6[%986, %c0_242] : memref<128x128xf32, #tpu.memory_space<vmem>>, vector<16x128xf32>
    %988 = arith.truncf %980 : vector<16x32xf32> to vector<16x32xbf16>
    %cst_243 = arith.constant dense<0.000000e+00> : vector<16x128xf32>
    %989 = tpu.matmul %988, %879, %cst_243 {dimension_numbers = #tpu.dot_dimension_numbers<[1], [0], [0], [1], [0, 0, 1, 1], [], []>} : vector<16x32xbf16>, vector<32x128xbf16>, vector<16x128xf32> -> vector<16x128xf32>
    %990 = arith.addf %987, %989 : vector<16x128xf32>
    %991 = vector.extract_strided_slice %990 {offsets = [0, 0], sizes = [16, 96], strides = [1, 1]} : vector<16x128xf32> to vector<16x96xf32>
    %992 = arith.negf %991 : vector<16x96xf32>
    %993 = math.exp %992 : vector<16x96xf32>
    %cst_244 = arith.constant 1.000000e+00 : f32
    %994 = vector.broadcast %cst_244 : f32 to vector<16x96xf32>
    %995 = arith.addf %994, %993 : vector<16x96xf32>
    %996 = arith.divf %994, %995 : vector<16x96xf32>
    %997 = vector.extract_strided_slice %996 {offsets = [0, 0], sizes = [16, 32], strides = [1, 1]} : vector<16x96xf32> to vector<16x32xf32>
    %998 = vector.extract_strided_slice %996 {offsets = [0, 32], sizes = [16, 32], strides = [1, 1]} : vector<16x96xf32> to vector<16x32xf32>
    %999 = vector.extract_strided_slice %996 {offsets = [0, 64], sizes = [16, 32], strides = [1, 1]} : vector<16x96xf32> to vector<16x32xf32>
    %1000 = vector.extract_strided_slice %990 {offsets = [0, 96], sizes = [16, 32], strides = [1, 1]} : vector<16x128xf32> to vector<16x32xf32>
    %1001 = math.tanh %1000 : vector<16x32xf32>
    %1002 = arith.mulf %998, %978 : vector<16x32xf32>
    %1003 = arith.mulf %997, %1001 : vector<16x32xf32>
    %1004 = arith.addf %1002, %1003 : vector<16x32xf32>
    %1005 = math.tanh %1004 : vector<16x32xf32>
    %1006 = arith.mulf %999, %1005 : vector<16x32xf32>
    %1007 = arith.truncf %1006 : vector<16x32xf32> to vector<16x32xbf16>
    %1008 = arith.index_cast %985 : i32 to index
    %c0_245 = arith.constant 0 : index
    %1009 = vector.load %arg12[%1008, %c0_245] : memref<128x32xbf16, #tpu.memory_space<vmem>>, vector<16x32xbf16>
    tpu.vector_store %arg12[%1008, %c0_245], %1007 {strides = array<i32>} : memref<128x32xbf16, #tpu.memory_space<vmem>>, vector<16x32xbf16>,
    %c5_i32_246 = arith.constant 5 : i32
    %c16_i32_247 = arith.constant 16 : i32
    %1010 = arith.muli %c5_i32_246, %c16_i32_247 : i32
    %1011 = tpu.assume_multiple %1010, 16 : i32
    %1012 = arith.index_cast %1011 : i32 to index
    %c0_248 = arith.constant 0 : index
    %1013 = vector.load %arg6[%1012, %c0_248] : memref<128x128xf32, #tpu.memory_space<vmem>>, vector<16x128xf32>
    %1014 = arith.truncf %1006 : vector<16x32xf32> to vector<16x32xbf16>
    %cst_249 = arith.constant dense<0.000000e+00> : vector<16x128xf32>
    %1015 = tpu.matmul %1014, %879, %cst_249 {dimension_numbers = #tpu.dot_dimension_numbers<[1], [0], [0], [1], [0, 0, 1, 1], [], []>} : vector<16x32xbf16>, vector<32x128xbf16>, vector<16x128xf32> -> vector<16x128xf32>
    %1016 = arith.addf %1013, %1015 : vector<16x128xf32>
    %1017 = vector.extract_strided_slice %1016 {offsets = [0, 0], sizes = [16, 96], strides = [1, 1]} : vector<16x128xf32> to vector<16x96xf32>
    %1018 = arith.negf %1017 : vector<16x96xf32>
    %1019 = math.exp %1018 : vector<16x96xf32>
    %cst_250 = arith.constant 1.000000e+00 : f32
    %1020 = vector.broadcast %cst_250 : f32 to vector<16x96xf32>
    %1021 = arith.addf %1020, %1019 : vector<16x96xf32>
    %1022 = arith.divf %1020, %1021 : vector<16x96xf32>
    %1023 = vector.extract_strided_slice %1022 {offsets = [0, 0], sizes = [16, 32], strides = [1, 1]} : vector<16x96xf32> to vector<16x32xf32>
    %1024 = vector.extract_strided_slice %1022 {offsets = [0, 32], sizes = [16, 32], strides = [1, 1]} : vector<16x96xf32> to vector<16x32xf32>
    %1025 = vector.extract_strided_slice %1022 {offsets = [0, 64], sizes = [16, 32], strides = [1, 1]} : vector<16x96xf32> to vector<16x32xf32>
    %1026 = vector.extract_strided_slice %1016 {offsets = [0, 96], sizes = [16, 32], strides = [1, 1]} : vector<16x128xf32> to vector<16x32xf32>
    %1027 = math.tanh %1026 : vector<16x32xf32>
    %1028 = arith.mulf %1024, %1004 : vector<16x32xf32>
    %1029 = arith.mulf %1023, %1027 : vector<16x32xf32>
    %1030 = arith.addf %1028, %1029 : vector<16x32xf32>
    %1031 = math.tanh %1030 : vector<16x32xf32>
    %1032 = arith.mulf %1025, %1031 : vector<16x32xf32>
    %1033 = arith.truncf %1032 : vector<16x32xf32> to vector<16x32xbf16>
    %1034 = arith.index_cast %1011 : i32 to index
    %c0_251 = arith.constant 0 : index
    %1035 = vector.load %arg12[%1034, %c0_251] : memref<128x32xbf16, #tpu.memory_space<vmem>>, vector<16x32xbf16>
    tpu.vector_store %arg12[%1034, %c0_251], %1033 {strides = array<i32>} : memref<128x32xbf16, #tpu.memory_space<vmem>>, vector<16x32xbf16>,
    %c6_i32_252 = arith.constant 6 : i32
    %c16_i32_253 = arith.constant 16 : i32
    %1036 = arith.muli %c6_i32_252, %c16_i32_253 : i32
    %1037 = tpu.assume_multiple %1036, 16 : i32
    %1038 = arith.index_cast %1037 : i32 to index
    %c0_254 = arith.constant 0 : index
    %1039 = vector.load %arg6[%1038, %c0_254] : memref<128x128xf32, #tpu.memory_space<vmem>>, vector<16x128xf32>
    %1040 = arith.truncf %1032 : vector<16x32xf32> to vector<16x32xbf16>
    %cst_255 = arith.constant dense<0.000000e+00> : vector<16x128xf32>
    %1041 = tpu.matmul %1040, %879, %cst_255 {dimension_numbers = #tpu.dot_dimension_numbers<[1], [0], [0], [1], [0, 0, 1, 1], [], []>} : vector<16x32xbf16>, vector<32x128xbf16>, vector<16x128xf32> -> vector<16x128xf32>
    %1042 = arith.addf %1039, %1041 : vector<16x128xf32>
    %1043 = vector.extract_strided_slice %1042 {offsets = [0, 0], sizes = [16, 96], strides = [1, 1]} : vector<16x128xf32> to vector<16x96xf32>
    %1044 = arith.negf %1043 : vector<16x96xf32>
    %1045 = math.exp %1044 : vector<16x96xf32>
    %cst_256 = arith.constant 1.000000e+00 : f32
    %1046 = vector.broadcast %cst_256 : f32 to vector<16x96xf32>
    %1047 = arith.addf %1046, %1045 : vector<16x96xf32>
    %1048 = arith.divf %1046, %1047 : vector<16x96xf32>
    %1049 = vector.extract_strided_slice %1048 {offsets = [0, 0], sizes = [16, 32], strides = [1, 1]} : vector<16x96xf32> to vector<16x32xf32>
    %1050 = vector.extract_strided_slice %1048 {offsets = [0, 32], sizes = [16, 32], strides = [1, 1]} : vector<16x96xf32> to vector<16x32xf32>
    %1051 = vector.extract_strided_slice %1048 {offsets = [0, 64], sizes = [16, 32], strides = [1, 1]} : vector<16x96xf32> to vector<16x32xf32>
    %1052 = vector.extract_strided_slice %1042 {offsets = [0, 96], sizes = [16, 32], strides = [1, 1]} : vector<16x128xf32> to vector<16x32xf32>
    %1053 = math.tanh %1052 : vector<16x32xf32>
    %1054 = arith.mulf %1050, %1030 : vector<16x32xf32>
    %1055 = arith.mulf %1049, %1053 : vector<16x32xf32>
    %1056 = arith.addf %1054, %1055 : vector<16x32xf32>
    %1057 = math.tanh %1056 : vector<16x32xf32>
    %1058 = arith.mulf %1051, %1057 : vector<16x32xf32>
    %1059 = arith.truncf %1058 : vector<16x32xf32> to vector<16x32xbf16>
    %1060 = arith.index_cast %1037 : i32 to index
    %c0_257 = arith.constant 0 : index
    %1061 = vector.load %arg12[%1060, %c0_257] : memref<128x32xbf16, #tpu.memory_space<vmem>>, vector<16x32xbf16>
    tpu.vector_store %arg12[%1060, %c0_257], %1059 {strides = array<i32>} : memref<128x32xbf16, #tpu.memory_space<vmem>>, vector<16x32xbf16>,
    %c7_i32_258 = arith.constant 7 : i32
    %c16_i32_259 = arith.constant 16 : i32
    %1062 = arith.muli %c7_i32_258, %c16_i32_259 : i32
    %1063 = tpu.assume_multiple %1062, 16 : i32
    %1064 = arith.index_cast %1063 : i32 to index
    %c0_260 = arith.constant 0 : index
    %1065 = vector.load %arg6[%1064, %c0_260] : memref<128x128xf32, #tpu.memory_space<vmem>>, vector<16x128xf32>
    %1066 = arith.truncf %1058 : vector<16x32xf32> to vector<16x32xbf16>
    %cst_261 = arith.constant dense<0.000000e+00> : vector<16x128xf32>
    %1067 = tpu.matmul %1066, %879, %cst_261 {dimension_numbers = #tpu.dot_dimension_numbers<[1], [0], [0], [1], [0, 0, 1, 1], [], []>} : vector<16x32xbf16>, vector<32x128xbf16>, vector<16x128xf32> -> vector<16x128xf32>
    %1068 = arith.addf %1065, %1067 : vector<16x128xf32>
    %1069 = vector.extract_strided_slice %1068 {offsets = [0, 0], sizes = [16, 96], strides = [1, 1]} : vector<16x128xf32> to vector<16x96xf32>
    %1070 = arith.negf %1069 : vector<16x96xf32>
    %1071 = math.exp %1070 : vector<16x96xf32>
    %cst_262 = arith.constant 1.000000e+00 : f32
    %1072 = vector.broadcast %cst_262 : f32 to vector<16x96xf32>
    %1073 = arith.addf %1072, %1071 : vector<16x96xf32>
    %1074 = arith.divf %1072, %1073 : vector<16x96xf32>
    %1075 = vector.extract_strided_slice %1074 {offsets = [0, 0], sizes = [16, 32], strides = [1, 1]} : vector<16x96xf32> to vector<16x32xf32>
    %1076 = vector.extract_strided_slice %1074 {offsets = [0, 32], sizes = [16, 32], strides = [1, 1]} : vector<16x96xf32> to vector<16x32xf32>
    %1077 = vector.extract_strided_slice %1074 {offsets = [0, 64], sizes = [16, 32], strides = [1, 1]} : vector<16x96xf32> to vector<16x32xf32>
    %1078 = vector.extract_strided_slice %1068 {offsets = [0, 96], sizes = [16, 32], strides = [1, 1]} : vector<16x128xf32> to vector<16x32xf32>
    %1079 = math.tanh %1078 : vector<16x32xf32>
    %1080 = arith.mulf %1076, %1056 : vector<16x32xf32>
    %1081 = arith.mulf %1075, %1079 : vector<16x32xf32>
    %1082 = arith.addf %1080, %1081 : vector<16x32xf32>
    %1083 = math.tanh %1082 : vector<16x32xf32>
    %1084 = arith.mulf %1077, %1083 : vector<16x32xf32>
    %1085 = arith.truncf %1084 : vector<16x32xf32> to vector<16x32xbf16>
    %1086 = arith.index_cast %1063 : i32 to index
    %c0_263 = arith.constant 0 : index
    %1087 = vector.load %arg12[%1086, %c0_263] : memref<128x32xbf16, #tpu.memory_space<vmem>>, vector<16x32xbf16>
    tpu.vector_store %arg12[%1086, %c0_263], %1085 {strides = array<i32>} : memref<128x32xbf16, #tpu.memory_space<vmem>>, vector<16x32xbf16>,
    %c8_i32_264 = arith.constant 8 : i32
    %c0_265 = arith.constant 0 : index
    %c0_266 = arith.constant 0 : index
    %1088 = vector.load %arg12[%c0_265, %c0_266] : memref<128x32xbf16, #tpu.memory_space<vmem>>, vector<128x32xbf16>
    %c256 = arith.constant 256 : index
    %c0_267 = arith.constant 0 : index
    %1089 = vector.load %arg2[%c256, %c0_267] : memref<512x256xbf16, #tpu.memory_space<vmem>>, vector<32x128xbf16>
    %cst_268 = arith.constant dense<0.000000e+00> : vector<128x128xf32>
    %1090 = tpu.matmul %1088, %1089, %cst_268 {dimension_numbers = #tpu.dot_dimension_numbers<[1], [0], [0], [1], [0, 0, 1, 1], [], []>} : vector<128x32xbf16>, vector<32x128xbf16>, vector<128x128xf32> -> vector<128x128xf32>
    %c24 = arith.constant 24 : index
    %c0_269 = arith.constant 0 : index
    %1091 = vector.load %arg3[%c24, %c0_269] : memref<64x256xf32, #tpu.memory_space<vmem>>, vector<1x128xf32>
    %1092 = vector.broadcast %1091 : vector<1x128xf32> to vector<128x128xf32>
    %1093 = arith.addf %1090, %1092 : vector<128x128xf32>
    %c0_270 = arith.constant 0 : index
    %c0_271 = arith.constant 0 : index
    %1094 = vector.load %arg7[%c0_270, %c0_271] : memref<128x128xf32, #tpu.memory_space<vmem>>, vector<128x128xf32>
    tpu.vector_store %arg7[%c0_270, %c0_271], %1093 {strides = array<i32>} : memref<128x128xf32, #tpu.memory_space<vmem>>, vector<128x128xf32>,
    %c288 = arith.constant 288 : index
    %c0_272 = arith.constant 0 : index
    %1095 = vector.load %arg2[%c288, %c0_272] : memref<512x256xbf16, #tpu.memory_space<vmem>>, vector<32x128xbf16>
    %c0_i32_273 = arith.constant 0 : i32
    %c16_i32_274 = arith.constant 16 : i32
    %1096 = arith.muli %c0_i32_273, %c16_i32_274 : i32
    %1097 = tpu.assume_multiple %1096, 16 : i32
    %1098 = arith.index_cast %1097 : i32 to index
    %c0_275 = arith.constant 0 : index
    %1099 = vector.load %arg7[%1098, %c0_275] : memref<128x128xf32, #tpu.memory_space<vmem>>, vector<16x128xf32>
    %1100 = arith.truncf %434 : vector<16x32xf32> to vector<16x32xbf16>
    %cst_276 = arith.constant dense<0.000000e+00> : vector<16x128xf32>
    %1101 = tpu.matmul %1100, %1095, %cst_276 {dimension_numbers = #tpu.dot_dimension_numbers<[1], [0], [0], [1], [0, 0, 1, 1], [], []>} : vector<16x32xbf16>, vector<32x128xbf16>, vector<16x128xf32> -> vector<16x128xf32>
    %1102 = arith.addf %1099, %1101 : vector<16x128xf32>
    %1103 = vector.extract_strided_slice %1102 {offsets = [0, 0], sizes = [16, 96], strides = [1, 1]} : vector<16x128xf32> to vector<16x96xf32>
    %1104 = arith.negf %1103 : vector<16x96xf32>
    %1105 = math.exp %1104 : vector<16x96xf32>
    %cst_277 = arith.constant 1.000000e+00 : f32
    %1106 = vector.broadcast %cst_277 : f32 to vector<16x96xf32>
    %1107 = arith.addf %1106, %1105 : vector<16x96xf32>
    %1108 = arith.divf %1106, %1107 : vector<16x96xf32>
    %1109 = vector.extract_strided_slice %1108 {offsets = [0, 0], sizes = [16, 32], strides = [1, 1]} : vector<16x96xf32> to vector<16x32xf32>
    %1110 = vector.extract_strided_slice %1108 {offsets = [0, 32], sizes = [16, 32], strides = [1, 1]} : vector<16x96xf32> to vector<16x32xf32>
    %1111 = vector.extract_strided_slice %1108 {offsets = [0, 64], sizes = [16, 32], strides = [1, 1]} : vector<16x96xf32> to vector<16x32xf32>
    %1112 = vector.extract_strided_slice %1102 {offsets = [0, 96], sizes = [16, 32], strides = [1, 1]} : vector<16x128xf32> to vector<16x32xf32>
    %1113 = math.tanh %1112 : vector<16x32xf32>
    %1114 = arith.mulf %1110, %432 : vector<16x32xf32>
    %1115 = arith.mulf %1109, %1113 : vector<16x32xf32>
    %1116 = arith.addf %1114, %1115 : vector<16x32xf32>
    %1117 = math.tanh %1116 : vector<16x32xf32>
    %1118 = arith.mulf %1111, %1117 : vector<16x32xf32>
    %1119 = arith.truncf %1118 : vector<16x32xf32> to vector<16x32xbf16>
    %1120 = arith.index_cast %1097 : i32 to index
    %c0_278 = arith.constant 0 : index
    %1121 = vector.load %arg13[%1120, %c0_278] : memref<128x32xbf16, #tpu.memory_space<vmem>>, vector<16x32xbf16>
    tpu.vector_store %arg13[%1120, %c0_278], %1119 {strides = array<i32>} : memref<128x32xbf16, #tpu.memory_space<vmem>>, vector<16x32xbf16>,
    %c1_i32_279 = arith.constant 1 : i32
    %c16_i32_280 = arith.constant 16 : i32
    %1122 = arith.muli %c1_i32_279, %c16_i32_280 : i32
    %1123 = tpu.assume_multiple %1122, 16 : i32
    %1124 = arith.index_cast %1123 : i32 to index
    %c0_281 = arith.constant 0 : index
    %1125 = vector.load %arg7[%1124, %c0_281] : memref<128x128xf32, #tpu.memory_space<vmem>>, vector<16x128xf32>
    %1126 = arith.truncf %1118 : vector<16x32xf32> to vector<16x32xbf16>
    %cst_282 = arith.constant dense<0.000000e+00> : vector<16x128xf32>
    %1127 = tpu.matmul %1126, %1095, %cst_282 {dimension_numbers = #tpu.dot_dimension_numbers<[1], [0], [0], [1], [0, 0, 1, 1], [], []>} : vector<16x32xbf16>, vector<32x128xbf16>, vector<16x128xf32> -> vector<16x128xf32>
    %1128 = arith.addf %1125, %1127 : vector<16x128xf32>
    %1129 = vector.extract_strided_slice %1128 {offsets = [0, 0], sizes = [16, 96], strides = [1, 1]} : vector<16x128xf32> to vector<16x96xf32>
    %1130 = arith.negf %1129 : vector<16x96xf32>
    %1131 = math.exp %1130 : vector<16x96xf32>
    %cst_283 = arith.constant 1.000000e+00 : f32
    %1132 = vector.broadcast %cst_283 : f32 to vector<16x96xf32>
    %1133 = arith.addf %1132, %1131 : vector<16x96xf32>
    %1134 = arith.divf %1132, %1133 : vector<16x96xf32>
    %1135 = vector.extract_strided_slice %1134 {offsets = [0, 0], sizes = [16, 32], strides = [1, 1]} : vector<16x96xf32> to vector<16x32xf32>
    %1136 = vector.extract_strided_slice %1134 {offsets = [0, 32], sizes = [16, 32], strides = [1, 1]} : vector<16x96xf32> to vector<16x32xf32>
    %1137 = vector.extract_strided_slice %1134 {offsets = [0, 64], sizes = [16, 32], strides = [1, 1]} : vector<16x96xf32> to vector<16x32xf32>
    %1138 = vector.extract_strided_slice %1128 {offsets = [0, 96], sizes = [16, 32], strides = [1, 1]} : vector<16x128xf32> to vector<16x32xf32>
    %1139 = math.tanh %1138 : vector<16x32xf32>
    %1140 = arith.mulf %1136, %1116 : vector<16x32xf32>
    %1141 = arith.mulf %1135, %1139 : vector<16x32xf32>
    %1142 = arith.addf %1140, %1141 : vector<16x32xf32>
    %1143 = math.tanh %1142 : vector<16x32xf32>
    %1144 = arith.mulf %1137, %1143 : vector<16x32xf32>
    %1145 = arith.truncf %1144 : vector<16x32xf32> to vector<16x32xbf16>
    %1146 = arith.index_cast %1123 : i32 to index
    %c0_284 = arith.constant 0 : index
    %1147 = vector.load %arg13[%1146, %c0_284] : memref<128x32xbf16, #tpu.memory_space<vmem>>, vector<16x32xbf16>
    tpu.vector_store %arg13[%1146, %c0_284], %1145 {strides = array<i32>} : memref<128x32xbf16, #tpu.memory_space<vmem>>, vector<16x32xbf16>,
    %c2_i32_285 = arith.constant 2 : i32
    %c16_i32_286 = arith.constant 16 : i32
    %1148 = arith.muli %c2_i32_285, %c16_i32_286 : i32
    %1149 = tpu.assume_multiple %1148, 16 : i32
    %1150 = arith.index_cast %1149 : i32 to index
    %c0_287 = arith.constant 0 : index
    %1151 = vector.load %arg7[%1150, %c0_287] : memref<128x128xf32, #tpu.memory_space<vmem>>, vector<16x128xf32>
    %1152 = arith.truncf %1144 : vector<16x32xf32> to vector<16x32xbf16>
    %cst_288 = arith.constant dense<0.000000e+00> : vector<16x128xf32>
    %1153 = tpu.matmul %1152, %1095, %cst_288 {dimension_numbers = #tpu.dot_dimension_numbers<[1], [0], [0], [1], [0, 0, 1, 1], [], []>} : vector<16x32xbf16>, vector<32x128xbf16>, vector<16x128xf32> -> vector<16x128xf32>
    %1154 = arith.addf %1151, %1153 : vector<16x128xf32>
    %1155 = vector.extract_strided_slice %1154 {offsets = [0, 0], sizes = [16, 96], strides = [1, 1]} : vector<16x128xf32> to vector<16x96xf32>
    %1156 = arith.negf %1155 : vector<16x96xf32>
    %1157 = math.exp %1156 : vector<16x96xf32>
    %cst_289 = arith.constant 1.000000e+00 : f32
    %1158 = vector.broadcast %cst_289 : f32 to vector<16x96xf32>
    %1159 = arith.addf %1158, %1157 : vector<16x96xf32>
    %1160 = arith.divf %1158, %1159 : vector<16x96xf32>
    %1161 = vector.extract_strided_slice %1160 {offsets = [0, 0], sizes = [16, 32], strides = [1, 1]} : vector<16x96xf32> to vector<16x32xf32>
    %1162 = vector.extract_strided_slice %1160 {offsets = [0, 32], sizes = [16, 32], strides = [1, 1]} : vector<16x96xf32> to vector<16x32xf32>
    %1163 = vector.extract_strided_slice %1160 {offsets = [0, 64], sizes = [16, 32], strides = [1, 1]} : vector<16x96xf32> to vector<16x32xf32>
    %1164 = vector.extract_strided_slice %1154 {offsets = [0, 96], sizes = [16, 32], strides = [1, 1]} : vector<16x128xf32> to vector<16x32xf32>
    %1165 = math.tanh %1164 : vector<16x32xf32>
    %1166 = arith.mulf %1162, %1142 : vector<16x32xf32>
    %1167 = arith.mulf %1161, %1165 : vector<16x32xf32>
    %1168 = arith.addf %1166, %1167 : vector<16x32xf32>
    %1169 = math.tanh %1168 : vector<16x32xf32>
    %1170 = arith.mulf %1163, %1169 : vector<16x32xf32>
    %1171 = arith.truncf %1170 : vector<16x32xf32> to vector<16x32xbf16>
    %1172 = arith.index_cast %1149 : i32 to index
    %c0_290 = arith.constant 0 : index
    %1173 = vector.load %arg13[%1172, %c0_290] : memref<128x32xbf16, #tpu.memory_space<vmem>>, vector<16x32xbf16>
    tpu.vector_store %arg13[%1172, %c0_290], %1171 {strides = array<i32>} : memref<128x32xbf16, #tpu.memory_space<vmem>>, vector<16x32xbf16>,
    %c3_i32_291 = arith.constant 3 : i32
    %c16_i32_292 = arith.constant 16 : i32
    %1174 = arith.muli %c3_i32_291, %c16_i32_292 : i32
    %1175 = tpu.assume_multiple %1174, 16 : i32
    %1176 = arith.index_cast %1175 : i32 to index
    %c0_293 = arith.constant 0 : index
    %1177 = vector.load %arg7[%1176, %c0_293] : memref<128x128xf32, #tpu.memory_space<vmem>>, vector<16x128xf32>
    %1178 = arith.truncf %1170 : vector<16x32xf32> to vector<16x32xbf16>
    %cst_294 = arith.constant dense<0.000000e+00> : vector<16x128xf32>
    %1179 = tpu.matmul %1178, %1095, %cst_294 {dimension_numbers = #tpu.dot_dimension_numbers<[1], [0], [0], [1], [0, 0, 1, 1], [], []>} : vector<16x32xbf16>, vector<32x128xbf16>, vector<16x128xf32> -> vector<16x128xf32>
    %1180 = arith.addf %1177, %1179 : vector<16x128xf32>
    %1181 = vector.extract_strided_slice %1180 {offsets = [0, 0], sizes = [16, 96], strides = [1, 1]} : vector<16x128xf32> to vector<16x96xf32>
    %1182 = arith.negf %1181 : vector<16x96xf32>
    %1183 = math.exp %1182 : vector<16x96xf32>
    %cst_295 = arith.constant 1.000000e+00 : f32
    %1184 = vector.broadcast %cst_295 : f32 to vector<16x96xf32>
    %1185 = arith.addf %1184, %1183 : vector<16x96xf32>
    %1186 = arith.divf %1184, %1185 : vector<16x96xf32>
    %1187 = vector.extract_strided_slice %1186 {offsets = [0, 0], sizes = [16, 32], strides = [1, 1]} : vector<16x96xf32> to vector<16x32xf32>
    %1188 = vector.extract_strided_slice %1186 {offsets = [0, 32], sizes = [16, 32], strides = [1, 1]} : vector<16x96xf32> to vector<16x32xf32>
    %1189 = vector.extract_strided_slice %1186 {offsets = [0, 64], sizes = [16, 32], strides = [1, 1]} : vector<16x96xf32> to vector<16x32xf32>
    %1190 = vector.extract_strided_slice %1180 {offsets = [0, 96], sizes = [16, 32], strides = [1, 1]} : vector<16x128xf32> to vector<16x32xf32>
    %1191 = math.tanh %1190 : vector<16x32xf32>
    %1192 = arith.mulf %1188, %1168 : vector<16x32xf32>
    %1193 = arith.mulf %1187, %1191 : vector<16x32xf32>
    %1194 = arith.addf %1192, %1193 : vector<16x32xf32>
    %1195 = math.tanh %1194 : vector<16x32xf32>
    %1196 = arith.mulf %1189, %1195 : vector<16x32xf32>
    %1197 = arith.truncf %1196 : vector<16x32xf32> to vector<16x32xbf16>
    %1198 = arith.index_cast %1175 : i32 to index
    %c0_296 = arith.constant 0 : index
    %1199 = vector.load %arg13[%1198, %c0_296] : memref<128x32xbf16, #tpu.memory_space<vmem>>, vector<16x32xbf16>
    tpu.vector_store %arg13[%1198, %c0_296], %1197 {strides = array<i32>} : memref<128x32xbf16, #tpu.memory_space<vmem>>, vector<16x32xbf16>,
    %c4_i32_297 = arith.constant 4 : i32
    %c16_i32_298 = arith.constant 16 : i32
    %1200 = arith.muli %c4_i32_297, %c16_i32_298 : i32
    %1201 = tpu.assume_multiple %1200, 16 : i32
    %1202 = arith.index_cast %1201 : i32 to index
    %c0_299 = arith.constant 0 : index
    %1203 = vector.load %arg7[%1202, %c0_299] : memref<128x128xf32, #tpu.memory_space<vmem>>, vector<16x128xf32>
    %1204 = arith.truncf %1196 : vector<16x32xf32> to vector<16x32xbf16>
    %cst_300 = arith.constant dense<0.000000e+00> : vector<16x128xf32>
    %1205 = tpu.matmul %1204, %1095, %cst_300 {dimension_numbers = #tpu.dot_dimension_numbers<[1], [0], [0], [1], [0, 0, 1, 1], [], []>} : vector<16x32xbf16>, vector<32x128xbf16>, vector<16x128xf32> -> vector<16x128xf32>
    %1206 = arith.addf %1203, %1205 : vector<16x128xf32>
    %1207 = vector.extract_strided_slice %1206 {offsets = [0, 0], sizes = [16, 96], strides = [1, 1]} : vector<16x128xf32> to vector<16x96xf32>
    %1208 = arith.negf %1207 : vector<16x96xf32>
    %1209 = math.exp %1208 : vector<16x96xf32>
    %cst_301 = arith.constant 1.000000e+00 : f32
    %1210 = vector.broadcast %cst_301 : f32 to vector<16x96xf32>
    %1211 = arith.addf %1210, %1209 : vector<16x96xf32>
    %1212 = arith.divf %1210, %1211 : vector<16x96xf32>
    %1213 = vector.extract_strided_slice %1212 {offsets = [0, 0], sizes = [16, 32], strides = [1, 1]} : vector<16x96xf32> to vector<16x32xf32>
    %1214 = vector.extract_strided_slice %1212 {offsets = [0, 32], sizes = [16, 32], strides = [1, 1]} : vector<16x96xf32> to vector<16x32xf32>
    %1215 = vector.extract_strided_slice %1212 {offsets = [0, 64], sizes = [16, 32], strides = [1, 1]} : vector<16x96xf32> to vector<16x32xf32>
    %1216 = vector.extract_strided_slice %1206 {offsets = [0, 96], sizes = [16, 32], strides = [1, 1]} : vector<16x128xf32> to vector<16x32xf32>
    %1217 = math.tanh %1216 : vector<16x32xf32>
    %1218 = arith.mulf %1214, %1194 : vector<16x32xf32>
    %1219 = arith.mulf %1213, %1217 : vector<16x32xf32>
    %1220 = arith.addf %1218, %1219 : vector<16x32xf32>
    %1221 = math.tanh %1220 : vector<16x32xf32>
    %1222 = arith.mulf %1215, %1221 : vector<16x32xf32>
    %1223 = arith.truncf %1222 : vector<16x32xf32> to vector<16x32xbf16>
    %1224 = arith.index_cast %1201 : i32 to index
    %c0_302 = arith.constant 0 : index
    %1225 = vector.load %arg13[%1224, %c0_302] : memref<128x32xbf16, #tpu.memory_space<vmem>>, vector<16x32xbf16>
    tpu.vector_store %arg13[%1224, %c0_302], %1223 {strides = array<i32>} : memref<128x32xbf16, #tpu.memory_space<vmem>>, vector<16x32xbf16>,
    %c5_i32_303 = arith.constant 5 : i32
    %c16_i32_304 = arith.constant 16 : i32
    %1226 = arith.muli %c5_i32_303, %c16_i32_304 : i32
    %1227 = tpu.assume_multiple %1226, 16 : i32
    %1228 = arith.index_cast %1227 : i32 to index
    %c0_305 = arith.constant 0 : index
    %1229 = vector.load %arg7[%1228, %c0_305] : memref<128x128xf32, #tpu.memory_space<vmem>>, vector<16x128xf32>
    %1230 = arith.truncf %1222 : vector<16x32xf32> to vector<16x32xbf16>
    %cst_306 = arith.constant dense<0.000000e+00> : vector<16x128xf32>
    %1231 = tpu.matmul %1230, %1095, %cst_306 {dimension_numbers = #tpu.dot_dimension_numbers<[1], [0], [0], [1], [0, 0, 1, 1], [], []>} : vector<16x32xbf16>, vector<32x128xbf16>, vector<16x128xf32> -> vector<16x128xf32>
    %1232 = arith.addf %1229, %1231 : vector<16x128xf32>
    %1233 = vector.extract_strided_slice %1232 {offsets = [0, 0], sizes = [16, 96], strides = [1, 1]} : vector<16x128xf32> to vector<16x96xf32>
    %1234 = arith.negf %1233 : vector<16x96xf32>
    %1235 = math.exp %1234 : vector<16x96xf32>
    %cst_307 = arith.constant 1.000000e+00 : f32
    %1236 = vector.broadcast %cst_307 : f32 to vector<16x96xf32>
    %1237 = arith.addf %1236, %1235 : vector<16x96xf32>
    %1238 = arith.divf %1236, %1237 : vector<16x96xf32>
    %1239 = vector.extract_strided_slice %1238 {offsets = [0, 0], sizes = [16, 32], strides = [1, 1]} : vector<16x96xf32> to vector<16x32xf32>
    %1240 = vector.extract_strided_slice %1238 {offsets = [0, 32], sizes = [16, 32], strides = [1, 1]} : vector<16x96xf32> to vector<16x32xf32>
    %1241 = vector.extract_strided_slice %1238 {offsets = [0, 64], sizes = [16, 32], strides = [1, 1]} : vector<16x96xf32> to vector<16x32xf32>
    %1242 = vector.extract_strided_slice %1232 {offsets = [0, 96], sizes = [16, 32], strides = [1, 1]} : vector<16x128xf32> to vector<16x32xf32>
    %1243 = math.tanh %1242 : vector<16x32xf32>
    %1244 = arith.mulf %1240, %1220 : vector<16x32xf32>
    %1245 = arith.mulf %1239, %1243 : vector<16x32xf32>
    %1246 = arith.addf %1244, %1245 : vector<16x32xf32>
    %1247 = math.tanh %1246 : vector<16x32xf32>
    %1248 = arith.mulf %1241, %1247 : vector<16x32xf32>
    %1249 = arith.truncf %1248 : vector<16x32xf32> to vector<16x32xbf16>
    %1250 = arith.index_cast %1227 : i32 to index
    %c0_308 = arith.constant 0 : index
    %1251 = vector.load %arg13[%1250, %c0_308] : memref<128x32xbf16, #tpu.memory_space<vmem>>, vector<16x32xbf16>
    tpu.vector_store %arg13[%1250, %c0_308], %1249 {strides = array<i32>} : memref<128x32xbf16, #tpu.memory_space<vmem>>, vector<16x32xbf16>,
    %c6_i32_309 = arith.constant 6 : i32
    %c16_i32_310 = arith.constant 16 : i32
    %1252 = arith.muli %c6_i32_309, %c16_i32_310 : i32
    %1253 = tpu.assume_multiple %1252, 16 : i32
    %1254 = arith.index_cast %1253 : i32 to index
    %c0_311 = arith.constant 0 : index
    %1255 = vector.load %arg7[%1254, %c0_311] : memref<128x128xf32, #tpu.memory_space<vmem>>, vector<16x128xf32>
    %1256 = arith.truncf %1248 : vector<16x32xf32> to vector<16x32xbf16>
    %cst_312 = arith.constant dense<0.000000e+00> : vector<16x128xf32>
    %1257 = tpu.matmul %1256, %1095, %cst_312 {dimension_numbers = #tpu.dot_dimension_numbers<[1], [0], [0], [1], [0, 0, 1, 1], [], []>} : vector<16x32xbf16>, vector<32x128xbf16>, vector<16x128xf32> -> vector<16x128xf32>
    %1258 = arith.addf %1255, %1257 : vector<16x128xf32>
    %1259 = vector.extract_strided_slice %1258 {offsets = [0, 0], sizes = [16, 96], strides = [1, 1]} : vector<16x128xf32> to vector<16x96xf32>
    %1260 = arith.negf %1259 : vector<16x96xf32>
    %1261 = math.exp %1260 : vector<16x96xf32>
    %cst_313 = arith.constant 1.000000e+00 : f32
    %1262 = vector.broadcast %cst_313 : f32 to vector<16x96xf32>
    %1263 = arith.addf %1262, %1261 : vector<16x96xf32>
    %1264 = arith.divf %1262, %1263 : vector<16x96xf32>
    %1265 = vector.extract_strided_slice %1264 {offsets = [0, 0], sizes = [16, 32], strides = [1, 1]} : vector<16x96xf32> to vector<16x32xf32>
    %1266 = vector.extract_strided_slice %1264 {offsets = [0, 32], sizes = [16, 32], strides = [1, 1]} : vector<16x96xf32> to vector<16x32xf32>
    %1267 = vector.extract_strided_slice %1264 {offsets = [0, 64], sizes = [16, 32], strides = [1, 1]} : vector<16x96xf32> to vector<16x32xf32>
    %1268 = vector.extract_strided_slice %1258 {offsets = [0, 96], sizes = [16, 32], strides = [1, 1]} : vector<16x128xf32> to vector<16x32xf32>
    %1269 = math.tanh %1268 : vector<16x32xf32>
    %1270 = arith.mulf %1266, %1246 : vector<16x32xf32>
    %1271 = arith.mulf %1265, %1269 : vector<16x32xf32>
    %1272 = arith.addf %1270, %1271 : vector<16x32xf32>
    %1273 = math.tanh %1272 : vector<16x32xf32>
    %1274 = arith.mulf %1267, %1273 : vector<16x32xf32>
    %1275 = arith.truncf %1274 : vector<16x32xf32> to vector<16x32xbf16>
    %1276 = arith.index_cast %1253 : i32 to index
    %c0_314 = arith.constant 0 : index
    %1277 = vector.load %arg13[%1276, %c0_314] : memref<128x32xbf16, #tpu.memory_space<vmem>>, vector<16x32xbf16>
    tpu.vector_store %arg13[%1276, %c0_314], %1275 {strides = array<i32>} : memref<128x32xbf16, #tpu.memory_space<vmem>>, vector<16x32xbf16>,
    %c7_i32_315 = arith.constant 7 : i32
    %c16_i32_316 = arith.constant 16 : i32
    %1278 = arith.muli %c7_i32_315, %c16_i32_316 : i32
    %1279 = tpu.assume_multiple %1278, 16 : i32
    %1280 = arith.index_cast %1279 : i32 to index
    %c0_317 = arith.constant 0 : index
    %1281 = vector.load %arg7[%1280, %c0_317] : memref<128x128xf32, #tpu.memory_space<vmem>>, vector<16x128xf32>
    %1282 = arith.truncf %1274 : vector<16x32xf32> to vector<16x32xbf16>
    %cst_318 = arith.constant dense<0.000000e+00> : vector<16x128xf32>
    %1283 = tpu.matmul %1282, %1095, %cst_318 {dimension_numbers = #tpu.dot_dimension_numbers<[1], [0], [0], [1], [0, 0, 1, 1], [], []>} : vector<16x32xbf16>, vector<32x128xbf16>, vector<16x128xf32> -> vector<16x128xf32>
    %1284 = arith.addf %1281, %1283 : vector<16x128xf32>
    %1285 = vector.extract_strided_slice %1284 {offsets = [0, 0], sizes = [16, 96], strides = [1, 1]} : vector<16x128xf32> to vector<16x96xf32>
    %1286 = arith.negf %1285 : vector<16x96xf32>
    %1287 = math.exp %1286 : vector<16x96xf32>
    %cst_319 = arith.constant 1.000000e+00 : f32
    %1288 = vector.broadcast %cst_319 : f32 to vector<16x96xf32>
    %1289 = arith.addf %1288, %1287 : vector<16x96xf32>
    %1290 = arith.divf %1288, %1289 : vector<16x96xf32>
    %1291 = vector.extract_strided_slice %1290 {offsets = [0, 0], sizes = [16, 32], strides = [1, 1]} : vector<16x96xf32> to vector<16x32xf32>
    %1292 = vector.extract_strided_slice %1290 {offsets = [0, 32], sizes = [16, 32], strides = [1, 1]} : vector<16x96xf32> to vector<16x32xf32>
    %1293 = vector.extract_strided_slice %1290 {offsets = [0, 64], sizes = [16, 32], strides = [1, 1]} : vector<16x96xf32> to vector<16x32xf32>
    %1294 = vector.extract_strided_slice %1284 {offsets = [0, 96], sizes = [16, 32], strides = [1, 1]} : vector<16x128xf32> to vector<16x32xf32>
    %1295 = math.tanh %1294 : vector<16x32xf32>
    %1296 = arith.mulf %1292, %1272 : vector<16x32xf32>
    %1297 = arith.mulf %1291, %1295 : vector<16x32xf32>
    %1298 = arith.addf %1296, %1297 : vector<16x32xf32>
    %1299 = math.tanh %1298 : vector<16x32xf32>
    %1300 = arith.mulf %1293, %1299 : vector<16x32xf32>
    %1301 = arith.truncf %1300 : vector<16x32xf32> to vector<16x32xbf16>
    %1302 = arith.index_cast %1279 : i32 to index
    %c0_320 = arith.constant 0 : index
    %1303 = vector.load %arg13[%1302, %c0_320] : memref<128x32xbf16, #tpu.memory_space<vmem>>, vector<16x32xbf16>
    tpu.vector_store %arg13[%1302, %c0_320], %1301 {strides = array<i32>} : memref<128x32xbf16, #tpu.memory_space<vmem>>, vector<16x32xbf16>,
    %c8_i32_321 = arith.constant 8 : i32
    %c0_322 = arith.constant 0 : index
    %c0_323 = arith.constant 0 : index
    %1304 = vector.load %arg13[%c0_322, %c0_323] : memref<128x32xbf16, #tpu.memory_space<vmem>>, vector<128x32xbf16>
    %c320 = arith.constant 320 : index
    %c0_324 = arith.constant 0 : index
    %1305 = vector.load %arg2[%c320, %c0_324] : memref<512x256xbf16, #tpu.memory_space<vmem>>, vector<32x128xbf16>
    %cst_325 = arith.constant dense<0.000000e+00> : vector<128x128xf32>
    %1306 = tpu.matmul %1304, %1305, %cst_325 {dimension_numbers = #tpu.dot_dimension_numbers<[1], [0], [0], [1], [0, 0, 1, 1], [], []>} : vector<128x32xbf16>, vector<32x128xbf16>, vector<128x128xf32> -> vector<128x128xf32>
    %c32 = arith.constant 32 : index
    %c0_326 = arith.constant 0 : index
    %1307 = vector.load %arg3[%c32, %c0_326] : memref<64x256xf32, #tpu.memory_space<vmem>>, vector<1x128xf32>
    %1308 = vector.broadcast %1307 : vector<1x128xf32> to vector<128x128xf32>
    %1309 = arith.addf %1306, %1308 : vector<128x128xf32>
    %c0_327 = arith.constant 0 : index
    %c0_328 = arith.constant 0 : index
    %1310 = vector.load %arg6[%c0_327, %c0_328] : memref<128x128xf32, #tpu.memory_space<vmem>>, vector<128x128xf32>
    tpu.vector_store %arg6[%c0_327, %c0_328], %1309 {strides = array<i32>} : memref<128x128xf32, #tpu.memory_space<vmem>>, vector<128x128xf32>,
    %c352 = arith.constant 352 : index
    %c0_329 = arith.constant 0 : index
    %1311 = vector.load %arg2[%c352, %c0_329] : memref<512x256xbf16, #tpu.memory_space<vmem>>, vector<32x128xbf16>
    %c0_i32_330 = arith.constant 0 : i32
    %c16_i32_331 = arith.constant 16 : i32
    %1312 = arith.muli %c0_i32_330, %c16_i32_331 : i32
    %1313 = tpu.assume_multiple %1312, 16 : i32
    %1314 = arith.index_cast %1313 : i32 to index
    %c0_332 = arith.constant 0 : index
    %1315 = vector.load %arg6[%1314, %c0_332] : memref<128x128xf32, #tpu.memory_space<vmem>>, vector<16x128xf32>
    %1316 = arith.truncf %853 : vector<16x32xf32> to vector<16x32xbf16>
    %cst_333 = arith.constant dense<0.000000e+00> : vector<16x128xf32>
    %1317 = tpu.matmul %1316, %1311, %cst_333 {dimension_numbers = #tpu.dot_dimension_numbers<[1], [0], [0], [1], [0, 0, 1, 1], [], []>} : vector<16x32xbf16>, vector<32x128xbf16>, vector<16x128xf32> -> vector<16x128xf32>
    %1318 = arith.addf %1315, %1317 : vector<16x128xf32>
    %1319 = vector.extract_strided_slice %1318 {offsets = [0, 0], sizes = [16, 96], strides = [1, 1]} : vector<16x128xf32> to vector<16x96xf32>
    %1320 = arith.negf %1319 : vector<16x96xf32>
    %1321 = math.exp %1320 : vector<16x96xf32>
    %cst_334 = arith.constant 1.000000e+00 : f32
    %1322 = vector.broadcast %cst_334 : f32 to vector<16x96xf32>
    %1323 = arith.addf %1322, %1321 : vector<16x96xf32>
    %1324 = arith.divf %1322, %1323 : vector<16x96xf32>
    %1325 = vector.extract_strided_slice %1324 {offsets = [0, 0], sizes = [16, 32], strides = [1, 1]} : vector<16x96xf32> to vector<16x32xf32>
    %1326 = vector.extract_strided_slice %1324 {offsets = [0, 32], sizes = [16, 32], strides = [1, 1]} : vector<16x96xf32> to vector<16x32xf32>
    %1327 = vector.extract_strided_slice %1324 {offsets = [0, 64], sizes = [16, 32], strides = [1, 1]} : vector<16x96xf32> to vector<16x32xf32>
    %1328 = vector.extract_strided_slice %1318 {offsets = [0, 96], sizes = [16, 32], strides = [1, 1]} : vector<16x128xf32> to vector<16x32xf32>
    %1329 = math.tanh %1328 : vector<16x32xf32>
    %1330 = arith.mulf %1326, %851 : vector<16x32xf32>
    %1331 = arith.mulf %1325, %1329 : vector<16x32xf32>
    %1332 = arith.addf %1330, %1331 : vector<16x32xf32>
    %1333 = math.tanh %1332 : vector<16x32xf32>
    %1334 = arith.mulf %1327, %1333 : vector<16x32xf32>
    %1335 = arith.truncf %1334 : vector<16x32xf32> to vector<16x32xbf16>
    %1336 = arith.index_cast %1313 : i32 to index
    %c0_335 = arith.constant 0 : index
    %1337 = vector.load %arg12[%1336, %c0_335] : memref<128x32xbf16, #tpu.memory_space<vmem>>, vector<16x32xbf16>
    tpu.vector_store %arg12[%1336, %c0_335], %1335 {strides = array<i32>} : memref<128x32xbf16, #tpu.memory_space<vmem>>, vector<16x32xbf16>,
    %c1_i32_336 = arith.constant 1 : i32
    %c16_i32_337 = arith.constant 16 : i32
    %1338 = arith.muli %c1_i32_336, %c16_i32_337 : i32
    %1339 = tpu.assume_multiple %1338, 16 : i32
    %1340 = arith.index_cast %1339 : i32 to index
    %c0_338 = arith.constant 0 : index
    %1341 = vector.load %arg6[%1340, %c0_338] : memref<128x128xf32, #tpu.memory_space<vmem>>, vector<16x128xf32>
    %1342 = arith.truncf %1334 : vector<16x32xf32> to vector<16x32xbf16>
    %cst_339 = arith.constant dense<0.000000e+00> : vector<16x128xf32>
    %1343 = tpu.matmul %1342, %1311, %cst_339 {dimension_numbers = #tpu.dot_dimension_numbers<[1], [0], [0], [1], [0, 0, 1, 1], [], []>} : vector<16x32xbf16>, vector<32x128xbf16>, vector<16x128xf32> -> vector<16x128xf32>
    %1344 = arith.addf %1341, %1343 : vector<16x128xf32>
    %1345 = vector.extract_strided_slice %1344 {offsets = [0, 0], sizes = [16, 96], strides = [1, 1]} : vector<16x128xf32> to vector<16x96xf32>
    %1346 = arith.negf %1345 : vector<16x96xf32>
    %1347 = math.exp %1346 : vector<16x96xf32>
    %cst_340 = arith.constant 1.000000e+00 : f32
    %1348 = vector.broadcast %cst_340 : f32 to vector<16x96xf32>
    %1349 = arith.addf %1348, %1347 : vector<16x96xf32>
    %1350 = arith.divf %1348, %1349 : vector<16x96xf32>
    %1351 = vector.extract_strided_slice %1350 {offsets = [0, 0], sizes = [16, 32], strides = [1, 1]} : vector<16x96xf32> to vector<16x32xf32>
    %1352 = vector.extract_strided_slice %1350 {offsets = [0, 32], sizes = [16, 32], strides = [1, 1]} : vector<16x96xf32> to vector<16x32xf32>
    %1353 = vector.extract_strided_slice %1350 {offsets = [0, 64], sizes = [16, 32], strides = [1, 1]} : vector<16x96xf32> to vector<16x32xf32>
    %1354 = vector.extract_strided_slice %1344 {offsets = [0, 96], sizes = [16, 32], strides = [1, 1]} : vector<16x128xf32> to vector<16x32xf32>
    %1355 = math.tanh %1354 : vector<16x32xf32>
    %1356 = arith.mulf %1352, %1332 : vector<16x32xf32>
    %1357 = arith.mulf %1351, %1355 : vector<16x32xf32>
    %1358 = arith.addf %1356, %1357 : vector<16x32xf32>
    %1359 = math.tanh %1358 : vector<16x32xf32>
    %1360 = arith.mulf %1353, %1359 : vector<16x32xf32>
    %1361 = arith.truncf %1360 : vector<16x32xf32> to vector<16x32xbf16>
    %1362 = arith.index_cast %1339 : i32 to index
    %c0_341 = arith.constant 0 : index
    %1363 = vector.load %arg12[%1362, %c0_341] : memref<128x32xbf16, #tpu.memory_space<vmem>>, vector<16x32xbf16>
    tpu.vector_store %arg12[%1362, %c0_341], %1361 {strides = array<i32>} : memref<128x32xbf16, #tpu.memory_space<vmem>>, vector<16x32xbf16>,
    %c2_i32_342 = arith.constant 2 : i32
    %c16_i32_343 = arith.constant 16 : i32
    %1364 = arith.muli %c2_i32_342, %c16_i32_343 : i32
    %1365 = tpu.assume_multiple %1364, 16 : i32
    %1366 = arith.index_cast %1365 : i32 to index
    %c0_344 = arith.constant 0 : index
    %1367 = vector.load %arg6[%1366, %c0_344] : memref<128x128xf32, #tpu.memory_space<vmem>>, vector<16x128xf32>
    %1368 = arith.truncf %1360 : vector<16x32xf32> to vector<16x32xbf16>
    %cst_345 = arith.constant dense<0.000000e+00> : vector<16x128xf32>
    %1369 = tpu.matmul %1368, %1311, %cst_345 {dimension_numbers = #tpu.dot_dimension_numbers<[1], [0], [0], [1], [0, 0, 1, 1], [], []>} : vector<16x32xbf16>, vector<32x128xbf16>, vector<16x128xf32> -> vector<16x128xf32>
    %1370 = arith.addf %1367, %1369 : vector<16x128xf32>
    %1371 = vector.extract_strided_slice %1370 {offsets = [0, 0], sizes = [16, 96], strides = [1, 1]} : vector<16x128xf32> to vector<16x96xf32>
    %1372 = arith.negf %1371 : vector<16x96xf32>
    %1373 = math.exp %1372 : vector<16x96xf32>
    %cst_346 = arith.constant 1.000000e+00 : f32
    %1374 = vector.broadcast %cst_346 : f32 to vector<16x96xf32>
    %1375 = arith.addf %1374, %1373 : vector<16x96xf32>
    %1376 = arith.divf %1374, %1375 : vector<16x96xf32>
    %1377 = vector.extract_strided_slice %1376 {offsets = [0, 0], sizes = [16, 32], strides = [1, 1]} : vector<16x96xf32> to vector<16x32xf32>
    %1378 = vector.extract_strided_slice %1376 {offsets = [0, 32], sizes = [16, 32], strides = [1, 1]} : vector<16x96xf32> to vector<16x32xf32>
    %1379 = vector.extract_strided_slice %1376 {offsets = [0, 64], sizes = [16, 32], strides = [1, 1]} : vector<16x96xf32> to vector<16x32xf32>
    %1380 = vector.extract_strided_slice %1370 {offsets = [0, 96], sizes = [16, 32], strides = [1, 1]} : vector<16x128xf32> to vector<16x32xf32>
    %1381 = math.tanh %1380 : vector<16x32xf32>
    %1382 = arith.mulf %1378, %1358 : vector<16x32xf32>
    %1383 = arith.mulf %1377, %1381 : vector<16x32xf32>
    %1384 = arith.addf %1382, %1383 : vector<16x32xf32>
    %1385 = math.tanh %1384 : vector<16x32xf32>
    %1386 = arith.mulf %1379, %1385 : vector<16x32xf32>
    %1387 = arith.truncf %1386 : vector<16x32xf32> to vector<16x32xbf16>
    %1388 = arith.index_cast %1365 : i32 to index
    %c0_347 = arith.constant 0 : index
    %1389 = vector.load %arg12[%1388, %c0_347] : memref<128x32xbf16, #tpu.memory_space<vmem>>, vector<16x32xbf16>
    tpu.vector_store %arg12[%1388, %c0_347], %1387 {strides = array<i32>} : memref<128x32xbf16, #tpu.memory_space<vmem>>, vector<16x32xbf16>,
    %c3_i32_348 = arith.constant 3 : i32
    %c16_i32_349 = arith.constant 16 : i32
    %1390 = arith.muli %c3_i32_348, %c16_i32_349 : i32
    %1391 = tpu.assume_multiple %1390, 16 : i32
    %1392 = arith.index_cast %1391 : i32 to index
    %c0_350 = arith.constant 0 : index
    %1393 = vector.load %arg6[%1392, %c0_350] : memref<128x128xf32, #tpu.memory_space<vmem>>, vector<16x128xf32>
    %1394 = arith.truncf %1386 : vector<16x32xf32> to vector<16x32xbf16>
    %cst_351 = arith.constant dense<0.000000e+00> : vector<16x128xf32>
    %1395 = tpu.matmul %1394, %1311, %cst_351 {dimension_numbers = #tpu.dot_dimension_numbers<[1], [0], [0], [1], [0, 0, 1, 1], [], []>} : vector<16x32xbf16>, vector<32x128xbf16>, vector<16x128xf32> -> vector<16x128xf32>
    %1396 = arith.addf %1393, %1395 : vector<16x128xf32>
    %1397 = vector.extract_strided_slice %1396 {offsets = [0, 0], sizes = [16, 96], strides = [1, 1]} : vector<16x128xf32> to vector<16x96xf32>
    %1398 = arith.negf %1397 : vector<16x96xf32>
    %1399 = math.exp %1398 : vector<16x96xf32>
    %cst_352 = arith.constant 1.000000e+00 : f32
    %1400 = vector.broadcast %cst_352 : f32 to vector<16x96xf32>
    %1401 = arith.addf %1400, %1399 : vector<16x96xf32>
    %1402 = arith.divf %1400, %1401 : vector<16x96xf32>
    %1403 = vector.extract_strided_slice %1402 {offsets = [0, 0], sizes = [16, 32], strides = [1, 1]} : vector<16x96xf32> to vector<16x32xf32>
    %1404 = vector.extract_strided_slice %1402 {offsets = [0, 32], sizes = [16, 32], strides = [1, 1]} : vector<16x96xf32> to vector<16x32xf32>
    %1405 = vector.extract_strided_slice %1402 {offsets = [0, 64], sizes = [16, 32], strides = [1, 1]} : vector<16x96xf32> to vector<16x32xf32>
    %1406 = vector.extract_strided_slice %1396 {offsets = [0, 96], sizes = [16, 32], strides = [1, 1]} : vector<16x128xf32> to vector<16x32xf32>
    %1407 = math.tanh %1406 : vector<16x32xf32>
    %1408 = arith.mulf %1404, %1384 : vector<16x32xf32>
    %1409 = arith.mulf %1403, %1407 : vector<16x32xf32>
    %1410 = arith.addf %1408, %1409 : vector<16x32xf32>
    %1411 = math.tanh %1410 : vector<16x32xf32>
    %1412 = arith.mulf %1405, %1411 : vector<16x32xf32>
    %1413 = arith.truncf %1412 : vector<16x32xf32> to vector<16x32xbf16>
    %1414 = arith.index_cast %1391 : i32 to index
    %c0_353 = arith.constant 0 : index
    %1415 = vector.load %arg12[%1414, %c0_353] : memref<128x32xbf16, #tpu.memory_space<vmem>>, vector<16x32xbf16>
    tpu.vector_store %arg12[%1414, %c0_353], %1413 {strides = array<i32>} : memref<128x32xbf16, #tpu.memory_space<vmem>>, vector<16x32xbf16>,
    %c4_i32_354 = arith.constant 4 : i32
    %c16_i32_355 = arith.constant 16 : i32
    %1416 = arith.muli %c4_i32_354, %c16_i32_355 : i32
    %1417 = tpu.assume_multiple %1416, 16 : i32
    %1418 = arith.index_cast %1417 : i32 to index
    %c0_356 = arith.constant 0 : index
    %1419 = vector.load %arg6[%1418, %c0_356] : memref<128x128xf32, #tpu.memory_space<vmem>>, vector<16x128xf32>
    %1420 = arith.truncf %1412 : vector<16x32xf32> to vector<16x32xbf16>
    %cst_357 = arith.constant dense<0.000000e+00> : vector<16x128xf32>
    %1421 = tpu.matmul %1420, %1311, %cst_357 {dimension_numbers = #tpu.dot_dimension_numbers<[1], [0], [0], [1], [0, 0, 1, 1], [], []>} : vector<16x32xbf16>, vector<32x128xbf16>, vector<16x128xf32> -> vector<16x128xf32>
    %1422 = arith.addf %1419, %1421 : vector<16x128xf32>
    %1423 = vector.extract_strided_slice %1422 {offsets = [0, 0], sizes = [16, 96], strides = [1, 1]} : vector<16x128xf32> to vector<16x96xf32>
    %1424 = arith.negf %1423 : vector<16x96xf32>
    %1425 = math.exp %1424 : vector<16x96xf32>
    %cst_358 = arith.constant 1.000000e+00 : f32
    %1426 = vector.broadcast %cst_358 : f32 to vector<16x96xf32>
    %1427 = arith.addf %1426, %1425 : vector<16x96xf32>
    %1428 = arith.divf %1426, %1427 : vector<16x96xf32>
    %1429 = vector.extract_strided_slice %1428 {offsets = [0, 0], sizes = [16, 32], strides = [1, 1]} : vector<16x96xf32> to vector<16x32xf32>
    %1430 = vector.extract_strided_slice %1428 {offsets = [0, 32], sizes = [16, 32], strides = [1, 1]} : vector<16x96xf32> to vector<16x32xf32>
    %1431 = vector.extract_strided_slice %1428 {offsets = [0, 64], sizes = [16, 32], strides = [1, 1]} : vector<16x96xf32> to vector<16x32xf32>
    %1432 = vector.extract_strided_slice %1422 {offsets = [0, 96], sizes = [16, 32], strides = [1, 1]} : vector<16x128xf32> to vector<16x32xf32>
    %1433 = math.tanh %1432 : vector<16x32xf32>
    %1434 = arith.mulf %1430, %1410 : vector<16x32xf32>
    %1435 = arith.mulf %1429, %1433 : vector<16x32xf32>
    %1436 = arith.addf %1434, %1435 : vector<16x32xf32>
    %1437 = math.tanh %1436 : vector<16x32xf32>
    %1438 = arith.mulf %1431, %1437 : vector<16x32xf32>
    %1439 = arith.truncf %1438 : vector<16x32xf32> to vector<16x32xbf16>
    %1440 = arith.index_cast %1417 : i32 to index
    %c0_359 = arith.constant 0 : index
    %1441 = vector.load %arg12[%1440, %c0_359] : memref<128x32xbf16, #tpu.memory_space<vmem>>, vector<16x32xbf16>
    tpu.vector_store %arg12[%1440, %c0_359], %1439 {strides = array<i32>} : memref<128x32xbf16, #tpu.memory_space<vmem>>, vector<16x32xbf16>,
    %c5_i32_360 = arith.constant 5 : i32
    %c16_i32_361 = arith.constant 16 : i32
    %1442 = arith.muli %c5_i32_360, %c16_i32_361 : i32
    %1443 = tpu.assume_multiple %1442, 16 : i32
    %1444 = arith.index_cast %1443 : i32 to index
    %c0_362 = arith.constant 0 : index
    %1445 = vector.load %arg6[%1444, %c0_362] : memref<128x128xf32, #tpu.memory_space<vmem>>, vector<16x128xf32>
    %1446 = arith.truncf %1438 : vector<16x32xf32> to vector<16x32xbf16>
    %cst_363 = arith.constant dense<0.000000e+00> : vector<16x128xf32>
    %1447 = tpu.matmul %1446, %1311, %cst_363 {dimension_numbers = #tpu.dot_dimension_numbers<[1], [0], [0], [1], [0, 0, 1, 1], [], []>} : vector<16x32xbf16>, vector<32x128xbf16>, vector<16x128xf32> -> vector<16x128xf32>
    %1448 = arith.addf %1445, %1447 : vector<16x128xf32>
    %1449 = vector.extract_strided_slice %1448 {offsets = [0, 0], sizes = [16, 96], strides = [1, 1]} : vector<16x128xf32> to vector<16x96xf32>
    %1450 = arith.negf %1449 : vector<16x96xf32>
    %1451 = math.exp %1450 : vector<16x96xf32>
    %cst_364 = arith.constant 1.000000e+00 : f32
    %1452 = vector.broadcast %cst_364 : f32 to vector<16x96xf32>
    %1453 = arith.addf %1452, %1451 : vector<16x96xf32>
    %1454 = arith.divf %1452, %1453 : vector<16x96xf32>
    %1455 = vector.extract_strided_slice %1454 {offsets = [0, 0], sizes = [16, 32], strides = [1, 1]} : vector<16x96xf32> to vector<16x32xf32>
    %1456 = vector.extract_strided_slice %1454 {offsets = [0, 32], sizes = [16, 32], strides = [1, 1]} : vector<16x96xf32> to vector<16x32xf32>
    %1457 = vector.extract_strided_slice %1454 {offsets = [0, 64], sizes = [16, 32], strides = [1, 1]} : vector<16x96xf32> to vector<16x32xf32>
    %1458 = vector.extract_strided_slice %1448 {offsets = [0, 96], sizes = [16, 32], strides = [1, 1]} : vector<16x128xf32> to vector<16x32xf32>
    %1459 = math.tanh %1458 : vector<16x32xf32>
    %1460 = arith.mulf %1456, %1436 : vector<16x32xf32>
    %1461 = arith.mulf %1455, %1459 : vector<16x32xf32>
    %1462 = arith.addf %1460, %1461 : vector<16x32xf32>
    %1463 = math.tanh %1462 : vector<16x32xf32>
    %1464 = arith.mulf %1457, %1463 : vector<16x32xf32>
    %1465 = arith.truncf %1464 : vector<16x32xf32> to vector<16x32xbf16>
    %1466 = arith.index_cast %1443 : i32 to index
    %c0_365 = arith.constant 0 : index
    %1467 = vector.load %arg12[%1466, %c0_365] : memref<128x32xbf16, #tpu.memory_space<vmem>>, vector<16x32xbf16>
    tpu.vector_store %arg12[%1466, %c0_365], %1465 {strides = array<i32>} : memref<128x32xbf16, #tpu.memory_space<vmem>>, vector<16x32xbf16>,
    %c6_i32_366 = arith.constant 6 : i32
    %c16_i32_367 = arith.constant 16 : i32
    %1468 = arith.muli %c6_i32_366, %c16_i32_367 : i32
    %1469 = tpu.assume_multiple %1468, 16 : i32
    %1470 = arith.index_cast %1469 : i32 to index
    %c0_368 = arith.constant 0 : index
    %1471 = vector.load %arg6[%1470, %c0_368] : memref<128x128xf32, #tpu.memory_space<vmem>>, vector<16x128xf32>
    %1472 = arith.truncf %1464 : vector<16x32xf32> to vector<16x32xbf16>
    %cst_369 = arith.constant dense<0.000000e+00> : vector<16x128xf32>
    %1473 = tpu.matmul %1472, %1311, %cst_369 {dimension_numbers = #tpu.dot_dimension_numbers<[1], [0], [0], [1], [0, 0, 1, 1], [], []>} : vector<16x32xbf16>, vector<32x128xbf16>, vector<16x128xf32> -> vector<16x128xf32>
    %1474 = arith.addf %1471, %1473 : vector<16x128xf32>
    %1475 = vector.extract_strided_slice %1474 {offsets = [0, 0], sizes = [16, 96], strides = [1, 1]} : vector<16x128xf32> to vector<16x96xf32>
    %1476 = arith.negf %1475 : vector<16x96xf32>
    %1477 = math.exp %1476 : vector<16x96xf32>
    %cst_370 = arith.constant 1.000000e+00 : f32
    %1478 = vector.broadcast %cst_370 : f32 to vector<16x96xf32>
    %1479 = arith.addf %1478, %1477 : vector<16x96xf32>
    %1480 = arith.divf %1478, %1479 : vector<16x96xf32>
    %1481 = vector.extract_strided_slice %1480 {offsets = [0, 0], sizes = [16, 32], strides = [1, 1]} : vector<16x96xf32> to vector<16x32xf32>
    %1482 = vector.extract_strided_slice %1480 {offsets = [0, 32], sizes = [16, 32], strides = [1, 1]} : vector<16x96xf32> to vector<16x32xf32>
    %1483 = vector.extract_strided_slice %1480 {offsets = [0, 64], sizes = [16, 32], strides = [1, 1]} : vector<16x96xf32> to vector<16x32xf32>
    %1484 = vector.extract_strided_slice %1474 {offsets = [0, 96], sizes = [16, 32], strides = [1, 1]} : vector<16x128xf32> to vector<16x32xf32>
    %1485 = math.tanh %1484 : vector<16x32xf32>
    %1486 = arith.mulf %1482, %1462 : vector<16x32xf32>
    %1487 = arith.mulf %1481, %1485 : vector<16x32xf32>
    %1488 = arith.addf %1486, %1487 : vector<16x32xf32>
    %1489 = math.tanh %1488 : vector<16x32xf32>
    %1490 = arith.mulf %1483, %1489 : vector<16x32xf32>
    %1491 = arith.truncf %1490 : vector<16x32xf32> to vector<16x32xbf16>
    %1492 = arith.index_cast %1469 : i32 to index
    %c0_371 = arith.constant 0 : index
    %1493 = vector.load %arg12[%1492, %c0_371] : memref<128x32xbf16, #tpu.memory_space<vmem>>, vector<16x32xbf16>
    tpu.vector_store %arg12[%1492, %c0_371], %1491 {strides = array<i32>} : memref<128x32xbf16, #tpu.memory_space<vmem>>, vector<16x32xbf16>,
    %c7_i32_372 = arith.constant 7 : i32
    %c16_i32_373 = arith.constant 16 : i32
    %1494 = arith.muli %c7_i32_372, %c16_i32_373 : i32
    %1495 = tpu.assume_multiple %1494, 16 : i32
    %1496 = arith.index_cast %1495 : i32 to index
    %c0_374 = arith.constant 0 : index
    %1497 = vector.load %arg6[%1496, %c0_374] : memref<128x128xf32, #tpu.memory_space<vmem>>, vector<16x128xf32>
    %1498 = arith.truncf %1490 : vector<16x32xf32> to vector<16x32xbf16>
    %cst_375 = arith.constant dense<0.000000e+00> : vector<16x128xf32>
    %1499 = tpu.matmul %1498, %1311, %cst_375 {dimension_numbers = #tpu.dot_dimension_numbers<[1], [0], [0], [1], [0, 0, 1, 1], [], []>} : vector<16x32xbf16>, vector<32x128xbf16>, vector<16x128xf32> -> vector<16x128xf32>
    %1500 = arith.addf %1497, %1499 : vector<16x128xf32>
    %1501 = vector.extract_strided_slice %1500 {offsets = [0, 0], sizes = [16, 96], strides = [1, 1]} : vector<16x128xf32> to vector<16x96xf32>
    %1502 = arith.negf %1501 : vector<16x96xf32>
    %1503 = math.exp %1502 : vector<16x96xf32>
    %cst_376 = arith.constant 1.000000e+00 : f32
    %1504 = vector.broadcast %cst_376 : f32 to vector<16x96xf32>
    %1505 = arith.addf %1504, %1503 : vector<16x96xf32>
    %1506 = arith.divf %1504, %1505 : vector<16x96xf32>
    %1507 = vector.extract_strided_slice %1506 {offsets = [0, 0], sizes = [16, 32], strides = [1, 1]} : vector<16x96xf32> to vector<16x32xf32>
    %1508 = vector.extract_strided_slice %1506 {offsets = [0, 32], sizes = [16, 32], strides = [1, 1]} : vector<16x96xf32> to vector<16x32xf32>
    %1509 = vector.extract_strided_slice %1506 {offsets = [0, 64], sizes = [16, 32], strides = [1, 1]} : vector<16x96xf32> to vector<16x32xf32>
    %1510 = vector.extract_strided_slice %1500 {offsets = [0, 96], sizes = [16, 32], strides = [1, 1]} : vector<16x128xf32> to vector<16x32xf32>
    %1511 = math.tanh %1510 : vector<16x32xf32>
    %1512 = arith.mulf %1508, %1488 : vector<16x32xf32>
    %1513 = arith.mulf %1507, %1511 : vector<16x32xf32>
    %1514 = arith.addf %1512, %1513 : vector<16x32xf32>
    %1515 = math.tanh %1514 : vector<16x32xf32>
    %1516 = arith.mulf %1509, %1515 : vector<16x32xf32>
    %1517 = arith.truncf %1516 : vector<16x32xf32> to vector<16x32xbf16>
    %1518 = arith.index_cast %1495 : i32 to index
    %c0_377 = arith.constant 0 : index
    %1519 = vector.load %arg12[%1518, %c0_377] : memref<128x32xbf16, #tpu.memory_space<vmem>>, vector<16x32xbf16>
    tpu.vector_store %arg12[%1518, %c0_377], %1517 {strides = array<i32>} : memref<128x32xbf16, #tpu.memory_space<vmem>>, vector<16x32xbf16>,
    %c8_i32_378 = arith.constant 8 : i32
    %c0_379 = arith.constant 0 : index
    %c0_380 = arith.constant 0 : index
    %1520 = vector.load %arg12[%c0_379, %c0_380] : memref<128x32xbf16, #tpu.memory_space<vmem>>, vector<128x32xbf16>
    %c384 = arith.constant 384 : index
    %c0_381 = arith.constant 0 : index
    %1521 = vector.load %arg2[%c384, %c0_381] : memref<512x256xbf16, #tpu.memory_space<vmem>>, vector<32x128xbf16>
    %cst_382 = arith.constant dense<0.000000e+00> : vector<128x128xf32>
    %1522 = tpu.matmul %1520, %1521, %cst_382 {dimension_numbers = #tpu.dot_dimension_numbers<[1], [0], [0], [1], [0, 0, 1, 1], [], []>} : vector<128x32xbf16>, vector<32x128xbf16>, vector<128x128xf32> -> vector<128x128xf32>
    %c40 = arith.constant 40 : index
    %c0_383 = arith.constant 0 : index
    %1523 = vector.load %arg3[%c40, %c0_383] : memref<64x256xf32, #tpu.memory_space<vmem>>, vector<1x128xf32>
    %1524 = vector.broadcast %1523 : vector<1x128xf32> to vector<128x128xf32>
    %1525 = arith.addf %1522, %1524 : vector<128x128xf32>
    %c0_384 = arith.constant 0 : index
    %c0_385 = arith.constant 0 : index
    %1526 = vector.load %arg7[%c0_384, %c0_385] : memref<128x128xf32, #tpu.memory_space<vmem>>, vector<128x128xf32>
    tpu.vector_store %arg7[%c0_384, %c0_385], %1525 {strides = array<i32>} : memref<128x128xf32, #tpu.memory_space<vmem>>, vector<128x128xf32>,
    %c416 = arith.constant 416 : index
    %c0_386 = arith.constant 0 : index
    %1527 = vector.load %arg2[%c416, %c0_386] : memref<512x256xbf16, #tpu.memory_space<vmem>>, vector<32x128xbf16>
    %c0_i32_387 = arith.constant 0 : i32
    %c16_i32_388 = arith.constant 16 : i32
    %1528 = arith.muli %c0_i32_387, %c16_i32_388 : i32
    %1529 = tpu.assume_multiple %1528, 16 : i32
    %1530 = arith.index_cast %1529 : i32 to index
    %c0_389 = arith.constant 0 : index
    %1531 = vector.load %arg7[%1530, %c0_389] : memref<128x128xf32, #tpu.memory_space<vmem>>, vector<16x128xf32>
    %1532 = arith.truncf %872 : vector<16x32xf32> to vector<16x32xbf16>
    %cst_390 = arith.constant dense<0.000000e+00> : vector<16x128xf32>
    %1533 = tpu.matmul %1532, %1527, %cst_390 {dimension_numbers = #tpu.dot_dimension_numbers<[1], [0], [0], [1], [0, 0, 1, 1], [], []>} : vector<16x32xbf16>, vector<32x128xbf16>, vector<16x128xf32> -> vector<16x128xf32>
    %1534 = arith.addf %1531, %1533 : vector<16x128xf32>
    %1535 = vector.extract_strided_slice %1534 {offsets = [0, 0], sizes = [16, 96], strides = [1, 1]} : vector<16x128xf32> to vector<16x96xf32>
    %1536 = arith.negf %1535 : vector<16x96xf32>
    %1537 = math.exp %1536 : vector<16x96xf32>
    %cst_391 = arith.constant 1.000000e+00 : f32
    %1538 = vector.broadcast %cst_391 : f32 to vector<16x96xf32>
    %1539 = arith.addf %1538, %1537 : vector<16x96xf32>
    %1540 = arith.divf %1538, %1539 : vector<16x96xf32>
    %1541 = vector.extract_strided_slice %1540 {offsets = [0, 0], sizes = [16, 32], strides = [1, 1]} : vector<16x96xf32> to vector<16x32xf32>
    %1542 = vector.extract_strided_slice %1540 {offsets = [0, 32], sizes = [16, 32], strides = [1, 1]} : vector<16x96xf32> to vector<16x32xf32>
    %1543 = vector.extract_strided_slice %1540 {offsets = [0, 64], sizes = [16, 32], strides = [1, 1]} : vector<16x96xf32> to vector<16x32xf32>
    %1544 = vector.extract_strided_slice %1534 {offsets = [0, 96], sizes = [16, 32], strides = [1, 1]} : vector<16x128xf32> to vector<16x32xf32>
    %1545 = math.tanh %1544 : vector<16x32xf32>
    %1546 = arith.mulf %1542, %870 : vector<16x32xf32>
    %1547 = arith.mulf %1541, %1545 : vector<16x32xf32>
    %1548 = arith.addf %1546, %1547 : vector<16x32xf32>
    %1549 = math.tanh %1548 : vector<16x32xf32>
    %1550 = arith.mulf %1543, %1549 : vector<16x32xf32>
    %1551 = arith.truncf %1550 : vector<16x32xf32> to vector<16x32xbf16>
    %1552 = arith.index_cast %1529 : i32 to index
    %c0_392 = arith.constant 0 : index
    %1553 = vector.load %arg13[%1552, %c0_392] : memref<128x32xbf16, #tpu.memory_space<vmem>>, vector<16x32xbf16>
    tpu.vector_store %arg13[%1552, %c0_392], %1551 {strides = array<i32>} : memref<128x32xbf16, #tpu.memory_space<vmem>>, vector<16x32xbf16>,
    %c1_i32_393 = arith.constant 1 : i32
    %c16_i32_394 = arith.constant 16 : i32
    %1554 = arith.muli %c1_i32_393, %c16_i32_394 : i32
    %1555 = tpu.assume_multiple %1554, 16 : i32
    %1556 = arith.index_cast %1555 : i32 to index
    %c0_395 = arith.constant 0 : index
    %1557 = vector.load %arg7[%1556, %c0_395] : memref<128x128xf32, #tpu.memory_space<vmem>>, vector<16x128xf32>
    %1558 = arith.truncf %1550 : vector<16x32xf32> to vector<16x32xbf16>
    %cst_396 = arith.constant dense<0.000000e+00> : vector<16x128xf32>
    %1559 = tpu.matmul %1558, %1527, %cst_396 {dimension_numbers = #tpu.dot_dimension_numbers<[1], [0], [0], [1], [0, 0, 1, 1], [], []>} : vector<16x32xbf16>, vector<32x128xbf16>, vector<16x128xf32> -> vector<16x128xf32>
    %1560 = arith.addf %1557, %1559 : vector<16x128xf32>
    %1561 = vector.extract_strided_slice %1560 {offsets = [0, 0], sizes = [16, 96], strides = [1, 1]} : vector<16x128xf32> to vector<16x96xf32>
    %1562 = arith.negf %1561 : vector<16x96xf32>
    %1563 = math.exp %1562 : vector<16x96xf32>
    %cst_397 = arith.constant 1.000000e+00 : f32
    %1564 = vector.broadcast %cst_397 : f32 to vector<16x96xf32>
    %1565 = arith.addf %1564, %1563 : vector<16x96xf32>
    %1566 = arith.divf %1564, %1565 : vector<16x96xf32>
    %1567 = vector.extract_strided_slice %1566 {offsets = [0, 0], sizes = [16, 32], strides = [1, 1]} : vector<16x96xf32> to vector<16x32xf32>
    %1568 = vector.extract_strided_slice %1566 {offsets = [0, 32], sizes = [16, 32], strides = [1, 1]} : vector<16x96xf32> to vector<16x32xf32>
    %1569 = vector.extract_strided_slice %1566 {offsets = [0, 64], sizes = [16, 32], strides = [1, 1]} : vector<16x96xf32> to vector<16x32xf32>
    %1570 = vector.extract_strided_slice %1560 {offsets = [0, 96], sizes = [16, 32], strides = [1, 1]} : vector<16x128xf32> to vector<16x32xf32>
    %1571 = math.tanh %1570 : vector<16x32xf32>
    %1572 = arith.mulf %1568, %1548 : vector<16x32xf32>
    %1573 = arith.mulf %1567, %1571 : vector<16x32xf32>
    %1574 = arith.addf %1572, %1573 : vector<16x32xf32>
    %1575 = math.tanh %1574 : vector<16x32xf32>
    %1576 = arith.mulf %1569, %1575 : vector<16x32xf32>
    %1577 = arith.truncf %1576 : vector<16x32xf32> to vector<16x32xbf16>
    %1578 = arith.index_cast %1555 : i32 to index
    %c0_398 = arith.constant 0 : index
    %1579 = vector.load %arg13[%1578, %c0_398] : memref<128x32xbf16, #tpu.memory_space<vmem>>, vector<16x32xbf16>
    tpu.vector_store %arg13[%1578, %c0_398], %1577 {strides = array<i32>} : memref<128x32xbf16, #tpu.memory_space<vmem>>, vector<16x32xbf16>,
    %c2_i32_399 = arith.constant 2 : i32
    %c16_i32_400 = arith.constant 16 : i32
    %1580 = arith.muli %c2_i32_399, %c16_i32_400 : i32
    %1581 = tpu.assume_multiple %1580, 16 : i32
    %1582 = arith.index_cast %1581 : i32 to index
    %c0_401 = arith.constant 0 : index
    %1583 = vector.load %arg7[%1582, %c0_401] : memref<128x128xf32, #tpu.memory_space<vmem>>, vector<16x128xf32>
    %1584 = arith.truncf %1576 : vector<16x32xf32> to vector<16x32xbf16>
    %cst_402 = arith.constant dense<0.000000e+00> : vector<16x128xf32>
    %1585 = tpu.matmul %1584, %1527, %cst_402 {dimension_numbers = #tpu.dot_dimension_numbers<[1], [0], [0], [1], [0, 0, 1, 1], [], []>} : vector<16x32xbf16>, vector<32x128xbf16>, vector<16x128xf32> -> vector<16x128xf32>
    %1586 = arith.addf %1583, %1585 : vector<16x128xf32>
    %1587 = vector.extract_strided_slice %1586 {offsets = [0, 0], sizes = [16, 96], strides = [1, 1]} : vector<16x128xf32> to vector<16x96xf32>
    %1588 = arith.negf %1587 : vector<16x96xf32>
    %1589 = math.exp %1588 : vector<16x96xf32>
    %cst_403 = arith.constant 1.000000e+00 : f32
    %1590 = vector.broadcast %cst_403 : f32 to vector<16x96xf32>
    %1591 = arith.addf %1590, %1589 : vector<16x96xf32>
    %1592 = arith.divf %1590, %1591 : vector<16x96xf32>
    %1593 = vector.extract_strided_slice %1592 {offsets = [0, 0], sizes = [16, 32], strides = [1, 1]} : vector<16x96xf32> to vector<16x32xf32>
    %1594 = vector.extract_strided_slice %1592 {offsets = [0, 32], sizes = [16, 32], strides = [1, 1]} : vector<16x96xf32> to vector<16x32xf32>
    %1595 = vector.extract_strided_slice %1592 {offsets = [0, 64], sizes = [16, 32], strides = [1, 1]} : vector<16x96xf32> to vector<16x32xf32>
    %1596 = vector.extract_strided_slice %1586 {offsets = [0, 96], sizes = [16, 32], strides = [1, 1]} : vector<16x128xf32> to vector<16x32xf32>
    %1597 = math.tanh %1596 : vector<16x32xf32>
    %1598 = arith.mulf %1594, %1574 : vector<16x32xf32>
    %1599 = arith.mulf %1593, %1597 : vector<16x32xf32>
    %1600 = arith.addf %1598, %1599 : vector<16x32xf32>
    %1601 = math.tanh %1600 : vector<16x32xf32>
    %1602 = arith.mulf %1595, %1601 : vector<16x32xf32>
    %1603 = arith.truncf %1602 : vector<16x32xf32> to vector<16x32xbf16>
    %1604 = arith.index_cast %1581 : i32 to index
    %c0_404 = arith.constant 0 : index
    %1605 = vector.load %arg13[%1604, %c0_404] : memref<128x32xbf16, #tpu.memory_space<vmem>>, vector<16x32xbf16>
    tpu.vector_store %arg13[%1604, %c0_404], %1603 {strides = array<i32>} : memref<128x32xbf16, #tpu.memory_space<vmem>>, vector<16x32xbf16>,
    %c3_i32_405 = arith.constant 3 : i32
    %c16_i32_406 = arith.constant 16 : i32
    %1606 = arith.muli %c3_i32_405, %c16_i32_406 : i32
    %1607 = tpu.assume_multiple %1606, 16 : i32
    %1608 = arith.index_cast %1607 : i32 to index
    %c0_407 = arith.constant 0 : index
    %1609 = vector.load %arg7[%1608, %c0_407] : memref<128x128xf32, #tpu.memory_space<vmem>>, vector<16x128xf32>
    %1610 = arith.truncf %1602 : vector<16x32xf32> to vector<16x32xbf16>
    %cst_408 = arith.constant dense<0.000000e+00> : vector<16x128xf32>
    %1611 = tpu.matmul %1610, %1527, %cst_408 {dimension_numbers = #tpu.dot_dimension_numbers<[1], [0], [0], [1], [0, 0, 1, 1], [], []>} : vector<16x32xbf16>, vector<32x128xbf16>, vector<16x128xf32> -> vector<16x128xf32>
    %1612 = arith.addf %1609, %1611 : vector<16x128xf32>
    %1613 = vector.extract_strided_slice %1612 {offsets = [0, 0], sizes = [16, 96], strides = [1, 1]} : vector<16x128xf32> to vector<16x96xf32>
    %1614 = arith.negf %1613 : vector<16x96xf32>
    %1615 = math.exp %1614 : vector<16x96xf32>
    %cst_409 = arith.constant 1.000000e+00 : f32
    %1616 = vector.broadcast %cst_409 : f32 to vector<16x96xf32>
    %1617 = arith.addf %1616, %1615 : vector<16x96xf32>
    %1618 = arith.divf %1616, %1617 : vector<16x96xf32>
    %1619 = vector.extract_strided_slice %1618 {offsets = [0, 0], sizes = [16, 32], strides = [1, 1]} : vector<16x96xf32> to vector<16x32xf32>
    %1620 = vector.extract_strided_slice %1618 {offsets = [0, 32], sizes = [16, 32], strides = [1, 1]} : vector<16x96xf32> to vector<16x32xf32>
    %1621 = vector.extract_strided_slice %1618 {offsets = [0, 64], sizes = [16, 32], strides = [1, 1]} : vector<16x96xf32> to vector<16x32xf32>
    %1622 = vector.extract_strided_slice %1612 {offsets = [0, 96], sizes = [16, 32], strides = [1, 1]} : vector<16x128xf32> to vector<16x32xf32>
    %1623 = math.tanh %1622 : vector<16x32xf32>
    %1624 = arith.mulf %1620, %1600 : vector<16x32xf32>
    %1625 = arith.mulf %1619, %1623 : vector<16x32xf32>
    %1626 = arith.addf %1624, %1625 : vector<16x32xf32>
    %1627 = math.tanh %1626 : vector<16x32xf32>
    %1628 = arith.mulf %1621, %1627 : vector<16x32xf32>
    %1629 = arith.truncf %1628 : vector<16x32xf32> to vector<16x32xbf16>
    %1630 = arith.index_cast %1607 : i32 to index
    %c0_410 = arith.constant 0 : index
    %1631 = vector.load %arg13[%1630, %c0_410] : memref<128x32xbf16, #tpu.memory_space<vmem>>, vector<16x32xbf16>
    tpu.vector_store %arg13[%1630, %c0_410], %1629 {strides = array<i32>} : memref<128x32xbf16, #tpu.memory_space<vmem>>, vector<16x32xbf16>,
    %c4_i32_411 = arith.constant 4 : i32
    %c16_i32_412 = arith.constant 16 : i32
    %1632 = arith.muli %c4_i32_411, %c16_i32_412 : i32
    %1633 = tpu.assume_multiple %1632, 16 : i32
    %1634 = arith.index_cast %1633 : i32 to index
    %c0_413 = arith.constant 0 : index
    %1635 = vector.load %arg7[%1634, %c0_413] : memref<128x128xf32, #tpu.memory_space<vmem>>, vector<16x128xf32>
    %1636 = arith.truncf %1628 : vector<16x32xf32> to vector<16x32xbf16>
    %cst_414 = arith.constant dense<0.000000e+00> : vector<16x128xf32>
    %1637 = tpu.matmul %1636, %1527, %cst_414 {dimension_numbers = #tpu.dot_dimension_numbers<[1], [0], [0], [1], [0, 0, 1, 1], [], []>} : vector<16x32xbf16>, vector<32x128xbf16>, vector<16x128xf32> -> vector<16x128xf32>
    %1638 = arith.addf %1635, %1637 : vector<16x128xf32>
    %1639 = vector.extract_strided_slice %1638 {offsets = [0, 0], sizes = [16, 96], strides = [1, 1]} : vector<16x128xf32> to vector<16x96xf32>
    %1640 = arith.negf %1639 : vector<16x96xf32>
    %1641 = math.exp %1640 : vector<16x96xf32>
    %cst_415 = arith.constant 1.000000e+00 : f32
    %1642 = vector.broadcast %cst_415 : f32 to vector<16x96xf32>
    %1643 = arith.addf %1642, %1641 : vector<16x96xf32>
    %1644 = arith.divf %1642, %1643 : vector<16x96xf32>
    %1645 = vector.extract_strided_slice %1644 {offsets = [0, 0], sizes = [16, 32], strides = [1, 1]} : vector<16x96xf32> to vector<16x32xf32>
    %1646 = vector.extract_strided_slice %1644 {offsets = [0, 32], sizes = [16, 32], strides = [1, 1]} : vector<16x96xf32> to vector<16x32xf32>
    %1647 = vector.extract_strided_slice %1644 {offsets = [0, 64], sizes = [16, 32], strides = [1, 1]} : vector<16x96xf32> to vector<16x32xf32>
    %1648 = vector.extract_strided_slice %1638 {offsets = [0, 96], sizes = [16, 32], strides = [1, 1]} : vector<16x128xf32> to vector<16x32xf32>
    %1649 = math.tanh %1648 : vector<16x32xf32>
    %1650 = arith.mulf %1646, %1626 : vector<16x32xf32>
    %1651 = arith.mulf %1645, %1649 : vector<16x32xf32>
    %1652 = arith.addf %1650, %1651 : vector<16x32xf32>
    %1653 = math.tanh %1652 : vector<16x32xf32>
    %1654 = arith.mulf %1647, %1653 : vector<16x32xf32>
    %1655 = arith.truncf %1654 : vector<16x32xf32> to vector<16x32xbf16>
    %1656 = arith.index_cast %1633 : i32 to index
    %c0_416 = arith.constant 0 : index
    %1657 = vector.load %arg13[%1656, %c0_416] : memref<128x32xbf16, #tpu.memory_space<vmem>>, vector<16x32xbf16>
    tpu.vector_store %arg13[%1656, %c0_416], %1655 {strides = array<i32>} : memref<128x32xbf16, #tpu.memory_space<vmem>>, vector<16x32xbf16>,
    %c5_i32_417 = arith.constant 5 : i32
    %c16_i32_418 = arith.constant 16 : i32
    %1658 = arith.muli %c5_i32_417, %c16_i32_418 : i32
    %1659 = tpu.assume_multiple %1658, 16 : i32
    %1660 = arith.index_cast %1659 : i32 to index
    %c0_419 = arith.constant 0 : index
    %1661 = vector.load %arg7[%1660, %c0_419] : memref<128x128xf32, #tpu.memory_space<vmem>>, vector<16x128xf32>
    %1662 = arith.truncf %1654 : vector<16x32xf32> to vector<16x32xbf16>
    %cst_420 = arith.constant dense<0.000000e+00> : vector<16x128xf32>
    %1663 = tpu.matmul %1662, %1527, %cst_420 {dimension_numbers = #tpu.dot_dimension_numbers<[1], [0], [0], [1], [0, 0, 1, 1], [], []>} : vector<16x32xbf16>, vector<32x128xbf16>, vector<16x128xf32> -> vector<16x128xf32>
    %1664 = arith.addf %1661, %1663 : vector<16x128xf32>
    %1665 = vector.extract_strided_slice %1664 {offsets = [0, 0], sizes = [16, 96], strides = [1, 1]} : vector<16x128xf32> to vector<16x96xf32>
    %1666 = arith.negf %1665 : vector<16x96xf32>
    %1667 = math.exp %1666 : vector<16x96xf32>
    %cst_421 = arith.constant 1.000000e+00 : f32
    %1668 = vector.broadcast %cst_421 : f32 to vector<16x96xf32>
    %1669 = arith.addf %1668, %1667 : vector<16x96xf32>
    %1670 = arith.divf %1668, %1669 : vector<16x96xf32>
    %1671 = vector.extract_strided_slice %1670 {offsets = [0, 0], sizes = [16, 32], strides = [1, 1]} : vector<16x96xf32> to vector<16x32xf32>
    %1672 = vector.extract_strided_slice %1670 {offsets = [0, 32], sizes = [16, 32], strides = [1, 1]} : vector<16x96xf32> to vector<16x32xf32>
    %1673 = vector.extract_strided_slice %1670 {offsets = [0, 64], sizes = [16, 32], strides = [1, 1]} : vector<16x96xf32> to vector<16x32xf32>
    %1674 = vector.extract_strided_slice %1664 {offsets = [0, 96], sizes = [16, 32], strides = [1, 1]} : vector<16x128xf32> to vector<16x32xf32>
    %1675 = math.tanh %1674 : vector<16x32xf32>
    %1676 = arith.mulf %1672, %1652 : vector<16x32xf32>
    %1677 = arith.mulf %1671, %1675 : vector<16x32xf32>
    %1678 = arith.addf %1676, %1677 : vector<16x32xf32>
    %1679 = math.tanh %1678 : vector<16x32xf32>
    %1680 = arith.mulf %1673, %1679 : vector<16x32xf32>
    %1681 = arith.truncf %1680 : vector<16x32xf32> to vector<16x32xbf16>
    %1682 = arith.index_cast %1659 : i32 to index
    %c0_422 = arith.constant 0 : index
    %1683 = vector.load %arg13[%1682, %c0_422] : memref<128x32xbf16, #tpu.memory_space<vmem>>, vector<16x32xbf16>
    tpu.vector_store %arg13[%1682, %c0_422], %1681 {strides = array<i32>} : memref<128x32xbf16, #tpu.memory_space<vmem>>, vector<16x32xbf16>,
    %c6_i32_423 = arith.constant 6 : i32
    %c16_i32_424 = arith.constant 16 : i32
    %1684 = arith.muli %c6_i32_423, %c16_i32_424 : i32
    %1685 = tpu.assume_multiple %1684, 16 : i32
    %1686 = arith.index_cast %1685 : i32 to index
    %c0_425 = arith.constant 0 : index
    %1687 = vector.load %arg7[%1686, %c0_425] : memref<128x128xf32, #tpu.memory_space<vmem>>, vector<16x128xf32>
    %1688 = arith.truncf %1680 : vector<16x32xf32> to vector<16x32xbf16>
    %cst_426 = arith.constant dense<0.000000e+00> : vector<16x128xf32>
    %1689 = tpu.matmul %1688, %1527, %cst_426 {dimension_numbers = #tpu.dot_dimension_numbers<[1], [0], [0], [1], [0, 0, 1, 1], [], []>} : vector<16x32xbf16>, vector<32x128xbf16>, vector<16x128xf32> -> vector<16x128xf32>
    %1690 = arith.addf %1687, %1689 : vector<16x128xf32>
    %1691 = vector.extract_strided_slice %1690 {offsets = [0, 0], sizes = [16, 96], strides = [1, 1]} : vector<16x128xf32> to vector<16x96xf32>
    %1692 = arith.negf %1691 : vector<16x96xf32>
    %1693 = math.exp %1692 : vector<16x96xf32>
    %cst_427 = arith.constant 1.000000e+00 : f32
    %1694 = vector.broadcast %cst_427 : f32 to vector<16x96xf32>
    %1695 = arith.addf %1694, %1693 : vector<16x96xf32>
    %1696 = arith.divf %1694, %1695 : vector<16x96xf32>
    %1697 = vector.extract_strided_slice %1696 {offsets = [0, 0], sizes = [16, 32], strides = [1, 1]} : vector<16x96xf32> to vector<16x32xf32>
    %1698 = vector.extract_strided_slice %1696 {offsets = [0, 32], sizes = [16, 32], strides = [1, 1]} : vector<16x96xf32> to vector<16x32xf32>
    %1699 = vector.extract_strided_slice %1696 {offsets = [0, 64], sizes = [16, 32], strides = [1, 1]} : vector<16x96xf32> to vector<16x32xf32>
    %1700 = vector.extract_strided_slice %1690 {offsets = [0, 96], sizes = [16, 32], strides = [1, 1]} : vector<16x128xf32> to vector<16x32xf32>
    %1701 = math.tanh %1700 : vector<16x32xf32>
    %1702 = arith.mulf %1698, %1678 : vector<16x32xf32>
    %1703 = arith.mulf %1697, %1701 : vector<16x32xf32>
    %1704 = arith.addf %1702, %1703 : vector<16x32xf32>
    %1705 = math.tanh %1704 : vector<16x32xf32>
    %1706 = arith.mulf %1699, %1705 : vector<16x32xf32>
    %1707 = arith.truncf %1706 : vector<16x32xf32> to vector<16x32xbf16>
    %1708 = arith.index_cast %1685 : i32 to index
    %c0_428 = arith.constant 0 : index
    %1709 = vector.load %arg13[%1708, %c0_428] : memref<128x32xbf16, #tpu.memory_space<vmem>>, vector<16x32xbf16>
    tpu.vector_store %arg13[%1708, %c0_428], %1707 {strides = array<i32>} : memref<128x32xbf16, #tpu.memory_space<vmem>>, vector<16x32xbf16>,
    %c7_i32_429 = arith.constant 7 : i32
    %c16_i32_430 = arith.constant 16 : i32
    %1710 = arith.muli %c7_i32_429, %c16_i32_430 : i32
    %1711 = tpu.assume_multiple %1710, 16 : i32
    %1712 = arith.index_cast %1711 : i32 to index
    %c0_431 = arith.constant 0 : index
    %1713 = vector.load %arg7[%1712, %c0_431] : memref<128x128xf32, #tpu.memory_space<vmem>>, vector<16x128xf32>
    %1714 = arith.truncf %1706 : vector<16x32xf32> to vector<16x32xbf16>
    %cst_432 = arith.constant dense<0.000000e+00> : vector<16x128xf32>
    %1715 = tpu.matmul %1714, %1527, %cst_432 {dimension_numbers = #tpu.dot_dimension_numbers<[1], [0], [0], [1], [0, 0, 1, 1], [], []>} : vector<16x32xbf16>, vector<32x128xbf16>, vector<16x128xf32> -> vector<16x128xf32>
    %1716 = arith.addf %1713, %1715 : vector<16x128xf32>
    %1717 = vector.extract_strided_slice %1716 {offsets = [0, 0], sizes = [16, 96], strides = [1, 1]} : vector<16x128xf32> to vector<16x96xf32>
    %1718 = arith.negf %1717 : vector<16x96xf32>
    %1719 = math.exp %1718 : vector<16x96xf32>
    %cst_433 = arith.constant 1.000000e+00 : f32
    %1720 = vector.broadcast %cst_433 : f32 to vector<16x96xf32>
    %1721 = arith.addf %1720, %1719 : vector<16x96xf32>
    %1722 = arith.divf %1720, %1721 : vector<16x96xf32>
    %1723 = vector.extract_strided_slice %1722 {offsets = [0, 0], sizes = [16, 32], strides = [1, 1]} : vector<16x96xf32> to vector<16x32xf32>
    %1724 = vector.extract_strided_slice %1722 {offsets = [0, 32], sizes = [16, 32], strides = [1, 1]} : vector<16x96xf32> to vector<16x32xf32>
    %1725 = vector.extract_strided_slice %1722 {offsets = [0, 64], sizes = [16, 32], strides = [1, 1]} : vector<16x96xf32> to vector<16x32xf32>
    %1726 = vector.extract_strided_slice %1716 {offsets = [0, 96], sizes = [16, 32], strides = [1, 1]} : vector<16x128xf32> to vector<16x32xf32>
    %1727 = math.tanh %1726 : vector<16x32xf32>
    %1728 = arith.mulf %1724, %1704 : vector<16x32xf32>
    %1729 = arith.mulf %1723, %1727 : vector<16x32xf32>
    %1730 = arith.addf %1728, %1729 : vector<16x32xf32>
    %1731 = math.tanh %1730 : vector<16x32xf32>
    %1732 = arith.mulf %1725, %1731 : vector<16x32xf32>
    %1733 = arith.truncf %1732 : vector<16x32xf32> to vector<16x32xbf16>
    %1734 = arith.index_cast %1711 : i32 to index
    %c0_434 = arith.constant 0 : index
    %1735 = vector.load %arg13[%1734, %c0_434] : memref<128x32xbf16, #tpu.memory_space<vmem>>, vector<16x32xbf16>
    tpu.vector_store %arg13[%1734, %c0_434], %1733 {strides = array<i32>} : memref<128x32xbf16, #tpu.memory_space<vmem>>, vector<16x32xbf16>,
    %c8_i32_435 = arith.constant 8 : i32
    %c0_436 = arith.constant 0 : index
    %c0_437 = arith.constant 0 : index
    %1736 = vector.load %arg13[%c0_436, %c0_437] : memref<128x32xbf16, #tpu.memory_space<vmem>>, vector<128x32xbf16>
    %cst_438 = arith.constant 0.000000e+00 : bf16
    %1737 = vector.broadcast %cst_438 : bf16 to vector<128x32xbf16>
    %1738 = arith.maximumf %1736, %1737 : vector<128x32xbf16>
    %c448 = arith.constant 448 : index
    %c0_439 = arith.constant 0 : index
    %1739 = vector.load %arg2[%c448, %c0_439] : memref<512x256xbf16, #tpu.memory_space<vmem>>, vector<32x32xbf16>
    %cst_440 = arith.constant dense<0.000000e+00> : vector<128x32xf32>
    %1740 = tpu.matmul %1738, %1739, %cst_440 {dimension_numbers = #tpu.dot_dimension_numbers<[1], [0], [0], [1], [0, 0, 1, 1], [], []>} : vector<128x32xbf16>, vector<32x32xbf16>, vector<128x32xf32> -> vector<128x32xf32>
    %c48_441 = arith.constant 48 : index
    %c0_442 = arith.constant 0 : index
    %1741 = vector.load %arg3[%c48_441, %c0_442] : memref<64x256xf32, #tpu.memory_space<vmem>>, vector<1x32xf32>
    %1742 = vector.broadcast %1741 : vector<1x32xf32> to vector<128x32xf32>
    %1743 = arith.addf %1740, %1742 : vector<128x32xf32>
    %cst_443 = arith.constant 0.000000e+00 : f32
    %1744 = vector.broadcast %cst_443 : f32 to vector<128x32xf32>
    %1745 = arith.maximumf %1743, %1744 : vector<128x32xf32>
    %1746 = arith.truncf %1745 : vector<128x32xf32> to vector<128x32xbf16>
    %c480 = arith.constant 480 : index
    %c0_444 = arith.constant 0 : index
    %1747 = vector.load %arg2[%c480, %c0_444] : memref<512x256xbf16, #tpu.memory_space<vmem>>, vector<32x128xbf16>
    %cst_445 = arith.constant dense<0.000000e+00> : vector<128x128xf32>
    %1748 = tpu.matmul %1746, %1747, %cst_445 {dimension_numbers = #tpu.dot_dimension_numbers<[1], [0], [0], [1], [0, 0, 1, 1], [], []>} : vector<128x32xbf16>, vector<32x128xbf16>, vector<128x128xf32> -> vector<128x128xf32>
    %c56 = arith.constant 56 : index
    %c0_446 = arith.constant 0 : index
    %1749 = vector.load %arg3[%c56, %c0_446] : memref<64x256xf32, #tpu.memory_space<vmem>>, vector<1x128xf32>
    %1750 = vector.broadcast %1749 : vector<1x128xf32> to vector<128x128xf32>
    %1751 = arith.addf %1748, %1750 : vector<128x128xf32>
    %c0_447 = arith.constant 0 : index
    %c0_448 = arith.constant 0 : index
    %1752 = vector.load %arg4[%c0_447, %c0_448] : memref<128x128xf32, #tpu.memory_space<vmem>>, vector<128x128xf32>
    tpu.vector_store %arg4[%c0_447, %c0_448], %1751 {strides = array<i32>} : memref<128x128xf32, #tpu.memory_space<vmem>>, vector<128x128xf32>,
    return
  }
}

</mosaic_0001>

<llo_original>
// kernel: forward.1
$region0: #{forward.1}
  #allocation0 [shape = 'u32[]', space=smem, size = 0x4, offset = 0x4, fixed_abs, tag = 'smem constant byte address 0x4 - core index']
  #allocation1 [shape = 'u32[144,128]{1,0:T(1,128)}', space=vmem, size = 0x12000, scoped, tag = 'internal scratch']
  #allocation2 [shape = 'f32[128,256]{1,0:T(8,128)}', space=vmem, size = 0x20000, scoped, tag = 'scratch operand']
  #allocation3 [shape = 'f32[128,128]{1,0:T(8,128)}', space=vmem, size = 0x10000, scoped, tag = 'scratch operand']
  #allocation4 [shape = 'f32[128,128]{1,0:T(8,128)}', space=vmem, size = 0x10000, scoped, tag = 'scratch operand']
  #allocation5 [shape = 'bf16[128,32]{1,0:T(16,128)(2,1)}', space=vmem, size = 0x8000, scoped, tag = 'scratch operand']
  #allocation6 [shape = 'bf16[128,32]{1,0:T(16,128)(2,1)}', space=vmem, size = 0x8000, scoped, tag = 'scratch operand']
  #allocation7 [shape = 'bf16[128,32]{1,0:T(16,128)(2,1)}', space=vmem, size = 0x8000, scoped, tag = 'scratch operand']
  #allocation8 [shape = 'bf16[128,32]{1,0:T(16,128)(2,1)}', space=vmem, size = 0x8000, scoped, tag = 'scratch operand']
  #allocation9 [shape = 'bf16[128,32]{1,0:T(16,128)(2,1)}', space=vmem, size = 0x8000, scoped, tag = 'scratch operand']
  #allocation10 [shape = 'bf16[128,32]{1,0:T(16,128)(2,1)}', space=vmem, size = 0x8000, scoped, tag = 'scratch operand']
  %s0 = inlined_call_operand.vmem [shape: bf16[128,16], index: 0, kind: input, shape index: {}]
  %s1 = inlined_call_operand.vmem [shape: bf16[128,16], index: 1, kind: input, shape index: {}]
  %s2 = inlined_call_operand.hbm [shape: bf16[512,256], index: 2, kind: input, shape index: {}]
  %s3 = inlined_call_operand.vmem [shape: f32[64,256], index: 3, kind: input, shape index: {}]
  %s4 = inlined_call_operand.vmem [shape: f32[128,128], index: 4, kind: output, shape index: {}]
  %s5 = sld [smem:[#allocation0]]
  $region30: #{forward.1} parent=0
    _
  %s7 = ssub.s32 1, %s5
  %s8 = scalar_select 0, %s7, %s5
  $region1: #{forward.1} parent=0
    #allocation11 [shape = 'u8[262144]{0}', space=vmem, size = 0x40000, scoped, tag = 'input window, operand 2, single buffered']
    #allocation12 [shape = 's32[1]{0}', space=sflag, size = 0x4, scoped, tag = 'scoped memory for forward.1']
    %9 = vsyncpa [#allocation12], 0
    // Predicated region
    $region2: #{forward.1} parent=1 // pred_check
      _
    $region3: #{forward.1} parent=1 // pred_check_branch
      %11 = sbr.rel (0) target = $region5
    $region4: #{forward.1} parent=1 // pred_region
      _
    $region5: #{forward.1} parent=1 // pred_fallthru
      _
    // Predicated region
    $region6: #{forward.1} parent=1 // pred_check
      _
    $region7: #{forward.1} parent=1 // pred_check_branch
      %13 = sbr.rel (0) target = $region9
    $region8: #{forward.1} parent=1 // pred_region
      _
    $region9: #{forward.1} parent=1 // pred_fallthru
      _
    // Predicated region
    $region10: #{forward.1} parent=1 // pred_check
      _
    $region11: #{forward.1} parent=1 // pred_check_branch
      %15 = sbr.rel (0) target = $region13
    $region12: #{forward.1} parent=1 // pred_region
      %s17 = ssub.s32 8192, 8192
      %18 = vsyncadd [#allocation12], %s17
      %s19 = sshll.u32 [#allocation11], 4
      %s20 = int_to_ptr.vmem [resolvable:$true] %s19
      %25 = dma.hbm_to_vmem [thread:$0]  %s2, 8192, %s20, [#allocation12], 128, 128, 8
    $region13: #{forward.1} parent=1 // pred_fallthru
      _
    // Predicated region
    $region14: #{forward.1} parent=1 // pred_check
      _
    $region15: #{forward.1} parent=1 // pred_check_branch
      %27 = sbr.rel (0) target = $region17
    $region16: #{forward.1} parent=1 // pred_region
      _
    $region17: #{forward.1} parent=1 // pred_fallthru
      _
    // Predicated region
    $region18: #{forward.1} parent=1 // pred_check
      _
    $region19: #{forward.1} parent=1 // pred_check_branch
      %29 = sbr.rel (0) target = $region21
    $region20: #{forward.1} parent=1 // pred_region
      %30 = dma.done [#allocation12], 8192
    $region21: #{forward.1} parent=1 // pred_fallthru
      _
    %v32 = vld [vmem:[%s1] sm:$0xf]
    %v33 = vld [vmem:[%s1 + $0x4] sm:$0xf]
    %v34 = vld [vmem:[%s1 + $0x8] sm:$0xf]
    %v35 = vld [vmem:[%s1 + $0xc] sm:$0xf]
    %v36 = vld [vmem:[%s1 + $0x10] sm:$0xf]
    %v37 = vld [vmem:[%s1 + $0x14] sm:$0xf]
    %v38 = vld [vmem:[%s1 + $0x18] sm:$0xf]
    %v39 = vld [vmem:[%s1 + $0x1c] sm:$0xf]
    %v40 = vld [vmem:[%s1 + $0x20] sm:$0xf]
    %v41 = vld [vmem:[%s1 + $0x24] sm:$0xf]
    %v42 = vld [vmem:[%s1 + $0x28] sm:$0xf]
    %v43 = vld [vmem:[%s1 + $0x2c] sm:$0xf]
    %v44 = vld [vmem:[%s1 + $0x30] sm:$0xf]
    %v45 = vld [vmem:[%s1 + $0x34] sm:$0xf]
    %v46 = vld [vmem:[%s1 + $0x38] sm:$0xf]
    %v47 = vld [vmem:[%s1 + $0x3c] sm:$0xf]
    %v48 = vld [vmem:[#allocation11 + $0xd0] sm:$0xf]
    %v49 = vld [vmem:[#allocation11 + $0xd8] sm:$0xf]
    %v50 = vld [vmem:[%s3 + $0x20] ss:$0 sm:$0xff]
    %v67 = vunpack.c.l.b16 %v32
    %v68 = vunpack.c.l.b16 %v33
    %v69 = vunpack.c.l.b16 %v34
    %v70 = vunpack.c.l.b16 %v35
    %v71 = vunpack.c.l.b16 %v36
    %v72 = vunpack.c.l.b16 %v37
    %v73 = vunpack.c.l.b16 %v38
    %v74 = vunpack.c.l.b16 %v39
    %v75 = vunpack.c.l.b16 %v40
    %v76 = vunpack.c.l.b16 %v41
    %v77 = vunpack.c.l.b16 %v42
    %v78 = vunpack.c.l.b16 %v43
    %v79 = vunpack.c.l.b16 %v44
    %v80 = vunpack.c.l.b16 %v45
    %v81 = vunpack.c.l.b16 %v46
    %v82 = vunpack.c.l.b16 %v47
    %v83 = vpack.c.b16 %v68, %v67
    %v84 = vpack.c.b16 %v70, %v69
    %v85 = vpack.c.b16 %v72, %v71
    %v86 = vpack.c.b16 %v74, %v73
    %v87 = vpack.c.b16 %v76, %v75
    %v88 = vpack.c.b16 %v78, %v77
    %v89 = vpack.c.b16 %v80, %v79
    %v90 = vpack.c.b16 %v82, %v81
    %v93 = vunpack.c.l.b16 %v48
    %v94 = vunpack.c.l.b16 %v49
    %v95 = vpack.c.b16 %v94, %v93
    %vm97 = vcmask 130048
    %v99 = vsel %vm97, %v83, 0
    %v102 = vsel %vm97, %v84, 0
    %v105 = vsel %vm97, %v85, 0
    %v108 = vsel %vm97, %v86, 0
    %v111 = vsel %vm97, %v87, 0
    %v114 = vsel %vm97, %v88, 0
    %v117 = vsel %vm97, %v89, 0
    %v120 = vsel %vm97, %v90, 0
    %122 = vmatprep.subr.bf16.mxu0 0
    %123 = vmatpush1.bf16.msra.mxu0 %v95
    %124 = vmatprep.subr.bf16.mxu0 0
    %125 = vmatpush1.bf16.msra.mxu0 0
    %126 = vmatprep.subr.bf16.mxu0 0
    %127 = vmatpush1.bf16.msra.mxu0 0
    %128 = vmatprep.subr.bf16.mxu0 0
    %129 = vmatpush1.bf16.msra.mxu0 0
    %130 = vmatprep.subr.bf16.mxu0 0
    %131 = vmatpush1.bf16.msra.mxu0 0
    %132 = vmatprep.subr.bf16.mxu0 0
    %133 = vmatpush1.bf16.msra.mxu0 0
    %134 = vmatprep.subr.bf16.mxu0 0
    %135 = vmatpush1.bf16.msra.mxu0 0
    %136 = vmatprep.subr.bf16.mxu0 0
    %137 = vmatpush1.bf16.msra.mxu0 0
    %138 = vmatprep.subr.bf16.mxu0 0
    %139 = vmatpush1.bf16.msra.mxu0 0
    %140 = vmatprep.subr.bf16.mxu0 0
    %141 = vmatpush1.bf16.msra.mxu0 0
    %142 = vmatprep.subr.bf16.mxu0 0
    %143 = vmatpush1.bf16.msra.mxu0 0
    %144 = vmatprep.subr.bf16.mxu0 0
    %145 = vmatpush1.bf16.msra.mxu0 0
    %146 = vmatprep.subr.bf16.mxu0 0
    %147 = vmatpush1.bf16.msra.mxu0 0
    %148 = vmatprep.subr.bf16.mxu0 0
    %149 = vmatpush1.bf16.msra.mxu0 0
    %150 = vmatprep.subr.bf16.mxu0 0
    %151 = vmatpush1.bf16.msra.mxu0 0
    %152 = vmatprep.subr.bf16.mxu0 0
    %153 = vmatpush1.bf16.msra.mxu0 0
    %154 = vmatprep.mubr.bf16.mxu0 0
    %155 = vmatmul.mubr.bf16.gmra.mrb[0].mxu0 %v99
    %v156 = vpop.f32.mrb[0].mxu0
    %v157 = vadd.f32 %v50, %v156
    %v158 = vpop.f32.mrb[0].mxu0
    %v159 = vpop.f32.mrb[0].mxu0
    %v160 = vadd.f32 %v50, %v159
    %v161 = vpop.f32.mrb[0].mxu0
    %162 = vmatprep.mubr.bf16.mxu0 0
    %163 = vmatmul.mubr.bf16.gmra.mrb[0].mxu0 %v102
    %v164 = vpop.f32.mrb[0].mxu0
    %v165 = vadd.f32 %v50, %v164
    %v166 = vpop.f32.mrb[0].mxu0
    %v167 = vpop.f32.mrb[0].mxu0
    %v168 = vadd.f32 %v50, %v167
    %v169 = vpop.f32.mrb[0].mxu0
    %170 = vmatprep.mubr.bf16.mxu0 0
    %171 = vmatmul.mubr.bf16.gmra.mrb[0].mxu0 %v105
    %v172 = vpop.f32.mrb[0].mxu0
    %v173 = vadd.f32 %v50, %v172
    %v174 = vpop.f32.mrb[0].mxu0
    %v175 = vpop.f32.mrb[0].mxu0
    %v176 = vadd.f32 %v50, %v175
    %v177 = vpop.f32.mrb[0].mxu0
    %178 = vmatprep.mubr.bf16.mxu0 0
    %179 = vmatmul.mubr.bf16.gmra.mrb[0].mxu0 %v108
    %v180 = vpop.f32.mrb[0].mxu0
    %v181 = vadd.f32 %v50, %v180
    %v182 = vpop.f32.mrb[0].mxu0
    %v183 = vpop.f32.mrb[0].mxu0
    %v184 = vadd.f32 %v50, %v183
    %v185 = vpop.f32.mrb[0].mxu0
    %186 = vmatprep.mubr.bf16.mxu0 0
    %187 = vmatmul.mubr.bf16.gmra.mrb[0].mxu0 %v111
    %v188 = vpop.f32.mrb[0].mxu0
    %v189 = vadd.f32 %v50, %v188
    %v190 = vpop.f32.mrb[0].mxu0
    %v191 = vpop.f32.mrb[0].mxu0
    %v192 = vadd.f32 %v50, %v191
    %v193 = vpop.f32.mrb[0].mxu0
    %194 = vmatprep.mubr.bf16.mxu0 0
    %195 = vmatmul.mubr.bf16.gmra.mrb[0].mxu0 %v114
    %v196 = vpop.f32.mrb[0].mxu0
    %v197 = vadd.f32 %v50, %v196
    %v198 = vpop.f32.mrb[0].mxu0
    %v199 = vpop.f32.mrb[0].mxu0
    %v200 = vadd.f32 %v50, %v199
    %v201 = vpop.f32.mrb[0].mxu0
    %202 = vmatprep.mubr.bf16.mxu0 0
    %203 = vmatmul.mubr.bf16.gmra.mrb[0].mxu0 %v117
    %v204 = vpop.f32.mrb[0].mxu0
    %v205 = vadd.f32 %v50, %v204
    %v206 = vpop.f32.mrb[0].mxu0
    %v207 = vpop.f32.mrb[0].mxu0
    %v208 = vadd.f32 %v50, %v207
    %v209 = vpop.f32.mrb[0].mxu0
    %210 = vmatprep.mubr.bf16.mxu0 0
    %211 = vmatmul.mubr.bf16.gmra.mrb[0].mxu0 %v120
    %v212 = vpop.f32.mrb[0].mxu0
    %v213 = vadd.f32 %v50, %v212
    %v214 = vpop.f32.mrb[0].mxu0
    %v215 = vpop.f32.mrb[0].mxu0
    %v216 = vadd.f32 %v50, %v215
    %v217 = vpop.f32.mrb[0].mxu0
    %218 = vdwg.mxu0
    %219 = vst [vmem:[#allocation3] sm:$0xff] %v157
    %220 = vst [vmem:[#allocation3 + $0x8] sm:$0xff] %v160
    %221 = vst [vmem:[#allocation3 + $0x10] sm:$0xff] %v165
    %222 = vst [vmem:[#allocation3 + $0x18] sm:$0xff] %v168
    %223 = vst [vmem:[#allocation3 + $0x20] sm:$0xff] %v173
    %224 = vst [vmem:[#allocation3 + $0x28] sm:$0xff] %v176
    %225 = vst [vmem:[#allocation3 + $0x30] sm:$0xff] %v181
    %226 = vst [vmem:[#allocation3 + $0x38] sm:$0xff] %v184
    %227 = vst [vmem:[#allocation3 + $0x40] sm:$0xff] %v189
    %228 = vst [vmem:[#allocation3 + $0x48] sm:$0xff] %v192
    %229 = vst [vmem:[#allocation3 + $0x50] sm:$0xff] %v197
    %230 = vst [vmem:[#allocation3 + $0x58] sm:$0xff] %v200
    %231 = vst [vmem:[#allocation3 + $0x60] sm:$0xff] %v205
    %232 = vst [vmem:[#allocation3 + $0x68] sm:$0xff] %v208
    %233 = vst [vmem:[#allocation3 + $0x70] sm:$0xff] %v213
    %234 = vst [vmem:[#allocation3 + $0x78] sm:$0xff] %v216
    %v235 = vld [vmem:[%s0] sm:$0xf]
    %v236 = vld [vmem:[%s0 + $0x4] sm:$0xf]
    %v237 = vld [vmem:[%s0 + $0x8] sm:$0xf]
    %v238 = vld [vmem:[%s0 + $0xc] sm:$0xf]
    %v239 = vld [vmem:[%s0 + $0x10] sm:$0xf]
    %v240 = vld [vmem:[%s0 + $0x14] sm:$0xf]
    %v241 = vld [vmem:[%s0 + $0x18] sm:$0xf]
    %v242 = vld [vmem:[%s0 + $0x1c] sm:$0xf]
    %v243 = vld [vmem:[%s0 + $0x20] sm:$0xf]
    %v244 = vld [vmem:[%s0 + $0x24] sm:$0xf]
    %v245 = vld [vmem:[%s0 + $0x28] sm:$0xf]
    %v246 = vld [vmem:[%s0 + $0x2c] sm:$0xf]
    %v247 = vld [vmem:[%s0 + $0x30] sm:$0xf]
    %v248 = vld [vmem:[%s0 + $0x34] sm:$0xf]
    %v249 = vld [vmem:[%s0 + $0x38] sm:$0xf]
    %v250 = vld [vmem:[%s0 + $0x3c] sm:$0xf]
    %v251 = vld [vmem:[#allocation11] sm:$0xff]
    %v252 = vld [vmem:[#allocation11 + $0x8] sm:$0xff]
    %v253 = vld [vmem:[%s3] ss:$8 sm:$0x3]
    %v255 = vlaneseq
    %v256 = vshrl.u32 %v255, 7
    %v257 = vsub.s32 0, %v256
    %v258 = vrot.slane %v253, %v257
    %v259 = vlaneseq
    %v260 = vshrl.u32 %v259, 7
    %v261 = vsub.s32 1, %v260
    %v262 = vrot.slane %v253, %v261
    %v281 = vunpack.c.l.b16 %v235
    %v282 = vunpack.c.l.b16 %v236
    %v283 = vunpack.c.l.b16 %v237
    %v284 = vunpack.c.l.b16 %v238
    %v285 = vunpack.c.l.b16 %v239
    %v286 = vunpack.c.l.b16 %v240
    %v287 = vunpack.c.l.b16 %v241
    %v288 = vunpack.c.l.b16 %v242
    %v289 = vunpack.c.l.b16 %v243
    %v290 = vunpack.c.l.b16 %v244
    %v291 = vunpack.c.l.b16 %v245
    %v292 = vunpack.c.l.b16 %v246
    %v293 = vunpack.c.l.b16 %v247
    %v294 = vunpack.c.l.b16 %v248
    %v295 = vunpack.c.l.b16 %v249
    %v296 = vunpack.c.l.b16 %v250
    %v297 = vpack.c.b16 %v282, %v281
    %v298 = vpack.c.b16 %v284, %v283
    %v299 = vpack.c.b16 %v286, %v285
    %v300 = vpack.c.b16 %v288, %v287
    %v301 = vpack.c.b16 %v290, %v289
    %v302 = vpack.c.b16 %v292, %v291
    %v303 = vpack.c.b16 %v294, %v293
    %v304 = vpack.c.b16 %v296, %v295
    %v307 = vunpack.c.l.b16 %v251
    %v308 = vunpack.c.h.b16 %v251
    %v309 = vunpack.c.l.b16 %v252
    %v310 = vunpack.c.h.b16 %v252
    %v311 = vpack.c.b16 %v309, %v307
    %v312 = vpack.c.b16 %v310, %v308
    %v316 = vsel %vm97, %v297, 0
    %v319 = vsel %vm97, %v298, 0
    %v322 = vsel %vm97, %v299, 0
    %v325 = vsel %vm97, %v300, 0
    %v328 = vsel %vm97, %v301, 0
    %v331 = vsel %vm97, %v302, 0
    %v334 = vsel %vm97, %v303, 0
    %v337 = vsel %vm97, %v304, 0
    %339 = vmatprep.subr.bf16.mxu0 %v312
    %340 = vmatpush1.bf16.msra.mxu0 %v311
    %341 = vmatprep.subr.bf16.mxu0 0
    %342 = vmatpush1.bf16.msra.mxu0 0
    %343 = vmatprep.subr.bf16.mxu0 0
    %344 = vmatpush1.bf16.msra.mxu0 0
    %345 = vmatprep.subr.bf16.mxu0 0
    %346 = vmatpush1.bf16.msra.mxu0 0
    %347 = vmatprep.subr.bf16.mxu0 0
    %348 = vmatpush1.bf16.msra.mxu0 0
    %349 = vmatprep.subr.bf16.mxu0 0
    %350 = vmatpush1.bf16.msra.mxu0 0
    %351 = vmatprep.subr.bf16.mxu0 0
    %352 = vmatpush1.bf16.msra.mxu0 0
    %353 = vmatprep.subr.bf16.mxu0 0
    %354 = vmatpush1.bf16.msra.mxu0 0
    %355 = vmatprep.subr.bf16.mxu0 0
    %356 = vmatpush1.bf16.msra.mxu0 0
    %357 = vmatprep.subr.bf16.mxu0 0
    %358 = vmatpush1.bf16.msra.mxu0 0
    %359 = vmatprep.subr.bf16.mxu0 0
    %360 = vmatpush1.bf16.msra.mxu0 0
    %361 = vmatprep.subr.bf16.mxu0 0
    %362 = vmatpush1.bf16.msra.mxu0 0
    %363 = vmatprep.subr.bf16.mxu0 0
    %364 = vmatpush1.bf16.msra.mxu0 0
    %365 = vmatprep.subr.bf16.mxu0 0
    %366 = vmatpush1.bf16.msra.mxu0 0
    %367 = vmatprep.subr.bf16.mxu0 0
    %368 = vmatpush1.bf16.msra.mxu0 0
    %369 = vmatprep.subr.bf16.mxu0 0
    %370 = vmatpush1.bf16.msra.mxu0 0
    %371 = vmatprep.mubr.bf16.mxu0 0
    %372 = vmatmul.mubr.bf16.gmra.mrb[0].mxu0 %v316
    %v373 = vpop.f32.mrb[0].mxu0
    %v374 = vadd.f32 %v258, %v373
    %v375 = vpop.f32.mrb[0].mxu0
    %v376 = vadd.f32 %v262, %v375
    %v377 = vpop.f32.mrb[0].mxu0
    %v378 = vadd.f32 %v258, %v377
    %v379 = vpop.f32.mrb[0].mxu0
    %v380 = vadd.f32 %v262, %v379
    %381 = vmatprep.mubr.bf16.mxu0 0
    %382 = vmatmul.mubr.bf16.gmra.mrb[0].mxu0 %v319
    %v383 = vpop.f32.mrb[0].mxu0
    %v384 = vadd.f32 %v258, %v383
    %v385 = vpop.f32.mrb[0].mxu0
    %v386 = vadd.f32 %v262, %v385
    %v387 = vpop.f32.mrb[0].mxu0
    %v388 = vadd.f32 %v258, %v387
    %v389 = vpop.f32.mrb[0].mxu0
    %v390 = vadd.f32 %v262, %v389
    %391 = vmatprep.mubr.bf16.mxu0 0
    %392 = vmatmul.mubr.bf16.gmra.mrb[0].mxu0 %v322
    %v393 = vpop.f32.mrb[0].mxu0
    %v394 = vadd.f32 %v258, %v393
    %v395 = vpop.f32.mrb[0].mxu0
    %v396 = vadd.f32 %v262, %v395
    %v397 = vpop.f32.mrb[0].mxu0
    %v398 = vadd.f32 %v258, %v397
    %v399 = vpop.f32.mrb[0].mxu0
    %v400 = vadd.f32 %v262, %v399
    %401 = vmatprep.mubr.bf16.mxu0 0
    %402 = vmatmul.mubr.bf16.gmra.mrb[0].mxu0 %v325
    %v403 = vpop.f32.mrb[0].mxu0
    %v404 = vadd.f32 %v258, %v403
    %v405 = vpop.f32.mrb[0].mxu0
    %v406 = vadd.f32 %v262, %v405
    %v407 = vpop.f32.mrb[0].mxu0
    %v408 = vadd.f32 %v258, %v407
    %v409 = vpop.f32.mrb[0].mxu0
    %v410 = vadd.f32 %v262, %v409
    %411 = vmatprep.mubr.bf16.mxu0 0
    %412 = vmatmul.mubr.bf16.gmra.mrb[0].mxu0 %v328
    %v413 = vpop.f32.mrb[0].mxu0
    %v414 = vadd.f32 %v258, %v413
    %v415 = vpop.f32.mrb[0].mxu0
    %v416 = vadd.f32 %v262, %v415
    %v417 = vpop.f32.mrb[0].mxu0
    %v418 = vadd.f32 %v258, %v417
    %v419 = vpop.f32.mrb[0].mxu0
    %v420 = vadd.f32 %v262, %v419
    %421 = vmatprep.mubr.bf16.mxu0 0
    %422 = vmatmul.mubr.bf16.gmra.mrb[0].mxu0 %v331
    %v423 = vpop.f32.mrb[0].mxu0
    %v424 = vadd.f32 %v258, %v423
    %v425 = vpop.f32.mrb[0].mxu0
    %v426 = vadd.f32 %v262, %v425
    %v427 = vpop.f32.mrb[0].mxu0
    %v428 = vadd.f32 %v258, %v427
    %v429 = vpop.f32.mrb[0].mxu0
    %v430 = vadd.f32 %v262, %v429
    %431 = vmatprep.mubr.bf16.mxu0 0
    %432 = vmatmul.mubr.bf16.gmra.mrb[0].mxu0 %v334
    %v433 = vpop.f32.mrb[0].mxu0
    %v434 = vadd.f32 %v258, %v433
    %v435 = vpop.f32.mrb[0].mxu0
    %v436 = vadd.f32 %v262, %v435
    %v437 = vpop.f32.mrb[0].mxu0
    %v438 = vadd.f32 %v258, %v437
    %v439 = vpop.f32.mrb[0].mxu0
    %v440 = vadd.f32 %v262, %v439
    %441 = vmatprep.mubr.bf16.mxu0 0
    %442 = vmatmul.mubr.bf16.gmra.mrb[0].mxu0 %v337
    %v443 = vpop.f32.mrb[0].mxu0
    %v444 = vadd.f32 %v258, %v443
    %v445 = vpop.f32.mrb[0].mxu0
    %v446 = vadd.f32 %v262, %v445
    %v447 = vpop.f32.mrb[0].mxu0
    %v448 = vadd.f32 %v258, %v447
    %v449 = vpop.f32.mrb[0].mxu0
    %v450 = vadd.f32 %v262, %v449
    %451 = vdwg.mxu0
    %452 = vst [vmem:[#allocation2] sm:$0xff] %v374
    %453 = vst [vmem:[#allocation2 + $0x8] sm:$0xff] %v376
    %454 = vst [vmem:[#allocation2 + $0x10] sm:$0xff] %v378
    %455 = vst [vmem:[#allocation2 + $0x18] sm:$0xff] %v380
    %456 = vst [vmem:[#allocation2 + $0x20] sm:$0xff] %v384
    %457 = vst [vmem:[#allocation2 + $0x28] sm:$0xff] %v386
    %458 = vst [vmem:[#allocation2 + $0x30] sm:$0xff] %v388
    %459 = vst [vmem:[#allocation2 + $0x38] sm:$0xff] %v390
    %460 = vst [vmem:[#allocation2 + $0x40] sm:$0xff] %v394
    %461 = vst [vmem:[#allocation2 + $0x48] sm:$0xff] %v396
    %462 = vst [vmem:[#allocation2 + $0x50] sm:$0xff] %v398
    %463 = vst [vmem:[#allocation2 + $0x58] sm:$0xff] %v400
    %464 = vst [vmem:[#allocation2 + $0x60] sm:$0xff] %v404
    %465 = vst [vmem:[#allocation2 + $0x68] sm:$0xff] %v406
    %466 = vst [vmem:[#allocation2 + $0x70] sm:$0xff] %v408
    %467 = vst [vmem:[#allocation2 + $0x78] sm:$0xff] %v410
    %468 = vst [vmem:[#allocation2 + $0x80] sm:$0xff] %v414
    %469 = vst [vmem:[#allocation2 + $0x88] sm:$0xff] %v416
    %470 = vst [vmem:[#allocation2 + $0x90] sm:$0xff] %v418
    %471 = vst [vmem:[#allocation2 + $0x98] sm:$0xff] %v420
    %472 = vst [vmem:[#allocation2 + $0xa0] sm:$0xff] %v424
    %473 = vst [vmem:[#allocation2 + $0xa8] sm:$0xff] %v426
    %474 = vst [vmem:[#allocation2 + $0xb0] sm:$0xff] %v428
    %475 = vst [vmem:[#allocation2 + $0xb8] sm:$0xff] %v430
    %476 = vst [vmem:[#allocation2 + $0xc0] sm:$0xff] %v434
    %477 = vst [vmem:[#allocation2 + $0xc8] sm:$0xff] %v436
    %478 = vst [vmem:[#allocation2 + $0xd0] sm:$0xff] %v438
    %479 = vst [vmem:[#allocation2 + $0xd8] sm:$0xff] %v440
    %480 = vst [vmem:[#allocation2 + $0xe0] sm:$0xff] %v444
    %481 = vst [vmem:[#allocation2 + $0xe8] sm:$0xff] %v446
    %482 = vst [vmem:[#allocation2 + $0xf0] sm:$0xff] %v448
    %483 = vst [vmem:[#allocation2 + $0xf8] sm:$0xff] %v450
    %v484 = vld [vmem:[#allocation11 + $0x10] sm:$0xf]
    %v485 = vld [vmem:[#allocation11 + $0x18] sm:$0xf]
    %v486 = vld [vmem:[#allocation11 + $0x20] sm:$0xf]
    %v487 = vld [vmem:[#allocation11 + $0x28] sm:$0xf]
    %v488 = vld [vmem:[#allocation11 + $0x30] sm:$0xf]
    %v489 = vld [vmem:[#allocation11 + $0x38] sm:$0xf]
    %v490 = vld [vmem:[#allocation11 + $0x40] sm:$0xf]
    %v491 = vld [vmem:[#allocation11 + $0x48] sm:$0xf]
    %s492 = smul.u32 0, 2
    %s493 = smul.addr %s492, 8
    %s494 = scalar_lea.vmem [#allocation2], %s493
    %v495 = vld [vmem:[%s494] sm:$0xff]
    %v496 = vld [vmem:[%s494 + $0x10] sm:$0xff]
    %s497 = smul.u32 14, 2
    %s498 = smul.addr %s497, 8
    %s499 = scalar_lea.vmem [#allocation2], %s498
    %v500 = vld [vmem:[%s499 + $0x8] sm:$0xff]
    %v501 = vld [vmem:[%s499 + $0x18] sm:$0xff]
    %v506 = vunpack.c.l.b16 %v484
    %v507 = vunpack.c.l.b16 %v485
    %v508 = vunpack.c.l.b16 %v486
    %v509 = vunpack.c.l.b16 %v487
    %v510 = vpack.c.b16 %v507, %v506
    %v511 = vpack.c.b16 %v509, %v508
    %vm514 = vcmask 261120
    %v516 = vsel %vm514, 0, 0
    %518 = vmatprep.subr.bf16.mxu0 0
    %519 = vmatpush1.bf16.msra.mxu0 %v510
    %520 = vmatprep.subr.bf16.mxu0 0
    %521 = vmatpush1.bf16.msra.mxu0 %v511
    %522 = vmatprep.subr.bf16.mxu0 0
    %523 = vmatpush1.bf16.msra.mxu0 0
    %524 = vmatprep.subr.bf16.mxu0 0
    %525 = vmatpush1.bf16.msra.mxu0 0
    %526 = vmatprep.subr.bf16.mxu0 0
    %527 = vmatpush1.bf16.msra.mxu0 0
    %528 = vmatprep.subr.bf16.mxu0 0
    %529 = vmatpush1.bf16.msra.mxu0 0
    %530 = vmatprep.subr.bf16.mxu0 0
    %531 = vmatpush1.bf16.msra.mxu0 0
    %532 = vmatprep.subr.bf16.mxu0 0
    %533 = vmatpush1.bf16.msra.mxu0 0
    %534 = vmatprep.subr.bf16.mxu0 0
    %535 = vmatpush1.bf16.msra.mxu0 0
    %536 = vmatprep.subr.bf16.mxu0 0
    %537 = vmatpush1.bf16.msra.mxu0 0
    %538 = vmatprep.subr.bf16.mxu0 0
    %539 = vmatpush1.bf16.msra.mxu0 0
    %540 = vmatprep.subr.bf16.mxu0 0
    %541 = vmatpush1.bf16.msra.mxu0 0
    %542 = vmatprep.subr.bf16.mxu0 0
    %543 = vmatpush1.bf16.msra.mxu0 0
    %544 = vmatprep.subr.bf16.mxu0 0
    %545 = vmatpush1.bf16.msra.mxu0 0
    %546 = vmatprep.subr.bf16.mxu0 0
    %547 = vmatpush1.bf16.msra.mxu0 0
    %548 = vmatprep.subr.bf16.mxu0 0
    %549 = vmatpush1.bf16.msra.mxu0 0
    %550 = vmatprep.mubr.bf16.mxu0 0
    %551 = vmatmul.mubr.bf16.gmra.mrb[0].mxu0 %v516
    %v552 = vpop.f32.mrb[0].mxu0
    %v553 = vadd.f32 0.0, %v552
    %v554 = vpop.f32.mrb[0].mxu0
    %v555 = vpop.f32.mrb[0].mxu0
    %v556 = vadd.f32 0.0, %v555
    %v557 = vpop.f32.mrb[0].mxu0
    %558 = vdwg.mxu0
    %v559 = vadd.f32 %v495, %v553
    %v560 = vadd.f32 %v496, %v556
    %v561 = vxor.u32 %v559, 2147483648
    %v562 = vxor.u32 %v560, 2147483648
    %v563 = vmul.f32 %v561, 1.442695
    %v564 = vpow.pop %v563
    %v565 = vmul.f32 %v562, 1.442695
    %v566 = vpow.pop %v565
    %v567 = vadd.f32 %v564, 1.0
    %v568 = vadd.f32 %v566, 1.0
    %v569 = vrcp.pop %v567
    %v570 = vmul.f32 1.0, %v569
    %v571 = vrcp.pop %v568
    %v572 = vmul.f32 1.0, %v571
    %v573 = vtanh.pop %v559
    %v574 = vtanh.pop %v560
    %v575 = vmul.f32 %v570, 0.0
    %v576 = vmul.f32 %v572, 0.0
    %579 = vrot.lane.b32.xlu0 %v573, 32
    %v580 = vpop.permute.xlu0 %579
    %581 = vrot.lane.b32.xlu0 %v574, 32
    %v582 = vpop.permute.xlu0 %581
    %v585 = vmul.f32 %v570, %v580
    %v586 = vmul.f32 %v572, %v582
    %589 = vrot.lane.b32.xlu0 %v585, 32
    %v590 = vpop.permute.xlu0 %589
    %591 = vrot.lane.b32.xlu0 %v586, 32
    %v592 = vpop.permute.xlu0 %591
    %v595 = vadd.f32 %v575, %v590
    %v596 = vadd.f32 %v576, %v592
    %v597 = vtanh.pop %v595
    %v598 = vtanh.pop %v596
    %601 = vrot.lane.b32.xlu0 %v597, 32
    %v602 = vpop.permute.xlu0 %601
    %603 = vrot.lane.b32.xlu0 %v598, 32
    %v604 = vpop.permute.xlu0 %603
    %v607 = vmul.f32 %v570, %v602
    %v608 = vmul.f32 %v572, %v604
    %v613 = vunpack.c.l.b16 %v488
    %v614 = vunpack.c.l.b16 %v489
    %v615 = vunpack.c.l.b16 %v490
    %v616 = vunpack.c.l.b16 %v491
    %v617 = vpack.c.b16 %v614, %v613
    %v618 = vpack.c.b16 %v616, %v615
    %621 = vmatprep.subr.bf16.mxu0 0
    %622 = vmatpush1.bf16.msra.mxu0 %v617
    %623 = vmatprep.subr.bf16.mxu0 0
    %624 = vmatpush1.bf16.msra.mxu0 %v618
    %625 = vmatprep.subr.bf16.mxu0 0
    %626 = vmatpush1.bf16.msra.mxu0 0
    %627 = vmatprep.subr.bf16.mxu0 0
    %628 = vmatpush1.bf16.msra.mxu0 0
    %629 = vmatprep.subr.bf16.mxu0 0
    %630 = vmatpush1.bf16.msra.mxu0 0
    %631 = vmatprep.subr.bf16.mxu0 0
    %632 = vmatpush1.bf16.msra.mxu0 0
    %633 = vmatprep.subr.bf16.mxu0 0
    %634 = vmatpush1.bf16.msra.mxu0 0
    %635 = vmatprep.subr.bf16.mxu0 0
    %636 = vmatpush1.bf16.msra.mxu0 0
    %637 = vmatprep.subr.bf16.mxu0 0
    %638 = vmatpush1.bf16.msra.mxu0 0
    %639 = vmatprep.subr.bf16.mxu0 0
    %640 = vmatpush1.bf16.msra.mxu0 0
    %641 = vmatprep.subr.bf16.mxu0 0
    %642 = vmatpush1.bf16.msra.mxu0 0
    %643 = vmatprep.subr.bf16.mxu0 0
    %644 = vmatpush1.bf16.msra.mxu0 0
    %645 = vmatprep.subr.bf16.mxu0 0
    %646 = vmatpush1.bf16.msra.mxu0 0
    %647 = vmatprep.subr.bf16.mxu0 0
    %648 = vmatpush1.bf16.msra.mxu0 0
    %649 = vmatprep.subr.bf16.mxu0 0
    %650 = vmatpush1.bf16.msra.mxu0 0
    %651 = vmatprep.subr.bf16.mxu0 0
    %652 = vmatpush1.bf16.msra.mxu0 0
    %653 = vmatprep.mubr.bf16.mxu0 0
    %654 = vmatmul.mubr.bf16.gmra.mrb[0].mxu0 %v516
    %v655 = vpop.f32.mrb[0].mxu0
    %v656 = vadd.f32 0.0, %v655
    %v657 = vpop.f32.mrb[0].mxu0
    %v658 = vpop.f32.mrb[0].mxu0
    %v659 = vadd.f32 0.0, %v658
    %v660 = vpop.f32.mrb[0].mxu0
    %661 = vdwg.mxu0
    %v662 = vadd.f32 %v500, %v656
    %v663 = vadd.f32 %v501, %v659
    %v664 = vxor.u32 %v662, 2147483648
    %v665 = vxor.u32 %v663, 2147483648
    %v666 = vmul.f32 %v664, 1.442695
    %v667 = vpow.pop %v666
    %v668 = vmul.f32 %v665, 1.442695
    %v669 = vpow.pop %v668
    %v670 = vadd.f32 %v667, 1.0
    %v671 = vadd.f32 %v669, 1.0
    %v672 = vrcp.pop %v670
    %v673 = vmul.f32 1.0, %v672
    %v674 = vrcp.pop %v671
    %v675 = vmul.f32 1.0, %v674
    %v676 = vtanh.pop %v662
    %v677 = vtanh.pop %v663
    %v678 = vmul.f32 %v673, 0.0
    %v679 = vmul.f32 %v675, 0.0
    %682 = vrot.lane.b32.xlu0 %v676, 32
    %v683 = vpop.permute.xlu0 %682
    %684 = vrot.lane.b32.xlu0 %v677, 32
    %v685 = vpop.permute.xlu0 %684
    %v688 = vmul.f32 %v673, %v683
    %v689 = vmul.f32 %v675, %v685
    %692 = vrot.lane.b32.xlu0 %v688, 32
    %v693 = vpop.permute.xlu0 %692
    %694 = vrot.lane.b32.xlu0 %v689, 32
    %v695 = vpop.permute.xlu0 %694
    %v698 = vadd.f32 %v678, %v693
    %v699 = vadd.f32 %v679, %v695
    %v700 = vtanh.pop %v698
    %v701 = vtanh.pop %v699
    %704 = vrot.lane.b32.xlu0 %v700, 32
    %v705 = vpop.permute.xlu0 %704
    %706 = vrot.lane.b32.xlu0 %v701, 32
    %v707 = vpop.permute.xlu0 %706
    %v710 = vmul.f32 %v673, %v705
    %v711 = vmul.f32 %v675, %v707
    %v712 = vpack.c.bf16 %v608, %v607
    %714 = vrot.lane.b32.xlu0 %v712, 64
    %v715 = vpop.permute.xlu0 %714
    %717 = vst.msk [vmem:[#allocation5] sm:$0xff] %vm514, %v715
    %v718 = vpack.c.bf16 %v711, %v710
    %720 = vrot.lane.b32.xlu0 %v718, 64
    %v721 = vpop.permute.xlu0 %720
    %s723 = scalar_lea.vmem [#allocation6], 56
    %724 = vst.msk [vmem:[%s723] sm:$0xff] %vm514, %v721
    %s725 = smul.u32 2, 2
    %s726 = smul.addr %s725, 8
    %s727 = scalar_lea.vmem [#allocation2], %s726
    %v728 = vld [vmem:[%s727] sm:$0xff]
    %v729 = vld [vmem:[%s727 + $0x10] sm:$0xff]
    %s730 = smul.u32 12, 2
    %s731 = smul.addr %s730, 8
    %s732 = scalar_lea.vmem [#allocation2], %s731
    %v733 = vld [vmem:[%s732 + $0x8] sm:$0xff]
    %v734 = vld [vmem:[%s732 + $0x18] sm:$0xff]
    %v736 = vsel %vm514, %v715, 0
    %738 = vmatprep.subr.bf16.mxu0 0
    %739 = vmatpush1.bf16.msra.mxu0 %v510
    %740 = vmatprep.subr.bf16.mxu0 0
    %741 = vmatpush1.bf16.msra.mxu0 %v511
    %742 = vmatprep.subr.bf16.mxu0 0
    %743 = vmatpush1.bf16.msra.mxu0 0
    %744 = vmatprep.subr.bf16.mxu0 0
    %745 = vmatpush1.bf16.msra.mxu0 0
    %746 = vmatprep.subr.bf16.mxu0 0
    %747 = vmatpush1.bf16.msra.mxu0 0
    %748 = vmatprep.subr.bf16.mxu0 0
    %749 = vmatpush1.bf16.msra.mxu0 0
    %750 = vmatprep.subr.bf16.mxu0 0
    %751 = vmatpush1.bf16.msra.mxu0 0
    %752 = vmatprep.subr.bf16.mxu0 0
    %753 = vmatpush1.bf16.msra.mxu0 0
    %754 = vmatprep.subr.bf16.mxu0 0
    %755 = vmatpush1.bf16.msra.mxu0 0
    %756 = vmatprep.subr.bf16.mxu0 0
    %757 = vmatpush1.bf16.msra.mxu0 0
    %758 = vmatprep.subr.bf16.mxu0 0
    %759 = vmatpush1.bf16.msra.mxu0 0
    %760 = vmatprep.subr.bf16.mxu0 0
    %761 = vmatpush1.bf16.msra.mxu0 0
    %762 = vmatprep.subr.bf16.mxu0 0
    %763 = vmatpush1.bf16.msra.mxu0 0
    %764 = vmatprep.subr.bf16.mxu0 0
    %765 = vmatpush1.bf16.msra.mxu0 0
    %766 = vmatprep.subr.bf16.mxu0 0
    %767 = vmatpush1.bf16.msra.mxu0 0
    %768 = vmatprep.subr.bf16.mxu0 0
    %769 = vmatpush1.bf16.msra.mxu0 0
    %770 = vmatprep.mubr.bf16.mxu0 0
    %771 = vmatmul.mubr.bf16.gmra.mrb[0].mxu0 %v736
    %v772 = vpop.f32.mrb[0].mxu0
    %v773 = vadd.f32 0.0, %v772
    %v774 = vpop.f32.mrb[0].mxu0
    %v775 = vpop.f32.mrb[0].mxu0
    %v776 = vadd.f32 0.0, %v775
    %v777 = vpop.f32.mrb[0].mxu0
    %778 = vdwg.mxu0
    %v779 = vadd.f32 %v728, %v773
    %v780 = vadd.f32 %v729, %v776
    %v781 = vxor.u32 %v779, 2147483648
    %v782 = vxor.u32 %v780, 2147483648
    %v783 = vmul.f32 %v781, 1.442695
    %v784 = vpow.pop %v783
    %v785 = vmul.f32 %v782, 1.442695
    %v786 = vpow.pop %v785
    %v787 = vadd.f32 %v784, 1.0
    %v788 = vadd.f32 %v786, 1.0
    %v789 = vrcp.pop %v787
    %v790 = vmul.f32 1.0, %v789
    %v791 = vrcp.pop %v788
    %v792 = vmul.f32 1.0, %v791
    %v793 = vtanh.pop %v779
    %v794 = vtanh.pop %v780
    %v795 = vmul.f32 %v790, %v595
    %v796 = vmul.f32 %v792, %v596
    %799 = vrot.lane.b32.xlu0 %v793, 32
    %v800 = vpop.permute.xlu0 %799
    %801 = vrot.lane.b32.xlu0 %v794, 32
    %v802 = vpop.permute.xlu0 %801
    %v805 = vmul.f32 %v790, %v800
    %v806 = vmul.f32 %v792, %v802
    %809 = vrot.lane.b32.xlu0 %v805, 32
    %v810 = vpop.permute.xlu0 %809
    %811 = vrot.lane.b32.xlu0 %v806, 32
    %v812 = vpop.permute.xlu0 %811
    %v815 = vadd.f32 %v795, %v810
    %v816 = vadd.f32 %v796, %v812
    %v817 = vtanh.pop %v815
    %v818 = vtanh.pop %v816
    %821 = vrot.lane.b32.xlu0 %v817, 32
    %v822 = vpop.permute.xlu0 %821
    %823 = vrot.lane.b32.xlu0 %v818, 32
    %v824 = vpop.permute.xlu0 %823
    %v827 = vmul.f32 %v790, %v822
    %v828 = vmul.f32 %v792, %v824
    %v830 = vsel %vm514, %v721, 0
    %832 = vmatprep.subr.bf16.mxu0 0
    %833 = vmatpush1.bf16.msra.mxu0 %v617
    %834 = vmatprep.subr.bf16.mxu0 0
    %835 = vmatpush1.bf16.msra.mxu0 %v618
    %836 = vmatprep.subr.bf16.mxu0 0
    %837 = vmatpush1.bf16.msra.mxu0 0
    %838 = vmatprep.subr.bf16.mxu0 0
    %839 = vmatpush1.bf16.msra.mxu0 0
    %840 = vmatprep.subr.bf16.mxu0 0
    %841 = vmatpush1.bf16.msra.mxu0 0
    %842 = vmatprep.subr.bf16.mxu0 0
    %843 = vmatpush1.bf16.msra.mxu0 0
    %844 = vmatprep.subr.bf16.mxu0 0
    %845 = vmatpush1.bf16.msra.mxu0 0
    %846 = vmatprep.subr.bf16.mxu0 0
    %847 = vmatpush1.bf16.msra.mxu0 0
    %848 = vmatprep.subr.bf16.mxu0 0
    %849 = vmatpush1.bf16.msra.mxu0 0
    %850 = vmatprep.subr.bf16.mxu0 0
    %851 = vmatpush1.bf16.msra.mxu0 0
    %852 = vmatprep.subr.bf16.mxu0 0
    %853 = vmatpush1.bf16.msra.mxu0 0
    %854 = vmatprep.subr.bf16.mxu0 0
    %855 = vmatpush1.bf16.msra.mxu0 0
    %856 = vmatprep.subr.bf16.mxu0 0
    %857 = vmatpush1.bf16.msra.mxu0 0
    %858 = vmatprep.subr.bf16.mxu0 0
    %859 = vmatpush1.bf16.msra.mxu0 0
    %860 = vmatprep.subr.bf16.mxu0 0
    %861 = vmatpush1.bf16.msra.mxu0 0
    %862 = vmatprep.subr.bf16.mxu0 0
    %863 = vmatpush1.bf16.msra.mxu0 0
    %864 = vmatprep.mubr.bf16.mxu0 0
    %865 = vmatmul.mubr.bf16.gmra.mrb[0].mxu0 %v830
    %v866 = vpop.f32.mrb[0].mxu0
    %v867 = vadd.f32 0.0, %v866
    %v868 = vpop.f32.mrb[0].mxu0
    %v869 = vpop.f32.mrb[0].mxu0
    %v870 = vadd.f32 0.0, %v869
    %v871 = vpop.f32.mrb[0].mxu0
    %872 = vdwg.mxu0
    %v873 = vadd.f32 %v733, %v867
    %v874 = vadd.f32 %v734, %v870
    %v875 = vxor.u32 %v873, 2147483648
    %v876 = vxor.u32 %v874, 2147483648
    %v877 = vmul.f32 %v875, 1.442695
    %v878 = vpow.pop %v877
    %v879 = vmul.f32 %v876, 1.442695
    %v880 = vpow.pop %v879
    %v881 = vadd.f32 %v878, 1.0
    %v882 = vadd.f32 %v880, 1.0
    %v883 = vrcp.pop %v881
    %v884 = vmul.f32 1.0, %v883
    %v885 = vrcp.pop %v882
    %v886 = vmul.f32 1.0, %v885
    %v887 = vtanh.pop %v873
    %v888 = vtanh.pop %v874
    %v889 = vmul.f32 %v884, %v698
    %v890 = vmul.f32 %v886, %v699
    %893 = vrot.lane.b32.xlu0 %v887, 32
    %v894 = vpop.permute.xlu0 %893
    %895 = vrot.lane.b32.xlu0 %v888, 32
    %v896 = vpop.permute.xlu0 %895
    %v899 = vmul.f32 %v884, %v894
    %v900 = vmul.f32 %v886, %v896
    %903 = vrot.lane.b32.xlu0 %v899, 32
    %v904 = vpop.permute.xlu0 %903
    %905 = vrot.lane.b32.xlu0 %v900, 32
    %v906 = vpop.permute.xlu0 %905
    %v909 = vadd.f32 %v889, %v904
    %v910 = vadd.f32 %v890, %v906
    %v911 = vtanh.pop %v909
    %v912 = vtanh.pop %v910
    %915 = vrot.lane.b32.xlu0 %v911, 32
    %v916 = vpop.permute.xlu0 %915
    %917 = vrot.lane.b32.xlu0 %v912, 32
    %v918 = vpop.permute.xlu0 %917
    %v921 = vmul.f32 %v884, %v916
    %v922 = vmul.f32 %v886, %v918
    %v923 = vpack.c.bf16 %v828, %v827
    %925 = vrot.lane.b32.xlu0 %v923, 64
    %v926 = vpop.permute.xlu0 %925
    %s928 = scalar_lea.vmem [#allocation5], 8
    %929 = vst.msk [vmem:[%s928] sm:$0xff] %vm514, %v926
    %v930 = vpack.c.bf16 %v922, %v921
    %932 = vrot.lane.b32.xlu0 %v930, 64
    %v933 = vpop.permute.xlu0 %932
    %s935 = scalar_lea.vmem [#allocation6], 48
    %936 = vst.msk [vmem:[%s935] sm:$0xff] %vm514, %v933
    %s937 = smul.u32 4, 2
    %s938 = smul.addr %s937, 8
    %s939 = scalar_lea.vmem [#allocation2], %s938
    %v940 = vld [vmem:[%s939] sm:$0xff]
    %v941 = vld [vmem:[%s939 + $0x10] sm:$0xff]
    %s942 = smul.u32 10, 2
    %s943 = smul.addr %s942, 8
    %s944 = scalar_lea.vmem [#allocation2], %s943
    %v945 = vld [vmem:[%s944 + $0x8] sm:$0xff]
    %v946 = vld [vmem:[%s944 + $0x18] sm:$0xff]
    %v948 = vsel %vm514, %v926, 0
    %950 = vmatprep.subr.bf16.mxu0 0
    %951 = vmatpush1.bf16.msra.mxu0 %v510
    %952 = vmatprep.subr.bf16.mxu0 0
    %953 = vmatpush1.bf16.msra.mxu0 %v511
    %954 = vmatprep.subr.bf16.mxu0 0
    %955 = vmatpush1.bf16.msra.mxu0 0
    %956 = vmatprep.subr.bf16.mxu0 0
    %957 = vmatpush1.bf16.msra.mxu0 0
    %958 = vmatprep.subr.bf16.mxu0 0
    %959 = vmatpush1.bf16.msra.mxu0 0
    %960 = vmatprep.subr.bf16.mxu0 0
    %961 = vmatpush1.bf16.msra.mxu0 0
    %962 = vmatprep.subr.bf16.mxu0 0
    %963 = vmatpush1.bf16.msra.mxu0 0
    %964 = vmatprep.subr.bf16.mxu0 0
    %965 = vmatpush1.bf16.msra.mxu0 0
    %966 = vmatprep.subr.bf16.mxu0 0
    %967 = vmatpush1.bf16.msra.mxu0 0
    %968 = vmatprep.subr.bf16.mxu0 0
    %969 = vmatpush1.bf16.msra.mxu0 0
    %970 = vmatprep.subr.bf16.mxu0 0
    %971 = vmatpush1.bf16.msra.mxu0 0
    %972 = vmatprep.subr.bf16.mxu0 0
    %973 = vmatpush1.bf16.msra.mxu0 0
    %974 = vmatprep.subr.bf16.mxu0 0
    %975 = vmatpush1.bf16.msra.mxu0 0
    %976 = vmatprep.subr.bf16.mxu0 0
    %977 = vmatpush1.bf16.msra.mxu0 0
    %978 = vmatprep.subr.bf16.mxu0 0
    %979 = vmatpush1.bf16.msra.mxu0 0
    %980 = vmatprep.subr.bf16.mxu0 0
    %981 = vmatpush1.bf16.msra.mxu0 0
    %982 = vmatprep.mubr.bf16.mxu0 0
    %983 = vmatmul.mubr.bf16.gmra.mrb[0].mxu0 %v948
    %v984 = vpop.f32.mrb[0].mxu0
    %v985 = vadd.f32 0.0, %v984
    %v986 = vpop.f32.mrb[0].mxu0
    %v987 = vpop.f32.mrb[0].mxu0
    %v988 = vadd.f32 0.0, %v987
    %v989 = vpop.f32.mrb[0].mxu0
    %990 = vdwg.mxu0
    %v991 = vadd.f32 %v940, %v985
    %v992 = vadd.f32 %v941, %v988
    %v993 = vxor.u32 %v991, 2147483648
    %v994 = vxor.u32 %v992, 2147483648
    %v995 = vmul.f32 %v993, 1.442695
    %v996 = vpow.pop %v995
    %v997 = vmul.f32 %v994, 1.442695
    %v998 = vpow.pop %v997
    %v999 = vadd.f32 %v996, 1.0
    %v1000 = vadd.f32 %v998, 1.0
    %v1001 = vrcp.pop %v999
    %v1002 = vmul.f32 1.0, %v1001
    %v1003 = vrcp.pop %v1000
    %v1004 = vmul.f32 1.0, %v1003
    %v1005 = vtanh.pop %v991
    %v1006 = vtanh.pop %v992
    %v1007 = vmul.f32 %v1002, %v815
    %v1008 = vmul.f32 %v1004, %v816
    %1011 = vrot.lane.b32.xlu0 %v1005, 32
    %v1012 = vpop.permute.xlu0 %1011
    %1013 = vrot.lane.b32.xlu0 %v1006, 32
    %v1014 = vpop.permute.xlu0 %1013
    %v1017 = vmul.f32 %v1002, %v1012
    %v1018 = vmul.f32 %v1004, %v1014
    %1021 = vrot.lane.b32.xlu0 %v1017, 32
    %v1022 = vpop.permute.xlu0 %1021
    %1023 = vrot.lane.b32.xlu0 %v1018, 32
    %v1024 = vpop.permute.xlu0 %1023
    %v1027 = vadd.f32 %v1007, %v1022
    %v1028 = vadd.f32 %v1008, %v1024
    %v1029 = vtanh.pop %v1027
    %v1030 = vtanh.pop %v1028
    %1033 = vrot.lane.b32.xlu0 %v1029, 32
    %v1034 = vpop.permute.xlu0 %1033
    %1035 = vrot.lane.b32.xlu0 %v1030, 32
    %v1036 = vpop.permute.xlu0 %1035
    %v1039 = vmul.f32 %v1002, %v1034
    %v1040 = vmul.f32 %v1004, %v1036
    %v1042 = vsel %vm514, %v933, 0
    %1044 = vmatprep.subr.bf16.mxu0 0
    %1045 = vmatpush1.bf16.msra.mxu0 %v617
    %1046 = vmatprep.subr.bf16.mxu0 0
    %1047 = vmatpush1.bf16.msra.mxu0 %v618
    %1048 = vmatprep.subr.bf16.mxu0 0
    %1049 = vmatpush1.bf16.msra.mxu0 0
    %1050 = vmatprep.subr.bf16.mxu0 0
    %1051 = vmatpush1.bf16.msra.mxu0 0
    %1052 = vmatprep.subr.bf16.mxu0 0
    %1053 = vmatpush1.bf16.msra.mxu0 0
    %1054 = vmatprep.subr.bf16.mxu0 0
    %1055 = vmatpush1.bf16.msra.mxu0 0
    %1056 = vmatprep.subr.bf16.mxu0 0
    %1057 = vmatpush1.bf16.msra.mxu0 0
    %1058 = vmatprep.subr.bf16.mxu0 0
    %1059 = vmatpush1.bf16.msra.mxu0 0
    %1060 = vmatprep.subr.bf16.mxu0 0
    %1061 = vmatpush1.bf16.msra.mxu0 0
    %1062 = vmatprep.subr.bf16.mxu0 0
    %1063 = vmatpush1.bf16.msra.mxu0 0
    %1064 = vmatprep.subr.bf16.mxu0 0
    %1065 = vmatpush1.bf16.msra.mxu0 0
    %1066 = vmatprep.subr.bf16.mxu0 0
    %1067 = vmatpush1.bf16.msra.mxu0 0
    %1068 = vmatprep.subr.bf16.mxu0 0
    %1069 = vmatpush1.bf16.msra.mxu0 0
    %1070 = vmatprep.subr.bf16.mxu0 0
    %1071 = vmatpush1.bf16.msra.mxu0 0
    %1072 = vmatprep.subr.bf16.mxu0 0
    %1073 = vmatpush1.bf16.msra.mxu0 0
    %1074 = vmatprep.subr.bf16.mxu0 0
    %1075 = vmatpush1.bf16.msra.mxu0 0
    %1076 = vmatprep.mubr.bf16.mxu0 0
    %1077 = vmatmul.mubr.bf16.gmra.mrb[0].mxu0 %v1042
    %v1078 = vpop.f32.mrb[0].mxu0
    %v1079 = vadd.f32 0.0, %v1078
    %v1080 = vpop.f32.mrb[0].mxu0
    %v1081 = vpop.f32.mrb[0].mxu0
    %v1082 = vadd.f32 0.0, %v1081
    %v1083 = vpop.f32.mrb[0].mxu0
    %1084 = vdwg.mxu0
    %v1085 = vadd.f32 %v945, %v1079
    %v1086 = vadd.f32 %v946, %v1082
    %v1087 = vxor.u32 %v1085, 2147483648
    %v1088 = vxor.u32 %v1086, 2147483648
    %v1089 = vmul.f32 %v1087, 1.442695
    %v1090 = vpow.pop %v1089
    %v1091 = vmul.f32 %v1088, 1.442695
    %v1092 = vpow.pop %v1091
    %v1093 = vadd.f32 %v1090, 1.0
    %v1094 = vadd.f32 %v1092, 1.0
    %v1095 = vrcp.pop %v1093
    %v1096 = vmul.f32 1.0, %v1095
    %v1097 = vrcp.pop %v1094
    %v1098 = vmul.f32 1.0, %v1097
    %v1099 = vtanh.pop %v1085
    %v1100 = vtanh.pop %v1086
    %v1101 = vmul.f32 %v1096, %v909
    %v1102 = vmul.f32 %v1098, %v910
    %1105 = vrot.lane.b32.xlu0 %v1099, 32
    %v1106 = vpop.permute.xlu0 %1105
    %1107 = vrot.lane.b32.xlu0 %v1100, 32
    %v1108 = vpop.permute.xlu0 %1107
    %v1111 = vmul.f32 %v1096, %v1106
    %v1112 = vmul.f32 %v1098, %v1108
    %1115 = vrot.lane.b32.xlu0 %v1111, 32
    %v1116 = vpop.permute.xlu0 %1115
    %1117 = vrot.lane.b32.xlu0 %v1112, 32
    %v1118 = vpop.permute.xlu0 %1117
    %v1121 = vadd.f32 %v1101, %v1116
    %v1122 = vadd.f32 %v1102, %v1118
    %v1123 = vtanh.pop %v1121
    %v1124 = vtanh.pop %v1122
    %1127 = vrot.lane.b32.xlu0 %v1123, 32
    %v1128 = vpop.permute.xlu0 %1127
    %1129 = vrot.lane.b32.xlu0 %v1124, 32
    %v1130 = vpop.permute.xlu0 %1129
    %v1133 = vmul.f32 %v1096, %v1128
    %v1134 = vmul.f32 %v1098, %v1130
    %v1135 = vpack.c.bf16 %v1040, %v1039
    %1137 = vrot.lane.b32.xlu0 %v1135, 64
    %v1138 = vpop.permute.xlu0 %1137
    %s1140 = scalar_lea.vmem [#allocation5], 16
    %1141 = vst.msk [vmem:[%s1140] sm:$0xff] %vm514, %v1138
    %v1142 = vpack.c.bf16 %v1134, %v1133
    %1144 = vrot.lane.b32.xlu0 %v1142, 64
    %v1145 = vpop.permute.xlu0 %1144
    %s1147 = scalar_lea.vmem [#allocation6], 40
    %1148 = vst.msk [vmem:[%s1147] sm:$0xff] %vm514, %v1145
    %s1149 = smul.u32 6, 2
    %s1150 = smul.addr %s1149, 8
    %s1151 = scalar_lea.vmem [#allocation2], %s1150
    %v1152 = vld [vmem:[%s1151] sm:$0xff]
    %v1153 = vld [vmem:[%s1151 + $0x10] sm:$0xff]
    %s1154 = smul.u32 8, 2
    %s1155 = smul.addr %s1154, 8
    %s1156 = scalar_lea.vmem [#allocation2], %s1155
    %v1157 = vld [vmem:[%s1156 + $0x8] sm:$0xff]
    %v1158 = vld [vmem:[%s1156 + $0x18] sm:$0xff]
    %v1160 = vsel %vm514, %v1138, 0
    %1162 = vmatprep.subr.bf16.mxu0 0
    %1163 = vmatpush1.bf16.msra.mxu0 %v510
    %1164 = vmatprep.subr.bf16.mxu0 0
    %1165 = vmatpush1.bf16.msra.mxu0 %v511
    %1166 = vmatprep.subr.bf16.mxu0 0
    %1167 = vmatpush1.bf16.msra.mxu0 0
    %1168 = vmatprep.subr.bf16.mxu0 0
    %1169 = vmatpush1.bf16.msra.mxu0 0
    %1170 = vmatprep.subr.bf16.mxu0 0
    %1171 = vmatpush1.bf16.msra.mxu0 0
    %1172 = vmatprep.subr.bf16.mxu0 0
    %1173 = vmatpush1.bf16.msra.mxu0 0
    %1174 = vmatprep.subr.bf16.mxu0 0
    %1175 = vmatpush1.bf16.msra.mxu0 0
    %1176 = vmatprep.subr.bf16.mxu0 0
    %1177 = vmatpush1.bf16.msra.mxu0 0
    %1178 = vmatprep.subr.bf16.mxu0 0
    %1179 = vmatpush1.bf16.msra.mxu0 0
    %1180 = vmatprep.subr.bf16.mxu0 0
    %1181 = vmatpush1.bf16.msra.mxu0 0
    %1182 = vmatprep.subr.bf16.mxu0 0
    %1183 = vmatpush1.bf16.msra.mxu0 0
    %1184 = vmatprep.subr.bf16.mxu0 0
    %1185 = vmatpush1.bf16.msra.mxu0 0
    %1186 = vmatprep.subr.bf16.mxu0 0
    %1187 = vmatpush1.bf16.msra.mxu0 0
    %1188 = vmatprep.subr.bf16.mxu0 0
    %1189 = vmatpush1.bf16.msra.mxu0 0
    %1190 = vmatprep.subr.bf16.mxu0 0
    %1191 = vmatpush1.bf16.msra.mxu0 0
    %1192 = vmatprep.subr.bf16.mxu0 0
    %1193 = vmatpush1.bf16.msra.mxu0 0
    %1194 = vmatprep.mubr.bf16.mxu0 0
    %1195 = vmatmul.mubr.bf16.gmra.mrb[0].mxu0 %v1160
    %v1196 = vpop.f32.mrb[0].mxu0
    %v1197 = vadd.f32 0.0, %v1196
    %v1198 = vpop.f32.mrb[0].mxu0
    %v1199 = vpop.f32.mrb[0].mxu0
    %v1200 = vadd.f32 0.0, %v1199
    %v1201 = vpop.f32.mrb[0].mxu0
    %1202 = vdwg.mxu0
    %v1203 = vadd.f32 %v1152, %v1197
    %v1204 = vadd.f32 %v1153, %v1200
    %v1205 = vxor.u32 %v1203, 2147483648
    %v1206 = vxor.u32 %v1204, 2147483648
    %v1207 = vmul.f32 %v1205, 1.442695
    %v1208 = vpow.pop %v1207
    %v1209 = vmul.f32 %v1206, 1.442695
    %v1210 = vpow.pop %v1209
    %v1211 = vadd.f32 %v1208, 1.0
    %v1212 = vadd.f32 %v1210, 1.0
    %v1213 = vrcp.pop %v1211
    %v1214 = vmul.f32 1.0, %v1213
    %v1215 = vrcp.pop %v1212
    %v1216 = vmul.f32 1.0, %v1215
    %v1217 = vtanh.pop %v1203
    %v1218 = vtanh.pop %v1204
    %v1219 = vmul.f32 %v1214, %v1027
    %v1220 = vmul.f32 %v1216, %v1028
    %1223 = vrot.lane.b32.xlu0 %v1217, 32
    %v1224 = vpop.permute.xlu0 %1223
    %1225 = vrot.lane.b32.xlu0 %v1218, 32
    %v1226 = vpop.permute.xlu0 %1225
    %v1229 = vmul.f32 %v1214, %v1224
    %v1230 = vmul.f32 %v1216, %v1226
    %1233 = vrot.lane.b32.xlu0 %v1229, 32
    %v1234 = vpop.permute.xlu0 %1233
    %1235 = vrot.lane.b32.xlu0 %v1230, 32
    %v1236 = vpop.permute.xlu0 %1235
    %v1239 = vadd.f32 %v1219, %v1234
    %v1240 = vadd.f32 %v1220, %v1236
    %v1241 = vtanh.pop %v1239
    %v1242 = vtanh.pop %v1240
    %1245 = vrot.lane.b32.xlu0 %v1241, 32
    %v1246 = vpop.permute.xlu0 %1245
    %1247 = vrot.lane.b32.xlu0 %v1242, 32
    %v1248 = vpop.permute.xlu0 %1247
    %v1251 = vmul.f32 %v1214, %v1246
    %v1252 = vmul.f32 %v1216, %v1248
    %v1254 = vsel %vm514, %v1145, 0
    %1256 = vmatprep.subr.bf16.mxu0 0
    %1257 = vmatpush1.bf16.msra.mxu0 %v617
    %1258 = vmatprep.subr.bf16.mxu0 0
    %1259 = vmatpush1.bf16.msra.mxu0 %v618
    %1260 = vmatprep.subr.bf16.mxu0 0
    %1261 = vmatpush1.bf16.msra.mxu0 0
    %1262 = vmatprep.subr.bf16.mxu0 0
    %1263 = vmatpush1.bf16.msra.mxu0 0
    %1264 = vmatprep.subr.bf16.mxu0 0
    %1265 = vmatpush1.bf16.msra.mxu0 0
    %1266 = vmatprep.subr.bf16.mxu0 0
    %1267 = vmatpush1.bf16.msra.mxu0 0
    %1268 = vmatprep.subr.bf16.mxu0 0
    %1269 = vmatpush1.bf16.msra.mxu0 0
    %1270 = vmatprep.subr.bf16.mxu0 0
    %1271 = vmatpush1.bf16.msra.mxu0 0
    %1272 = vmatprep.subr.bf16.mxu0 0
    %1273 = vmatpush1.bf16.msra.mxu0 0
    %1274 = vmatprep.subr.bf16.mxu0 0
    %1275 = vmatpush1.bf16.msra.mxu0 0
    %1276 = vmatprep.subr.bf16.mxu0 0
    %1277 = vmatpush1.bf16.msra.mxu0 0
    %1278 = vmatprep.subr.bf16.mxu0 0
    %1279 = vmatpush1.bf16.msra.mxu0 0
    %1280 = vmatprep.subr.bf16.mxu0 0
    %1281 = vmatpush1.bf16.msra.mxu0 0
    %1282 = vmatprep.subr.bf16.mxu0 0
    %1283 = vmatpush1.bf16.msra.mxu0 0
    %1284 = vmatprep.subr.bf16.mxu0 0
    %1285 = vmatpush1.bf16.msra.mxu0 0
    %1286 = vmatprep.subr.bf16.mxu0 0
    %1287 = vmatpush1.bf16.msra.mxu0 0
    %1288 = vmatprep.mubr.bf16.mxu0 0
    %1289 = vmatmul.mubr.bf16.gmra.mrb[0].mxu0 %v1254
    %v1290 = vpop.f32.mrb[0].mxu0
    %v1291 = vadd.f32 0.0, %v1290
    %v1292 = vpop.f32.mrb[0].mxu0
    %v1293 = vpop.f32.mrb[0].mxu0
    %v1294 = vadd.f32 0.0, %v1293
    %v1295 = vpop.f32.mrb[0].mxu0
    %1296 = vdwg.mxu0
    %v1297 = vadd.f32 %v1157, %v1291
    %v1298 = vadd.f32 %v1158, %v1294
    %v1299 = vxor.u32 %v1297, 2147483648
    %v1300 = vxor.u32 %v1298, 2147483648
    %v1301 = vmul.f32 %v1299, 1.442695
    %v1302 = vpow.pop %v1301
    %v1303 = vmul.f32 %v1300, 1.442695
    %v1304 = vpow.pop %v1303
    %v1305 = vadd.f32 %v1302, 1.0
    %v1306 = vadd.f32 %v1304, 1.0
    %v1307 = vrcp.pop %v1305
    %v1308 = vmul.f32 1.0, %v1307
    %v1309 = vrcp.pop %v1306
    %v1310 = vmul.f32 1.0, %v1309
    %v1311 = vtanh.pop %v1297
    %v1312 = vtanh.pop %v1298
    %v1313 = vmul.f32 %v1308, %v1121
    %v1314 = vmul.f32 %v1310, %v1122
    %1317 = vrot.lane.b32.xlu0 %v1311, 32
    %v1318 = vpop.permute.xlu0 %1317
    %1319 = vrot.lane.b32.xlu0 %v1312, 32
    %v1320 = vpop.permute.xlu0 %1319
    %v1323 = vmul.f32 %v1308, %v1318
    %v1324 = vmul.f32 %v1310, %v1320
    %1327 = vrot.lane.b32.xlu0 %v1323, 32
    %v1328 = vpop.permute.xlu0 %1327
    %1329 = vrot.lane.b32.xlu0 %v1324, 32
    %v1330 = vpop.permute.xlu0 %1329
    %v1333 = vadd.f32 %v1313, %v1328
    %v1334 = vadd.f32 %v1314, %v1330
    %v1335 = vtanh.pop %v1333
    %v1336 = vtanh.pop %v1334
    %1339 = vrot.lane.b32.xlu0 %v1335, 32
    %v1340 = vpop.permute.xlu0 %1339
    %1341 = vrot.lane.b32.xlu0 %v1336, 32
    %v1342 = vpop.permute.xlu0 %1341
    %v1345 = vmul.f32 %v1308, %v1340
    %v1346 = vmul.f32 %v1310, %v1342
    %v1347 = vpack.c.bf16 %v1252, %v1251
    %1349 = vrot.lane.b32.xlu0 %v1347, 64
    %v1350 = vpop.permute.xlu0 %1349
    %s1352 = scalar_lea.vmem [#allocation5], 24
    %1353 = vst.msk [vmem:[%s1352] sm:$0xff] %vm514, %v1350
    %v1354 = vpack.c.bf16 %v1346, %v1345
    %1356 = vrot.lane.b32.xlu0 %v1354, 64
    %v1357 = vpop.permute.xlu0 %1356
    %s1359 = scalar_lea.vmem [#allocation6], 32
    %1360 = vst.msk [vmem:[%s1359] sm:$0xff] %vm514, %v1357
    %v1361 = vld [vmem:[%s1156] sm:$0xff]
    %v1362 = vld [vmem:[%s1156 + $0x10] sm:$0xff]
    %v1363 = vld [vmem:[%s1151 + $0x8] sm:$0xff]
    %v1364 = vld [vmem:[%s1151 + $0x18] sm:$0xff]
    %v1366 = vsel %vm514, %v1350, 0
    %1368 = vmatprep.subr.bf16.mxu0 0
    %1369 = vmatpush1.bf16.msra.mxu0 %v510
    %1370 = vmatprep.subr.bf16.mxu0 0
    %1371 = vmatpush1.bf16.msra.mxu0 %v511
    %1372 = vmatprep.subr.bf16.mxu0 0
    %1373 = vmatpush1.bf16.msra.mxu0 0
    %1374 = vmatprep.subr.bf16.mxu0 0
    %1375 = vmatpush1.bf16.msra.mxu0 0
    %1376 = vmatprep.subr.bf16.mxu0 0
    %1377 = vmatpush1.bf16.msra.mxu0 0
    %1378 = vmatprep.subr.bf16.mxu0 0
    %1379 = vmatpush1.bf16.msra.mxu0 0
    %1380 = vmatprep.subr.bf16.mxu0 0
    %1381 = vmatpush1.bf16.msra.mxu0 0
    %1382 = vmatprep.subr.bf16.mxu0 0
    %1383 = vmatpush1.bf16.msra.mxu0 0
    %1384 = vmatprep.subr.bf16.mxu0 0
    %1385 = vmatpush1.bf16.msra.mxu0 0
    %1386 = vmatprep.subr.bf16.mxu0 0
    %1387 = vmatpush1.bf16.msra.mxu0 0
    %1388 = vmatprep.subr.bf16.mxu0 0
    %1389 = vmatpush1.bf16.msra.mxu0 0
    %1390 = vmatprep.subr.bf16.mxu0 0
    %1391 = vmatpush1.bf16.msra.mxu0 0
    %1392 = vmatprep.subr.bf16.mxu0 0
    %1393 = vmatpush1.bf16.msra.mxu0 0
    %1394 = vmatprep.subr.bf16.mxu0 0
    %1395 = vmatpush1.bf16.msra.mxu0 0
    %1396 = vmatprep.subr.bf16.mxu0 0
    %1397 = vmatpush1.bf16.msra.mxu0 0
    %1398 = vmatprep.subr.bf16.mxu0 0
    %1399 = vmatpush1.bf16.msra.mxu0 0
    %1400 = vmatprep.mubr.bf16.mxu0 0
    %1401 = vmatmul.mubr.bf16.gmra.mrb[0].mxu0 %v1366
    %v1402 = vpop.f32.mrb[0].mxu0
    %v1403 = vadd.f32 0.0, %v1402
    %v1404 = vpop.f32.mrb[0].mxu0
    %v1405 = vpop.f32.mrb[0].mxu0
    %v1406 = vadd.f32 0.0, %v1405
    %v1407 = vpop.f32.mrb[0].mxu0
    %1408 = vdwg.mxu0
    %v1409 = vadd.f32 %v1361, %v1403
    %v1410 = vadd.f32 %v1362, %v1406
    %v1411 = vxor.u32 %v1409, 2147483648
    %v1412 = vxor.u32 %v1410, 2147483648
    %v1413 = vmul.f32 %v1411, 1.442695
    %v1414 = vpow.pop %v1413
    %v1415 = vmul.f32 %v1412, 1.442695
    %v1416 = vpow.pop %v1415
    %v1417 = vadd.f32 %v1414, 1.0
    %v1418 = vadd.f32 %v1416, 1.0
    %v1419 = vrcp.pop %v1417
    %v1420 = vmul.f32 1.0, %v1419
    %v1421 = vrcp.pop %v1418
    %v1422 = vmul.f32 1.0, %v1421
    %v1423 = vtanh.pop %v1409
    %v1424 = vtanh.pop %v1410
    %v1425 = vmul.f32 %v1420, %v1239
    %v1426 = vmul.f32 %v1422, %v1240
    %1429 = vrot.lane.b32.xlu0 %v1423, 32
    %v1430 = vpop.permute.xlu0 %1429
    %1431 = vrot.lane.b32.xlu0 %v1424, 32
    %v1432 = vpop.permute.xlu0 %1431
    %v1435 = vmul.f32 %v1420, %v1430
    %v1436 = vmul.f32 %v1422, %v1432
    %1439 = vrot.lane.b32.xlu0 %v1435, 32
    %v1440 = vpop.permute.xlu0 %1439
    %1441 = vrot.lane.b32.xlu0 %v1436, 32
    %v1442 = vpop.permute.xlu0 %1441
    %v1445 = vadd.f32 %v1425, %v1440
    %v1446 = vadd.f32 %v1426, %v1442
    %v1447 = vtanh.pop %v1445
    %v1448 = vtanh.pop %v1446
    %1451 = vrot.lane.b32.xlu0 %v1447, 32
    %v1452 = vpop.permute.xlu0 %1451
    %1453 = vrot.lane.b32.xlu0 %v1448, 32
    %v1454 = vpop.permute.xlu0 %1453
    %v1457 = vmul.f32 %v1420, %v1452
    %v1458 = vmul.f32 %v1422, %v1454
    %v1460 = vsel %vm514, %v1357, 0
    %1462 = vmatprep.subr.bf16.mxu0 0
    %1463 = vmatpush1.bf16.msra.mxu0 %v617
    %1464 = vmatprep.subr.bf16.mxu0 0
    %1465 = vmatpush1.bf16.msra.mxu0 %v618
    %1466 = vmatprep.subr.bf16.mxu0 0
    %1467 = vmatpush1.bf16.msra.mxu0 0
    %1468 = vmatprep.subr.bf16.mxu0 0
    %1469 = vmatpush1.bf16.msra.mxu0 0
    %1470 = vmatprep.subr.bf16.mxu0 0
    %1471 = vmatpush1.bf16.msra.mxu0 0
    %1472 = vmatprep.subr.bf16.mxu0 0
    %1473 = vmatpush1.bf16.msra.mxu0 0
    %1474 = vmatprep.subr.bf16.mxu0 0
    %1475 = vmatpush1.bf16.msra.mxu0 0
    %1476 = vmatprep.subr.bf16.mxu0 0
    %1477 = vmatpush1.bf16.msra.mxu0 0
    %1478 = vmatprep.subr.bf16.mxu0 0
    %1479 = vmatpush1.bf16.msra.mxu0 0
    %1480 = vmatprep.subr.bf16.mxu0 0
    %1481 = vmatpush1.bf16.msra.mxu0 0
    %1482 = vmatprep.subr.bf16.mxu0 0
    %1483 = vmatpush1.bf16.msra.mxu0 0
    %1484 = vmatprep.subr.bf16.mxu0 0
    %1485 = vmatpush1.bf16.msra.mxu0 0
    %1486 = vmatprep.subr.bf16.mxu0 0
    %1487 = vmatpush1.bf16.msra.mxu0 0
    %1488 = vmatprep.subr.bf16.mxu0 0
    %1489 = vmatpush1.bf16.msra.mxu0 0
    %1490 = vmatprep.subr.bf16.mxu0 0
    %1491 = vmatpush1.bf16.msra.mxu0 0
    %1492 = vmatprep.subr.bf16.mxu0 0
    %1493 = vmatpush1.bf16.msra.mxu0 0
    %1494 = vmatprep.mubr.bf16.mxu0 0
    %1495 = vmatmul.mubr.bf16.gmra.mrb[0].mxu0 %v1460
    %v1496 = vpop.f32.mrb[0].mxu0
    %v1497 = vadd.f32 0.0, %v1496
    %v1498 = vpop.f32.mrb[0].mxu0
    %v1499 = vpop.f32.mrb[0].mxu0
    %v1500 = vadd.f32 0.0, %v1499
    %v1501 = vpop.f32.mrb[0].mxu0
    %1502 = vdwg.mxu0
    %v1503 = vadd.f32 %v1363, %v1497
    %v1504 = vadd.f32 %v1364, %v1500
    %v1505 = vxor.u32 %v1503, 2147483648
    %v1506 = vxor.u32 %v1504, 2147483648
    %v1507 = vmul.f32 %v1505, 1.442695
    %v1508 = vpow.pop %v1507
    %v1509 = vmul.f32 %v1506, 1.442695
    %v1510 = vpow.pop %v1509
    %v1511 = vadd.f32 %v1508, 1.0
    %v1512 = vadd.f32 %v1510, 1.0
    %v1513 = vrcp.pop %v1511
    %v1514 = vmul.f32 1.0, %v1513
    %v1515 = vrcp.pop %v1512
    %v1516 = vmul.f32 1.0, %v1515
    %v1517 = vtanh.pop %v1503
    %v1518 = vtanh.pop %v1504
    %v1519 = vmul.f32 %v1514, %v1333
    %v1520 = vmul.f32 %v1516, %v1334
    %1523 = vrot.lane.b32.xlu0 %v1517, 32
    %v1524 = vpop.permute.xlu0 %1523
    %1525 = vrot.lane.b32.xlu0 %v1518, 32
    %v1526 = vpop.permute.xlu0 %1525
    %v1529 = vmul.f32 %v1514, %v1524
    %v1530 = vmul.f32 %v1516, %v1526
    %1533 = vrot.lane.b32.xlu0 %v1529, 32
    %v1534 = vpop.permute.xlu0 %1533
    %1535 = vrot.lane.b32.xlu0 %v1530, 32
    %v1536 = vpop.permute.xlu0 %1535
    %v1539 = vadd.f32 %v1519, %v1534
    %v1540 = vadd.f32 %v1520, %v1536
    %v1541 = vtanh.pop %v1539
    %v1542 = vtanh.pop %v1540
    %1545 = vrot.lane.b32.xlu0 %v1541, 32
    %v1546 = vpop.permute.xlu0 %1545
    %1547 = vrot.lane.b32.xlu0 %v1542, 32
    %v1548 = vpop.permute.xlu0 %1547
    %v1551 = vmul.f32 %v1514, %v1546
    %v1552 = vmul.f32 %v1516, %v1548
    %v1553 = vpack.c.bf16 %v1458, %v1457
    %1555 = vrot.lane.b32.xlu0 %v1553, 64
    %v1556 = vpop.permute.xlu0 %1555
    %s1558 = scalar_lea.vmem [#allocation5], 32
    %1559 = vst.msk [vmem:[%s1558] sm:$0xff] %vm514, %v1556
    %v1560 = vpack.c.bf16 %v1552, %v1551
    %1562 = vrot.lane.b32.xlu0 %v1560, 64
    %v1563 = vpop.permute.xlu0 %1562
    %s1565 = scalar_lea.vmem [#allocation6], 24
    %1566 = vst.msk [vmem:[%s1565] sm:$0xff] %vm514, %v1563
    %v1567 = vld [vmem:[%s944] sm:$0xff]
    %v1568 = vld [vmem:[%s944 + $0x10] sm:$0xff]
    %v1569 = vld [vmem:[%s939 + $0x8] sm:$0xff]
    %v1570 = vld [vmem:[%s939 + $0x18] sm:$0xff]
    %v1572 = vsel %vm514, %v1556, 0
    %1574 = vmatprep.subr.bf16.mxu0 0
    %1575 = vmatpush1.bf16.msra.mxu0 %v510
    %1576 = vmatprep.subr.bf16.mxu0 0
    %1577 = vmatpush1.bf16.msra.mxu0 %v511
    %1578 = vmatprep.subr.bf16.mxu0 0
    %1579 = vmatpush1.bf16.msra.mxu0 0
    %1580 = vmatprep.subr.bf16.mxu0 0
    %1581 = vmatpush1.bf16.msra.mxu0 0
    %1582 = vmatprep.subr.bf16.mxu0 0
    %1583 = vmatpush1.bf16.msra.mxu0 0
    %1584 = vmatprep.subr.bf16.mxu0 0
    %1585 = vmatpush1.bf16.msra.mxu0 0
    %1586 = vmatprep.subr.bf16.mxu0 0
    %1587 = vmatpush1.bf16.msra.mxu0 0
    %1588 = vmatprep.subr.bf16.mxu0 0
    %1589 = vmatpush1.bf16.msra.mxu0 0
    %1590 = vmatprep.subr.bf16.mxu0 0
    %1591 = vmatpush1.bf16.msra.mxu0 0
    %1592 = vmatprep.subr.bf16.mxu0 0
    %1593 = vmatpush1.bf16.msra.mxu0 0
    %1594 = vmatprep.subr.bf16.mxu0 0
    %1595 = vmatpush1.bf16.msra.mxu0 0
    %1596 = vmatprep.subr.bf16.mxu0 0
    %1597 = vmatpush1.bf16.msra.mxu0 0
    %1598 = vmatprep.subr.bf16.mxu0 0
    %1599 = vmatpush1.bf16.msra.mxu0 0
    %1600 = vmatprep.subr.bf16.mxu0 0
    %1601 = vmatpush1.bf16.msra.mxu0 0
    %1602 = vmatprep.subr.bf16.mxu0 0
    %1603 = vmatpush1.bf16.msra.mxu0 0
    %1604 = vmatprep.subr.bf16.mxu0 0
    %1605 = vmatpush1.bf16.msra.mxu0 0
    %1606 = vmatprep.mubr.bf16.mxu0 0
    %1607 = vmatmul.mubr.bf16.gmra.mrb[0].mxu0 %v1572
    %v1608 = vpop.f32.mrb[0].mxu0
    %v1609 = vadd.f32 0.0, %v1608
    %v1610 = vpop.f32.mrb[0].mxu0
    %v1611 = vpop.f32.mrb[0].mxu0
    %v1612 = vadd.f32 0.0, %v1611
    %v1613 = vpop.f32.mrb[0].mxu0
    %1614 = vdwg.mxu0
    %v1615 = vadd.f32 %v1567, %v1609
    %v1616 = vadd.f32 %v1568, %v1612
    %v1617 = vxor.u32 %v1615, 2147483648
    %v1618 = vxor.u32 %v1616, 2147483648
    %v1619 = vmul.f32 %v1617, 1.442695
    %v1620 = vpow.pop %v1619
    %v1621 = vmul.f32 %v1618, 1.442695
    %v1622 = vpow.pop %v1621
    %v1623 = vadd.f32 %v1620, 1.0
    %v1624 = vadd.f32 %v1622, 1.0
    %v1625 = vrcp.pop %v1623
    %v1626 = vmul.f32 1.0, %v1625
    %v1627 = vrcp.pop %v1624
    %v1628 = vmul.f32 1.0, %v1627
    %v1629 = vtanh.pop %v1615
    %v1630 = vtanh.pop %v1616
    %v1631 = vmul.f32 %v1626, %v1445
    %v1632 = vmul.f32 %v1628, %v1446
    %1635 = vrot.lane.b32.xlu0 %v1629, 32
    %v1636 = vpop.permute.xlu0 %1635
    %1637 = vrot.lane.b32.xlu0 %v1630, 32
    %v1638 = vpop.permute.xlu0 %1637
    %v1641 = vmul.f32 %v1626, %v1636
    %v1642 = vmul.f32 %v1628, %v1638
    %1645 = vrot.lane.b32.xlu0 %v1641, 32
    %v1646 = vpop.permute.xlu0 %1645
    %1647 = vrot.lane.b32.xlu0 %v1642, 32
    %v1648 = vpop.permute.xlu0 %1647
    %v1651 = vadd.f32 %v1631, %v1646
    %v1652 = vadd.f32 %v1632, %v1648
    %v1653 = vtanh.pop %v1651
    %v1654 = vtanh.pop %v1652
    %1657 = vrot.lane.b32.xlu0 %v1653, 32
    %v1658 = vpop.permute.xlu0 %1657
    %1659 = vrot.lane.b32.xlu0 %v1654, 32
    %v1660 = vpop.permute.xlu0 %1659
    %v1663 = vmul.f32 %v1626, %v1658
    %v1664 = vmul.f32 %v1628, %v1660
    %v1666 = vsel %vm514, %v1563, 0
    %1668 = vmatprep.subr.bf16.mxu0 0
    %1669 = vmatpush1.bf16.msra.mxu0 %v617
    %1670 = vmatprep.subr.bf16.mxu0 0
    %1671 = vmatpush1.bf16.msra.mxu0 %v618
    %1672 = vmatprep.subr.bf16.mxu0 0
    %1673 = vmatpush1.bf16.msra.mxu0 0
    %1674 = vmatprep.subr.bf16.mxu0 0
    %1675 = vmatpush1.bf16.msra.mxu0 0
    %1676 = vmatprep.subr.bf16.mxu0 0
    %1677 = vmatpush1.bf16.msra.mxu0 0
    %1678 = vmatprep.subr.bf16.mxu0 0
    %1679 = vmatpush1.bf16.msra.mxu0 0
    %1680 = vmatprep.subr.bf16.mxu0 0
    %1681 = vmatpush1.bf16.msra.mxu0 0
    %1682 = vmatprep.subr.bf16.mxu0 0
    %1683 = vmatpush1.bf16.msra.mxu0 0
    %1684 = vmatprep.subr.bf16.mxu0 0
    %1685 = vmatpush1.bf16.msra.mxu0 0
    %1686 = vmatprep.subr.bf16.mxu0 0
    %1687 = vmatpush1.bf16.msra.mxu0 0
    %1688 = vmatprep.subr.bf16.mxu0 0
    %1689 = vmatpush1.bf16.msra.mxu0 0
    %1690 = vmatprep.subr.bf16.mxu0 0
    %1691 = vmatpush1.bf16.msra.mxu0 0
    %1692 = vmatprep.subr.bf16.mxu0 0
    %1693 = vmatpush1.bf16.msra.mxu0 0
    %1694 = vmatprep.subr.bf16.mxu0 0
    %1695 = vmatpush1.bf16.msra.mxu0 0
    %1696 = vmatprep.subr.bf16.mxu0 0
    %1697 = vmatpush1.bf16.msra.mxu0 0
    %1698 = vmatprep.subr.bf16.mxu0 0
    %1699 = vmatpush1.bf16.msra.mxu0 0
    %1700 = vmatprep.mubr.bf16.mxu0 0
    %1701 = vmatmul.mubr.bf16.gmra.mrb[0].mxu0 %v1666
    %v1702 = vpop.f32.mrb[0].mxu0
    %v1703 = vadd.f32 0.0, %v1702
    %v1704 = vpop.f32.mrb[0].mxu0
    %v1705 = vpop.f32.mrb[0].mxu0
    %v1706 = vadd.f32 0.0, %v1705
    %v1707 = vpop.f32.mrb[0].mxu0
    %1708 = vdwg.mxu0
    %v1709 = vadd.f32 %v1569, %v1703
    %v1710 = vadd.f32 %v1570, %v1706
    %v1711 = vxor.u32 %v1709, 2147483648
    %v1712 = vxor.u32 %v1710, 2147483648
    %v1713 = vmul.f32 %v1711, 1.442695
    %v1714 = vpow.pop %v1713
    %v1715 = vmul.f32 %v1712, 1.442695
    %v1716 = vpow.pop %v1715
    %v1717 = vadd.f32 %v1714, 1.0
    %v1718 = vadd.f32 %v1716, 1.0
    %v1719 = vrcp.pop %v1717
    %v1720 = vmul.f32 1.0, %v1719
    %v1721 = vrcp.pop %v1718
    %v1722 = vmul.f32 1.0, %v1721
    %v1723 = vtanh.pop %v1709
    %v1724 = vtanh.pop %v1710
    %v1725 = vmul.f32 %v1720, %v1539
    %v1726 = vmul.f32 %v1722, %v1540
    %1729 = vrot.lane.b32.xlu0 %v1723, 32
    %v1730 = vpop.permute.xlu0 %1729
    %1731 = vrot.lane.b32.xlu0 %v1724, 32
    %v1732 = vpop.permute.xlu0 %1731
    %v1735 = vmul.f32 %v1720, %v1730
    %v1736 = vmul.f32 %v1722, %v1732
    %1739 = vrot.lane.b32.xlu0 %v1735, 32
    %v1740 = vpop.permute.xlu0 %1739
    %1741 = vrot.lane.b32.xlu0 %v1736, 32
    %v1742 = vpop.permute.xlu0 %1741
    %v1745 = vadd.f32 %v1725, %v1740
    %v1746 = vadd.f32 %v1726, %v1742
    %v1747 = vtanh.pop %v1745
    %v1748 = vtanh.pop %v1746
    %1751 = vrot.lane.b32.xlu0 %v1747, 32
    %v1752 = vpop.permute.xlu0 %1751
    %1753 = vrot.lane.b32.xlu0 %v1748, 32
    %v1754 = vpop.permute.xlu0 %1753
    %v1757 = vmul.f32 %v1720, %v1752
    %v1758 = vmul.f32 %v1722, %v1754
    %v1759 = vpack.c.bf16 %v1664, %v1663
    %1761 = vrot.lane.b32.xlu0 %v1759, 64
    %v1762 = vpop.permute.xlu0 %1761
    %s1764 = scalar_lea.vmem [#allocation5], 40
    %1765 = vst.msk [vmem:[%s1764] sm:$0xff] %vm514, %v1762
    %v1766 = vpack.c.bf16 %v1758, %v1757
    %1768 = vrot.lane.b32.xlu0 %v1766, 64
    %v1769 = vpop.permute.xlu0 %1768
    %s1771 = scalar_lea.vmem [#allocation6], 16
    %1772 = vst.msk [vmem:[%s1771] sm:$0xff] %vm514, %v1769
    %v1773 = vld [vmem:[%s732] sm:$0xff]
    %v1774 = vld [vmem:[%s732 + $0x10] sm:$0xff]
    %v1775 = vld [vmem:[%s727 + $0x8] sm:$0xff]
    %v1776 = vld [vmem:[%s727 + $0x18] sm:$0xff]
    %v1778 = vsel %vm514, %v1762, 0
    %1780 = vmatprep.subr.bf16.mxu0 0
    %1781 = vmatpush1.bf16.msra.mxu0 %v510
    %1782 = vmatprep.subr.bf16.mxu0 0
    %1783 = vmatpush1.bf16.msra.mxu0 %v511
    %1784 = vmatprep.subr.bf16.mxu0 0
    %1785 = vmatpush1.bf16.msra.mxu0 0
    %1786 = vmatprep.subr.bf16.mxu0 0
    %1787 = vmatpush1.bf16.msra.mxu0 0
    %1788 = vmatprep.subr.bf16.mxu0 0
    %1789 = vmatpush1.bf16.msra.mxu0 0
    %1790 = vmatprep.subr.bf16.mxu0 0
    %1791 = vmatpush1.bf16.msra.mxu0 0
    %1792 = vmatprep.subr.bf16.mxu0 0
    %1793 = vmatpush1.bf16.msra.mxu0 0
    %1794 = vmatprep.subr.bf16.mxu0 0
    %1795 = vmatpush1.bf16.msra.mxu0 0
    %1796 = vmatprep.subr.bf16.mxu0 0
    %1797 = vmatpush1.bf16.msra.mxu0 0
    %1798 = vmatprep.subr.bf16.mxu0 0
    %1799 = vmatpush1.bf16.msra.mxu0 0
    %1800 = vmatprep.subr.bf16.mxu0 0
    %1801 = vmatpush1.bf16.msra.mxu0 0
    %1802 = vmatprep.subr.bf16.mxu0 0
    %1803 = vmatpush1.bf16.msra.mxu0 0
    %1804 = vmatprep.subr.bf16.mxu0 0
    %1805 = vmatpush1.bf16.msra.mxu0 0
    %1806 = vmatprep.subr.bf16.mxu0 0
    %1807 = vmatpush1.bf16.msra.mxu0 0
    %1808 = vmatprep.subr.bf16.mxu0 0
    %1809 = vmatpush1.bf16.msra.mxu0 0
    %1810 = vmatprep.subr.bf16.mxu0 0
    %1811 = vmatpush1.bf16.msra.mxu0 0
    %1812 = vmatprep.mubr.bf16.mxu0 0
    %1813 = vmatmul.mubr.bf16.gmra.mrb[0].mxu0 %v1778
    %v1814 = vpop.f32.mrb[0].mxu0
    %v1815 = vadd.f32 0.0, %v1814
    %v1816 = vpop.f32.mrb[0].mxu0
    %v1817 = vpop.f32.mrb[0].mxu0
    %v1818 = vadd.f32 0.0, %v1817
    %v1819 = vpop.f32.mrb[0].mxu0
    %1820 = vdwg.mxu0
    %v1821 = vadd.f32 %v1773, %v1815
    %v1822 = vadd.f32 %v1774, %v1818
    %v1823 = vxor.u32 %v1821, 2147483648
    %v1824 = vxor.u32 %v1822, 2147483648
    %v1825 = vmul.f32 %v1823, 1.442695
    %v1826 = vpow.pop %v1825
    %v1827 = vmul.f32 %v1824, 1.442695
    %v1828 = vpow.pop %v1827
    %v1829 = vadd.f32 %v1826, 1.0
    %v1830 = vadd.f32 %v1828, 1.0
    %v1831 = vrcp.pop %v1829
    %v1832 = vmul.f32 1.0, %v1831
    %v1833 = vrcp.pop %v1830
    %v1834 = vmul.f32 1.0, %v1833
    %v1835 = vtanh.pop %v1821
    %v1836 = vtanh.pop %v1822
    %v1837 = vmul.f32 %v1832, %v1651
    %v1838 = vmul.f32 %v1834, %v1652
    %1841 = vrot.lane.b32.xlu0 %v1835, 32
    %v1842 = vpop.permute.xlu0 %1841
    %1843 = vrot.lane.b32.xlu0 %v1836, 32
    %v1844 = vpop.permute.xlu0 %1843
    %v1847 = vmul.f32 %v1832, %v1842
    %v1848 = vmul.f32 %v1834, %v1844
    %1851 = vrot.lane.b32.xlu0 %v1847, 32
    %v1852 = vpop.permute.xlu0 %1851
    %1853 = vrot.lane.b32.xlu0 %v1848, 32
    %v1854 = vpop.permute.xlu0 %1853
    %v1857 = vadd.f32 %v1837, %v1852
    %v1858 = vadd.f32 %v1838, %v1854
    %v1859 = vtanh.pop %v1857
    %v1860 = vtanh.pop %v1858
    %1863 = vrot.lane.b32.xlu0 %v1859, 32
    %v1864 = vpop.permute.xlu0 %1863
    %1865 = vrot.lane.b32.xlu0 %v1860, 32
    %v1866 = vpop.permute.xlu0 %1865
    %v1869 = vmul.f32 %v1832, %v1864
    %v1870 = vmul.f32 %v1834, %v1866
    %v1872 = vsel %vm514, %v1769, 0
    %1874 = vmatprep.subr.bf16.mxu0 0
    %1875 = vmatpush1.bf16.msra.mxu0 %v617
    %1876 = vmatprep.subr.bf16.mxu0 0
    %1877 = vmatpush1.bf16.msra.mxu0 %v618
    %1878 = vmatprep.subr.bf16.mxu0 0
    %1879 = vmatpush1.bf16.msra.mxu0 0
    %1880 = vmatprep.subr.bf16.mxu0 0
    %1881 = vmatpush1.bf16.msra.mxu0 0
    %1882 = vmatprep.subr.bf16.mxu0 0
    %1883 = vmatpush1.bf16.msra.mxu0 0
    %1884 = vmatprep.subr.bf16.mxu0 0
    %1885 = vmatpush1.bf16.msra.mxu0 0
    %1886 = vmatprep.subr.bf16.mxu0 0
    %1887 = vmatpush1.bf16.msra.mxu0 0
    %1888 = vmatprep.subr.bf16.mxu0 0
    %1889 = vmatpush1.bf16.msra.mxu0 0
    %1890 = vmatprep.subr.bf16.mxu0 0
    %1891 = vmatpush1.bf16.msra.mxu0 0
    %1892 = vmatprep.subr.bf16.mxu0 0
    %1893 = vmatpush1.bf16.msra.mxu0 0
    %1894 = vmatprep.subr.bf16.mxu0 0
    %1895 = vmatpush1.bf16.msra.mxu0 0
    %1896 = vmatprep.subr.bf16.mxu0 0
    %1897 = vmatpush1.bf16.msra.mxu0 0
    %1898 = vmatprep.subr.bf16.mxu0 0
    %1899 = vmatpush1.bf16.msra.mxu0 0
    %1900 = vmatprep.subr.bf16.mxu0 0
    %1901 = vmatpush1.bf16.msra.mxu0 0
    %1902 = vmatprep.subr.bf16.mxu0 0
    %1903 = vmatpush1.bf16.msra.mxu0 0
    %1904 = vmatprep.subr.bf16.mxu0 0
    %1905 = vmatpush1.bf16.msra.mxu0 0
    %1906 = vmatprep.mubr.bf16.mxu0 0
    %1907 = vmatmul.mubr.bf16.gmra.mrb[0].mxu0 %v1872
    %v1908 = vpop.f32.mrb[0].mxu0
    %v1909 = vadd.f32 0.0, %v1908
    %v1910 = vpop.f32.mrb[0].mxu0
    %v1911 = vpop.f32.mrb[0].mxu0
    %v1912 = vadd.f32 0.0, %v1911
    %v1913 = vpop.f32.mrb[0].mxu0
    %1914 = vdwg.mxu0
    %v1915 = vadd.f32 %v1775, %v1909
    %v1916 = vadd.f32 %v1776, %v1912
    %v1917 = vxor.u32 %v1915, 2147483648
    %v1918 = vxor.u32 %v1916, 2147483648
    %v1919 = vmul.f32 %v1917, 1.442695
    %v1920 = vpow.pop %v1919
    %v1921 = vmul.f32 %v1918, 1.442695
    %v1922 = vpow.pop %v1921
    %v1923 = vadd.f32 %v1920, 1.0
    %v1924 = vadd.f32 %v1922, 1.0
    %v1925 = vrcp.pop %v1923
    %v1926 = vmul.f32 1.0, %v1925
    %v1927 = vrcp.pop %v1924
    %v1928 = vmul.f32 1.0, %v1927
    %v1929 = vtanh.pop %v1915
    %v1930 = vtanh.pop %v1916
    %v1931 = vmul.f32 %v1926, %v1745
    %v1932 = vmul.f32 %v1928, %v1746
    %1935 = vrot.lane.b32.xlu0 %v1929, 32
    %v1936 = vpop.permute.xlu0 %1935
    %1937 = vrot.lane.b32.xlu0 %v1930, 32
    %v1938 = vpop.permute.xlu0 %1937
    %v1941 = vmul.f32 %v1926, %v1936
    %v1942 = vmul.f32 %v1928, %v1938
    %1945 = vrot.lane.b32.xlu0 %v1941, 32
    %v1946 = vpop.permute.xlu0 %1945
    %1947 = vrot.lane.b32.xlu0 %v1942, 32
    %v1948 = vpop.permute.xlu0 %1947
    %v1951 = vadd.f32 %v1931, %v1946
    %v1952 = vadd.f32 %v1932, %v1948
    %v1953 = vtanh.pop %v1951
    %v1954 = vtanh.pop %v1952
    %1957 = vrot.lane.b32.xlu0 %v1953, 32
    %v1958 = vpop.permute.xlu0 %1957
    %1959 = vrot.lane.b32.xlu0 %v1954, 32
    %v1960 = vpop.permute.xlu0 %1959
    %v1963 = vmul.f32 %v1926, %v1958
    %v1964 = vmul.f32 %v1928, %v1960
    %v1965 = vpack.c.bf16 %v1870, %v1869
    %1967 = vrot.lane.b32.xlu0 %v1965, 64
    %v1968 = vpop.permute.xlu0 %1967
    %s1970 = scalar_lea.vmem [#allocation5], 48
    %1971 = vst.msk [vmem:[%s1970] sm:$0xff] %vm514, %v1968
    %v1972 = vpack.c.bf16 %v1964, %v1963
    %1974 = vrot.lane.b32.xlu0 %v1972, 64
    %v1975 = vpop.permute.xlu0 %1974
    %s1977 = scalar_lea.vmem [#allocation6], 8
    %1978 = vst.msk [vmem:[%s1977] sm:$0xff] %vm514, %v1975
    %v1979 = vld [vmem:[%s499] sm:$0xff]
    %v1980 = vld [vmem:[%s499 + $0x10] sm:$0xff]
    %v1981 = vld [vmem:[%s494 + $0x8] sm:$0xff]
    %v1982 = vld [vmem:[%s494 + $0x18] sm:$0xff]
    %v1984 = vsel %vm514, %v1968, 0
    %1986 = vmatprep.subr.bf16.mxu0 0
    %1987 = vmatpush1.bf16.msra.mxu0 %v510
    %1988 = vmatprep.subr.bf16.mxu0 0
    %1989 = vmatpush1.bf16.msra.mxu0 %v511
    %1990 = vmatprep.subr.bf16.mxu0 0
    %1991 = vmatpush1.bf16.msra.mxu0 0
    %1992 = vmatprep.subr.bf16.mxu0 0
    %1993 = vmatpush1.bf16.msra.mxu0 0
    %1994 = vmatprep.subr.bf16.mxu0 0
    %1995 = vmatpush1.bf16.msra.mxu0 0
    %1996 = vmatprep.subr.bf16.mxu0 0
    %1997 = vmatpush1.bf16.msra.mxu0 0
    %1998 = vmatprep.subr.bf16.mxu0 0
    %1999 = vmatpush1.bf16.msra.mxu0 0
    %2000 = vmatprep.subr.bf16.mxu0 0
    %2001 = vmatpush1.bf16.msra.mxu0 0
    %2002 = vmatprep.subr.bf16.mxu0 0
    %2003 = vmatpush1.bf16.msra.mxu0 0
    %2004 = vmatprep.subr.bf16.mxu0 0
    %2005 = vmatpush1.bf16.msra.mxu0 0
    %2006 = vmatprep.subr.bf16.mxu0 0
    %2007 = vmatpush1.bf16.msra.mxu0 0
    %2008 = vmatprep.subr.bf16.mxu0 0
    %2009 = vmatpush1.bf16.msra.mxu0 0
    %2010 = vmatprep.subr.bf16.mxu0 0
    %2011 = vmatpush1.bf16.msra.mxu0 0
    %2012 = vmatprep.subr.bf16.mxu0 0
    %2013 = vmatpush1.bf16.msra.mxu0 0
    %2014 = vmatprep.subr.bf16.mxu0 0
    %2015 = vmatpush1.bf16.msra.mxu0 0
    %2016 = vmatprep.subr.bf16.mxu0 0
    %2017 = vmatpush1.bf16.msra.mxu0 0
    %2018 = vmatprep.mubr.bf16.mxu0 0
    %2019 = vmatmul.mubr.bf16.gmra.mrb[0].mxu0 %v1984
    %v2020 = vpop.f32.mrb[0].mxu0
    %v2021 = vadd.f32 0.0, %v2020
    %v2022 = vpop.f32.mrb[0].mxu0
    %v2023 = vpop.f32.mrb[0].mxu0
    %v2024 = vadd.f32 0.0, %v2023
    %v2025 = vpop.f32.mrb[0].mxu0
    %2026 = vdwg.mxu0
    %v2027 = vadd.f32 %v1979, %v2021
    %v2028 = vadd.f32 %v1980, %v2024
    %v2029 = vxor.u32 %v2027, 2147483648
    %v2030 = vxor.u32 %v2028, 2147483648
    %v2031 = vmul.f32 %v2029, 1.442695
    %v2032 = vpow.pop %v2031
    %v2033 = vmul.f32 %v2030, 1.442695
    %v2034 = vpow.pop %v2033
    %v2035 = vadd.f32 %v2032, 1.0
    %v2036 = vadd.f32 %v2034, 1.0
    %v2037 = vrcp.pop %v2035
    %v2038 = vmul.f32 1.0, %v2037
    %v2039 = vrcp.pop %v2036
    %v2040 = vmul.f32 1.0, %v2039
    %v2041 = vtanh.pop %v2027
    %v2042 = vtanh.pop %v2028
    %v2043 = vmul.f32 %v2038, %v1857
    %v2044 = vmul.f32 %v2040, %v1858
    %2047 = vrot.lane.b32.xlu0 %v2041, 32
    %v2048 = vpop.permute.xlu0 %2047
    %2049 = vrot.lane.b32.xlu0 %v2042, 32
    %v2050 = vpop.permute.xlu0 %2049
    %v2053 = vmul.f32 %v2038, %v2048
    %v2054 = vmul.f32 %v2040, %v2050
    %2057 = vrot.lane.b32.xlu0 %v2053, 32
    %v2058 = vpop.permute.xlu0 %2057
    %2059 = vrot.lane.b32.xlu0 %v2054, 32
    %v2060 = vpop.permute.xlu0 %2059
    %v2063 = vadd.f32 %v2043, %v2058
    %v2064 = vadd.f32 %v2044, %v2060
    %v2065 = vtanh.pop %v2063
    %v2066 = vtanh.pop %v2064
    %2069 = vrot.lane.b32.xlu0 %v2065, 32
    %v2070 = vpop.permute.xlu0 %2069
    %2071 = vrot.lane.b32.xlu0 %v2066, 32
    %v2072 = vpop.permute.xlu0 %2071
    %v2075 = vmul.f32 %v2038, %v2070
    %v2076 = vmul.f32 %v2040, %v2072
    %v2078 = vsel %vm514, %v1975, 0
    %2080 = vmatprep.subr.bf16.mxu0 0
    %2081 = vmatpush1.bf16.msra.mxu0 %v617
    %2082 = vmatprep.subr.bf16.mxu0 0
    %2083 = vmatpush1.bf16.msra.mxu0 %v618
    %2084 = vmatprep.subr.bf16.mxu0 0
    %2085 = vmatpush1.bf16.msra.mxu0 0
    %2086 = vmatprep.subr.bf16.mxu0 0
    %2087 = vmatpush1.bf16.msra.mxu0 0
    %2088 = vmatprep.subr.bf16.mxu0 0
    %2089 = vmatpush1.bf16.msra.mxu0 0
    %2090 = vmatprep.subr.bf16.mxu0 0
    %2091 = vmatpush1.bf16.msra.mxu0 0
    %2092 = vmatprep.subr.bf16.mxu0 0
    %2093 = vmatpush1.bf16.msra.mxu0 0
    %2094 = vmatprep.subr.bf16.mxu0 0
    %2095 = vmatpush1.bf16.msra.mxu0 0
    %2096 = vmatprep.subr.bf16.mxu0 0
    %2097 = vmatpush1.bf16.msra.mxu0 0
    %2098 = vmatprep.subr.bf16.mxu0 0
    %2099 = vmatpush1.bf16.msra.mxu0 0
    %2100 = vmatprep.subr.bf16.mxu0 0
    %2101 = vmatpush1.bf16.msra.mxu0 0
    %2102 = vmatprep.subr.bf16.mxu0 0
    %2103 = vmatpush1.bf16.msra.mxu0 0
    %2104 = vmatprep.subr.bf16.mxu0 0
    %2105 = vmatpush1.bf16.msra.mxu0 0
    %2106 = vmatprep.subr.bf16.mxu0 0
    %2107 = vmatpush1.bf16.msra.mxu0 0
    %2108 = vmatprep.subr.bf16.mxu0 0
    %2109 = vmatpush1.bf16.msra.mxu0 0
    %2110 = vmatprep.subr.bf16.mxu0 0
    %2111 = vmatpush1.bf16.msra.mxu0 0
    %2112 = vmatprep.mubr.bf16.mxu0 0
    %2113 = vmatmul.mubr.bf16.gmra.mrb[0].mxu0 %v2078
    %v2114 = vpop.f32.mrb[0].mxu0
    %v2115 = vadd.f32 0.0, %v2114
    %v2116 = vpop.f32.mrb[0].mxu0
    %v2117 = vpop.f32.mrb[0].mxu0
    %v2118 = vadd.f32 0.0, %v2117
    %v2119 = vpop.f32.mrb[0].mxu0
    %2120 = vdwg.mxu0
    %v2121 = vadd.f32 %v1981, %v2115
    %v2122 = vadd.f32 %v1982, %v2118
    %v2123 = vxor.u32 %v2121, 2147483648
    %v2124 = vxor.u32 %v2122, 2147483648
    %v2125 = vmul.f32 %v2123, 1.442695
    %v2126 = vpow.pop %v2125
    %v2127 = vmul.f32 %v2124, 1.442695
    %v2128 = vpow.pop %v2127
    %v2129 = vadd.f32 %v2126, 1.0
    %v2130 = vadd.f32 %v2128, 1.0
    %v2131 = vrcp.pop %v2129
    %v2132 = vmul.f32 1.0, %v2131
    %v2133 = vrcp.pop %v2130
    %v2134 = vmul.f32 1.0, %v2133
    %v2135 = vtanh.pop %v2121
    %v2136 = vtanh.pop %v2122
    %v2137 = vmul.f32 %v2132, %v1951
    %v2138 = vmul.f32 %v2134, %v1952
    %2141 = vrot.lane.b32.xlu0 %v2135, 32
    %v2142 = vpop.permute.xlu0 %2141
    %2143 = vrot.lane.b32.xlu0 %v2136, 32
    %v2144 = vpop.permute.xlu0 %2143
    %v2147 = vmul.f32 %v2132, %v2142
    %v2148 = vmul.f32 %v2134, %v2144
    %2151 = vrot.lane.b32.xlu0 %v2147, 32
    %v2152 = vpop.permute.xlu0 %2151
    %2153 = vrot.lane.b32.xlu0 %v2148, 32
    %v2154 = vpop.permute.xlu0 %2153
    %v2157 = vadd.f32 %v2137, %v2152
    %v2158 = vadd.f32 %v2138, %v2154
    %v2159 = vtanh.pop %v2157
    %v2160 = vtanh.pop %v2158
    %2163 = vrot.lane.b32.xlu0 %v2159, 32
    %v2164 = vpop.permute.xlu0 %2163
    %2165 = vrot.lane.b32.xlu0 %v2160, 32
    %v2166 = vpop.permute.xlu0 %2165
    %v2169 = vmul.f32 %v2132, %v2164
    %v2170 = vmul.f32 %v2134, %v2166
    %v2171 = vpack.c.bf16 %v2076, %v2075
    %2173 = vrot.lane.b32.xlu0 %v2171, 64
    %v2174 = vpop.permute.xlu0 %2173
    %s2176 = scalar_lea.vmem [#allocation5], 56
    %2177 = vst.msk [vmem:[%s2176] sm:$0xff] %vm514, %v2174
    %v2178 = vpack.c.bf16 %v2170, %v2169
    %2180 = vrot.lane.b32.xlu0 %v2178, 64
    %v2181 = vpop.permute.xlu0 %2180
    %2183 = vst.msk [vmem:[#allocation6] sm:$0xff] %vm514, %v2181
    %v2184 = vld [vmem:[#allocation5] sm:$0xff]
    %v2185 = vld [vmem:[#allocation5 + $0x8] sm:$0xff]
    %v2186 = vld [vmem:[#allocation5 + $0x10] sm:$0xff]
    %v2187 = vld [vmem:[#allocation5 + $0x18] sm:$0xff]
    %v2188 = vld [vmem:[#allocation5 + $0x20] sm:$0xff]
    %v2189 = vld [vmem:[#allocation5 + $0x28] sm:$0xff]
    %v2190 = vld [vmem:[#allocation5 + $0x30] sm:$0xff]
    %v2191 = vld [vmem:[#allocation5 + $0x38] sm:$0xff]
    %v2192 = vld [vmem:[#allocation11 + $0x50] sm:$0xff]
    %v2193 = vld [vmem:[#allocation11 + $0x58] sm:$0xff]
    %v2194 = vld [vmem:[#allocation11 + $0x60] sm:$0xff]
    %v2195 = vld [vmem:[#allocation11 + $0x68] sm:$0xff]
    %v2196 = vld [vmem:[#allocation6] sm:$0xff]
    %v2197 = vld [vmem:[#allocation6 + $0x8] sm:$0xff]
    %v2198 = vld [vmem:[#allocation6 + $0x10] sm:$0xff]
    %v2199 = vld [vmem:[#allocation6 + $0x18] sm:$0xff]
    %v2200 = vld [vmem:[#allocation6 + $0x20] sm:$0xff]
    %v2201 = vld [vmem:[#allocation6 + $0x28] sm:$0xff]
    %v2202 = vld [vmem:[#allocation6 + $0x30] sm:$0xff]
    %v2203 = vld [vmem:[#allocation6 + $0x38] sm:$0xff]
    %v2204 = vld [vmem:[#allocation11 + $0x70] sm:$0xff]
    %v2205 = vld [vmem:[#allocation11 + $0x78] sm:$0xff]
    %v2206 = vld [vmem:[#allocation11 + $0x80] sm:$0xff]
    %v2207 = vld [vmem:[#allocation11 + $0x88] sm:$0xff]
    %v2212 = vunpack.c.l.b16 %v2204
    %v2213 = vunpack.c.h.b16 %v2204
    %v2214 = vunpack.c.l.b16 %v2205
    %v2215 = vunpack.c.h.b16 %v2205
    %v2216 = vunpack.c.l.b16 %v2206
    %v2217 = vunpack.c.h.b16 %v2206
    %v2218 = vunpack.c.l.b16 %v2207
    %v2219 = vunpack.c.h.b16 %v2207
    %v2220 = vpack.c.b16 %v2214, %v2212
    %v2221 = vpack.c.b16 %v2215, %v2213
    %v2222 = vpack.c.b16 %v2218, %v2216
    %v2223 = vpack.c.b16 %v2219, %v2217
    %v2229 = vsel %vm514, %v2196, 0
    %v2232 = vsel %vm514, %v2197, 0
    %v2235 = vsel %vm514, %v2198, 0
    %v2238 = vsel %vm514, %v2199, 0
    %v2241 = vsel %vm514, %v2200, 0
    %v2244 = vsel %vm514, %v2201, 0
    %v2247 = vsel %vm514, %v2202, 0
    %v2250 = vsel %vm514, %v2203, 0
    %2252 = vmatprep.subr.bf16.mxu0 %v2221
    %2253 = vmatpush1.bf16.msra.mxu0 %v2220
    %2254 = vmatprep.subr.bf16.mxu0 %v2223
    %2255 = vmatpush1.bf16.msra.mxu0 %v2222
    %2256 = vmatprep.subr.bf16.mxu0 0
    %2257 = vmatpush1.bf16.msra.mxu0 0
    %2258 = vmatprep.subr.bf16.mxu0 0
    %2259 = vmatpush1.bf16.msra.mxu0 0
    %2260 = vmatprep.subr.bf16.mxu0 0
    %2261 = vmatpush1.bf16.msra.mxu0 0
    %2262 = vmatprep.subr.bf16.mxu0 0
    %2263 = vmatpush1.bf16.msra.mxu0 0
    %2264 = vmatprep.subr.bf16.mxu0 0
    %2265 = vmatpush1.bf16.msra.mxu0 0
    %2266 = vmatprep.subr.bf16.mxu0 0
    %2267 = vmatpush1.bf16.msra.mxu0 0
    %2268 = vmatprep.subr.bf16.mxu0 0
    %2269 = vmatpush1.bf16.msra.mxu0 0
    %2270 = vmatprep.subr.bf16.mxu0 0
    %2271 = vmatpush1.bf16.msra.mxu0 0
    %2272 = vmatprep.subr.bf16.mxu0 0
    %2273 = vmatpush1.bf16.msra.mxu0 0
    %2274 = vmatprep.subr.bf16.mxu0 0
    %2275 = vmatpush1.bf16.msra.mxu0 0
    %2276 = vmatprep.subr.bf16.mxu0 0
    %2277 = vmatpush1.bf16.msra.mxu0 0
    %2278 = vmatprep.subr.bf16.mxu0 0
    %2279 = vmatpush1.bf16.msra.mxu0 0
    %2280 = vmatprep.subr.bf16.mxu0 0
    %2281 = vmatpush1.bf16.msra.mxu0 0
    %2282 = vmatprep.subr.bf16.mxu0 0
    %2283 = vmatpush1.bf16.msra.mxu0 0
    %2284 = vmatprep.mubr.bf16.mxu0 0
    %2285 = vmatmul.mubr.bf16.gmra.mrb[0].mxu0 %v2229
    %v2286 = vpop.f32.mrb[0].mxu0
    %v2287 = vadd.f32 0.0, %v2286
    %v2288 = vpop.f32.mrb[0].mxu0
    %v2289 = vadd.f32 0.0, %v2288
    %v2290 = vpop.f32.mrb[0].mxu0
    %v2291 = vadd.f32 0.0, %v2290
    %v2292 = vpop.f32.mrb[0].mxu0
    %v2293 = vadd.f32 0.0, %v2292
    %2294 = vmatprep.mubr.bf16.mxu0 0
    %2295 = vmatmul.mubr.bf16.gmra.mrb[0].mxu0 %v2232
    %v2296 = vpop.f32.mrb[0].mxu0
    %v2297 = vadd.f32 0.0, %v2296
    %v2298 = vpop.f32.mrb[0].mxu0
    %v2299 = vadd.f32 0.0, %v2298
    %v2300 = vpop.f32.mrb[0].mxu0
    %v2301 = vadd.f32 0.0, %v2300
    %v2302 = vpop.f32.mrb[0].mxu0
    %v2303 = vadd.f32 0.0, %v2302
    %2304 = vmatprep.mubr.bf16.mxu0 0
    %2305 = vmatmul.mubr.bf16.gmra.mrb[0].mxu0 %v2235
    %v2306 = vpop.f32.mrb[0].mxu0
    %v2307 = vadd.f32 0.0, %v2306
    %v2308 = vpop.f32.mrb[0].mxu0
    %v2309 = vadd.f32 0.0, %v2308
    %v2310 = vpop.f32.mrb[0].mxu0
    %v2311 = vadd.f32 0.0, %v2310
    %v2312 = vpop.f32.mrb[0].mxu0
    %v2313 = vadd.f32 0.0, %v2312
    %2314 = vmatprep.mubr.bf16.mxu0 0
    %2315 = vmatmul.mubr.bf16.gmra.mrb[0].mxu0 %v2238
    %v2316 = vpop.f32.mrb[0].mxu0
    %v2317 = vadd.f32 0.0, %v2316
    %v2318 = vpop.f32.mrb[0].mxu0
    %v2319 = vadd.f32 0.0, %v2318
    %v2320 = vpop.f32.mrb[0].mxu0
    %v2321 = vadd.f32 0.0, %v2320
    %v2322 = vpop.f32.mrb[0].mxu0
    %v2323 = vadd.f32 0.0, %v2322
    %2324 = vmatprep.mubr.bf16.mxu0 0
    %2325 = vmatmul.mubr.bf16.gmra.mrb[0].mxu0 %v2241
    %v2326 = vpop.f32.mrb[0].mxu0
    %v2327 = vadd.f32 0.0, %v2326
    %v2328 = vpop.f32.mrb[0].mxu0
    %v2329 = vadd.f32 0.0, %v2328
    %v2330 = vpop.f32.mrb[0].mxu0
    %v2331 = vadd.f32 0.0, %v2330
    %v2332 = vpop.f32.mrb[0].mxu0
    %v2333 = vadd.f32 0.0, %v2332
    %2334 = vmatprep.mubr.bf16.mxu0 0
    %2335 = vmatmul.mubr.bf16.gmra.mrb[0].mxu0 %v2244
    %v2336 = vpop.f32.mrb[0].mxu0
    %v2337 = vadd.f32 0.0, %v2336
    %v2338 = vpop.f32.mrb[0].mxu0
    %v2339 = vadd.f32 0.0, %v2338
    %v2340 = vpop.f32.mrb[0].mxu0
    %v2341 = vadd.f32 0.0, %v2340
    %v2342 = vpop.f32.mrb[0].mxu0
    %v2343 = vadd.f32 0.0, %v2342
    %2344 = vmatprep.mubr.bf16.mxu0 0
    %2345 = vmatmul.mubr.bf16.gmra.mrb[0].mxu0 %v2247
    %v2346 = vpop.f32.mrb[0].mxu0
    %v2347 = vadd.f32 0.0, %v2346
    %v2348 = vpop.f32.mrb[0].mxu0
    %v2349 = vadd.f32 0.0, %v2348
    %v2350 = vpop.f32.mrb[0].mxu0
    %v2351 = vadd.f32 0.0, %v2350
    %v2352 = vpop.f32.mrb[0].mxu0
    %v2353 = vadd.f32 0.0, %v2352
    %2354 = vmatprep.mubr.bf16.mxu0 0
    %2355 = vmatmul.mubr.bf16.gmra.mrb[0].mxu0 %v2250
    %v2356 = vpop.f32.mrb[0].mxu0
    %v2357 = vadd.f32 0.0, %v2356
    %v2358 = vpop.f32.mrb[0].mxu0
    %v2359 = vadd.f32 0.0, %v2358
    %v2360 = vpop.f32.mrb[0].mxu0
    %v2361 = vadd.f32 0.0, %v2360
    %v2362 = vpop.f32.mrb[0].mxu0
    %v2363 = vadd.f32 0.0, %v2362
    %2364 = vdwg.mxu0
    %v2369 = vunpack.c.l.b16 %v2192
    %v2370 = vunpack.c.h.b16 %v2192
    %v2371 = vunpack.c.l.b16 %v2193
    %v2372 = vunpack.c.h.b16 %v2193
    %v2373 = vunpack.c.l.b16 %v2194
    %v2374 = vunpack.c.h.b16 %v2194
    %v2375 = vunpack.c.l.b16 %v2195
    %v2376 = vunpack.c.h.b16 %v2195
    %v2377 = vpack.c.b16 %v2371, %v2369
    %v2378 = vpack.c.b16 %v2372, %v2370
    %v2379 = vpack.c.b16 %v2375, %v2373
    %v2380 = vpack.c.b16 %v2376, %v2374
    %v2386 = vsel %vm514, %v2184, 0
    %v2389 = vsel %vm514, %v2185, 0
    %v2392 = vsel %vm514, %v2186, 0
    %v2395 = vsel %vm514, %v2187, 0
    %v2398 = vsel %vm514, %v2188, 0
    %v2401 = vsel %vm514, %v2189, 0
    %v2404 = vsel %vm514, %v2190, 0
    %v2407 = vsel %vm514, %v2191, 0
    %2409 = vmatprep.subr.bf16.mxu0 %v2378
    %2410 = vmatpush1.bf16.msra.mxu0 %v2377
    %2411 = vmatprep.subr.bf16.mxu0 %v2380
    %2412 = vmatpush1.bf16.msra.mxu0 %v2379
    %2413 = vmatprep.subr.bf16.mxu0 0
    %2414 = vmatpush1.bf16.msra.mxu0 0
    %2415 = vmatprep.subr.bf16.mxu0 0
    %2416 = vmatpush1.bf16.msra.mxu0 0
    %2417 = vmatprep.subr.bf16.mxu0 0
    %2418 = vmatpush1.bf16.msra.mxu0 0
    %2419 = vmatprep.subr.bf16.mxu0 0
    %2420 = vmatpush1.bf16.msra.mxu0 0
    %2421 = vmatprep.subr.bf16.mxu0 0
    %2422 = vmatpush1.bf16.msra.mxu0 0
    %2423 = vmatprep.subr.bf16.mxu0 0
    %2424 = vmatpush1.bf16.msra.mxu0 0
    %2425 = vmatprep.subr.bf16.mxu0 0
    %2426 = vmatpush1.bf16.msra.mxu0 0
    %2427 = vmatprep.subr.bf16.mxu0 0
    %2428 = vmatpush1.bf16.msra.mxu0 0
    %2429 = vmatprep.subr.bf16.mxu0 0
    %2430 = vmatpush1.bf16.msra.mxu0 0
    %2431 = vmatprep.subr.bf16.mxu0 0
    %2432 = vmatpush1.bf16.msra.mxu0 0
    %2433 = vmatprep.subr.bf16.mxu0 0
    %2434 = vmatpush1.bf16.msra.mxu0 0
    %2435 = vmatprep.subr.bf16.mxu0 0
    %2436 = vmatpush1.bf16.msra.mxu0 0
    %2437 = vmatprep.subr.bf16.mxu0 0
    %2438 = vmatpush1.bf16.msra.mxu0 0
    %2439 = vmatprep.subr.bf16.mxu0 0
    %2440 = vmatpush1.bf16.msra.mxu0 0
    %2441 = vmatprep.mubr.bf16.mxu0 0
    %2442 = vmatmul.mubr.bf16.gmra.mrb[0].mxu0 %v2386
    %v2443 = vpop.f32.mrb[0].mxu0
    %v2444 = vadd.f32 %v2287, %v2443
    %v2445 = vpop.f32.mrb[0].mxu0
    %v2446 = vadd.f32 %v2289, %v2445
    %v2447 = vpop.f32.mrb[0].mxu0
    %v2448 = vadd.f32 %v2291, %v2447
    %v2449 = vpop.f32.mrb[0].mxu0
    %v2450 = vadd.f32 %v2293, %v2449
    %2451 = vmatprep.mubr.bf16.mxu0 0
    %2452 = vmatmul.mubr.bf16.gmra.mrb[0].mxu0 %v2389
    %v2453 = vpop.f32.mrb[0].mxu0
    %v2454 = vadd.f32 %v2297, %v2453
    %v2455 = vpop.f32.mrb[0].mxu0
    %v2456 = vadd.f32 %v2299, %v2455
    %v2457 = vpop.f32.mrb[0].mxu0
    %v2458 = vadd.f32 %v2301, %v2457
    %v2459 = vpop.f32.mrb[0].mxu0
    %v2460 = vadd.f32 %v2303, %v2459
    %2461 = vmatprep.mubr.bf16.mxu0 0
    %2462 = vmatmul.mubr.bf16.gmra.mrb[0].mxu0 %v2392
    %v2463 = vpop.f32.mrb[0].mxu0
    %v2464 = vadd.f32 %v2307, %v2463
    %v2465 = vpop.f32.mrb[0].mxu0
    %v2466 = vadd.f32 %v2309, %v2465
    %v2467 = vpop.f32.mrb[0].mxu0
    %v2468 = vadd.f32 %v2311, %v2467
    %v2469 = vpop.f32.mrb[0].mxu0
    %v2470 = vadd.f32 %v2313, %v2469
    %2471 = vmatprep.mubr.bf16.mxu0 0
    %2472 = vmatmul.mubr.bf16.gmra.mrb[0].mxu0 %v2395
    %v2473 = vpop.f32.mrb[0].mxu0
    %v2474 = vadd.f32 %v2317, %v2473
    %v2475 = vpop.f32.mrb[0].mxu0
    %v2476 = vadd.f32 %v2319, %v2475
    %v2477 = vpop.f32.mrb[0].mxu0
    %v2478 = vadd.f32 %v2321, %v2477
    %v2479 = vpop.f32.mrb[0].mxu0
    %v2480 = vadd.f32 %v2323, %v2479
    %2481 = vmatprep.mubr.bf16.mxu0 0
    %2482 = vmatmul.mubr.bf16.gmra.mrb[0].mxu0 %v2398
    %v2483 = vpop.f32.mrb[0].mxu0
    %v2484 = vadd.f32 %v2327, %v2483
    %v2485 = vpop.f32.mrb[0].mxu0
    %v2486 = vadd.f32 %v2329, %v2485
    %v2487 = vpop.f32.mrb[0].mxu0
    %v2488 = vadd.f32 %v2331, %v2487
    %v2489 = vpop.f32.mrb[0].mxu0
    %v2490 = vadd.f32 %v2333, %v2489
    %2491 = vmatprep.mubr.bf16.mxu0 0
    %2492 = vmatmul.mubr.bf16.gmra.mrb[0].mxu0 %v2401
    %v2493 = vpop.f32.mrb[0].mxu0
    %v2494 = vadd.f32 %v2337, %v2493
    %v2495 = vpop.f32.mrb[0].mxu0
    %v2496 = vadd.f32 %v2339, %v2495
    %v2497 = vpop.f32.mrb[0].mxu0
    %v2498 = vadd.f32 %v2341, %v2497
    %v2499 = vpop.f32.mrb[0].mxu0
    %v2500 = vadd.f32 %v2343, %v2499
    %2501 = vmatprep.mubr.bf16.mxu0 0
    %2502 = vmatmul.mubr.bf16.gmra.mrb[0].mxu0 %v2404
    %v2503 = vpop.f32.mrb[0].mxu0
    %v2504 = vadd.f32 %v2347, %v2503
    %v2505 = vpop.f32.mrb[0].mxu0
    %v2506 = vadd.f32 %v2349, %v2505
    %v2507 = vpop.f32.mrb[0].mxu0
    %v2508 = vadd.f32 %v2351, %v2507
    %v2509 = vpop.f32.mrb[0].mxu0
    %v2510 = vadd.f32 %v2353, %v2509
    %2511 = vmatprep.mubr.bf16.mxu0 0
    %2512 = vmatmul.mubr.bf16.gmra.mrb[0].mxu0 %v2407
    %v2513 = vpop.f32.mrb[0].mxu0
    %v2514 = vadd.f32 %v2357, %v2513
    %v2515 = vpop.f32.mrb[0].mxu0
    %v2516 = vadd.f32 %v2359, %v2515
    %v2517 = vpop.f32.mrb[0].mxu0
    %v2518 = vadd.f32 %v2361, %v2517
    %v2519 = vpop.f32.mrb[0].mxu0
    %v2520 = vadd.f32 %v2363, %v2519
    %2521 = vdwg.mxu0
    %s2522 = scalar_lea.vmem %s3, 16
    %v2523 = vld [vmem:[%s2522] ss:$8 sm:$0x3]
    %v2525 = vlaneseq
    %v2526 = vshrl.u32 %v2525, 7
    %v2527 = vsub.s32 0, %v2526
    %v2528 = vrot.slane %v2523, %v2527
    %v2529 = vlaneseq
    %v2530 = vshrl.u32 %v2529, 7
    %v2531 = vsub.s32 1, %v2530
    %v2532 = vrot.slane %v2523, %v2531
    %v2535 = vadd.f32 %v2444, %v2528
    %v2536 = vadd.f32 %v2446, %v2532
    %v2537 = vadd.f32 %v2448, %v2528
    %v2538 = vadd.f32 %v2450, %v2532
    %v2539 = vadd.f32 %v2454, %v2528
    %v2540 = vadd.f32 %v2456, %v2532
    %v2541 = vadd.f32 %v2458, %v2528
    %v2542 = vadd.f32 %v2460, %v2532
    %v2543 = vadd.f32 %v2464, %v2528
    %v2544 = vadd.f32 %v2466, %v2532
    %v2545 = vadd.f32 %v2468, %v2528
    %v2546 = vadd.f32 %v2470, %v2532
    %v2547 = vadd.f32 %v2474, %v2528
    %v2548 = vadd.f32 %v2476, %v2532
    %v2549 = vadd.f32 %v2478, %v2528
    %v2550 = vadd.f32 %v2480, %v2532
    %v2551 = vadd.f32 %v2484, %v2528
    %v2552 = vadd.f32 %v2486, %v2532
    %v2553 = vadd.f32 %v2488, %v2528
    %v2554 = vadd.f32 %v2490, %v2532
    %v2555 = vadd.f32 %v2494, %v2528
    %v2556 = vadd.f32 %v2496, %v2532
    %v2557 = vadd.f32 %v2498, %v2528
    %v2558 = vadd.f32 %v2500, %v2532
    %v2559 = vadd.f32 %v2504, %v2528
    %v2560 = vadd.f32 %v2506, %v2532
    %v2561 = vadd.f32 %v2508, %v2528
    %v2562 = vadd.f32 %v2510, %v2532
    %v2563 = vadd.f32 %v2514, %v2528
    %v2564 = vadd.f32 %v2516, %v2532
    %v2565 = vadd.f32 %v2518, %v2528
    %v2566 = vadd.f32 %v2520, %v2532
    %2567 = vst [vmem:[#allocation2] sm:$0xff] %v2535
    %2568 = vst [vmem:[#allocation2 + $0x8] sm:$0xff] %v2536
    %2569 = vst [vmem:[#allocation2 + $0x10] sm:$0xff] %v2537
    %2570 = vst [vmem:[#allocation2 + $0x18] sm:$0xff] %v2538
    %2571 = vst [vmem:[#allocation2 + $0x20] sm:$0xff] %v2539
    %2572 = vst [vmem:[#allocation2 + $0x28] sm:$0xff] %v2540
    %2573 = vst [vmem:[#allocation2 + $0x30] sm:$0xff] %v2541
    %2574 = vst [vmem:[#allocation2 + $0x38] sm:$0xff] %v2542
    %2575 = vst [vmem:[#allocation2 + $0x40] sm:$0xff] %v2543
    %2576 = vst [vmem:[#allocation2 + $0x48] sm:$0xff] %v2544
    %2577 = vst [vmem:[#allocation2 + $0x50] sm:$0xff] %v2545
    %2578 = vst [vmem:[#allocation2 + $0x58] sm:$0xff] %v2546
    %2579 = vst [vmem:[#allocation2 + $0x60] sm:$0xff] %v2547
    %2580 = vst [vmem:[#allocation2 + $0x68] sm:$0xff] %v2548
    %2581 = vst [vmem:[#allocation2 + $0x70] sm:$0xff] %v2549
    %2582 = vst [vmem:[#allocation2 + $0x78] sm:$0xff] %v2550
    %2583 = vst [vmem:[#allocation2 + $0x80] sm:$0xff] %v2551
    %2584 = vst [vmem:[#allocation2 + $0x88] sm:$0xff] %v2552
    %2585 = vst [vmem:[#allocation2 + $0x90] sm:$0xff] %v2553
    %2586 = vst [vmem:[#allocation2 + $0x98] sm:$0xff] %v2554
    %2587 = vst [vmem:[#allocation2 + $0xa0] sm:$0xff] %v2555
    %2588 = vst [vmem:[#allocation2 + $0xa8] sm:$0xff] %v2556
    %2589 = vst [vmem:[#allocation2 + $0xb0] sm:$0xff] %v2557
    %2590 = vst [vmem:[#allocation2 + $0xb8] sm:$0xff] %v2558
    %2591 = vst [vmem:[#allocation2 + $0xc0] sm:$0xff] %v2559
    %2592 = vst [vmem:[#allocation2 + $0xc8] sm:$0xff] %v2560
    %2593 = vst [vmem:[#allocation2 + $0xd0] sm:$0xff] %v2561
    %2594 = vst [vmem:[#allocation2 + $0xd8] sm:$0xff] %v2562
    %2595 = vst [vmem:[#allocation2 + $0xe0] sm:$0xff] %v2563
    %2596 = vst [vmem:[#allocation2 + $0xe8] sm:$0xff] %v2564
    %2597 = vst [vmem:[#allocation2 + $0xf0] sm:$0xff] %v2565
    %2598 = vst [vmem:[#allocation2 + $0xf8] sm:$0xff] %v2566
    %v2599 = vld [vmem:[#allocation11 + $0x90] sm:$0xf]
    %v2600 = vld [vmem:[#allocation11 + $0x98] sm:$0xf]
    %v2601 = vld [vmem:[#allocation11 + $0xa0] sm:$0xf]
    %v2602 = vld [vmem:[#allocation11 + $0xa8] sm:$0xf]
    %v2603 = vld [vmem:[#allocation11 + $0xb0] sm:$0xf]
    %v2604 = vld [vmem:[#allocation11 + $0xb8] sm:$0xf]
    %v2605 = vld [vmem:[#allocation11 + $0xc0] sm:$0xf]
    %v2606 = vld [vmem:[#allocation11 + $0xc8] sm:$0xf]
    %v2607 = vld [vmem:[%s494] sm:$0xff]
    %v2608 = vld [vmem:[%s494 + $0x10] sm:$0xff]
    %v2609 = vld [vmem:[%s499 + $0x8] sm:$0xff]
    %v2610 = vld [vmem:[%s499 + $0x18] sm:$0xff]
    %v2615 = vunpack.c.l.b16 %v2599
    %v2616 = vunpack.c.l.b16 %v2600
    %v2617 = vunpack.c.l.b16 %v2601
    %v2618 = vunpack.c.l.b16 %v2602
    %v2619 = vpack.c.b16 %v2616, %v2615
    %v2620 = vpack.c.b16 %v2618, %v2617
    %2623 = vmatprep.subr.bf16.mxu0 0
    %2624 = vmatpush1.bf16.msra.mxu0 %v2619
    %2625 = vmatprep.subr.bf16.mxu0 0
    %2626 = vmatpush1.bf16.msra.mxu0 %v2620
    %2627 = vmatprep.subr.bf16.mxu0 0
    %2628 = vmatpush1.bf16.msra.mxu0 0
    %2629 = vmatprep.subr.bf16.mxu0 0
    %2630 = vmatpush1.bf16.msra.mxu0 0
    %2631 = vmatprep.subr.bf16.mxu0 0
    %2632 = vmatpush1.bf16.msra.mxu0 0
    %2633 = vmatprep.subr.bf16.mxu0 0
    %2634 = vmatpush1.bf16.msra.mxu0 0
    %2635 = vmatprep.subr.bf16.mxu0 0
    %2636 = vmatpush1.bf16.msra.mxu0 0
    %2637 = vmatprep.subr.bf16.mxu0 0
    %2638 = vmatpush1.bf16.msra.mxu0 0
    %2639 = vmatprep.subr.bf16.mxu0 0
    %2640 = vmatpush1.bf16.msra.mxu0 0
    %2641 = vmatprep.subr.bf16.mxu0 0
    %2642 = vmatpush1.bf16.msra.mxu0 0
    %2643 = vmatprep.subr.bf16.mxu0 0
    %2644 = vmatpush1.bf16.msra.mxu0 0
    %2645 = vmatprep.subr.bf16.mxu0 0
    %2646 = vmatpush1.bf16.msra.mxu0 0
    %2647 = vmatprep.subr.bf16.mxu0 0
    %2648 = vmatpush1.bf16.msra.mxu0 0
    %2649 = vmatprep.subr.bf16.mxu0 0
    %2650 = vmatpush1.bf16.msra.mxu0 0
    %2651 = vmatprep.subr.bf16.mxu0 0
    %2652 = vmatpush1.bf16.msra.mxu0 0
    %2653 = vmatprep.subr.bf16.mxu0 0
    %2654 = vmatpush1.bf16.msra.mxu0 0
    %2655 = vmatprep.mubr.bf16.mxu0 0
    %2656 = vmatmul.mubr.bf16.gmra.mrb[0].mxu0 %v516
    %v2657 = vpop.f32.mrb[0].mxu0
    %v2658 = vadd.f32 0.0, %v2657
    %v2659 = vpop.f32.mrb[0].mxu0
    %v2660 = vpop.f32.mrb[0].mxu0
    %v2661 = vadd.f32 0.0, %v2660
    %v2662 = vpop.f32.mrb[0].mxu0
    %2663 = vdwg.mxu0
    %v2664 = vadd.f32 %v2607, %v2658
    %v2665 = vadd.f32 %v2608, %v2661
    %v2666 = vxor.u32 %v2664, 2147483648
    %v2667 = vxor.u32 %v2665, 2147483648
    %v2668 = vmul.f32 %v2666, 1.442695
    %v2669 = vpow.pop %v2668
    %v2670 = vmul.f32 %v2667, 1.442695
    %v2671 = vpow.pop %v2670
    %v2672 = vadd.f32 %v2669, 1.0
    %v2673 = vadd.f32 %v2671, 1.0
    %v2674 = vrcp.pop %v2672
    %v2675 = vmul.f32 1.0, %v2674
    %v2676 = vrcp.pop %v2673
    %v2677 = vmul.f32 1.0, %v2676
    %v2678 = vtanh.pop %v2664
    %v2679 = vtanh.pop %v2665
    %v2680 = vmul.f32 %v2675, 0.0
    %v2681 = vmul.f32 %v2677, 0.0
    %2684 = vrot.lane.b32.xlu0 %v2678, 32
    %v2685 = vpop.permute.xlu0 %2684
    %2686 = vrot.lane.b32.xlu0 %v2679, 32
    %v2687 = vpop.permute.xlu0 %2686
    %v2690 = vmul.f32 %v2675, %v2685
    %v2691 = vmul.f32 %v2677, %v2687
    %2694 = vrot.lane.b32.xlu0 %v2690, 32
    %v2695 = vpop.permute.xlu0 %2694
    %2696 = vrot.lane.b32.xlu0 %v2691, 32
    %v2697 = vpop.permute.xlu0 %2696
    %v2700 = vadd.f32 %v2680, %v2695
    %v2701 = vadd.f32 %v2681, %v2697
    %v2702 = vtanh.pop %v2700
    %v2703 = vtanh.pop %v2701
    %2706 = vrot.lane.b32.xlu0 %v2702, 32
    %v2707 = vpop.permute.xlu0 %2706
    %2708 = vrot.lane.b32.xlu0 %v2703, 32
    %v2709 = vpop.permute.xlu0 %2708
    %v2712 = vmul.f32 %v2675, %v2707
    %v2713 = vmul.f32 %v2677, %v2709
    %v2718 = vunpack.c.l.b16 %v2603
    %v2719 = vunpack.c.l.b16 %v2604
    %v2720 = vunpack.c.l.b16 %v2605
    %v2721 = vunpack.c.l.b16 %v2606
    %v2722 = vpack.c.b16 %v2719, %v2718
    %v2723 = vpack.c.b16 %v2721, %v2720
    %2726 = vmatprep.subr.bf16.mxu0 0
    %2727 = vmatpush1.bf16.msra.mxu0 %v2722
    %2728 = vmatprep.subr.bf16.mxu0 0
    %2729 = vmatpush1.bf16.msra.mxu0 %v2723
    %2730 = vmatprep.subr.bf16.mxu0 0
    %2731 = vmatpush1.bf16.msra.mxu0 0
    %2732 = vmatprep.subr.bf16.mxu0 0
    %2733 = vmatpush1.bf16.msra.mxu0 0
    %2734 = vmatprep.subr.bf16.mxu0 0
    %2735 = vmatpush1.bf16.msra.mxu0 0
    %2736 = vmatprep.subr.bf16.mxu0 0
    %2737 = vmatpush1.bf16.msra.mxu0 0
    %2738 = vmatprep.subr.bf16.mxu0 0
    %2739 = vmatpush1.bf16.msra.mxu0 0
    %2740 = vmatprep.subr.bf16.mxu0 0
    %2741 = vmatpush1.bf16.msra.mxu0 0
    %2742 = vmatprep.subr.bf16.mxu0 0
    %2743 = vmatpush1.bf16.msra.mxu0 0
    %2744 = vmatprep.subr.bf16.mxu0 0
    %2745 = vmatpush1.bf16.msra.mxu0 0
    %2746 = vmatprep.subr.bf16.mxu0 0
    %2747 = vmatpush1.bf16.msra.mxu0 0
    %2748 = vmatprep.subr.bf16.mxu0 0
    %2749 = vmatpush1.bf16.msra.mxu0 0
    %2750 = vmatprep.subr.bf16.mxu0 0
    %2751 = vmatpush1.bf16.msra.mxu0 0
    %2752 = vmatprep.subr.bf16.mxu0 0
    %2753 = vmatpush1.bf16.msra.mxu0 0
    %2754 = vmatprep.subr.bf16.mxu0 0
    %2755 = vmatpush1.bf16.msra.mxu0 0
    %2756 = vmatprep.subr.bf16.mxu0 0
    %2757 = vmatpush1.bf16.msra.mxu0 0
    %2758 = vmatprep.mubr.bf16.mxu0 0
    %2759 = vmatmul.mubr.bf16.gmra.mrb[0].mxu0 %v516
    %v2760 = vpop.f32.mrb[0].mxu0
    %v2761 = vadd.f32 0.0, %v2760
    %v2762 = vpop.f32.mrb[0].mxu0
    %v2763 = vpop.f32.mrb[0].mxu0
    %v2764 = vadd.f32 0.0, %v2763
    %v2765 = vpop.f32.mrb[0].mxu0
    %2766 = vdwg.mxu0
    %v2767 = vadd.f32 %v2609, %v2761
    %v2768 = vadd.f32 %v2610, %v2764
    %v2769 = vxor.u32 %v2767, 2147483648
    %v2770 = vxor.u32 %v2768, 2147483648
    %v2771 = vmul.f32 %v2769, 1.442695
    %v2772 = vpow.pop %v2771
    %v2773 = vmul.f32 %v2770, 1.442695
    %v2774 = vpow.pop %v2773
    %v2775 = vadd.f32 %v2772, 1.0
    %v2776 = vadd.f32 %v2774, 1.0
    %v2777 = vrcp.pop %v2775
    %v2778 = vmul.f32 1.0, %v2777
    %v2779 = vrcp.pop %v2776
    %v2780 = vmul.f32 1.0, %v2779
    %v2781 = vtanh.pop %v2767
    %v2782 = vtanh.pop %v2768
    %v2783 = vmul.f32 %v2778, 0.0
    %v2784 = vmul.f32 %v2780, 0.0
    %2787 = vrot.lane.b32.xlu0 %v2781, 32
    %v2788 = vpop.permute.xlu0 %2787
    %2789 = vrot.lane.b32.xlu0 %v2782, 32
    %v2790 = vpop.permute.xlu0 %2789
    %v2793 = vmul.f32 %v2778, %v2788
    %v2794 = vmul.f32 %v2780, %v2790
    %2797 = vrot.lane.b32.xlu0 %v2793, 32
    %v2798 = vpop.permute.xlu0 %2797
    %2799 = vrot.lane.b32.xlu0 %v2794, 32
    %v2800 = vpop.permute.xlu0 %2799
    %v2803 = vadd.f32 %v2783, %v2798
    %v2804 = vadd.f32 %v2784, %v2800
    %v2805 = vtanh.pop %v2803
    %v2806 = vtanh.pop %v2804
    %2809 = vrot.lane.b32.xlu0 %v2805, 32
    %v2810 = vpop.permute.xlu0 %2809
    %2811 = vrot.lane.b32.xlu0 %v2806, 32
    %v2812 = vpop.permute.xlu0 %2811
    %v2815 = vmul.f32 %v2778, %v2810
    %v2816 = vmul.f32 %v2780, %v2812
    %v2817 = vpack.c.bf16 %v2713, %v2712
    %2819 = vrot.lane.b32.xlu0 %v2817, 64
    %v2820 = vpop.permute.xlu0 %2819
    %2822 = vst.msk [vmem:[#allocation7] sm:$0xff] %vm514, %v2820
    %v2823 = vpack.c.bf16 %v2816, %v2815
    %2825 = vrot.lane.b32.xlu0 %v2823, 64
    %v2826 = vpop.permute.xlu0 %2825
    %s2828 = scalar_lea.vmem [#allocation8], 56
    %2829 = vst.msk [vmem:[%s2828] sm:$0xff] %vm514, %v2826
    %v2830 = vld [vmem:[%s727] sm:$0xff]
    %v2831 = vld [vmem:[%s727 + $0x10] sm:$0xff]
    %v2832 = vld [vmem:[%s732 + $0x8] sm:$0xff]
    %v2833 = vld [vmem:[%s732 + $0x18] sm:$0xff]
    %v2835 = vsel %vm514, %v2820, 0
    %2837 = vmatprep.subr.bf16.mxu0 0
    %2838 = vmatpush1.bf16.msra.mxu0 %v2619
    %2839 = vmatprep.subr.bf16.mxu0 0
    %2840 = vmatpush1.bf16.msra.mxu0 %v2620
    %2841 = vmatprep.subr.bf16.mxu0 0
    %2842 = vmatpush1.bf16.msra.mxu0 0
    %2843 = vmatprep.subr.bf16.mxu0 0
    %2844 = vmatpush1.bf16.msra.mxu0 0
    %2845 = vmatprep.subr.bf16.mxu0 0
    %2846 = vmatpush1.bf16.msra.mxu0 0
    %2847 = vmatprep.subr.bf16.mxu0 0
    %2848 = vmatpush1.bf16.msra.mxu0 0
    %2849 = vmatprep.subr.bf16.mxu0 0
    %2850 = vmatpush1.bf16.msra.mxu0 0
    %2851 = vmatprep.subr.bf16.mxu0 0
    %2852 = vmatpush1.bf16.msra.mxu0 0
    %2853 = vmatprep.subr.bf16.mxu0 0
    %2854 = vmatpush1.bf16.msra.mxu0 0
    %2855 = vmatprep.subr.bf16.mxu0 0
    %2856 = vmatpush1.bf16.msra.mxu0 0
    %2857 = vmatprep.subr.bf16.mxu0 0
    %2858 = vmatpush1.bf16.msra.mxu0 0
    %2859 = vmatprep.subr.bf16.mxu0 0
    %2860 = vmatpush1.bf16.msra.mxu0 0
    %2861 = vmatprep.subr.bf16.mxu0 0
    %2862 = vmatpush1.bf16.msra.mxu0 0
    %2863 = vmatprep.subr.bf16.mxu0 0
    %2864 = vmatpush1.bf16.msra.mxu0 0
    %2865 = vmatprep.subr.bf16.mxu0 0
    %2866 = vmatpush1.bf16.msra.mxu0 0
    %2867 = vmatprep.subr.bf16.mxu0 0
    %2868 = vmatpush1.bf16.msra.mxu0 0
    %2869 = vmatprep.mubr.bf16.mxu0 0
    %2870 = vmatmul.mubr.bf16.gmra.mrb[0].mxu0 %v2835
    %v2871 = vpop.f32.mrb[0].mxu0
    %v2872 = vadd.f32 0.0, %v2871
    %v2873 = vpop.f32.mrb[0].mxu0
    %v2874 = vpop.f32.mrb[0].mxu0
    %v2875 = vadd.f32 0.0, %v2874
    %v2876 = vpop.f32.mrb[0].mxu0
    %2877 = vdwg.mxu0
    %v2878 = vadd.f32 %v2830, %v2872
    %v2879 = vadd.f32 %v2831, %v2875
    %v2880 = vxor.u32 %v2878, 2147483648
    %v2881 = vxor.u32 %v2879, 2147483648
    %v2882 = vmul.f32 %v2880, 1.442695
    %v2883 = vpow.pop %v2882
    %v2884 = vmul.f32 %v2881, 1.442695
    %v2885 = vpow.pop %v2884
    %v2886 = vadd.f32 %v2883, 1.0
    %v2887 = vadd.f32 %v2885, 1.0
    %v2888 = vrcp.pop %v2886
    %v2889 = vmul.f32 1.0, %v2888
    %v2890 = vrcp.pop %v2887
    %v2891 = vmul.f32 1.0, %v2890
    %v2892 = vtanh.pop %v2878
    %v2893 = vtanh.pop %v2879
    %v2894 = vmul.f32 %v2889, %v2700
    %v2895 = vmul.f32 %v2891, %v2701
    %2898 = vrot.lane.b32.xlu0 %v2892, 32
    %v2899 = vpop.permute.xlu0 %2898
    %2900 = vrot.lane.b32.xlu0 %v2893, 32
    %v2901 = vpop.permute.xlu0 %2900
    %v2904 = vmul.f32 %v2889, %v2899
    %v2905 = vmul.f32 %v2891, %v2901
    %2908 = vrot.lane.b32.xlu0 %v2904, 32
    %v2909 = vpop.permute.xlu0 %2908
    %2910 = vrot.lane.b32.xlu0 %v2905, 32
    %v2911 = vpop.permute.xlu0 %2910
    %v2914 = vadd.f32 %v2894, %v2909
    %v2915 = vadd.f32 %v2895, %v2911
    %v2916 = vtanh.pop %v2914
    %v2917 = vtanh.pop %v2915
    %2920 = vrot.lane.b32.xlu0 %v2916, 32
    %v2921 = vpop.permute.xlu0 %2920
    %2922 = vrot.lane.b32.xlu0 %v2917, 32
    %v2923 = vpop.permute.xlu0 %2922
    %v2926 = vmul.f32 %v2889, %v2921
    %v2927 = vmul.f32 %v2891, %v2923
    %v2929 = vsel %vm514, %v2826, 0
    %2931 = vmatprep.subr.bf16.mxu0 0
    %2932 = vmatpush1.bf16.msra.mxu0 %v2722
    %2933 = vmatprep.subr.bf16.mxu0 0
    %2934 = vmatpush1.bf16.msra.mxu0 %v2723
    %2935 = vmatprep.subr.bf16.mxu0 0
    %2936 = vmatpush1.bf16.msra.mxu0 0
    %2937 = vmatprep.subr.bf16.mxu0 0
    %2938 = vmatpush1.bf16.msra.mxu0 0
    %2939 = vmatprep.subr.bf16.mxu0 0
    %2940 = vmatpush1.bf16.msra.mxu0 0
    %2941 = vmatprep.subr.bf16.mxu0 0
    %2942 = vmatpush1.bf16.msra.mxu0 0
    %2943 = vmatprep.subr.bf16.mxu0 0
    %2944 = vmatpush1.bf16.msra.mxu0 0
    %2945 = vmatprep.subr.bf16.mxu0 0
    %2946 = vmatpush1.bf16.msra.mxu0 0
    %2947 = vmatprep.subr.bf16.mxu0 0
    %2948 = vmatpush1.bf16.msra.mxu0 0
    %2949 = vmatprep.subr.bf16.mxu0 0
    %2950 = vmatpush1.bf16.msra.mxu0 0
    %2951 = vmatprep.subr.bf16.mxu0 0
    %2952 = vmatpush1.bf16.msra.mxu0 0
    %2953 = vmatprep.subr.bf16.mxu0 0
    %2954 = vmatpush1.bf16.msra.mxu0 0
    %2955 = vmatprep.subr.bf16.mxu0 0
    %2956 = vmatpush1.bf16.msra.mxu0 0
    %2957 = vmatprep.subr.bf16.mxu0 0
    %2958 = vmatpush1.bf16.msra.mxu0 0
    %2959 = vmatprep.subr.bf16.mxu0 0
    %2960 = vmatpush1.bf16.msra.mxu0 0
    %2961 = vmatprep.subr.bf16.mxu0 0
    %2962 = vmatpush1.bf16.msra.mxu0 0
    %2963 = vmatprep.mubr.bf16.mxu0 0
    %2964 = vmatmul.mubr.bf16.gmra.mrb[0].mxu0 %v2929
    %v2965 = vpop.f32.mrb[0].mxu0
    %v2966 = vadd.f32 0.0, %v2965
    %v2967 = vpop.f32.mrb[0].mxu0
    %v2968 = vpop.f32.mrb[0].mxu0
    %v2969 = vadd.f32 0.0, %v2968
    %v2970 = vpop.f32.mrb[0].mxu0
    %2971 = vdwg.mxu0
    %v2972 = vadd.f32 %v2832, %v2966
    %v2973 = vadd.f32 %v2833, %v2969
    %v2974 = vxor.u32 %v2972, 2147483648
    %v2975 = vxor.u32 %v2973, 2147483648
    %v2976 = vmul.f32 %v2974, 1.442695
    %v2977 = vpow.pop %v2976
    %v2978 = vmul.f32 %v2975, 1.442695
    %v2979 = vpow.pop %v2978
    %v2980 = vadd.f32 %v2977, 1.0
    %v2981 = vadd.f32 %v2979, 1.0
    %v2982 = vrcp.pop %v2980
    %v2983 = vmul.f32 1.0, %v2982
    %v2984 = vrcp.pop %v2981
    %v2985 = vmul.f32 1.0, %v2984
    %v2986 = vtanh.pop %v2972
    %v2987 = vtanh.pop %v2973
    %v2988 = vmul.f32 %v2983, %v2803
    %v2989 = vmul.f32 %v2985, %v2804
    %2992 = vrot.lane.b32.xlu0 %v2986, 32
    %v2993 = vpop.permute.xlu0 %2992
    %2994 = vrot.lane.b32.xlu0 %v2987, 32
    %v2995 = vpop.permute.xlu0 %2994
    %v2998 = vmul.f32 %v2983, %v2993
    %v2999 = vmul.f32 %v2985, %v2995
    %3002 = vrot.lane.b32.xlu0 %v2998, 32
    %v3003 = vpop.permute.xlu0 %3002
    %3004 = vrot.lane.b32.xlu0 %v2999, 32
    %v3005 = vpop.permute.xlu0 %3004
    %v3008 = vadd.f32 %v2988, %v3003
    %v3009 = vadd.f32 %v2989, %v3005
    %v3010 = vtanh.pop %v3008
    %v3011 = vtanh.pop %v3009
    %3014 = vrot.lane.b32.xlu0 %v3010, 32
    %v3015 = vpop.permute.xlu0 %3014
    %3016 = vrot.lane.b32.xlu0 %v3011, 32
    %v3017 = vpop.permute.xlu0 %3016
    %v3020 = vmul.f32 %v2983, %v3015
    %v3021 = vmul.f32 %v2985, %v3017
    %v3022 = vpack.c.bf16 %v2927, %v2926
    %3024 = vrot.lane.b32.xlu0 %v3022, 64
    %v3025 = vpop.permute.xlu0 %3024
    %s3027 = scalar_lea.vmem [#allocation7], 8
    %3028 = vst.msk [vmem:[%s3027] sm:$0xff] %vm514, %v3025
    %v3029 = vpack.c.bf16 %v3021, %v3020
    %3031 = vrot.lane.b32.xlu0 %v3029, 64
    %v3032 = vpop.permute.xlu0 %3031
    %s3034 = scalar_lea.vmem [#allocation8], 48
    %3035 = vst.msk [vmem:[%s3034] sm:$0xff] %vm514, %v3032
    %v3036 = vld [vmem:[%s939] sm:$0xff]
    %v3037 = vld [vmem:[%s939 + $0x10] sm:$0xff]
    %v3038 = vld [vmem:[%s944 + $0x8] sm:$0xff]
    %v3039 = vld [vmem:[%s944 + $0x18] sm:$0xff]
    %v3041 = vsel %vm514, %v3025, 0
    %3043 = vmatprep.subr.bf16.mxu0 0
    %3044 = vmatpush1.bf16.msra.mxu0 %v2619
    %3045 = vmatprep.subr.bf16.mxu0 0
    %3046 = vmatpush1.bf16.msra.mxu0 %v2620
    %3047 = vmatprep.subr.bf16.mxu0 0
    %3048 = vmatpush1.bf16.msra.mxu0 0
    %3049 = vmatprep.subr.bf16.mxu0 0
    %3050 = vmatpush1.bf16.msra.mxu0 0
    %3051 = vmatprep.subr.bf16.mxu0 0
    %3052 = vmatpush1.bf16.msra.mxu0 0
    %3053 = vmatprep.subr.bf16.mxu0 0
    %3054 = vmatpush1.bf16.msra.mxu0 0
    %3055 = vmatprep.subr.bf16.mxu0 0
    %3056 = vmatpush1.bf16.msra.mxu0 0
    %3057 = vmatprep.subr.bf16.mxu0 0
    %3058 = vmatpush1.bf16.msra.mxu0 0
    %3059 = vmatprep.subr.bf16.mxu0 0
    %3060 = vmatpush1.bf16.msra.mxu0 0
    %3061 = vmatprep.subr.bf16.mxu0 0
    %3062 = vmatpush1.bf16.msra.mxu0 0
    %3063 = vmatprep.subr.bf16.mxu0 0
    %3064 = vmatpush1.bf16.msra.mxu0 0
    %3065 = vmatprep.subr.bf16.mxu0 0
    %3066 = vmatpush1.bf16.msra.mxu0 0
    %3067 = vmatprep.subr.bf16.mxu0 0
    %3068 = vmatpush1.bf16.msra.mxu0 0
    %3069 = vmatprep.subr.bf16.mxu0 0
    %3070 = vmatpush1.bf16.msra.mxu0 0
    %3071 = vmatprep.subr.bf16.mxu0 0
    %3072 = vmatpush1.bf16.msra.mxu0 0
    %3073 = vmatprep.subr.bf16.mxu0 0
    %3074 = vmatpush1.bf16.msra.mxu0 0
    %3075 = vmatprep.mubr.bf16.mxu0 0
    %3076 = vmatmul.mubr.bf16.gmra.mrb[0].mxu0 %v3041
    %v3077 = vpop.f32.mrb[0].mxu0
    %v3078 = vadd.f32 0.0, %v3077
    %v3079 = vpop.f32.mrb[0].mxu0
    %v3080 = vpop.f32.mrb[0].mxu0
    %v3081 = vadd.f32 0.0, %v3080
    %v3082 = vpop.f32.mrb[0].mxu0
    %3083 = vdwg.mxu0
    %v3084 = vadd.f32 %v3036, %v3078
    %v3085 = vadd.f32 %v3037, %v3081
    %v3086 = vxor.u32 %v3084, 2147483648
    %v3087 = vxor.u32 %v3085, 2147483648
    %v3088 = vmul.f32 %v3086, 1.442695
    %v3089 = vpow.pop %v3088
    %v3090 = vmul.f32 %v3087, 1.442695
    %v3091 = vpow.pop %v3090
    %v3092 = vadd.f32 %v3089, 1.0
    %v3093 = vadd.f32 %v3091, 1.0
    %v3094 = vrcp.pop %v3092
    %v3095 = vmul.f32 1.0, %v3094
    %v3096 = vrcp.pop %v3093
    %v3097 = vmul.f32 1.0, %v3096
    %v3098 = vtanh.pop %v3084
    %v3099 = vtanh.pop %v3085
    %v3100 = vmul.f32 %v3095, %v2914
    %v3101 = vmul.f32 %v3097, %v2915
    %3104 = vrot.lane.b32.xlu0 %v3098, 32
    %v3105 = vpop.permute.xlu0 %3104
    %3106 = vrot.lane.b32.xlu0 %v3099, 32
    %v3107 = vpop.permute.xlu0 %3106
    %v3110 = vmul.f32 %v3095, %v3105
    %v3111 = vmul.f32 %v3097, %v3107
    %3114 = vrot.lane.b32.xlu0 %v3110, 32
    %v3115 = vpop.permute.xlu0 %3114
    %3116 = vrot.lane.b32.xlu0 %v3111, 32
    %v3117 = vpop.permute.xlu0 %3116
    %v3120 = vadd.f32 %v3100, %v3115
    %v3121 = vadd.f32 %v3101, %v3117
    %v3122 = vtanh.pop %v3120
    %v3123 = vtanh.pop %v3121
    %3126 = vrot.lane.b32.xlu0 %v3122, 32
    %v3127 = vpop.permute.xlu0 %3126
    %3128 = vrot.lane.b32.xlu0 %v3123, 32
    %v3129 = vpop.permute.xlu0 %3128
    %v3132 = vmul.f32 %v3095, %v3127
    %v3133 = vmul.f32 %v3097, %v3129
    %v3135 = vsel %vm514, %v3032, 0
    %3137 = vmatprep.subr.bf16.mxu0 0
    %3138 = vmatpush1.bf16.msra.mxu0 %v2722
    %3139 = vmatprep.subr.bf16.mxu0 0
    %3140 = vmatpush1.bf16.msra.mxu0 %v2723
    %3141 = vmatprep.subr.bf16.mxu0 0
    %3142 = vmatpush1.bf16.msra.mxu0 0
    %3143 = vmatprep.subr.bf16.mxu0 0
    %3144 = vmatpush1.bf16.msra.mxu0 0
    %3145 = vmatprep.subr.bf16.mxu0 0
    %3146 = vmatpush1.bf16.msra.mxu0 0
    %3147 = vmatprep.subr.bf16.mxu0 0
    %3148 = vmatpush1.bf16.msra.mxu0 0
    %3149 = vmatprep.subr.bf16.mxu0 0
    %3150 = vmatpush1.bf16.msra.mxu0 0
    %3151 = vmatprep.subr.bf16.mxu0 0
    %3152 = vmatpush1.bf16.msra.mxu0 0
    %3153 = vmatprep.subr.bf16.mxu0 0
    %3154 = vmatpush1.bf16.msra.mxu0 0
    %3155 = vmatprep.subr.bf16.mxu0 0
    %3156 = vmatpush1.bf16.msra.mxu0 0
    %3157 = vmatprep.subr.bf16.mxu0 0
    %3158 = vmatpush1.bf16.msra.mxu0 0
    %3159 = vmatprep.subr.bf16.mxu0 0
    %3160 = vmatpush1.bf16.msra.mxu0 0
    %3161 = vmatprep.subr.bf16.mxu0 0
    %3162 = vmatpush1.bf16.msra.mxu0 0
    %3163 = vmatprep.subr.bf16.mxu0 0
    %3164 = vmatpush1.bf16.msra.mxu0 0
    %3165 = vmatprep.subr.bf16.mxu0 0
    %3166 = vmatpush1.bf16.msra.mxu0 0
    %3167 = vmatprep.subr.bf16.mxu0 0
    %3168 = vmatpush1.bf16.msra.mxu0 0
    %3169 = vmatprep.mubr.bf16.mxu0 0
    %3170 = vmatmul.mubr.bf16.gmra.mrb[0].mxu0 %v3135
    %v3171 = vpop.f32.mrb[0].mxu0
    %v3172 = vadd.f32 0.0, %v3171
    %v3173 = vpop.f32.mrb[0].mxu0
    %v3174 = vpop.f32.mrb[0].mxu0
    %v3175 = vadd.f32 0.0, %v3174
    %v3176 = vpop.f32.mrb[0].mxu0
    %3177 = vdwg.mxu0
    %v3178 = vadd.f32 %v3038, %v3172
    %v3179 = vadd.f32 %v3039, %v3175
    %v3180 = vxor.u32 %v3178, 2147483648
    %v3181 = vxor.u32 %v3179, 2147483648
    %v3182 = vmul.f32 %v3180, 1.442695
    %v3183 = vpow.pop %v3182
    %v3184 = vmul.f32 %v3181, 1.442695
    %v3185 = vpow.pop %v3184
    %v3186 = vadd.f32 %v3183, 1.0
    %v3187 = vadd.f32 %v3185, 1.0
    %v3188 = vrcp.pop %v3186
    %v3189 = vmul.f32 1.0, %v3188
    %v3190 = vrcp.pop %v3187
    %v3191 = vmul.f32 1.0, %v3190
    %v3192 = vtanh.pop %v3178
    %v3193 = vtanh.pop %v3179
    %v3194 = vmul.f32 %v3189, %v3008
    %v3195 = vmul.f32 %v3191, %v3009
    %3198 = vrot.lane.b32.xlu0 %v3192, 32
    %v3199 = vpop.permute.xlu0 %3198
    %3200 = vrot.lane.b32.xlu0 %v3193, 32
    %v3201 = vpop.permute.xlu0 %3200
    %v3204 = vmul.f32 %v3189, %v3199
    %v3205 = vmul.f32 %v3191, %v3201
    %3208 = vrot.lane.b32.xlu0 %v3204, 32
    %v3209 = vpop.permute.xlu0 %3208
    %3210 = vrot.lane.b32.xlu0 %v3205, 32
    %v3211 = vpop.permute.xlu0 %3210
    %v3214 = vadd.f32 %v3194, %v3209
    %v3215 = vadd.f32 %v3195, %v3211
    %v3216 = vtanh.pop %v3214
    %v3217 = vtanh.pop %v3215
    %3220 = vrot.lane.b32.xlu0 %v3216, 32
    %v3221 = vpop.permute.xlu0 %3220
    %3222 = vrot.lane.b32.xlu0 %v3217, 32
    %v3223 = vpop.permute.xlu0 %3222
    %v3226 = vmul.f32 %v3189, %v3221
    %v3227 = vmul.f32 %v3191, %v3223
    %v3228 = vpack.c.bf16 %v3133, %v3132
    %3230 = vrot.lane.b32.xlu0 %v3228, 64
    %v3231 = vpop.permute.xlu0 %3230
    %s3233 = scalar_lea.vmem [#allocation7], 16
    %3234 = vst.msk [vmem:[%s3233] sm:$0xff] %vm514, %v3231
    %v3235 = vpack.c.bf16 %v3227, %v3226
    %3237 = vrot.lane.b32.xlu0 %v3235, 64
    %v3238 = vpop.permute.xlu0 %3237
    %s3240 = scalar_lea.vmem [#allocation8], 40
    %3241 = vst.msk [vmem:[%s3240] sm:$0xff] %vm514, %v3238
    %v3242 = vld [vmem:[%s1151] sm:$0xff]
    %v3243 = vld [vmem:[%s1151 + $0x10] sm:$0xff]
    %v3244 = vld [vmem:[%s1156 + $0x8] sm:$0xff]
    %v3245 = vld [vmem:[%s1156 + $0x18] sm:$0xff]
    %v3247 = vsel %vm514, %v3231, 0
    %3249 = vmatprep.subr.bf16.mxu0 0
    %3250 = vmatpush1.bf16.msra.mxu0 %v2619
    %3251 = vmatprep.subr.bf16.mxu0 0
    %3252 = vmatpush1.bf16.msra.mxu0 %v2620
    %3253 = vmatprep.subr.bf16.mxu0 0
    %3254 = vmatpush1.bf16.msra.mxu0 0
    %3255 = vmatprep.subr.bf16.mxu0 0
    %3256 = vmatpush1.bf16.msra.mxu0 0
    %3257 = vmatprep.subr.bf16.mxu0 0
    %3258 = vmatpush1.bf16.msra.mxu0 0
    %3259 = vmatprep.subr.bf16.mxu0 0
    %3260 = vmatpush1.bf16.msra.mxu0 0
    %3261 = vmatprep.subr.bf16.mxu0 0
    %3262 = vmatpush1.bf16.msra.mxu0 0
    %3263 = vmatprep.subr.bf16.mxu0 0
    %3264 = vmatpush1.bf16.msra.mxu0 0
    %3265 = vmatprep.subr.bf16.mxu0 0
    %3266 = vmatpush1.bf16.msra.mxu0 0
    %3267 = vmatprep.subr.bf16.mxu0 0
    %3268 = vmatpush1.bf16.msra.mxu0 0
    %3269 = vmatprep.subr.bf16.mxu0 0
    %3270 = vmatpush1.bf16.msra.mxu0 0
    %3271 = vmatprep.subr.bf16.mxu0 0
    %3272 = vmatpush1.bf16.msra.mxu0 0
    %3273 = vmatprep.subr.bf16.mxu0 0
    %3274 = vmatpush1.bf16.msra.mxu0 0
    %3275 = vmatprep.subr.bf16.mxu0 0
    %3276 = vmatpush1.bf16.msra.mxu0 0
    %3277 = vmatprep.subr.bf16.mxu0 0
    %3278 = vmatpush1.bf16.msra.mxu0 0
    %3279 = vmatprep.subr.bf16.mxu0 0
    %3280 = vmatpush1.bf16.msra.mxu0 0
    %3281 = vmatprep.mubr.bf16.mxu0 0
    %3282 = vmatmul.mubr.bf16.gmra.mrb[0].mxu0 %v3247
    %v3283 = vpop.f32.mrb[0].mxu0
    %v3284 = vadd.f32 0.0, %v3283
    %v3285 = vpop.f32.mrb[0].mxu0
    %v3286 = vpop.f32.mrb[0].mxu0
    %v3287 = vadd.f32 0.0, %v3286
    %v3288 = vpop.f32.mrb[0].mxu0
    %3289 = vdwg.mxu0
    %v3290 = vadd.f32 %v3242, %v3284
    %v3291 = vadd.f32 %v3243, %v3287
    %v3292 = vxor.u32 %v3290, 2147483648
    %v3293 = vxor.u32 %v3291, 2147483648
    %v3294 = vmul.f32 %v3292, 1.442695
    %v3295 = vpow.pop %v3294
    %v3296 = vmul.f32 %v3293, 1.442695
    %v3297 = vpow.pop %v3296
    %v3298 = vadd.f32 %v3295, 1.0
    %v3299 = vadd.f32 %v3297, 1.0
    %v3300 = vrcp.pop %v3298
    %v3301 = vmul.f32 1.0, %v3300
    %v3302 = vrcp.pop %v3299
    %v3303 = vmul.f32 1.0, %v3302
    %v3304 = vtanh.pop %v3290
    %v3305 = vtanh.pop %v3291
    %v3306 = vmul.f32 %v3301, %v3120
    %v3307 = vmul.f32 %v3303, %v3121
    %3310 = vrot.lane.b32.xlu0 %v3304, 32
    %v3311 = vpop.permute.xlu0 %3310
    %3312 = vrot.lane.b32.xlu0 %v3305, 32
    %v3313 = vpop.permute.xlu0 %3312
    %v3316 = vmul.f32 %v3301, %v3311
    %v3317 = vmul.f32 %v3303, %v3313
    %3320 = vrot.lane.b32.xlu0 %v3316, 32
    %v3321 = vpop.permute.xlu0 %3320
    %3322 = vrot.lane.b32.xlu0 %v3317, 32
    %v3323 = vpop.permute.xlu0 %3322
    %v3326 = vadd.f32 %v3306, %v3321
    %v3327 = vadd.f32 %v3307, %v3323
    %v3328 = vtanh.pop %v3326
    %v3329 = vtanh.pop %v3327
    %3332 = vrot.lane.b32.xlu0 %v3328, 32
    %v3333 = vpop.permute.xlu0 %3332
    %3334 = vrot.lane.b32.xlu0 %v3329, 32
    %v3335 = vpop.permute.xlu0 %3334
    %v3338 = vmul.f32 %v3301, %v3333
    %v3339 = vmul.f32 %v3303, %v3335
    %v3341 = vsel %vm514, %v3238, 0
    %3343 = vmatprep.subr.bf16.mxu0 0
    %3344 = vmatpush1.bf16.msra.mxu0 %v2722
    %3345 = vmatprep.subr.bf16.mxu0 0
    %3346 = vmatpush1.bf16.msra.mxu0 %v2723
    %3347 = vmatprep.subr.bf16.mxu0 0
    %3348 = vmatpush1.bf16.msra.mxu0 0
    %3349 = vmatprep.subr.bf16.mxu0 0
    %3350 = vmatpush1.bf16.msra.mxu0 0
    %3351 = vmatprep.subr.bf16.mxu0 0
    %3352 = vmatpush1.bf16.msra.mxu0 0
    %3353 = vmatprep.subr.bf16.mxu0 0
    %3354 = vmatpush1.bf16.msra.mxu0 0
    %3355 = vmatprep.subr.bf16.mxu0 0
    %3356 = vmatpush1.bf16.msra.mxu0 0
    %3357 = vmatprep.subr.bf16.mxu0 0
    %3358 = vmatpush1.bf16.msra.mxu0 0
    %3359 = vmatprep.subr.bf16.mxu0 0
    %3360 = vmatpush1.bf16.msra.mxu0 0
    %3361 = vmatprep.subr.bf16.mxu0 0
    %3362 = vmatpush1.bf16.msra.mxu0 0
    %3363 = vmatprep.subr.bf16.mxu0 0
    %3364 = vmatpush1.bf16.msra.mxu0 0
    %3365 = vmatprep.subr.bf16.mxu0 0
    %3366 = vmatpush1.bf16.msra.mxu0 0
    %3367 = vmatprep.subr.bf16.mxu0 0
    %3368 = vmatpush1.bf16.msra.mxu0 0
    %3369 = vmatprep.subr.bf16.mxu0 0
    %3370 = vmatpush1.bf16.msra.mxu0 0
    %3371 = vmatprep.subr.bf16.mxu0 0
    %3372 = vmatpush1.bf16.msra.mxu0 0
    %3373 = vmatprep.subr.bf16.mxu0 0
    %3374 = vmatpush1.bf16.msra.mxu0 0
    %3375 = vmatprep.mubr.bf16.mxu0 0
    %3376 = vmatmul.mubr.bf16.gmra.mrb[0].mxu0 %v3341
    %v3377 = vpop.f32.mrb[0].mxu0
    %v3378 = vadd.f32 0.0, %v3377
    %v3379 = vpop.f32.mrb[0].mxu0
    %v3380 = vpop.f32.mrb[0].mxu0
    %v3381 = vadd.f32 0.0, %v3380
    %v3382 = vpop.f32.mrb[0].mxu0
    %3383 = vdwg.mxu0
    %v3384 = vadd.f32 %v3244, %v3378
    %v3385 = vadd.f32 %v3245, %v3381
    %v3386 = vxor.u32 %v3384, 2147483648
    %v3387 = vxor.u32 %v3385, 2147483648
    %v3388 = vmul.f32 %v3386, 1.442695
    %v3389 = vpow.pop %v3388
    %v3390 = vmul.f32 %v3387, 1.442695
    %v3391 = vpow.pop %v3390
    %v3392 = vadd.f32 %v3389, 1.0
    %v3393 = vadd.f32 %v3391, 1.0
    %v3394 = vrcp.pop %v3392
    %v3395 = vmul.f32 1.0, %v3394
    %v3396 = vrcp.pop %v3393
    %v3397 = vmul.f32 1.0, %v3396
    %v3398 = vtanh.pop %v3384
    %v3399 = vtanh.pop %v3385
    %v3400 = vmul.f32 %v3395, %v3214
    %v3401 = vmul.f32 %v3397, %v3215
    %3404 = vrot.lane.b32.xlu0 %v3398, 32
    %v3405 = vpop.permute.xlu0 %3404
    %3406 = vrot.lane.b32.xlu0 %v3399, 32
    %v3407 = vpop.permute.xlu0 %3406
    %v3410 = vmul.f32 %v3395, %v3405
    %v3411 = vmul.f32 %v3397, %v3407
    %3414 = vrot.lane.b32.xlu0 %v3410, 32
    %v3415 = vpop.permute.xlu0 %3414
    %3416 = vrot.lane.b32.xlu0 %v3411, 32
    %v3417 = vpop.permute.xlu0 %3416
    %v3420 = vadd.f32 %v3400, %v3415
    %v3421 = vadd.f32 %v3401, %v3417
    %v3422 = vtanh.pop %v3420
    %v3423 = vtanh.pop %v3421
    %3426 = vrot.lane.b32.xlu0 %v3422, 32
    %v3427 = vpop.permute.xlu0 %3426
    %3428 = vrot.lane.b32.xlu0 %v3423, 32
    %v3429 = vpop.permute.xlu0 %3428
    %v3432 = vmul.f32 %v3395, %v3427
    %v3433 = vmul.f32 %v3397, %v3429
    %v3434 = vpack.c.bf16 %v3339, %v3338
    %3436 = vrot.lane.b32.xlu0 %v3434, 64
    %v3437 = vpop.permute.xlu0 %3436
    %s3439 = scalar_lea.vmem [#allocation7], 24
    %3440 = vst.msk [vmem:[%s3439] sm:$0xff] %vm514, %v3437
    %v3441 = vpack.c.bf16 %v3433, %v3432
    %3443 = vrot.lane.b32.xlu0 %v3441, 64
    %v3444 = vpop.permute.xlu0 %3443
    %s3446 = scalar_lea.vmem [#allocation8], 32
    %3447 = vst.msk [vmem:[%s3446] sm:$0xff] %vm514, %v3444
    %v3448 = vld [vmem:[%s1156] sm:$0xff]
    %v3449 = vld [vmem:[%s1156 + $0x10] sm:$0xff]
    %v3450 = vld [vmem:[%s1151 + $0x8] sm:$0xff]
    %v3451 = vld [vmem:[%s1151 + $0x18] sm:$0xff]
    %v3453 = vsel %vm514, %v3437, 0
    %3455 = vmatprep.subr.bf16.mxu0 0
    %3456 = vmatpush1.bf16.msra.mxu0 %v2619
    %3457 = vmatprep.subr.bf16.mxu0 0
    %3458 = vmatpush1.bf16.msra.mxu0 %v2620
    %3459 = vmatprep.subr.bf16.mxu0 0
    %3460 = vmatpush1.bf16.msra.mxu0 0
    %3461 = vmatprep.subr.bf16.mxu0 0
    %3462 = vmatpush1.bf16.msra.mxu0 0
    %3463 = vmatprep.subr.bf16.mxu0 0
    %3464 = vmatpush1.bf16.msra.mxu0 0
    %3465 = vmatprep.subr.bf16.mxu0 0
    %3466 = vmatpush1.bf16.msra.mxu0 0
    %3467 = vmatprep.subr.bf16.mxu0 0
    %3468 = vmatpush1.bf16.msra.mxu0 0
    %3469 = vmatprep.subr.bf16.mxu0 0
    %3470 = vmatpush1.bf16.msra.mxu0 0
    %3471 = vmatprep.subr.bf16.mxu0 0
    %3472 = vmatpush1.bf16.msra.mxu0 0
    %3473 = vmatprep.subr.bf16.mxu0 0
    %3474 = vmatpush1.bf16.msra.mxu0 0
    %3475 = vmatprep.subr.bf16.mxu0 0
    %3476 = vmatpush1.bf16.msra.mxu0 0
    %3477 = vmatprep.subr.bf16.mxu0 0
    %3478 = vmatpush1.bf16.msra.mxu0 0
    %3479 = vmatprep.subr.bf16.mxu0 0
    %3480 = vmatpush1.bf16.msra.mxu0 0
    %3481 = vmatprep.subr.bf16.mxu0 0
    %3482 = vmatpush1.bf16.msra.mxu0 0
    %3483 = vmatprep.subr.bf16.mxu0 0
    %3484 = vmatpush1.bf16.msra.mxu0 0
    %3485 = vmatprep.subr.bf16.mxu0 0
    %3486 = vmatpush1.bf16.msra.mxu0 0
    %3487 = vmatprep.mubr.bf16.mxu0 0
    %3488 = vmatmul.mubr.bf16.gmra.mrb[0].mxu0 %v3453
    %v3489 = vpop.f32.mrb[0].mxu0
    %v3490 = vadd.f32 0.0, %v3489
    %v3491 = vpop.f32.mrb[0].mxu0
    %v3492 = vpop.f32.mrb[0].mxu0
    %v3493 = vadd.f32 0.0, %v3492
    %v3494 = vpop.f32.mrb[0].mxu0
    %3495 = vdwg.mxu0
    %v3496 = vadd.f32 %v3448, %v3490
    %v3497 = vadd.f32 %v3449, %v3493
    %v3498 = vxor.u32 %v3496, 2147483648
    %v3499 = vxor.u32 %v3497, 2147483648
    %v3500 = vmul.f32 %v3498, 1.442695
    %v3501 = vpow.pop %v3500
    %v3502 = vmul.f32 %v3499, 1.442695
    %v3503 = vpow.pop %v3502
    %v3504 = vadd.f32 %v3501, 1.0
    %v3505 = vadd.f32 %v3503, 1.0
    %v3506 = vrcp.pop %v3504
    %v3507 = vmul.f32 1.0, %v3506
    %v3508 = vrcp.pop %v3505
    %v3509 = vmul.f32 1.0, %v3508
    %v3510 = vtanh.pop %v3496
    %v3511 = vtanh.pop %v3497
    %v3512 = vmul.f32 %v3507, %v3326
    %v3513 = vmul.f32 %v3509, %v3327
    %3516 = vrot.lane.b32.xlu0 %v3510, 32
    %v3517 = vpop.permute.xlu0 %3516
    %3518 = vrot.lane.b32.xlu0 %v3511, 32
    %v3519 = vpop.permute.xlu0 %3518
    %v3522 = vmul.f32 %v3507, %v3517
    %v3523 = vmul.f32 %v3509, %v3519
    %3526 = vrot.lane.b32.xlu0 %v3522, 32
    %v3527 = vpop.permute.xlu0 %3526
    %3528 = vrot.lane.b32.xlu0 %v3523, 32
    %v3529 = vpop.permute.xlu0 %3528
    %v3532 = vadd.f32 %v3512, %v3527
    %v3533 = vadd.f32 %v3513, %v3529
    %v3534 = vtanh.pop %v3532
    %v3535 = vtanh.pop %v3533
    %3538 = vrot.lane.b32.xlu0 %v3534, 32
    %v3539 = vpop.permute.xlu0 %3538
    %3540 = vrot.lane.b32.xlu0 %v3535, 32
    %v3541 = vpop.permute.xlu0 %3540
    %v3544 = vmul.f32 %v3507, %v3539
    %v3545 = vmul.f32 %v3509, %v3541
    %v3547 = vsel %vm514, %v3444, 0
    %3549 = vmatprep.subr.bf16.mxu0 0
    %3550 = vmatpush1.bf16.msra.mxu0 %v2722
    %3551 = vmatprep.subr.bf16.mxu0 0
    %3552 = vmatpush1.bf16.msra.mxu0 %v2723
    %3553 = vmatprep.subr.bf16.mxu0 0
    %3554 = vmatpush1.bf16.msra.mxu0 0
    %3555 = vmatprep.subr.bf16.mxu0 0
    %3556 = vmatpush1.bf16.msra.mxu0 0
    %3557 = vmatprep.subr.bf16.mxu0 0
    %3558 = vmatpush1.bf16.msra.mxu0 0
    %3559 = vmatprep.subr.bf16.mxu0 0
    %3560 = vmatpush1.bf16.msra.mxu0 0
    %3561 = vmatprep.subr.bf16.mxu0 0
    %3562 = vmatpush1.bf16.msra.mxu0 0
    %3563 = vmatprep.subr.bf16.mxu0 0
    %3564 = vmatpush1.bf16.msra.mxu0 0
    %3565 = vmatprep.subr.bf16.mxu0 0
    %3566 = vmatpush1.bf16.msra.mxu0 0
    %3567 = vmatprep.subr.bf16.mxu0 0
    %3568 = vmatpush1.bf16.msra.mxu0 0
    %3569 = vmatprep.subr.bf16.mxu0 0
    %3570 = vmatpush1.bf16.msra.mxu0 0
    %3571 = vmatprep.subr.bf16.mxu0 0
    %3572 = vmatpush1.bf16.msra.mxu0 0
    %3573 = vmatprep.subr.bf16.mxu0 0
    %3574 = vmatpush1.bf16.msra.mxu0 0
    %3575 = vmatprep.subr.bf16.mxu0 0
    %3576 = vmatpush1.bf16.msra.mxu0 0
    %3577 = vmatprep.subr.bf16.mxu0 0
    %3578 = vmatpush1.bf16.msra.mxu0 0
    %3579 = vmatprep.subr.bf16.mxu0 0
    %3580 = vmatpush1.bf16.msra.mxu0 0
    %3581 = vmatprep.mubr.bf16.mxu0 0
    %3582 = vmatmul.mubr.bf16.gmra.mrb[0].mxu0 %v3547
    %v3583 = vpop.f32.mrb[0].mxu0
    %v3584 = vadd.f32 0.0, %v3583
    %v3585 = vpop.f32.mrb[0].mxu0
    %v3586 = vpop.f32.mrb[0].mxu0
    %v3587 = vadd.f32 0.0, %v3586
    %v3588 = vpop.f32.mrb[0].mxu0
    %3589 = vdwg.mxu0
    %v3590 = vadd.f32 %v3450, %v3584
    %v3591 = vadd.f32 %v3451, %v3587
    %v3592 = vxor.u32 %v3590, 2147483648
    %v3593 = vxor.u32 %v3591, 2147483648
    %v3594 = vmul.f32 %v3592, 1.442695
    %v3595 = vpow.pop %v3594
    %v3596 = vmul.f32 %v3593, 1.442695
    %v3597 = vpow.pop %v3596
    %v3598 = vadd.f32 %v3595, 1.0
    %v3599 = vadd.f32 %v3597, 1.0
    %v3600 = vrcp.pop %v3598
    %v3601 = vmul.f32 1.0, %v3600
    %v3602 = vrcp.pop %v3599
    %v3603 = vmul.f32 1.0, %v3602
    %v3604 = vtanh.pop %v3590
    %v3605 = vtanh.pop %v3591
    %v3606 = vmul.f32 %v3601, %v3420
    %v3607 = vmul.f32 %v3603, %v3421
    %3610 = vrot.lane.b32.xlu0 %v3604, 32
    %v3611 = vpop.permute.xlu0 %3610
    %3612 = vrot.lane.b32.xlu0 %v3605, 32
    %v3613 = vpop.permute.xlu0 %3612
    %v3616 = vmul.f32 %v3601, %v3611
    %v3617 = vmul.f32 %v3603, %v3613
    %3620 = vrot.lane.b32.xlu0 %v3616, 32
    %v3621 = vpop.permute.xlu0 %3620
    %3622 = vrot.lane.b32.xlu0 %v3617, 32
    %v3623 = vpop.permute.xlu0 %3622
    %v3626 = vadd.f32 %v3606, %v3621
    %v3627 = vadd.f32 %v3607, %v3623
    %v3628 = vtanh.pop %v3626
    %v3629 = vtanh.pop %v3627
    %3632 = vrot.lane.b32.xlu0 %v3628, 32
    %v3633 = vpop.permute.xlu0 %3632
    %3634 = vrot.lane.b32.xlu0 %v3629, 32
    %v3635 = vpop.permute.xlu0 %3634
    %v3638 = vmul.f32 %v3601, %v3633
    %v3639 = vmul.f32 %v3603, %v3635
    %v3640 = vpack.c.bf16 %v3545, %v3544
    %3642 = vrot.lane.b32.xlu0 %v3640, 64
    %v3643 = vpop.permute.xlu0 %3642
    %s3645 = scalar_lea.vmem [#allocation7], 32
    %3646 = vst.msk [vmem:[%s3645] sm:$0xff] %vm514, %v3643
    %v3647 = vpack.c.bf16 %v3639, %v3638
    %3649 = vrot.lane.b32.xlu0 %v3647, 64
    %v3650 = vpop.permute.xlu0 %3649
    %s3652 = scalar_lea.vmem [#allocation8], 24
    %3653 = vst.msk [vmem:[%s3652] sm:$0xff] %vm514, %v3650
    %v3654 = vld [vmem:[%s944] sm:$0xff]
    %v3655 = vld [vmem:[%s944 + $0x10] sm:$0xff]
    %v3656 = vld [vmem:[%s939 + $0x8] sm:$0xff]
    %v3657 = vld [vmem:[%s939 + $0x18] sm:$0xff]
    %v3659 = vsel %vm514, %v3643, 0
    %3661 = vmatprep.subr.bf16.mxu0 0
    %3662 = vmatpush1.bf16.msra.mxu0 %v2619
    %3663 = vmatprep.subr.bf16.mxu0 0
    %3664 = vmatpush1.bf16.msra.mxu0 %v2620
    %3665 = vmatprep.subr.bf16.mxu0 0
    %3666 = vmatpush1.bf16.msra.mxu0 0
    %3667 = vmatprep.subr.bf16.mxu0 0
    %3668 = vmatpush1.bf16.msra.mxu0 0
    %3669 = vmatprep.subr.bf16.mxu0 0
    %3670 = vmatpush1.bf16.msra.mxu0 0
    %3671 = vmatprep.subr.bf16.mxu0 0
    %3672 = vmatpush1.bf16.msra.mxu0 0
    %3673 = vmatprep.subr.bf16.mxu0 0
    %3674 = vmatpush1.bf16.msra.mxu0 0
    %3675 = vmatprep.subr.bf16.mxu0 0
    %3676 = vmatpush1.bf16.msra.mxu0 0
    %3677 = vmatprep.subr.bf16.mxu0 0
    %3678 = vmatpush1.bf16.msra.mxu0 0
    %3679 = vmatprep.subr.bf16.mxu0 0
    %3680 = vmatpush1.bf16.msra.mxu0 0
    %3681 = vmatprep.subr.bf16.mxu0 0
    %3682 = vmatpush1.bf16.msra.mxu0 0
    %3683 = vmatprep.subr.bf16.mxu0 0
    %3684 = vmatpush1.bf16.msra.mxu0 0
    %3685 = vmatprep.subr.bf16.mxu0 0
    %3686 = vmatpush1.bf16.msra.mxu0 0
    %3687 = vmatprep.subr.bf16.mxu0 0
    %3688 = vmatpush1.bf16.msra.mxu0 0
    %3689 = vmatprep.subr.bf16.mxu0 0
    %3690 = vmatpush1.bf16.msra.mxu0 0
    %3691 = vmatprep.subr.bf16.mxu0 0
    %3692 = vmatpush1.bf16.msra.mxu0 0
    %3693 = vmatprep.mubr.bf16.mxu0 0
    %3694 = vmatmul.mubr.bf16.gmra.mrb[0].mxu0 %v3659
    %v3695 = vpop.f32.mrb[0].mxu0
    %v3696 = vadd.f32 0.0, %v3695
    %v3697 = vpop.f32.mrb[0].mxu0
    %v3698 = vpop.f32.mrb[0].mxu0
    %v3699 = vadd.f32 0.0, %v3698
    %v3700 = vpop.f32.mrb[0].mxu0
    %3701 = vdwg.mxu0
    %v3702 = vadd.f32 %v3654, %v3696
    %v3703 = vadd.f32 %v3655, %v3699
    %v3704 = vxor.u32 %v3702, 2147483648
    %v3705 = vxor.u32 %v3703, 2147483648
    %v3706 = vmul.f32 %v3704, 1.442695
    %v3707 = vpow.pop %v3706
    %v3708 = vmul.f32 %v3705, 1.442695
    %v3709 = vpow.pop %v3708
    %v3710 = vadd.f32 %v3707, 1.0
    %v3711 = vadd.f32 %v3709, 1.0
    %v3712 = vrcp.pop %v3710
    %v3713 = vmul.f32 1.0, %v3712
    %v3714 = vrcp.pop %v3711
    %v3715 = vmul.f32 1.0, %v3714
    %v3716 = vtanh.pop %v3702
    %v3717 = vtanh.pop %v3703
    %v3718 = vmul.f32 %v3713, %v3532
    %v3719 = vmul.f32 %v3715, %v3533
    %3722 = vrot.lane.b32.xlu0 %v3716, 32
    %v3723 = vpop.permute.xlu0 %3722
    %3724 = vrot.lane.b32.xlu0 %v3717, 32
    %v3725 = vpop.permute.xlu0 %3724
    %v3728 = vmul.f32 %v3713, %v3723
    %v3729 = vmul.f32 %v3715, %v3725
    %3732 = vrot.lane.b32.xlu0 %v3728, 32
    %v3733 = vpop.permute.xlu0 %3732
    %3734 = vrot.lane.b32.xlu0 %v3729, 32
    %v3735 = vpop.permute.xlu0 %3734
    %v3738 = vadd.f32 %v3718, %v3733
    %v3739 = vadd.f32 %v3719, %v3735
    %v3740 = vtanh.pop %v3738
    %v3741 = vtanh.pop %v3739
    %3744 = vrot.lane.b32.xlu0 %v3740, 32
    %v3745 = vpop.permute.xlu0 %3744
    %3746 = vrot.lane.b32.xlu0 %v3741, 32
    %v3747 = vpop.permute.xlu0 %3746
    %v3750 = vmul.f32 %v3713, %v3745
    %v3751 = vmul.f32 %v3715, %v3747
    %v3753 = vsel %vm514, %v3650, 0
    %3755 = vmatprep.subr.bf16.mxu0 0
    %3756 = vmatpush1.bf16.msra.mxu0 %v2722
    %3757 = vmatprep.subr.bf16.mxu0 0
    %3758 = vmatpush1.bf16.msra.mxu0 %v2723
    %3759 = vmatprep.subr.bf16.mxu0 0
    %3760 = vmatpush1.bf16.msra.mxu0 0
    %3761 = vmatprep.subr.bf16.mxu0 0
    %3762 = vmatpush1.bf16.msra.mxu0 0
    %3763 = vmatprep.subr.bf16.mxu0 0
    %3764 = vmatpush1.bf16.msra.mxu0 0
    %3765 = vmatprep.subr.bf16.mxu0 0
    %3766 = vmatpush1.bf16.msra.mxu0 0
    %3767 = vmatprep.subr.bf16.mxu0 0
    %3768 = vmatpush1.bf16.msra.mxu0 0
    %3769 = vmatprep.subr.bf16.mxu0 0
    %3770 = vmatpush1.bf16.msra.mxu0 0
    %3771 = vmatprep.subr.bf16.mxu0 0
    %3772 = vmatpush1.bf16.msra.mxu0 0
    %3773 = vmatprep.subr.bf16.mxu0 0
    %3774 = vmatpush1.bf16.msra.mxu0 0
    %3775 = vmatprep.subr.bf16.mxu0 0
    %3776 = vmatpush1.bf16.msra.mxu0 0
    %3777 = vmatprep.subr.bf16.mxu0 0
    %3778 = vmatpush1.bf16.msra.mxu0 0
    %3779 = vmatprep.subr.bf16.mxu0 0
    %3780 = vmatpush1.bf16.msra.mxu0 0
    %3781 = vmatprep.subr.bf16.mxu0 0
    %3782 = vmatpush1.bf16.msra.mxu0 0
    %3783 = vmatprep.subr.bf16.mxu0 0
    %3784 = vmatpush1.bf16.msra.mxu0 0
    %3785 = vmatprep.subr.bf16.mxu0 0
    %3786 = vmatpush1.bf16.msra.mxu0 0
    %3787 = vmatprep.mubr.bf16.mxu0 0
    %3788 = vmatmul.mubr.bf16.gmra.mrb[0].mxu0 %v3753
    %v3789 = vpop.f32.mrb[0].mxu0
    %v3790 = vadd.f32 0.0, %v3789
    %v3791 = vpop.f32.mrb[0].mxu0
    %v3792 = vpop.f32.mrb[0].mxu0
    %v3793 = vadd.f32 0.0, %v3792
    %v3794 = vpop.f32.mrb[0].mxu0
    %3795 = vdwg.mxu0
    %v3796 = vadd.f32 %v3656, %v3790
    %v3797 = vadd.f32 %v3657, %v3793
    %v3798 = vxor.u32 %v3796, 2147483648
    %v3799 = vxor.u32 %v3797, 2147483648
    %v3800 = vmul.f32 %v3798, 1.442695
    %v3801 = vpow.pop %v3800
    %v3802 = vmul.f32 %v3799, 1.442695
    %v3803 = vpow.pop %v3802
    %v3804 = vadd.f32 %v3801, 1.0
    %v3805 = vadd.f32 %v3803, 1.0
    %v3806 = vrcp.pop %v3804
    %v3807 = vmul.f32 1.0, %v3806
    %v3808 = vrcp.pop %v3805
    %v3809 = vmul.f32 1.0, %v3808
    %v3810 = vtanh.pop %v3796
    %v3811 = vtanh.pop %v3797
    %v3812 = vmul.f32 %v3807, %v3626
    %v3813 = vmul.f32 %v3809, %v3627
    %3816 = vrot.lane.b32.xlu0 %v3810, 32
    %v3817 = vpop.permute.xlu0 %3816
    %3818 = vrot.lane.b32.xlu0 %v3811, 32
    %v3819 = vpop.permute.xlu0 %3818
    %v3822 = vmul.f32 %v3807, %v3817
    %v3823 = vmul.f32 %v3809, %v3819
    %3826 = vrot.lane.b32.xlu0 %v3822, 32
    %v3827 = vpop.permute.xlu0 %3826
    %3828 = vrot.lane.b32.xlu0 %v3823, 32
    %v3829 = vpop.permute.xlu0 %3828
    %v3832 = vadd.f32 %v3812, %v3827
    %v3833 = vadd.f32 %v3813, %v3829
    %v3834 = vtanh.pop %v3832
    %v3835 = vtanh.pop %v3833
    %3838 = vrot.lane.b32.xlu0 %v3834, 32
    %v3839 = vpop.permute.xlu0 %3838
    %3840 = vrot.lane.b32.xlu0 %v3835, 32
    %v3841 = vpop.permute.xlu0 %3840
    %v3844 = vmul.f32 %v3807, %v3839
    %v3845 = vmul.f32 %v3809, %v3841
    %v3846 = vpack.c.bf16 %v3751, %v3750
    %3848 = vrot.lane.b32.xlu0 %v3846, 64
    %v3849 = vpop.permute.xlu0 %3848
    %s3851 = scalar_lea.vmem [#allocation7], 40
    %3852 = vst.msk [vmem:[%s3851] sm:$0xff] %vm514, %v3849
    %v3853 = vpack.c.bf16 %v3845, %v3844
    %3855 = vrot.lane.b32.xlu0 %v3853, 64
    %v3856 = vpop.permute.xlu0 %3855
    %s3858 = scalar_lea.vmem [#allocation8], 16
    %3859 = vst.msk [vmem:[%s3858] sm:$0xff] %vm514, %v3856
    %v3860 = vld [vmem:[%s732] sm:$0xff]
    %v3861 = vld [vmem:[%s732 + $0x10] sm:$0xff]
    %v3862 = vld [vmem:[%s727 + $0x8] sm:$0xff]
    %v3863 = vld [vmem:[%s727 + $0x18] sm:$0xff]
    %v3865 = vsel %vm514, %v3849, 0
    %3867 = vmatprep.subr.bf16.mxu0 0
    %3868 = vmatpush1.bf16.msra.mxu0 %v2619
    %3869 = vmatprep.subr.bf16.mxu0 0
    %3870 = vmatpush1.bf16.msra.mxu0 %v2620
    %3871 = vmatprep.subr.bf16.mxu0 0
    %3872 = vmatpush1.bf16.msra.mxu0 0
    %3873 = vmatprep.subr.bf16.mxu0 0
    %3874 = vmatpush1.bf16.msra.mxu0 0
    %3875 = vmatprep.subr.bf16.mxu0 0
    %3876 = vmatpush1.bf16.msra.mxu0 0
    %3877 = vmatprep.subr.bf16.mxu0 0
    %3878 = vmatpush1.bf16.msra.mxu0 0
    %3879 = vmatprep.subr.bf16.mxu0 0
    %3880 = vmatpush1.bf16.msra.mxu0 0
    %3881 = vmatprep.subr.bf16.mxu0 0
    %3882 = vmatpush1.bf16.msra.mxu0 0
    %3883 = vmatprep.subr.bf16.mxu0 0
    %3884 = vmatpush1.bf16.msra.mxu0 0
    %3885 = vmatprep.subr.bf16.mxu0 0
    %3886 = vmatpush1.bf16.msra.mxu0 0
    %3887 = vmatprep.subr.bf16.mxu0 0
    %3888 = vmatpush1.bf16.msra.mxu0 0
    %3889 = vmatprep.subr.bf16.mxu0 0
    %3890 = vmatpush1.bf16.msra.mxu0 0
    %3891 = vmatprep.subr.bf16.mxu0 0
    %3892 = vmatpush1.bf16.msra.mxu0 0
    %3893 = vmatprep.subr.bf16.mxu0 0
    %3894 = vmatpush1.bf16.msra.mxu0 0
    %3895 = vmatprep.subr.bf16.mxu0 0
    %3896 = vmatpush1.bf16.msra.mxu0 0
    %3897 = vmatprep.subr.bf16.mxu0 0
    %3898 = vmatpush1.bf16.msra.mxu0 0
    %3899 = vmatprep.mubr.bf16.mxu0 0
    %3900 = vmatmul.mubr.bf16.gmra.mrb[0].mxu0 %v3865
    %v3901 = vpop.f32.mrb[0].mxu0
    %v3902 = vadd.f32 0.0, %v3901
    %v3903 = vpop.f32.mrb[0].mxu0
    %v3904 = vpop.f32.mrb[0].mxu0
    %v3905 = vadd.f32 0.0, %v3904
    %v3906 = vpop.f32.mrb[0].mxu0
    %3907 = vdwg.mxu0
    %v3908 = vadd.f32 %v3860, %v3902
    %v3909 = vadd.f32 %v3861, %v3905
    %v3910 = vxor.u32 %v3908, 2147483648
    %v3911 = vxor.u32 %v3909, 2147483648
    %v3912 = vmul.f32 %v3910, 1.442695
    %v3913 = vpow.pop %v3912
    %v3914 = vmul.f32 %v3911, 1.442695
    %v3915 = vpow.pop %v3914
    %v3916 = vadd.f32 %v3913, 1.0
    %v3917 = vadd.f32 %v3915, 1.0
    %v3918 = vrcp.pop %v3916
    %v3919 = vmul.f32 1.0, %v3918
    %v3920 = vrcp.pop %v3917
    %v3921 = vmul.f32 1.0, %v3920
    %v3922 = vtanh.pop %v3908
    %v3923 = vtanh.pop %v3909
    %v3924 = vmul.f32 %v3919, %v3738
    %v3925 = vmul.f32 %v3921, %v3739
    %3928 = vrot.lane.b32.xlu0 %v3922, 32
    %v3929 = vpop.permute.xlu0 %3928
    %3930 = vrot.lane.b32.xlu0 %v3923, 32
    %v3931 = vpop.permute.xlu0 %3930
    %v3934 = vmul.f32 %v3919, %v3929
    %v3935 = vmul.f32 %v3921, %v3931
    %3938 = vrot.lane.b32.xlu0 %v3934, 32
    %v3939 = vpop.permute.xlu0 %3938
    %3940 = vrot.lane.b32.xlu0 %v3935, 32
    %v3941 = vpop.permute.xlu0 %3940
    %v3944 = vadd.f32 %v3924, %v3939
    %v3945 = vadd.f32 %v3925, %v3941
    %v3946 = vtanh.pop %v3944
    %v3947 = vtanh.pop %v3945
    %3950 = vrot.lane.b32.xlu0 %v3946, 32
    %v3951 = vpop.permute.xlu0 %3950
    %3952 = vrot.lane.b32.xlu0 %v3947, 32
    %v3953 = vpop.permute.xlu0 %3952
    %v3956 = vmul.f32 %v3919, %v3951
    %v3957 = vmul.f32 %v3921, %v3953
    %v3959 = vsel %vm514, %v3856, 0
    %3961 = vmatprep.subr.bf16.mxu0 0
    %3962 = vmatpush1.bf16.msra.mxu0 %v2722
    %3963 = vmatprep.subr.bf16.mxu0 0
    %3964 = vmatpush1.bf16.msra.mxu0 %v2723
    %3965 = vmatprep.subr.bf16.mxu0 0
    %3966 = vmatpush1.bf16.msra.mxu0 0
    %3967 = vmatprep.subr.bf16.mxu0 0
    %3968 = vmatpush1.bf16.msra.mxu0 0
    %3969 = vmatprep.subr.bf16.mxu0 0
    %3970 = vmatpush1.bf16.msra.mxu0 0
    %3971 = vmatprep.subr.bf16.mxu0 0
    %3972 = vmatpush1.bf16.msra.mxu0 0
    %3973 = vmatprep.subr.bf16.mxu0 0
    %3974 = vmatpush1.bf16.msra.mxu0 0
    %3975 = vmatprep.subr.bf16.mxu0 0
    %3976 = vmatpush1.bf16.msra.mxu0 0
    %3977 = vmatprep.subr.bf16.mxu0 0
    %3978 = vmatpush1.bf16.msra.mxu0 0
    %3979 = vmatprep.subr.bf16.mxu0 0
    %3980 = vmatpush1.bf16.msra.mxu0 0
    %3981 = vmatprep.subr.bf16.mxu0 0
    %3982 = vmatpush1.bf16.msra.mxu0 0
    %3983 = vmatprep.subr.bf16.mxu0 0
    %3984 = vmatpush1.bf16.msra.mxu0 0
    %3985 = vmatprep.subr.bf16.mxu0 0
    %3986 = vmatpush1.bf16.msra.mxu0 0
    %3987 = vmatprep.subr.bf16.mxu0 0
    %3988 = vmatpush1.bf16.msra.mxu0 0
    %3989 = vmatprep.subr.bf16.mxu0 0
    %3990 = vmatpush1.bf16.msra.mxu0 0
    %3991 = vmatprep.subr.bf16.mxu0 0
    %3992 = vmatpush1.bf16.msra.mxu0 0
    %3993 = vmatprep.mubr.bf16.mxu0 0
    %3994 = vmatmul.mubr.bf16.gmra.mrb[0].mxu0 %v3959
    %v3995 = vpop.f32.mrb[0].mxu0
    %v3996 = vadd.f32 0.0, %v3995
    %v3997 = vpop.f32.mrb[0].mxu0
    %v3998 = vpop.f32.mrb[0].mxu0
    %v3999 = vadd.f32 0.0, %v3998
    %v4000 = vpop.f32.mrb[0].mxu0
    %4001 = vdwg.mxu0
    %v4002 = vadd.f32 %v3862, %v3996
    %v4003 = vadd.f32 %v3863, %v3999
    %v4004 = vxor.u32 %v4002, 2147483648
    %v4005 = vxor.u32 %v4003, 2147483648
    %v4006 = vmul.f32 %v4004, 1.442695
    %v4007 = vpow.pop %v4006
    %v4008 = vmul.f32 %v4005, 1.442695
    %v4009 = vpow.pop %v4008
    %v4010 = vadd.f32 %v4007, 1.0
    %v4011 = vadd.f32 %v4009, 1.0
    %v4012 = vrcp.pop %v4010
    %v4013 = vmul.f32 1.0, %v4012
    %v4014 = vrcp.pop %v4011
    %v4015 = vmul.f32 1.0, %v4014
    %v4016 = vtanh.pop %v4002
    %v4017 = vtanh.pop %v4003
    %v4018 = vmul.f32 %v4013, %v3832
    %v4019 = vmul.f32 %v4015, %v3833
    %4022 = vrot.lane.b32.xlu0 %v4016, 32
    %v4023 = vpop.permute.xlu0 %4022
    %4024 = vrot.lane.b32.xlu0 %v4017, 32
    %v4025 = vpop.permute.xlu0 %4024
    %v4028 = vmul.f32 %v4013, %v4023
    %v4029 = vmul.f32 %v4015, %v4025
    %4032 = vrot.lane.b32.xlu0 %v4028, 32
    %v4033 = vpop.permute.xlu0 %4032
    %4034 = vrot.lane.b32.xlu0 %v4029, 32
    %v4035 = vpop.permute.xlu0 %4034
    %v4038 = vadd.f32 %v4018, %v4033
    %v4039 = vadd.f32 %v4019, %v4035
    %v4040 = vtanh.pop %v4038
    %v4041 = vtanh.pop %v4039
    %4044 = vrot.lane.b32.xlu0 %v4040, 32
    %v4045 = vpop.permute.xlu0 %4044
    %4046 = vrot.lane.b32.xlu0 %v4041, 32
    %v4047 = vpop.permute.xlu0 %4046
    %v4050 = vmul.f32 %v4013, %v4045
    %v4051 = vmul.f32 %v4015, %v4047
    %v4052 = vpack.c.bf16 %v3957, %v3956
    %4054 = vrot.lane.b32.xlu0 %v4052, 64
    %v4055 = vpop.permute.xlu0 %4054
    %s4057 = scalar_lea.vmem [#allocation7], 48
    %4058 = vst.msk [vmem:[%s4057] sm:$0xff] %vm514, %v4055
    %v4059 = vpack.c.bf16 %v4051, %v4050
    %4061 = vrot.lane.b32.xlu0 %v4059, 64
    %v4062 = vpop.permute.xlu0 %4061
    %s4064 = scalar_lea.vmem [#allocation8], 8
    %4065 = vst.msk [vmem:[%s4064] sm:$0xff] %vm514, %v4062
    %v4066 = vld [vmem:[%s499] sm:$0xff]
    %v4067 = vld [vmem:[%s499 + $0x10] sm:$0xff]
    %v4068 = vld [vmem:[%s494 + $0x8] sm:$0xff]
    %v4069 = vld [vmem:[%s494 + $0x18] sm:$0xff]
    %v4071 = vsel %vm514, %v4055, 0
    %4073 = vmatprep.subr.bf16.mxu0 0
    %4074 = vmatpush1.bf16.msra.mxu0 %v2619
    %4075 = vmatprep.subr.bf16.mxu0 0
    %4076 = vmatpush1.bf16.msra.mxu0 %v2620
    %4077 = vmatprep.subr.bf16.mxu0 0
    %4078 = vmatpush1.bf16.msra.mxu0 0
    %4079 = vmatprep.subr.bf16.mxu0 0
    %4080 = vmatpush1.bf16.msra.mxu0 0
    %4081 = vmatprep.subr.bf16.mxu0 0
    %4082 = vmatpush1.bf16.msra.mxu0 0
    %4083 = vmatprep.subr.bf16.mxu0 0
    %4084 = vmatpush1.bf16.msra.mxu0 0
    %4085 = vmatprep.subr.bf16.mxu0 0
    %4086 = vmatpush1.bf16.msra.mxu0 0
    %4087 = vmatprep.subr.bf16.mxu0 0
    %4088 = vmatpush1.bf16.msra.mxu0 0
    %4089 = vmatprep.subr.bf16.mxu0 0
    %4090 = vmatpush1.bf16.msra.mxu0 0
    %4091 = vmatprep.subr.bf16.mxu0 0
    %4092 = vmatpush1.bf16.msra.mxu0 0
    %4093 = vmatprep.subr.bf16.mxu0 0
    %4094 = vmatpush1.bf16.msra.mxu0 0
    %4095 = vmatprep.subr.bf16.mxu0 0
    %4096 = vmatpush1.bf16.msra.mxu0 0
    %4097 = vmatprep.subr.bf16.mxu0 0
    %4098 = vmatpush1.bf16.msra.mxu0 0
    %4099 = vmatprep.subr.bf16.mxu0 0
    %4100 = vmatpush1.bf16.msra.mxu0 0
    %4101 = vmatprep.subr.bf16.mxu0 0
    %4102 = vmatpush1.bf16.msra.mxu0 0
    %4103 = vmatprep.subr.bf16.mxu0 0
    %4104 = vmatpush1.bf16.msra.mxu0 0
    %4105 = vmatprep.mubr.bf16.mxu0 0
    %4106 = vmatmul.mubr.bf16.gmra.mrb[0].mxu0 %v4071
    %v4107 = vpop.f32.mrb[0].mxu0
    %v4108 = vadd.f32 0.0, %v4107
    %v4109 = vpop.f32.mrb[0].mxu0
    %v4110 = vpop.f32.mrb[0].mxu0
    %v4111 = vadd.f32 0.0, %v4110
    %v4112 = vpop.f32.mrb[0].mxu0
    %4113 = vdwg.mxu0
    %v4114 = vadd.f32 %v4066, %v4108
    %v4115 = vadd.f32 %v4067, %v4111
    %v4116 = vxor.u32 %v4114, 2147483648
    %v4117 = vxor.u32 %v4115, 2147483648
    %v4118 = vmul.f32 %v4116, 1.442695
    %v4119 = vpow.pop %v4118
    %v4120 = vmul.f32 %v4117, 1.442695
    %v4121 = vpow.pop %v4120
    %v4122 = vadd.f32 %v4119, 1.0
    %v4123 = vadd.f32 %v4121, 1.0
    %v4124 = vrcp.pop %v4122
    %v4125 = vmul.f32 1.0, %v4124
    %v4126 = vrcp.pop %v4123
    %v4127 = vmul.f32 1.0, %v4126
    %v4128 = vtanh.pop %v4114
    %v4129 = vtanh.pop %v4115
    %v4130 = vmul.f32 %v4125, %v3944
    %v4131 = vmul.f32 %v4127, %v3945
    %4134 = vrot.lane.b32.xlu0 %v4128, 32
    %v4135 = vpop.permute.xlu0 %4134
    %4136 = vrot.lane.b32.xlu0 %v4129, 32
    %v4137 = vpop.permute.xlu0 %4136
    %v4140 = vmul.f32 %v4125, %v4135
    %v4141 = vmul.f32 %v4127, %v4137
    %4144 = vrot.lane.b32.xlu0 %v4140, 32
    %v4145 = vpop.permute.xlu0 %4144
    %4146 = vrot.lane.b32.xlu0 %v4141, 32
    %v4147 = vpop.permute.xlu0 %4146
    %v4150 = vadd.f32 %v4130, %v4145
    %v4151 = vadd.f32 %v4131, %v4147
    %v4152 = vtanh.pop %v4150
    %v4153 = vtanh.pop %v4151
    %4156 = vrot.lane.b32.xlu0 %v4152, 32
    %v4157 = vpop.permute.xlu0 %4156
    %4158 = vrot.lane.b32.xlu0 %v4153, 32
    %v4159 = vpop.permute.xlu0 %4158
    %v4162 = vmul.f32 %v4125, %v4157
    %v4163 = vmul.f32 %v4127, %v4159
    %v4165 = vsel %vm514, %v4062, 0
    %4167 = vmatprep.subr.bf16.mxu0 0
    %4168 = vmatpush1.bf16.msra.mxu0 %v2722
    %4169 = vmatprep.subr.bf16.mxu0 0
    %4170 = vmatpush1.bf16.msra.mxu0 %v2723
    %4171 = vmatprep.subr.bf16.mxu0 0
    %4172 = vmatpush1.bf16.msra.mxu0 0
    %4173 = vmatprep.subr.bf16.mxu0 0
    %4174 = vmatpush1.bf16.msra.mxu0 0
    %4175 = vmatprep.subr.bf16.mxu0 0
    %4176 = vmatpush1.bf16.msra.mxu0 0
    %4177 = vmatprep.subr.bf16.mxu0 0
    %4178 = vmatpush1.bf16.msra.mxu0 0
    %4179 = vmatprep.subr.bf16.mxu0 0
    %4180 = vmatpush1.bf16.msra.mxu0 0
    %4181 = vmatprep.subr.bf16.mxu0 0
    %4182 = vmatpush1.bf16.msra.mxu0 0
    %4183 = vmatprep.subr.bf16.mxu0 0
    %4184 = vmatpush1.bf16.msra.mxu0 0
    %4185 = vmatprep.subr.bf16.mxu0 0
    %4186 = vmatpush1.bf16.msra.mxu0 0
    %4187 = vmatprep.subr.bf16.mxu0 0
    %4188 = vmatpush1.bf16.msra.mxu0 0
    %4189 = vmatprep.subr.bf16.mxu0 0
    %4190 = vmatpush1.bf16.msra.mxu0 0
    %4191 = vmatprep.subr.bf16.mxu0 0
    %4192 = vmatpush1.bf16.msra.mxu0 0
    %4193 = vmatprep.subr.bf16.mxu0 0
    %4194 = vmatpush1.bf16.msra.mxu0 0
    %4195 = vmatprep.subr.bf16.mxu0 0
    %4196 = vmatpush1.bf16.msra.mxu0 0
    %4197 = vmatprep.subr.bf16.mxu0 0
    %4198 = vmatpush1.bf16.msra.mxu0 0
    %4199 = vmatprep.mubr.bf16.mxu0 0
    %4200 = vmatmul.mubr.bf16.gmra.mrb[0].mxu0 %v4165
    %v4201 = vpop.f32.mrb[0].mxu0
    %v4202 = vadd.f32 0.0, %v4201
    %v4203 = vpop.f32.mrb[0].mxu0
    %v4204 = vpop.f32.mrb[0].mxu0
    %v4205 = vadd.f32 0.0, %v4204
    %v4206 = vpop.f32.mrb[0].mxu0
    %4207 = vdwg.mxu0
    %v4208 = vadd.f32 %v4068, %v4202
    %v4209 = vadd.f32 %v4069, %v4205
    %v4210 = vxor.u32 %v4208, 2147483648
    %v4211 = vxor.u32 %v4209, 2147483648
    %v4212 = vmul.f32 %v4210, 1.442695
    %v4213 = vpow.pop %v4212
    %v4214 = vmul.f32 %v4211, 1.442695
    %v4215 = vpow.pop %v4214
    %v4216 = vadd.f32 %v4213, 1.0
    %v4217 = vadd.f32 %v4215, 1.0
    %v4218 = vrcp.pop %v4216
    %v4219 = vmul.f32 1.0, %v4218
    %v4220 = vrcp.pop %v4217
    %v4221 = vmul.f32 1.0, %v4220
    %v4222 = vtanh.pop %v4208
    %v4223 = vtanh.pop %v4209
    %v4224 = vmul.f32 %v4219, %v4038
    %v4225 = vmul.f32 %v4221, %v4039
    %4228 = vrot.lane.b32.xlu0 %v4222, 32
    %v4229 = vpop.permute.xlu0 %4228
    %4230 = vrot.lane.b32.xlu0 %v4223, 32
    %v4231 = vpop.permute.xlu0 %4230
    %v4234 = vmul.f32 %v4219, %v4229
    %v4235 = vmul.f32 %v4221, %v4231
    %4238 = vrot.lane.b32.xlu0 %v4234, 32
    %v4239 = vpop.permute.xlu0 %4238
    %4240 = vrot.lane.b32.xlu0 %v4235, 32
    %v4241 = vpop.permute.xlu0 %4240
    %v4244 = vadd.f32 %v4224, %v4239
    %v4245 = vadd.f32 %v4225, %v4241
    %v4246 = vtanh.pop %v4244
    %v4247 = vtanh.pop %v4245
    %4250 = vrot.lane.b32.xlu0 %v4246, 32
    %v4251 = vpop.permute.xlu0 %4250
    %4252 = vrot.lane.b32.xlu0 %v4247, 32
    %v4253 = vpop.permute.xlu0 %4252
    %v4256 = vmul.f32 %v4219, %v4251
    %v4257 = vmul.f32 %v4221, %v4253
    %v4258 = vpack.c.bf16 %v4163, %v4162
    %4260 = vrot.lane.b32.xlu0 %v4258, 64
    %v4261 = vpop.permute.xlu0 %4260
    %s4263 = scalar_lea.vmem [#allocation7], 56
    %4264 = vst.msk [vmem:[%s4263] sm:$0xff] %vm514, %v4261
    %v4265 = vpack.c.bf16 %v4257, %v4256
    %4267 = vrot.lane.b32.xlu0 %v4265, 64
    %v4268 = vpop.permute.xlu0 %4267
    %4270 = vst.msk [vmem:[#allocation8] sm:$0xff] %vm514, %v4268
    %v4271 = vld [vmem:[#allocation11 + $0xe0] sm:$0xf]
    %v4272 = vld [vmem:[#allocation11 + $0xe8] sm:$0xf]
    %v4273 = vld [vmem:[#allocation11 + $0xf0] sm:$0xf]
    %v4274 = vld [vmem:[#allocation11 + $0xf8] sm:$0xf]
    %v4275 = vld [vmem:[#allocation3] sm:$0xff]
    %v4276 = vld [vmem:[#allocation3 + $0x8] sm:$0xff]
    %v4281 = vunpack.c.l.b16 %v4271
    %v4282 = vunpack.c.l.b16 %v4272
    %v4283 = vunpack.c.l.b16 %v4273
    %v4284 = vunpack.c.l.b16 %v4274
    %v4285 = vpack.c.b16 %v4282, %v4281
    %v4286 = vpack.c.b16 %v4284, %v4283
    %v4290 = vsel %vm514, %v2174, 0
    %4292 = vmatprep.subr.bf16.mxu0 0
    %4293 = vmatpush1.bf16.msra.mxu0 %v4285
    %4294 = vmatprep.subr.bf16.mxu0 0
    %4295 = vmatpush1.bf16.msra.mxu0 %v4286
    %4296 = vmatprep.subr.bf16.mxu0 0
    %4297 = vmatpush1.bf16.msra.mxu0 0
    %4298 = vmatprep.subr.bf16.mxu0 0
    %4299 = vmatpush1.bf16.msra.mxu0 0
    %4300 = vmatprep.subr.bf16.mxu0 0
    %4301 = vmatpush1.bf16.msra.mxu0 0
    %4302 = vmatprep.subr.bf16.mxu0 0
    %4303 = vmatpush1.bf16.msra.mxu0 0
    %4304 = vmatprep.subr.bf16.mxu0 0
    %4305 = vmatpush1.bf16.msra.mxu0 0
    %4306 = vmatprep.subr.bf16.mxu0 0
    %4307 = vmatpush1.bf16.msra.mxu0 0
    %4308 = vmatprep.subr.bf16.mxu0 0
    %4309 = vmatpush1.bf16.msra.mxu0 0
    %4310 = vmatprep.subr.bf16.mxu0 0
    %4311 = vmatpush1.bf16.msra.mxu0 0
    %4312 = vmatprep.subr.bf16.mxu0 0
    %4313 = vmatpush1.bf16.msra.mxu0 0
    %4314 = vmatprep.subr.bf16.mxu0 0
    %4315 = vmatpush1.bf16.msra.mxu0 0
    %4316 = vmatprep.subr.bf16.mxu0 0
    %4317 = vmatpush1.bf16.msra.mxu0 0
    %4318 = vmatprep.subr.bf16.mxu0 0
    %4319 = vmatpush1.bf16.msra.mxu0 0
    %4320 = vmatprep.subr.bf16.mxu0 0
    %4321 = vmatpush1.bf16.msra.mxu0 0
    %4322 = vmatprep.subr.bf16.mxu0 0
    %4323 = vmatpush1.bf16.msra.mxu0 0
    %4324 = vmatprep.mubr.bf16.mxu0 0
    %4325 = vmatmul.mubr.bf16.gmra.mrb[0].mxu0 %v4290
    %v4326 = vpop.f32.mrb[0].mxu0
    %v4327 = vadd.f32 0.0, %v4326
    %v4328 = vpop.f32.mrb[0].mxu0
    %v4329 = vpop.f32.mrb[0].mxu0
    %v4330 = vadd.f32 0.0, %v4329
    %v4331 = vpop.f32.mrb[0].mxu0
    %4332 = vdwg.mxu0
    %v4333 = vadd.f32 %v4275, %v4327
    %v4334 = vadd.f32 %v4276, %v4330
    %v4335 = vxor.u32 %v4333, 2147483648
    %v4336 = vxor.u32 %v4334, 2147483648
    %v4337 = vmul.f32 %v4335, 1.442695
    %v4338 = vpow.pop %v4337
    %v4339 = vmul.f32 %v4336, 1.442695
    %v4340 = vpow.pop %v4339
    %v4341 = vadd.f32 %v4338, 1.0
    %v4342 = vadd.f32 %v4340, 1.0
    %v4343 = vrcp.pop %v4341
    %v4344 = vmul.f32 1.0, %v4343
    %v4345 = vrcp.pop %v4342
    %v4346 = vmul.f32 1.0, %v4345
    %v4347 = vtanh.pop %v4333
    %v4348 = vtanh.pop %v4334
    %v4349 = vmul.f32 %v4344, %v2063
    %v4350 = vmul.f32 %v4346, %v2064
    %4353 = vrot.lane.b32.xlu0 %v4347, 32
    %v4354 = vpop.permute.xlu0 %4353
    %4355 = vrot.lane.b32.xlu0 %v4348, 32
    %v4356 = vpop.permute.xlu0 %4355
    %v4359 = vmul.f32 %v4344, %v4354
    %v4360 = vmul.f32 %v4346, %v4356
    %4363 = vrot.lane.b32.xlu0 %v4359, 32
    %v4364 = vpop.permute.xlu0 %4363
    %4365 = vrot.lane.b32.xlu0 %v4360, 32
    %v4366 = vpop.permute.xlu0 %4365
    %v4369 = vadd.f32 %v4349, %v4364
    %v4370 = vadd.f32 %v4350, %v4366
    %v4371 = vtanh.pop %v4369
    %v4372 = vtanh.pop %v4370
    %4375 = vrot.lane.b32.xlu0 %v4371, 32
    %v4376 = vpop.permute.xlu0 %4375
    %4377 = vrot.lane.b32.xlu0 %v4372, 32
    %v4378 = vpop.permute.xlu0 %4377
    %v4381 = vmul.f32 %v4344, %v4376
    %v4382 = vmul.f32 %v4346, %v4378
    %v4383 = vpack.c.bf16 %v4382, %v4381
    %4385 = vrot.lane.b32.xlu0 %v4383, 64
    %v4386 = vpop.permute.xlu0 %4385
    %4388 = vst.msk [vmem:[#allocation9] sm:$0xff] %vm514, %v4386
    %s4389 = scalar_lea.vmem [#allocation3], 16
    %v4390 = vld [vmem:[%s4389] sm:$0xff]
    %v4391 = vld [vmem:[%s4389 + $0x8] sm:$0xff]
    %v4393 = vsel %vm514, %v4386, 0
    %4395 = vmatprep.subr.bf16.mxu0 0
    %4396 = vmatpush1.bf16.msra.mxu0 %v4285
    %4397 = vmatprep.subr.bf16.mxu0 0
    %4398 = vmatpush1.bf16.msra.mxu0 %v4286
    %4399 = vmatprep.subr.bf16.mxu0 0
    %4400 = vmatpush1.bf16.msra.mxu0 0
    %4401 = vmatprep.subr.bf16.mxu0 0
    %4402 = vmatpush1.bf16.msra.mxu0 0
    %4403 = vmatprep.subr.bf16.mxu0 0
    %4404 = vmatpush1.bf16.msra.mxu0 0
    %4405 = vmatprep.subr.bf16.mxu0 0
    %4406 = vmatpush1.bf16.msra.mxu0 0
    %4407 = vmatprep.subr.bf16.mxu0 0
    %4408 = vmatpush1.bf16.msra.mxu0 0
    %4409 = vmatprep.subr.bf16.mxu0 0
    %4410 = vmatpush1.bf16.msra.mxu0 0
    %4411 = vmatprep.subr.bf16.mxu0 0
    %4412 = vmatpush1.bf16.msra.mxu0 0
    %4413 = vmatprep.subr.bf16.mxu0 0
    %4414 = vmatpush1.bf16.msra.mxu0 0
    %4415 = vmatprep.subr.bf16.mxu0 0
    %4416 = vmatpush1.bf16.msra.mxu0 0
    %4417 = vmatprep.subr.bf16.mxu0 0
    %4418 = vmatpush1.bf16.msra.mxu0 0
    %4419 = vmatprep.subr.bf16.mxu0 0
    %4420 = vmatpush1.bf16.msra.mxu0 0
    %4421 = vmatprep.subr.bf16.mxu0 0
    %4422 = vmatpush1.bf16.msra.mxu0 0
    %4423 = vmatprep.subr.bf16.mxu0 0
    %4424 = vmatpush1.bf16.msra.mxu0 0
    %4425 = vmatprep.subr.bf16.mxu0 0
    %4426 = vmatpush1.bf16.msra.mxu0 0
    %4427 = vmatprep.mubr.bf16.mxu0 0
    %4428 = vmatmul.mubr.bf16.gmra.mrb[0].mxu0 %v4393
    %v4429 = vpop.f32.mrb[0].mxu0
    %v4430 = vadd.f32 0.0, %v4429
    %v4431 = vpop.f32.mrb[0].mxu0
    %v4432 = vpop.f32.mrb[0].mxu0
    %v4433 = vadd.f32 0.0, %v4432
    %v4434 = vpop.f32.mrb[0].mxu0
    %4435 = vdwg.mxu0
    %v4436 = vadd.f32 %v4390, %v4430
    %v4437 = vadd.f32 %v4391, %v4433
    %v4438 = vxor.u32 %v4436, 2147483648
    %v4439 = vxor.u32 %v4437, 2147483648
    %v4440 = vmul.f32 %v4438, 1.442695
    %v4441 = vpow.pop %v4440
    %v4442 = vmul.f32 %v4439, 1.442695
    %v4443 = vpow.pop %v4442
    %v4444 = vadd.f32 %v4441, 1.0
    %v4445 = vadd.f32 %v4443, 1.0
    %v4446 = vrcp.pop %v4444
    %v4447 = vmul.f32 1.0, %v4446
    %v4448 = vrcp.pop %v4445
    %v4449 = vmul.f32 1.0, %v4448
    %v4450 = vtanh.pop %v4436
    %v4451 = vtanh.pop %v4437
    %v4452 = vmul.f32 %v4447, %v4369
    %v4453 = vmul.f32 %v4449, %v4370
    %4456 = vrot.lane.b32.xlu0 %v4450, 32
    %v4457 = vpop.permute.xlu0 %4456
    %4458 = vrot.lane.b32.xlu0 %v4451, 32
    %v4459 = vpop.permute.xlu0 %4458
    %v4462 = vmul.f32 %v4447, %v4457
    %v4463 = vmul.f32 %v4449, %v4459
    %4466 = vrot.lane.b32.xlu0 %v4462, 32
    %v4467 = vpop.permute.xlu0 %4466
    %4468 = vrot.lane.b32.xlu0 %v4463, 32
    %v4469 = vpop.permute.xlu0 %4468
    %v4472 = vadd.f32 %v4452, %v4467
    %v4473 = vadd.f32 %v4453, %v4469
    %v4474 = vtanh.pop %v4472
    %v4475 = vtanh.pop %v4473
    %4478 = vrot.lane.b32.xlu0 %v4474, 32
    %v4479 = vpop.permute.xlu0 %4478
    %4480 = vrot.lane.b32.xlu0 %v4475, 32
    %v4481 = vpop.permute.xlu0 %4480
    %v4484 = vmul.f32 %v4447, %v4479
    %v4485 = vmul.f32 %v4449, %v4481
    %v4486 = vpack.c.bf16 %v4485, %v4484
    %4488 = vrot.lane.b32.xlu0 %v4486, 64
    %v4489 = vpop.permute.xlu0 %4488
    %s4491 = scalar_lea.vmem [#allocation9], 8
    %4492 = vst.msk [vmem:[%s4491] sm:$0xff] %vm514, %v4489
    %s4493 = scalar_lea.vmem [#allocation3], 32
    %v4494 = vld [vmem:[%s4493] sm:$0xff]
    %v4495 = vld [vmem:[%s4493 + $0x8] sm:$0xff]
    %v4497 = vsel %vm514, %v4489, 0
    %4499 = vmatprep.subr.bf16.mxu0 0
    %4500 = vmatpush1.bf16.msra.mxu0 %v4285
    %4501 = vmatprep.subr.bf16.mxu0 0
    %4502 = vmatpush1.bf16.msra.mxu0 %v4286
    %4503 = vmatprep.subr.bf16.mxu0 0
    %4504 = vmatpush1.bf16.msra.mxu0 0
    %4505 = vmatprep.subr.bf16.mxu0 0
    %4506 = vmatpush1.bf16.msra.mxu0 0
    %4507 = vmatprep.subr.bf16.mxu0 0
    %4508 = vmatpush1.bf16.msra.mxu0 0
    %4509 = vmatprep.subr.bf16.mxu0 0
    %4510 = vmatpush1.bf16.msra.mxu0 0
    %4511 = vmatprep.subr.bf16.mxu0 0
    %4512 = vmatpush1.bf16.msra.mxu0 0
    %4513 = vmatprep.subr.bf16.mxu0 0
    %4514 = vmatpush1.bf16.msra.mxu0 0
    %4515 = vmatprep.subr.bf16.mxu0 0
    %4516 = vmatpush1.bf16.msra.mxu0 0
    %4517 = vmatprep.subr.bf16.mxu0 0
    %4518 = vmatpush1.bf16.msra.mxu0 0
    %4519 = vmatprep.subr.bf16.mxu0 0
    %4520 = vmatpush1.bf16.msra.mxu0 0
    %4521 = vmatprep.subr.bf16.mxu0 0
    %4522 = vmatpush1.bf16.msra.mxu0 0
    %4523 = vmatprep.subr.bf16.mxu0 0
    %4524 = vmatpush1.bf16.msra.mxu0 0
    %4525 = vmatprep.subr.bf16.mxu0 0
    %4526 = vmatpush1.bf16.msra.mxu0 0
    %4527 = vmatprep.subr.bf16.mxu0 0
    %4528 = vmatpush1.bf16.msra.mxu0 0
    %4529 = vmatprep.subr.bf16.mxu0 0
    %4530 = vmatpush1.bf16.msra.mxu0 0
    %4531 = vmatprep.mubr.bf16.mxu0 0
    %4532 = vmatmul.mubr.bf16.gmra.mrb[0].mxu0 %v4497
    %v4533 = vpop.f32.mrb[0].mxu0
    %v4534 = vadd.f32 0.0, %v4533
    %v4535 = vpop.f32.mrb[0].mxu0
    %v4536 = vpop.f32.mrb[0].mxu0
    %v4537 = vadd.f32 0.0, %v4536
    %v4538 = vpop.f32.mrb[0].mxu0
    %4539 = vdwg.mxu0
    %v4540 = vadd.f32 %v4494, %v4534
    %v4541 = vadd.f32 %v4495, %v4537
    %v4542 = vxor.u32 %v4540, 2147483648
    %v4543 = vxor.u32 %v4541, 2147483648
    %v4544 = vmul.f32 %v4542, 1.442695
    %v4545 = vpow.pop %v4544
    %v4546 = vmul.f32 %v4543, 1.442695
    %v4547 = vpow.pop %v4546
    %v4548 = vadd.f32 %v4545, 1.0
    %v4549 = vadd.f32 %v4547, 1.0
    %v4550 = vrcp.pop %v4548
    %v4551 = vmul.f32 1.0, %v4550
    %v4552 = vrcp.pop %v4549
    %v4553 = vmul.f32 1.0, %v4552
    %v4554 = vtanh.pop %v4540
    %v4555 = vtanh.pop %v4541
    %v4556 = vmul.f32 %v4551, %v4472
    %v4557 = vmul.f32 %v4553, %v4473
    %4560 = vrot.lane.b32.xlu0 %v4554, 32
    %v4561 = vpop.permute.xlu0 %4560
    %4562 = vrot.lane.b32.xlu0 %v4555, 32
    %v4563 = vpop.permute.xlu0 %4562
    %v4566 = vmul.f32 %v4551, %v4561
    %v4567 = vmul.f32 %v4553, %v4563
    %4570 = vrot.lane.b32.xlu0 %v4566, 32
    %v4571 = vpop.permute.xlu0 %4570
    %4572 = vrot.lane.b32.xlu0 %v4567, 32
    %v4573 = vpop.permute.xlu0 %4572
    %v4576 = vadd.f32 %v4556, %v4571
    %v4577 = vadd.f32 %v4557, %v4573
    %v4578 = vtanh.pop %v4576
    %v4579 = vtanh.pop %v4577
    %4582 = vrot.lane.b32.xlu0 %v4578, 32
    %v4583 = vpop.permute.xlu0 %4582
    %4584 = vrot.lane.b32.xlu0 %v4579, 32
    %v4585 = vpop.permute.xlu0 %4584
    %v4588 = vmul.f32 %v4551, %v4583
    %v4589 = vmul.f32 %v4553, %v4585
    %v4590 = vpack.c.bf16 %v4589, %v4588
    %4592 = vrot.lane.b32.xlu0 %v4590, 64
    %v4593 = vpop.permute.xlu0 %4592
    %s4595 = scalar_lea.vmem [#allocation9], 16
    %4596 = vst.msk [vmem:[%s4595] sm:$0xff] %vm514, %v4593
    %s4597 = scalar_lea.vmem [#allocation3], 48
    %v4598 = vld [vmem:[%s4597] sm:$0xff]
    %v4599 = vld [vmem:[%s4597 + $0x8] sm:$0xff]
    %v4601 = vsel %vm514, %v4593, 0
    %4603 = vmatprep.subr.bf16.mxu0 0
    %4604 = vmatpush1.bf16.msra.mxu0 %v4285
    %4605 = vmatprep.subr.bf16.mxu0 0
    %4606 = vmatpush1.bf16.msra.mxu0 %v4286
    %4607 = vmatprep.subr.bf16.mxu0 0
    %4608 = vmatpush1.bf16.msra.mxu0 0
    %4609 = vmatprep.subr.bf16.mxu0 0
    %4610 = vmatpush1.bf16.msra.mxu0 0
    %4611 = vmatprep.subr.bf16.mxu0 0
    %4612 = vmatpush1.bf16.msra.mxu0 0
    %4613 = vmatprep.subr.bf16.mxu0 0
    %4614 = vmatpush1.bf16.msra.mxu0 0
    %4615 = vmatprep.subr.bf16.mxu0 0
    %4616 = vmatpush1.bf16.msra.mxu0 0
    %4617 = vmatprep.subr.bf16.mxu0 0
    %4618 = vmatpush1.bf16.msra.mxu0 0
    %4619 = vmatprep.subr.bf16.mxu0 0
    %4620 = vmatpush1.bf16.msra.mxu0 0
    %4621 = vmatprep.subr.bf16.mxu0 0
    %4622 = vmatpush1.bf16.msra.mxu0 0
    %4623 = vmatprep.subr.bf16.mxu0 0
    %4624 = vmatpush1.bf16.msra.mxu0 0
    %4625 = vmatprep.subr.bf16.mxu0 0
    %4626 = vmatpush1.bf16.msra.mxu0 0
    %4627 = vmatprep.subr.bf16.mxu0 0
    %4628 = vmatpush1.bf16.msra.mxu0 0
    %4629 = vmatprep.subr.bf16.mxu0 0
    %4630 = vmatpush1.bf16.msra.mxu0 0
    %4631 = vmatprep.subr.bf16.mxu0 0
    %4632 = vmatpush1.bf16.msra.mxu0 0
    %4633 = vmatprep.subr.bf16.mxu0 0
    %4634 = vmatpush1.bf16.msra.mxu0 0
    %4635 = vmatprep.mubr.bf16.mxu0 0
    %4636 = vmatmul.mubr.bf16.gmra.mrb[0].mxu0 %v4601
    %v4637 = vpop.f32.mrb[0].mxu0
    %v4638 = vadd.f32 0.0, %v4637
    %v4639 = vpop.f32.mrb[0].mxu0
    %v4640 = vpop.f32.mrb[0].mxu0
    %v4641 = vadd.f32 0.0, %v4640
    %v4642 = vpop.f32.mrb[0].mxu0
    %4643 = vdwg.mxu0
    %v4644 = vadd.f32 %v4598, %v4638
    %v4645 = vadd.f32 %v4599, %v4641
    %v4646 = vxor.u32 %v4644, 2147483648
    %v4647 = vxor.u32 %v4645, 2147483648
    %v4648 = vmul.f32 %v4646, 1.442695
    %v4649 = vpow.pop %v4648
    %v4650 = vmul.f32 %v4647, 1.442695
    %v4651 = vpow.pop %v4650
    %v4652 = vadd.f32 %v4649, 1.0
    %v4653 = vadd.f32 %v4651, 1.0
    %v4654 = vrcp.pop %v4652
    %v4655 = vmul.f32 1.0, %v4654
    %v4656 = vrcp.pop %v4653
    %v4657 = vmul.f32 1.0, %v4656
    %v4658 = vtanh.pop %v4644
    %v4659 = vtanh.pop %v4645
    %v4660 = vmul.f32 %v4655, %v4576
    %v4661 = vmul.f32 %v4657, %v4577
    %4664 = vrot.lane.b32.xlu0 %v4658, 32
    %v4665 = vpop.permute.xlu0 %4664
    %4666 = vrot.lane.b32.xlu0 %v4659, 32
    %v4667 = vpop.permute.xlu0 %4666
    %v4670 = vmul.f32 %v4655, %v4665
    %v4671 = vmul.f32 %v4657, %v4667
    %4674 = vrot.lane.b32.xlu0 %v4670, 32
    %v4675 = vpop.permute.xlu0 %4674
    %4676 = vrot.lane.b32.xlu0 %v4671, 32
    %v4677 = vpop.permute.xlu0 %4676
    %v4680 = vadd.f32 %v4660, %v4675
    %v4681 = vadd.f32 %v4661, %v4677
    %v4682 = vtanh.pop %v4680
    %v4683 = vtanh.pop %v4681
    %4686 = vrot.lane.b32.xlu0 %v4682, 32
    %v4687 = vpop.permute.xlu0 %4686
    %4688 = vrot.lane.b32.xlu0 %v4683, 32
    %v4689 = vpop.permute.xlu0 %4688
    %v4692 = vmul.f32 %v4655, %v4687
    %v4693 = vmul.f32 %v4657, %v4689
    %v4694 = vpack.c.bf16 %v4693, %v4692
    %4696 = vrot.lane.b32.xlu0 %v4694, 64
    %v4697 = vpop.permute.xlu0 %4696
    %s4699 = scalar_lea.vmem [#allocation9], 24
    %4700 = vst.msk [vmem:[%s4699] sm:$0xff] %vm514, %v4697
    %s4701 = scalar_lea.vmem [#allocation3], 64
    %v4702 = vld [vmem:[%s4701] sm:$0xff]
    %v4703 = vld [vmem:[%s4701 + $0x8] sm:$0xff]
    %v4705 = vsel %vm514, %v4697, 0
    %4707 = vmatprep.subr.bf16.mxu0 0
    %4708 = vmatpush1.bf16.msra.mxu0 %v4285
    %4709 = vmatprep.subr.bf16.mxu0 0
    %4710 = vmatpush1.bf16.msra.mxu0 %v4286
    %4711 = vmatprep.subr.bf16.mxu0 0
    %4712 = vmatpush1.bf16.msra.mxu0 0
    %4713 = vmatprep.subr.bf16.mxu0 0
    %4714 = vmatpush1.bf16.msra.mxu0 0
    %4715 = vmatprep.subr.bf16.mxu0 0
    %4716 = vmatpush1.bf16.msra.mxu0 0
    %4717 = vmatprep.subr.bf16.mxu0 0
    %4718 = vmatpush1.bf16.msra.mxu0 0
    %4719 = vmatprep.subr.bf16.mxu0 0
    %4720 = vmatpush1.bf16.msra.mxu0 0
    %4721 = vmatprep.subr.bf16.mxu0 0
    %4722 = vmatpush1.bf16.msra.mxu0 0
    %4723 = vmatprep.subr.bf16.mxu0 0
    %4724 = vmatpush1.bf16.msra.mxu0 0
    %4725 = vmatprep.subr.bf16.mxu0 0
    %4726 = vmatpush1.bf16.msra.mxu0 0
    %4727 = vmatprep.subr.bf16.mxu0 0
    %4728 = vmatpush1.bf16.msra.mxu0 0
    %4729 = vmatprep.subr.bf16.mxu0 0
    %4730 = vmatpush1.bf16.msra.mxu0 0
    %4731 = vmatprep.subr.bf16.mxu0 0
    %4732 = vmatpush1.bf16.msra.mxu0 0
    %4733 = vmatprep.subr.bf16.mxu0 0
    %4734 = vmatpush1.bf16.msra.mxu0 0
    %4735 = vmatprep.subr.bf16.mxu0 0
    %4736 = vmatpush1.bf16.msra.mxu0 0
    %4737 = vmatprep.subr.bf16.mxu0 0
    %4738 = vmatpush1.bf16.msra.mxu0 0
    %4739 = vmatprep.mubr.bf16.mxu0 0
    %4740 = vmatmul.mubr.bf16.gmra.mrb[0].mxu0 %v4705
    %v4741 = vpop.f32.mrb[0].mxu0
    %v4742 = vadd.f32 0.0, %v4741
    %v4743 = vpop.f32.mrb[0].mxu0
    %v4744 = vpop.f32.mrb[0].mxu0
    %v4745 = vadd.f32 0.0, %v4744
    %v4746 = vpop.f32.mrb[0].mxu0
    %4747 = vdwg.mxu0
    %v4748 = vadd.f32 %v4702, %v4742
    %v4749 = vadd.f32 %v4703, %v4745
    %v4750 = vxor.u32 %v4748, 2147483648
    %v4751 = vxor.u32 %v4749, 2147483648
    %v4752 = vmul.f32 %v4750, 1.442695
    %v4753 = vpow.pop %v4752
    %v4754 = vmul.f32 %v4751, 1.442695
    %v4755 = vpow.pop %v4754
    %v4756 = vadd.f32 %v4753, 1.0
    %v4757 = vadd.f32 %v4755, 1.0
    %v4758 = vrcp.pop %v4756
    %v4759 = vmul.f32 1.0, %v4758
    %v4760 = vrcp.pop %v4757
    %v4761 = vmul.f32 1.0, %v4760
    %v4762 = vtanh.pop %v4748
    %v4763 = vtanh.pop %v4749
    %v4764 = vmul.f32 %v4759, %v4680
    %v4765 = vmul.f32 %v4761, %v4681
    %4768 = vrot.lane.b32.xlu0 %v4762, 32
    %v4769 = vpop.permute.xlu0 %4768
    %4770 = vrot.lane.b32.xlu0 %v4763, 32
    %v4771 = vpop.permute.xlu0 %4770
    %v4774 = vmul.f32 %v4759, %v4769
    %v4775 = vmul.f32 %v4761, %v4771
    %4778 = vrot.lane.b32.xlu0 %v4774, 32
    %v4779 = vpop.permute.xlu0 %4778
    %4780 = vrot.lane.b32.xlu0 %v4775, 32
    %v4781 = vpop.permute.xlu0 %4780
    %v4784 = vadd.f32 %v4764, %v4779
    %v4785 = vadd.f32 %v4765, %v4781
    %v4786 = vtanh.pop %v4784
    %v4787 = vtanh.pop %v4785
    %4790 = vrot.lane.b32.xlu0 %v4786, 32
    %v4791 = vpop.permute.xlu0 %4790
    %4792 = vrot.lane.b32.xlu0 %v4787, 32
    %v4793 = vpop.permute.xlu0 %4792
    %v4796 = vmul.f32 %v4759, %v4791
    %v4797 = vmul.f32 %v4761, %v4793
    %v4798 = vpack.c.bf16 %v4797, %v4796
    %4800 = vrot.lane.b32.xlu0 %v4798, 64
    %v4801 = vpop.permute.xlu0 %4800
    %s4803 = scalar_lea.vmem [#allocation9], 32
    %4804 = vst.msk [vmem:[%s4803] sm:$0xff] %vm514, %v4801
    %s4805 = scalar_lea.vmem [#allocation3], 80
    %v4806 = vld [vmem:[%s4805] sm:$0xff]
    %v4807 = vld [vmem:[%s4805 + $0x8] sm:$0xff]
    %v4809 = vsel %vm514, %v4801, 0
    %4811 = vmatprep.subr.bf16.mxu0 0
    %4812 = vmatpush1.bf16.msra.mxu0 %v4285
    %4813 = vmatprep.subr.bf16.mxu0 0
    %4814 = vmatpush1.bf16.msra.mxu0 %v4286
    %4815 = vmatprep.subr.bf16.mxu0 0
    %4816 = vmatpush1.bf16.msra.mxu0 0
    %4817 = vmatprep.subr.bf16.mxu0 0
    %4818 = vmatpush1.bf16.msra.mxu0 0
    %4819 = vmatprep.subr.bf16.mxu0 0
    %4820 = vmatpush1.bf16.msra.mxu0 0
    %4821 = vmatprep.subr.bf16.mxu0 0
    %4822 = vmatpush1.bf16.msra.mxu0 0
    %4823 = vmatprep.subr.bf16.mxu0 0
    %4824 = vmatpush1.bf16.msra.mxu0 0
    %4825 = vmatprep.subr.bf16.mxu0 0
    %4826 = vmatpush1.bf16.msra.mxu0 0
    %4827 = vmatprep.subr.bf16.mxu0 0
    %4828 = vmatpush1.bf16.msra.mxu0 0
    %4829 = vmatprep.subr.bf16.mxu0 0
    %4830 = vmatpush1.bf16.msra.mxu0 0
    %4831 = vmatprep.subr.bf16.mxu0 0
    %4832 = vmatpush1.bf16.msra.mxu0 0
    %4833 = vmatprep.subr.bf16.mxu0 0
    %4834 = vmatpush1.bf16.msra.mxu0 0
    %4835 = vmatprep.subr.bf16.mxu0 0
    %4836 = vmatpush1.bf16.msra.mxu0 0
    %4837 = vmatprep.subr.bf16.mxu0 0
    %4838 = vmatpush1.bf16.msra.mxu0 0
    %4839 = vmatprep.subr.bf16.mxu0 0
    %4840 = vmatpush1.bf16.msra.mxu0 0
    %4841 = vmatprep.subr.bf16.mxu0 0
    %4842 = vmatpush1.bf16.msra.mxu0 0
    %4843 = vmatprep.mubr.bf16.mxu0 0
    %4844 = vmatmul.mubr.bf16.gmra.mrb[0].mxu0 %v4809
    %v4845 = vpop.f32.mrb[0].mxu0
    %v4846 = vadd.f32 0.0, %v4845
    %v4847 = vpop.f32.mrb[0].mxu0
    %v4848 = vpop.f32.mrb[0].mxu0
    %v4849 = vadd.f32 0.0, %v4848
    %v4850 = vpop.f32.mrb[0].mxu0
    %4851 = vdwg.mxu0
    %v4852 = vadd.f32 %v4806, %v4846
    %v4853 = vadd.f32 %v4807, %v4849
    %v4854 = vxor.u32 %v4852, 2147483648
    %v4855 = vxor.u32 %v4853, 2147483648
    %v4856 = vmul.f32 %v4854, 1.442695
    %v4857 = vpow.pop %v4856
    %v4858 = vmul.f32 %v4855, 1.442695
    %v4859 = vpow.pop %v4858
    %v4860 = vadd.f32 %v4857, 1.0
    %v4861 = vadd.f32 %v4859, 1.0
    %v4862 = vrcp.pop %v4860
    %v4863 = vmul.f32 1.0, %v4862
    %v4864 = vrcp.pop %v4861
    %v4865 = vmul.f32 1.0, %v4864
    %v4866 = vtanh.pop %v4852
    %v4867 = vtanh.pop %v4853
    %v4868 = vmul.f32 %v4863, %v4784
    %v4869 = vmul.f32 %v4865, %v4785
    %4872 = vrot.lane.b32.xlu0 %v4866, 32
    %v4873 = vpop.permute.xlu0 %4872
    %4874 = vrot.lane.b32.xlu0 %v4867, 32
    %v4875 = vpop.permute.xlu0 %4874
    %v4878 = vmul.f32 %v4863, %v4873
    %v4879 = vmul.f32 %v4865, %v4875
    %4882 = vrot.lane.b32.xlu0 %v4878, 32
    %v4883 = vpop.permute.xlu0 %4882
    %4884 = vrot.lane.b32.xlu0 %v4879, 32
    %v4885 = vpop.permute.xlu0 %4884
    %v4888 = vadd.f32 %v4868, %v4883
    %v4889 = vadd.f32 %v4869, %v4885
    %v4890 = vtanh.pop %v4888
    %v4891 = vtanh.pop %v4889
    %4894 = vrot.lane.b32.xlu0 %v4890, 32
    %v4895 = vpop.permute.xlu0 %4894
    %4896 = vrot.lane.b32.xlu0 %v4891, 32
    %v4897 = vpop.permute.xlu0 %4896
    %v4900 = vmul.f32 %v4863, %v4895
    %v4901 = vmul.f32 %v4865, %v4897
    %v4902 = vpack.c.bf16 %v4901, %v4900
    %4904 = vrot.lane.b32.xlu0 %v4902, 64
    %v4905 = vpop.permute.xlu0 %4904
    %s4907 = scalar_lea.vmem [#allocation9], 40
    %4908 = vst.msk [vmem:[%s4907] sm:$0xff] %vm514, %v4905
    %s4909 = scalar_lea.vmem [#allocation3], 96
    %v4910 = vld [vmem:[%s4909] sm:$0xff]
    %v4911 = vld [vmem:[%s4909 + $0x8] sm:$0xff]
    %v4913 = vsel %vm514, %v4905, 0
    %4915 = vmatprep.subr.bf16.mxu0 0
    %4916 = vmatpush1.bf16.msra.mxu0 %v4285
    %4917 = vmatprep.subr.bf16.mxu0 0
    %4918 = vmatpush1.bf16.msra.mxu0 %v4286
    %4919 = vmatprep.subr.bf16.mxu0 0
    %4920 = vmatpush1.bf16.msra.mxu0 0
    %4921 = vmatprep.subr.bf16.mxu0 0
    %4922 = vmatpush1.bf16.msra.mxu0 0
    %4923 = vmatprep.subr.bf16.mxu0 0
    %4924 = vmatpush1.bf16.msra.mxu0 0
    %4925 = vmatprep.subr.bf16.mxu0 0
    %4926 = vmatpush1.bf16.msra.mxu0 0
    %4927 = vmatprep.subr.bf16.mxu0 0
    %4928 = vmatpush1.bf16.msra.mxu0 0
    %4929 = vmatprep.subr.bf16.mxu0 0
    %4930 = vmatpush1.bf16.msra.mxu0 0
    %4931 = vmatprep.subr.bf16.mxu0 0
    %4932 = vmatpush1.bf16.msra.mxu0 0
    %4933 = vmatprep.subr.bf16.mxu0 0
    %4934 = vmatpush1.bf16.msra.mxu0 0
    %4935 = vmatprep.subr.bf16.mxu0 0
    %4936 = vmatpush1.bf16.msra.mxu0 0
    %4937 = vmatprep.subr.bf16.mxu0 0
    %4938 = vmatpush1.bf16.msra.mxu0 0
    %4939 = vmatprep.subr.bf16.mxu0 0
    %4940 = vmatpush1.bf16.msra.mxu0 0
    %4941 = vmatprep.subr.bf16.mxu0 0
    %4942 = vmatpush1.bf16.msra.mxu0 0
    %4943 = vmatprep.subr.bf16.mxu0 0
    %4944 = vmatpush1.bf16.msra.mxu0 0
    %4945 = vmatprep.subr.bf16.mxu0 0
    %4946 = vmatpush1.bf16.msra.mxu0 0
    %4947 = vmatprep.mubr.bf16.mxu0 0
    %4948 = vmatmul.mubr.bf16.gmra.mrb[0].mxu0 %v4913
    %v4949 = vpop.f32.mrb[0].mxu0
    %v4950 = vadd.f32 0.0, %v4949
    %v4951 = vpop.f32.mrb[0].mxu0
    %v4952 = vpop.f32.mrb[0].mxu0
    %v4953 = vadd.f32 0.0, %v4952
    %v4954 = vpop.f32.mrb[0].mxu0
    %4955 = vdwg.mxu0
    %v4956 = vadd.f32 %v4910, %v4950
    %v4957 = vadd.f32 %v4911, %v4953
    %v4958 = vxor.u32 %v4956, 2147483648
    %v4959 = vxor.u32 %v4957, 2147483648
    %v4960 = vmul.f32 %v4958, 1.442695
    %v4961 = vpow.pop %v4960
    %v4962 = vmul.f32 %v4959, 1.442695
    %v4963 = vpow.pop %v4962
    %v4964 = vadd.f32 %v4961, 1.0
    %v4965 = vadd.f32 %v4963, 1.0
    %v4966 = vrcp.pop %v4964
    %v4967 = vmul.f32 1.0, %v4966
    %v4968 = vrcp.pop %v4965
    %v4969 = vmul.f32 1.0, %v4968
    %v4970 = vtanh.pop %v4956
    %v4971 = vtanh.pop %v4957
    %v4972 = vmul.f32 %v4967, %v4888
    %v4973 = vmul.f32 %v4969, %v4889
    %4976 = vrot.lane.b32.xlu0 %v4970, 32
    %v4977 = vpop.permute.xlu0 %4976
    %4978 = vrot.lane.b32.xlu0 %v4971, 32
    %v4979 = vpop.permute.xlu0 %4978
    %v4982 = vmul.f32 %v4967, %v4977
    %v4983 = vmul.f32 %v4969, %v4979
    %4986 = vrot.lane.b32.xlu0 %v4982, 32
    %v4987 = vpop.permute.xlu0 %4986
    %4988 = vrot.lane.b32.xlu0 %v4983, 32
    %v4989 = vpop.permute.xlu0 %4988
    %v4992 = vadd.f32 %v4972, %v4987
    %v4993 = vadd.f32 %v4973, %v4989
    %v4994 = vtanh.pop %v4992
    %v4995 = vtanh.pop %v4993
    %4998 = vrot.lane.b32.xlu0 %v4994, 32
    %v4999 = vpop.permute.xlu0 %4998
    %5000 = vrot.lane.b32.xlu0 %v4995, 32
    %v5001 = vpop.permute.xlu0 %5000
    %v5004 = vmul.f32 %v4967, %v4999
    %v5005 = vmul.f32 %v4969, %v5001
    %v5006 = vpack.c.bf16 %v5005, %v5004
    %5008 = vrot.lane.b32.xlu0 %v5006, 64
    %v5009 = vpop.permute.xlu0 %5008
    %s5011 = scalar_lea.vmem [#allocation9], 48
    %5012 = vst.msk [vmem:[%s5011] sm:$0xff] %vm514, %v5009
    %s5013 = scalar_lea.vmem [#allocation3], 112
    %v5014 = vld [vmem:[%s5013] sm:$0xff]
    %v5015 = vld [vmem:[%s5013 + $0x8] sm:$0xff]
    %v5017 = vsel %vm514, %v5009, 0
    %5019 = vmatprep.subr.bf16.mxu0 0
    %5020 = vmatpush1.bf16.msra.mxu0 %v4285
    %5021 = vmatprep.subr.bf16.mxu0 0
    %5022 = vmatpush1.bf16.msra.mxu0 %v4286
    %5023 = vmatprep.subr.bf16.mxu0 0
    %5024 = vmatpush1.bf16.msra.mxu0 0
    %5025 = vmatprep.subr.bf16.mxu0 0
    %5026 = vmatpush1.bf16.msra.mxu0 0
    %5027 = vmatprep.subr.bf16.mxu0 0
    %5028 = vmatpush1.bf16.msra.mxu0 0
    %5029 = vmatprep.subr.bf16.mxu0 0
    %5030 = vmatpush1.bf16.msra.mxu0 0
    %5031 = vmatprep.subr.bf16.mxu0 0
    %5032 = vmatpush1.bf16.msra.mxu0 0
    %5033 = vmatprep.subr.bf16.mxu0 0
    %5034 = vmatpush1.bf16.msra.mxu0 0
    %5035 = vmatprep.subr.bf16.mxu0 0
    %5036 = vmatpush1.bf16.msra.mxu0 0
    %5037 = vmatprep.subr.bf16.mxu0 0
    %5038 = vmatpush1.bf16.msra.mxu0 0
    %5039 = vmatprep.subr.bf16.mxu0 0
    %5040 = vmatpush1.bf16.msra.mxu0 0
    %5041 = vmatprep.subr.bf16.mxu0 0
    %5042 = vmatpush1.bf16.msra.mxu0 0
    %5043 = vmatprep.subr.bf16.mxu0 0
    %5044 = vmatpush1.bf16.msra.mxu0 0
    %5045 = vmatprep.subr.bf16.mxu0 0
    %5046 = vmatpush1.bf16.msra.mxu0 0
    %5047 = vmatprep.subr.bf16.mxu0 0
    %5048 = vmatpush1.bf16.msra.mxu0 0
    %5049 = vmatprep.subr.bf16.mxu0 0
    %5050 = vmatpush1.bf16.msra.mxu0 0
    %5051 = vmatprep.mubr.bf16.mxu0 0
    %5052 = vmatmul.mubr.bf16.gmra.mrb[0].mxu0 %v5017
    %v5053 = vpop.f32.mrb[0].mxu0
    %v5054 = vadd.f32 0.0, %v5053
    %v5055 = vpop.f32.mrb[0].mxu0
    %v5056 = vpop.f32.mrb[0].mxu0
    %v5057 = vadd.f32 0.0, %v5056
    %v5058 = vpop.f32.mrb[0].mxu0
    %5059 = vdwg.mxu0
    %v5060 = vadd.f32 %v5014, %v5054
    %v5061 = vadd.f32 %v5015, %v5057
    %v5062 = vxor.u32 %v5060, 2147483648
    %v5063 = vxor.u32 %v5061, 2147483648
    %v5064 = vmul.f32 %v5062, 1.442695
    %v5065 = vpow.pop %v5064
    %v5066 = vmul.f32 %v5063, 1.442695
    %v5067 = vpow.pop %v5066
    %v5068 = vadd.f32 %v5065, 1.0
    %v5069 = vadd.f32 %v5067, 1.0
    %v5070 = vrcp.pop %v5068
    %v5071 = vmul.f32 1.0, %v5070
    %v5072 = vrcp.pop %v5069
    %v5073 = vmul.f32 1.0, %v5072
    %v5074 = vtanh.pop %v5060
    %v5075 = vtanh.pop %v5061
    %v5076 = vmul.f32 %v5071, %v4992
    %v5077 = vmul.f32 %v5073, %v4993
    %5080 = vrot.lane.b32.xlu0 %v5074, 32
    %v5081 = vpop.permute.xlu0 %5080
    %5082 = vrot.lane.b32.xlu0 %v5075, 32
    %v5083 = vpop.permute.xlu0 %5082
    %v5086 = vmul.f32 %v5071, %v5081
    %v5087 = vmul.f32 %v5073, %v5083
    %5090 = vrot.lane.b32.xlu0 %v5086, 32
    %v5091 = vpop.permute.xlu0 %5090
    %5092 = vrot.lane.b32.xlu0 %v5087, 32
    %v5093 = vpop.permute.xlu0 %5092
    %v5096 = vadd.f32 %v5076, %v5091
    %v5097 = vadd.f32 %v5077, %v5093
    %v5098 = vtanh.pop %v5096
    %v5099 = vtanh.pop %v5097
    %5102 = vrot.lane.b32.xlu0 %v5098, 32
    %v5103 = vpop.permute.xlu0 %5102
    %5104 = vrot.lane.b32.xlu0 %v5099, 32
    %v5105 = vpop.permute.xlu0 %5104
    %v5108 = vmul.f32 %v5071, %v5103
    %v5109 = vmul.f32 %v5073, %v5105
    %v5110 = vpack.c.bf16 %v5109, %v5108
    %5112 = vrot.lane.b32.xlu0 %v5110, 64
    %v5113 = vpop.permute.xlu0 %5112
    %s5115 = scalar_lea.vmem [#allocation9], 56
    %5116 = vst.msk [vmem:[%s5115] sm:$0xff] %vm514, %v5113
    %v5117 = vld [vmem:[#allocation9] sm:$0xff]
    %v5118 = vld [vmem:[#allocation9 + $0x8] sm:$0xff]
    %v5119 = vld [vmem:[#allocation9 + $0x10] sm:$0xff]
    %v5120 = vld [vmem:[#allocation9 + $0x18] sm:$0xff]
    %v5121 = vld [vmem:[#allocation9 + $0x20] sm:$0xff]
    %v5122 = vld [vmem:[#allocation9 + $0x28] sm:$0xff]
    %v5123 = vld [vmem:[#allocation9 + $0x30] sm:$0xff]
    %v5124 = vld [vmem:[#allocation9 + $0x38] sm:$0xff]
    %v5125 = vld [vmem:[#allocation11 + $0x100] sm:$0xf]
    %v5126 = vld [vmem:[#allocation11 + $0x108] sm:$0xf]
    %v5127 = vld [vmem:[#allocation11 + $0x110] sm:$0xf]
    %v5128 = vld [vmem:[#allocation11 + $0x118] sm:$0xf]
    %v5129 = vld [vmem:[%s3 + $0x30] ss:$0 sm:$0xff]
    %v5134 = vunpack.c.l.b16 %v5125
    %v5135 = vunpack.c.l.b16 %v5126
    %v5136 = vunpack.c.l.b16 %v5127
    %v5137 = vunpack.c.l.b16 %v5128
    %v5138 = vpack.c.b16 %v5135, %v5134
    %v5139 = vpack.c.b16 %v5137, %v5136
    %v5143 = vsel %vm514, %v5117, 0
    %v5146 = vsel %vm514, %v5118, 0
    %v5149 = vsel %vm514, %v5119, 0
    %v5152 = vsel %vm514, %v5120, 0
    %v5155 = vsel %vm514, %v5121, 0
    %v5158 = vsel %vm514, %v5122, 0
    %v5161 = vsel %vm514, %v5123, 0
    %v5164 = vsel %vm514, %v5124, 0
    %5166 = vmatprep.subr.bf16.mxu0 0
    %5167 = vmatpush1.bf16.msra.mxu0 %v5138
    %5168 = vmatprep.subr.bf16.mxu0 0
    %5169 = vmatpush1.bf16.msra.mxu0 %v5139
    %5170 = vmatprep.subr.bf16.mxu0 0
    %5171 = vmatpush1.bf16.msra.mxu0 0
    %5172 = vmatprep.subr.bf16.mxu0 0
    %5173 = vmatpush1.bf16.msra.mxu0 0
    %5174 = vmatprep.subr.bf16.mxu0 0
    %5175 = vmatpush1.bf16.msra.mxu0 0
    %5176 = vmatprep.subr.bf16.mxu0 0
    %5177 = vmatpush1.bf16.msra.mxu0 0
    %5178 = vmatprep.subr.bf16.mxu0 0
    %5179 = vmatpush1.bf16.msra.mxu0 0
    %5180 = vmatprep.subr.bf16.mxu0 0
    %5181 = vmatpush1.bf16.msra.mxu0 0
    %5182 = vmatprep.subr.bf16.mxu0 0
    %5183 = vmatpush1.bf16.msra.mxu0 0
    %5184 = vmatprep.subr.bf16.mxu0 0
    %5185 = vmatpush1.bf16.msra.mxu0 0
    %5186 = vmatprep.subr.bf16.mxu0 0
    %5187 = vmatpush1.bf16.msra.mxu0 0
    %5188 = vmatprep.subr.bf16.mxu0 0
    %5189 = vmatpush1.bf16.msra.mxu0 0
    %5190 = vmatprep.subr.bf16.mxu0 0
    %5191 = vmatpush1.bf16.msra.mxu0 0
    %5192 = vmatprep.subr.bf16.mxu0 0
    %5193 = vmatpush1.bf16.msra.mxu0 0
    %5194 = vmatprep.subr.bf16.mxu0 0
    %5195 = vmatpush1.bf16.msra.mxu0 0
    %5196 = vmatprep.subr.bf16.mxu0 0
    %5197 = vmatpush1.bf16.msra.mxu0 0
    %5198 = vmatprep.mubr.bf16.mxu0 0
    %5199 = vmatmul.mubr.bf16.gmra.mrb[0].mxu0 %v5143
    %v5200 = vpop.f32.mrb[0].mxu0
    %v5201 = vadd.f32 %v5129, %v5200
    %v5202 = vpop.f32.mrb[0].mxu0
    %v5203 = vpop.f32.mrb[0].mxu0
    %v5204 = vadd.f32 %v5129, %v5203
    %v5205 = vpop.f32.mrb[0].mxu0
    %5206 = vmatprep.mubr.bf16.mxu0 0
    %5207 = vmatmul.mubr.bf16.gmra.mrb[0].mxu0 %v5146
    %v5208 = vpop.f32.mrb[0].mxu0
    %v5209 = vadd.f32 %v5129, %v5208
    %v5210 = vpop.f32.mrb[0].mxu0
    %v5211 = vpop.f32.mrb[0].mxu0
    %v5212 = vadd.f32 %v5129, %v5211
    %v5213 = vpop.f32.mrb[0].mxu0
    %5214 = vmatprep.mubr.bf16.mxu0 0
    %5215 = vmatmul.mubr.bf16.gmra.mrb[0].mxu0 %v5149
    %v5216 = vpop.f32.mrb[0].mxu0
    %v5217 = vadd.f32 %v5129, %v5216
    %v5218 = vpop.f32.mrb[0].mxu0
    %v5219 = vpop.f32.mrb[0].mxu0
    %v5220 = vadd.f32 %v5129, %v5219
    %v5221 = vpop.f32.mrb[0].mxu0
    %5222 = vmatprep.mubr.bf16.mxu0 0
    %5223 = vmatmul.mubr.bf16.gmra.mrb[0].mxu0 %v5152
    %v5224 = vpop.f32.mrb[0].mxu0
    %v5225 = vadd.f32 %v5129, %v5224
    %v5226 = vpop.f32.mrb[0].mxu0
    %v5227 = vpop.f32.mrb[0].mxu0
    %v5228 = vadd.f32 %v5129, %v5227
    %v5229 = vpop.f32.mrb[0].mxu0
    %5230 = vmatprep.mubr.bf16.mxu0 0
    %5231 = vmatmul.mubr.bf16.gmra.mrb[0].mxu0 %v5155
    %v5232 = vpop.f32.mrb[0].mxu0
    %v5233 = vadd.f32 %v5129, %v5232
    %v5234 = vpop.f32.mrb[0].mxu0
    %v5235 = vpop.f32.mrb[0].mxu0
    %v5236 = vadd.f32 %v5129, %v5235
    %v5237 = vpop.f32.mrb[0].mxu0
    %5238 = vmatprep.mubr.bf16.mxu0 0
    %5239 = vmatmul.mubr.bf16.gmra.mrb[0].mxu0 %v5158
    %v5240 = vpop.f32.mrb[0].mxu0
    %v5241 = vadd.f32 %v5129, %v5240
    %v5242 = vpop.f32.mrb[0].mxu0
    %v5243 = vpop.f32.mrb[0].mxu0
    %v5244 = vadd.f32 %v5129, %v5243
    %v5245 = vpop.f32.mrb[0].mxu0
    %5246 = vmatprep.mubr.bf16.mxu0 0
    %5247 = vmatmul.mubr.bf16.gmra.mrb[0].mxu0 %v5161
    %v5248 = vpop.f32.mrb[0].mxu0
    %v5249 = vadd.f32 %v5129, %v5248
    %v5250 = vpop.f32.mrb[0].mxu0
    %v5251 = vpop.f32.mrb[0].mxu0
    %v5252 = vadd.f32 %v5129, %v5251
    %v5253 = vpop.f32.mrb[0].mxu0
    %5254 = vmatprep.mubr.bf16.mxu0 0
    %5255 = vmatmul.mubr.bf16.gmra.mrb[0].mxu0 %v5164
    %v5256 = vpop.f32.mrb[0].mxu0
    %v5257 = vadd.f32 %v5129, %v5256
    %v5258 = vpop.f32.mrb[0].mxu0
    %v5259 = vpop.f32.mrb[0].mxu0
    %v5260 = vadd.f32 %v5129, %v5259
    %v5261 = vpop.f32.mrb[0].mxu0
    %5262 = vdwg.mxu0
    %5263 = vst [vmem:[#allocation4] sm:$0xff] %v5201
    %5264 = vst [vmem:[#allocation4 + $0x8] sm:$0xff] %v5204
    %5265 = vst [vmem:[#allocation4 + $0x10] sm:$0xff] %v5209
    %5266 = vst [vmem:[#allocation4 + $0x18] sm:$0xff] %v5212
    %5267 = vst [vmem:[#allocation4 + $0x20] sm:$0xff] %v5217
    %5268 = vst [vmem:[#allocation4 + $0x28] sm:$0xff] %v5220
    %5269 = vst [vmem:[#allocation4 + $0x30] sm:$0xff] %v5225
    %5270 = vst [vmem:[#allocation4 + $0x38] sm:$0xff] %v5228
    %5271 = vst [vmem:[#allocation4 + $0x40] sm:$0xff] %v5233
    %5272 = vst [vmem:[#allocation4 + $0x48] sm:$0xff] %v5236
    %5273 = vst [vmem:[#allocation4 + $0x50] sm:$0xff] %v5241
    %5274 = vst [vmem:[#allocation4 + $0x58] sm:$0xff] %v5244
    %5275 = vst [vmem:[#allocation4 + $0x60] sm:$0xff] %v5249
    %5276 = vst [vmem:[#allocation4 + $0x68] sm:$0xff] %v5252
    %5277 = vst [vmem:[#allocation4 + $0x70] sm:$0xff] %v5257
    %5278 = vst [vmem:[#allocation4 + $0x78] sm:$0xff] %v5260
    %v5279 = vld [vmem:[#allocation11 + $0x120] sm:$0xf]
    %v5280 = vld [vmem:[#allocation11 + $0x128] sm:$0xf]
    %v5281 = vld [vmem:[#allocation11 + $0x130] sm:$0xf]
    %v5282 = vld [vmem:[#allocation11 + $0x138] sm:$0xf]
    %v5283 = vld [vmem:[#allocation4] sm:$0xff]
    %v5284 = vld [vmem:[#allocation4 + $0x8] sm:$0xff]
    %v5289 = vunpack.c.l.b16 %v5279
    %v5290 = vunpack.c.l.b16 %v5280
    %v5291 = vunpack.c.l.b16 %v5281
    %v5292 = vunpack.c.l.b16 %v5282
    %v5293 = vpack.c.b16 %v5290, %v5289
    %v5294 = vpack.c.b16 %v5292, %v5291
    %v5298 = vsel %vm514, %v2181, 0
    %5300 = vmatprep.subr.bf16.mxu0 0
    %5301 = vmatpush1.bf16.msra.mxu0 %v5293
    %5302 = vmatprep.subr.bf16.mxu0 0
    %5303 = vmatpush1.bf16.msra.mxu0 %v5294
    %5304 = vmatprep.subr.bf16.mxu0 0
    %5305 = vmatpush1.bf16.msra.mxu0 0
    %5306 = vmatprep.subr.bf16.mxu0 0
    %5307 = vmatpush1.bf16.msra.mxu0 0
    %5308 = vmatprep.subr.bf16.mxu0 0
    %5309 = vmatpush1.bf16.msra.mxu0 0
    %5310 = vmatprep.subr.bf16.mxu0 0
    %5311 = vmatpush1.bf16.msra.mxu0 0
    %5312 = vmatprep.subr.bf16.mxu0 0
    %5313 = vmatpush1.bf16.msra.mxu0 0
    %5314 = vmatprep.subr.bf16.mxu0 0
    %5315 = vmatpush1.bf16.msra.mxu0 0
    %5316 = vmatprep.subr.bf16.mxu0 0
    %5317 = vmatpush1.bf16.msra.mxu0 0
    %5318 = vmatprep.subr.bf16.mxu0 0
    %5319 = vmatpush1.bf16.msra.mxu0 0
    %5320 = vmatprep.subr.bf16.mxu0 0
    %5321 = vmatpush1.bf16.msra.mxu0 0
    %5322 = vmatprep.subr.bf16.mxu0 0
    %5323 = vmatpush1.bf16.msra.mxu0 0
    %5324 = vmatprep.subr.bf16.mxu0 0
    %5325 = vmatpush1.bf16.msra.mxu0 0
    %5326 = vmatprep.subr.bf16.mxu0 0
    %5327 = vmatpush1.bf16.msra.mxu0 0
    %5328 = vmatprep.subr.bf16.mxu0 0
    %5329 = vmatpush1.bf16.msra.mxu0 0
    %5330 = vmatprep.subr.bf16.mxu0 0
    %5331 = vmatpush1.bf16.msra.mxu0 0
    %5332 = vmatprep.mubr.bf16.mxu0 0
    %5333 = vmatmul.mubr.bf16.gmra.mrb[0].mxu0 %v5298
    %v5334 = vpop.f32.mrb[0].mxu0
    %v5335 = vadd.f32 0.0, %v5334
    %v5336 = vpop.f32.mrb[0].mxu0
    %v5337 = vpop.f32.mrb[0].mxu0
    %v5338 = vadd.f32 0.0, %v5337
    %v5339 = vpop.f32.mrb[0].mxu0
    %5340 = vdwg.mxu0
    %v5341 = vadd.f32 %v5283, %v5335
    %v5342 = vadd.f32 %v5284, %v5338
    %v5343 = vxor.u32 %v5341, 2147483648
    %v5344 = vxor.u32 %v5342, 2147483648
    %v5345 = vmul.f32 %v5343, 1.442695
    %v5346 = vpow.pop %v5345
    %v5347 = vmul.f32 %v5344, 1.442695
    %v5348 = vpow.pop %v5347
    %v5349 = vadd.f32 %v5346, 1.0
    %v5350 = vadd.f32 %v5348, 1.0
    %v5351 = vrcp.pop %v5349
    %v5352 = vmul.f32 1.0, %v5351
    %v5353 = vrcp.pop %v5350
    %v5354 = vmul.f32 1.0, %v5353
    %v5355 = vtanh.pop %v5341
    %v5356 = vtanh.pop %v5342
    %v5357 = vmul.f32 %v5352, %v2157
    %v5358 = vmul.f32 %v5354, %v2158
    %5361 = vrot.lane.b32.xlu0 %v5355, 32
    %v5362 = vpop.permute.xlu0 %5361
    %5363 = vrot.lane.b32.xlu0 %v5356, 32
    %v5364 = vpop.permute.xlu0 %5363
    %v5367 = vmul.f32 %v5352, %v5362
    %v5368 = vmul.f32 %v5354, %v5364
    %5371 = vrot.lane.b32.xlu0 %v5367, 32
    %v5372 = vpop.permute.xlu0 %5371
    %5373 = vrot.lane.b32.xlu0 %v5368, 32
    %v5374 = vpop.permute.xlu0 %5373
    %v5377 = vadd.f32 %v5357, %v5372
    %v5378 = vadd.f32 %v5358, %v5374
    %v5379 = vtanh.pop %v5377
    %v5380 = vtanh.pop %v5378
    %5383 = vrot.lane.b32.xlu0 %v5379, 32
    %v5384 = vpop.permute.xlu0 %5383
    %5385 = vrot.lane.b32.xlu0 %v5380, 32
    %v5386 = vpop.permute.xlu0 %5385
    %v5389 = vmul.f32 %v5352, %v5384
    %v5390 = vmul.f32 %v5354, %v5386
    %v5391 = vpack.c.bf16 %v5390, %v5389
    %5393 = vrot.lane.b32.xlu0 %v5391, 64
    %v5394 = vpop.permute.xlu0 %5393
    %5396 = vst.msk [vmem:[#allocation10] sm:$0xff] %vm514, %v5394
    %s5397 = scalar_lea.vmem [#allocation4], 16
    %v5398 = vld [vmem:[%s5397] sm:$0xff]
    %v5399 = vld [vmem:[%s5397 + $0x8] sm:$0xff]
    %v5401 = vsel %vm514, %v5394, 0
    %5403 = vmatprep.subr.bf16.mxu0 0
    %5404 = vmatpush1.bf16.msra.mxu0 %v5293
    %5405 = vmatprep.subr.bf16.mxu0 0
    %5406 = vmatpush1.bf16.msra.mxu0 %v5294
    %5407 = vmatprep.subr.bf16.mxu0 0
    %5408 = vmatpush1.bf16.msra.mxu0 0
    %5409 = vmatprep.subr.bf16.mxu0 0
    %5410 = vmatpush1.bf16.msra.mxu0 0
    %5411 = vmatprep.subr.bf16.mxu0 0
    %5412 = vmatpush1.bf16.msra.mxu0 0
    %5413 = vmatprep.subr.bf16.mxu0 0
    %5414 = vmatpush1.bf16.msra.mxu0 0
    %5415 = vmatprep.subr.bf16.mxu0 0
    %5416 = vmatpush1.bf16.msra.mxu0 0
    %5417 = vmatprep.subr.bf16.mxu0 0
    %5418 = vmatpush1.bf16.msra.mxu0 0
    %5419 = vmatprep.subr.bf16.mxu0 0
    %5420 = vmatpush1.bf16.msra.mxu0 0
    %5421 = vmatprep.subr.bf16.mxu0 0
    %5422 = vmatpush1.bf16.msra.mxu0 0
    %5423 = vmatprep.subr.bf16.mxu0 0
    %5424 = vmatpush1.bf16.msra.mxu0 0
    %5425 = vmatprep.subr.bf16.mxu0 0
    %5426 = vmatpush1.bf16.msra.mxu0 0
    %5427 = vmatprep.subr.bf16.mxu0 0
    %5428 = vmatpush1.bf16.msra.mxu0 0
    %5429 = vmatprep.subr.bf16.mxu0 0
    %5430 = vmatpush1.bf16.msra.mxu0 0
    %5431 = vmatprep.subr.bf16.mxu0 0
    %5432 = vmatpush1.bf16.msra.mxu0 0
    %5433 = vmatprep.subr.bf16.mxu0 0
    %5434 = vmatpush1.bf16.msra.mxu0 0
    %5435 = vmatprep.mubr.bf16.mxu0 0
    %5436 = vmatmul.mubr.bf16.gmra.mrb[0].mxu0 %v5401
    %v5437 = vpop.f32.mrb[0].mxu0
    %v5438 = vadd.f32 0.0, %v5437
    %v5439 = vpop.f32.mrb[0].mxu0
    %v5440 = vpop.f32.mrb[0].mxu0
    %v5441 = vadd.f32 0.0, %v5440
    %v5442 = vpop.f32.mrb[0].mxu0
    %5443 = vdwg.mxu0
    %v5444 = vadd.f32 %v5398, %v5438
    %v5445 = vadd.f32 %v5399, %v5441
    %v5446 = vxor.u32 %v5444, 2147483648
    %v5447 = vxor.u32 %v5445, 2147483648
    %v5448 = vmul.f32 %v5446, 1.442695
    %v5449 = vpow.pop %v5448
    %v5450 = vmul.f32 %v5447, 1.442695
    %v5451 = vpow.pop %v5450
    %v5452 = vadd.f32 %v5449, 1.0
    %v5453 = vadd.f32 %v5451, 1.0
    %v5454 = vrcp.pop %v5452
    %v5455 = vmul.f32 1.0, %v5454
    %v5456 = vrcp.pop %v5453
    %v5457 = vmul.f32 1.0, %v5456
    %v5458 = vtanh.pop %v5444
    %v5459 = vtanh.pop %v5445
    %v5460 = vmul.f32 %v5455, %v5377
    %v5461 = vmul.f32 %v5457, %v5378
    %5464 = vrot.lane.b32.xlu0 %v5458, 32
    %v5465 = vpop.permute.xlu0 %5464
    %5466 = vrot.lane.b32.xlu0 %v5459, 32
    %v5467 = vpop.permute.xlu0 %5466
    %v5470 = vmul.f32 %v5455, %v5465
    %v5471 = vmul.f32 %v5457, %v5467
    %5474 = vrot.lane.b32.xlu0 %v5470, 32
    %v5475 = vpop.permute.xlu0 %5474
    %5476 = vrot.lane.b32.xlu0 %v5471, 32
    %v5477 = vpop.permute.xlu0 %5476
    %v5480 = vadd.f32 %v5460, %v5475
    %v5481 = vadd.f32 %v5461, %v5477
    %v5482 = vtanh.pop %v5480
    %v5483 = vtanh.pop %v5481
    %5486 = vrot.lane.b32.xlu0 %v5482, 32
    %v5487 = vpop.permute.xlu0 %5486
    %5488 = vrot.lane.b32.xlu0 %v5483, 32
    %v5489 = vpop.permute.xlu0 %5488
    %v5492 = vmul.f32 %v5455, %v5487
    %v5493 = vmul.f32 %v5457, %v5489
    %v5494 = vpack.c.bf16 %v5493, %v5492
    %5496 = vrot.lane.b32.xlu0 %v5494, 64
    %v5497 = vpop.permute.xlu0 %5496
    %s5499 = scalar_lea.vmem [#allocation10], 8
    %5500 = vst.msk [vmem:[%s5499] sm:$0xff] %vm514, %v5497
    %s5501 = scalar_lea.vmem [#allocation4], 32
    %v5502 = vld [vmem:[%s5501] sm:$0xff]
    %v5503 = vld [vmem:[%s5501 + $0x8] sm:$0xff]
    %v5505 = vsel %vm514, %v5497, 0
    %5507 = vmatprep.subr.bf16.mxu0 0
    %5508 = vmatpush1.bf16.msra.mxu0 %v5293
    %5509 = vmatprep.subr.bf16.mxu0 0
    %5510 = vmatpush1.bf16.msra.mxu0 %v5294
    %5511 = vmatprep.subr.bf16.mxu0 0
    %5512 = vmatpush1.bf16.msra.mxu0 0
    %5513 = vmatprep.subr.bf16.mxu0 0
    %5514 = vmatpush1.bf16.msra.mxu0 0
    %5515 = vmatprep.subr.bf16.mxu0 0
    %5516 = vmatpush1.bf16.msra.mxu0 0
    %5517 = vmatprep.subr.bf16.mxu0 0
    %5518 = vmatpush1.bf16.msra.mxu0 0
    %5519 = vmatprep.subr.bf16.mxu0 0
    %5520 = vmatpush1.bf16.msra.mxu0 0
    %5521 = vmatprep.subr.bf16.mxu0 0
    %5522 = vmatpush1.bf16.msra.mxu0 0
    %5523 = vmatprep.subr.bf16.mxu0 0
    %5524 = vmatpush1.bf16.msra.mxu0 0
    %5525 = vmatprep.subr.bf16.mxu0 0
    %5526 = vmatpush1.bf16.msra.mxu0 0
    %5527 = vmatprep.subr.bf16.mxu0 0
    %5528 = vmatpush1.bf16.msra.mxu0 0
    %5529 = vmatprep.subr.bf16.mxu0 0
    %5530 = vmatpush1.bf16.msra.mxu0 0
    %5531 = vmatprep.subr.bf16.mxu0 0
    %5532 = vmatpush1.bf16.msra.mxu0 0
    %5533 = vmatprep.subr.bf16.mxu0 0
    %5534 = vmatpush1.bf16.msra.mxu0 0
    %5535 = vmatprep.subr.bf16.mxu0 0
    %5536 = vmatpush1.bf16.msra.mxu0 0
    %5537 = vmatprep.subr.bf16.mxu0 0
    %5538 = vmatpush1.bf16.msra.mxu0 0
    %5539 = vmatprep.mubr.bf16.mxu0 0
    %5540 = vmatmul.mubr.bf16.gmra.mrb[0].mxu0 %v5505
    %v5541 = vpop.f32.mrb[0].mxu0
    %v5542 = vadd.f32 0.0, %v5541
    %v5543 = vpop.f32.mrb[0].mxu0
    %v5544 = vpop.f32.mrb[0].mxu0
    %v5545 = vadd.f32 0.0, %v5544
    %v5546 = vpop.f32.mrb[0].mxu0
    %5547 = vdwg.mxu0
    %v5548 = vadd.f32 %v5502, %v5542
    %v5549 = vadd.f32 %v5503, %v5545
    %v5550 = vxor.u32 %v5548, 2147483648
    %v5551 = vxor.u32 %v5549, 2147483648
    %v5552 = vmul.f32 %v5550, 1.442695
    %v5553 = vpow.pop %v5552
    %v5554 = vmul.f32 %v5551, 1.442695
    %v5555 = vpow.pop %v5554
    %v5556 = vadd.f32 %v5553, 1.0
    %v5557 = vadd.f32 %v5555, 1.0
    %v5558 = vrcp.pop %v5556
    %v5559 = vmul.f32 1.0, %v5558
    %v5560 = vrcp.pop %v5557
    %v5561 = vmul.f32 1.0, %v5560
    %v5562 = vtanh.pop %v5548
    %v5563 = vtanh.pop %v5549
    %v5564 = vmul.f32 %v5559, %v5480
    %v5565 = vmul.f32 %v5561, %v5481
    %5568 = vrot.lane.b32.xlu0 %v5562, 32
    %v5569 = vpop.permute.xlu0 %5568
    %5570 = vrot.lane.b32.xlu0 %v5563, 32
    %v5571 = vpop.permute.xlu0 %5570
    %v5574 = vmul.f32 %v5559, %v5569
    %v5575 = vmul.f32 %v5561, %v5571
    %5578 = vrot.lane.b32.xlu0 %v5574, 32
    %v5579 = vpop.permute.xlu0 %5578
    %5580 = vrot.lane.b32.xlu0 %v5575, 32
    %v5581 = vpop.permute.xlu0 %5580
    %v5584 = vadd.f32 %v5564, %v5579
    %v5585 = vadd.f32 %v5565, %v5581
    %v5586 = vtanh.pop %v5584
    %v5587 = vtanh.pop %v5585
    %5590 = vrot.lane.b32.xlu0 %v5586, 32
    %v5591 = vpop.permute.xlu0 %5590
    %5592 = vrot.lane.b32.xlu0 %v5587, 32
    %v5593 = vpop.permute.xlu0 %5592
    %v5596 = vmul.f32 %v5559, %v5591
    %v5597 = vmul.f32 %v5561, %v5593
    %v5598 = vpack.c.bf16 %v5597, %v5596
    %5600 = vrot.lane.b32.xlu0 %v5598, 64
    %v5601 = vpop.permute.xlu0 %5600
    %s5603 = scalar_lea.vmem [#allocation10], 16
    %5604 = vst.msk [vmem:[%s5603] sm:$0xff] %vm514, %v5601
    %s5605 = scalar_lea.vmem [#allocation4], 48
    %v5606 = vld [vmem:[%s5605] sm:$0xff]
    %v5607 = vld [vmem:[%s5605 + $0x8] sm:$0xff]
    %v5609 = vsel %vm514, %v5601, 0
    %5611 = vmatprep.subr.bf16.mxu0 0
    %5612 = vmatpush1.bf16.msra.mxu0 %v5293
    %5613 = vmatprep.subr.bf16.mxu0 0
    %5614 = vmatpush1.bf16.msra.mxu0 %v5294
    %5615 = vmatprep.subr.bf16.mxu0 0
    %5616 = vmatpush1.bf16.msra.mxu0 0
    %5617 = vmatprep.subr.bf16.mxu0 0
    %5618 = vmatpush1.bf16.msra.mxu0 0
    %5619 = vmatprep.subr.bf16.mxu0 0
    %5620 = vmatpush1.bf16.msra.mxu0 0
    %5621 = vmatprep.subr.bf16.mxu0 0
    %5622 = vmatpush1.bf16.msra.mxu0 0
    %5623 = vmatprep.subr.bf16.mxu0 0
    %5624 = vmatpush1.bf16.msra.mxu0 0
    %5625 = vmatprep.subr.bf16.mxu0 0
    %5626 = vmatpush1.bf16.msra.mxu0 0
    %5627 = vmatprep.subr.bf16.mxu0 0
    %5628 = vmatpush1.bf16.msra.mxu0 0
    %5629 = vmatprep.subr.bf16.mxu0 0
    %5630 = vmatpush1.bf16.msra.mxu0 0
    %5631 = vmatprep.subr.bf16.mxu0 0
    %5632 = vmatpush1.bf16.msra.mxu0 0
    %5633 = vmatprep.subr.bf16.mxu0 0
    %5634 = vmatpush1.bf16.msra.mxu0 0
    %5635 = vmatprep.subr.bf16.mxu0 0
    %5636 = vmatpush1.bf16.msra.mxu0 0
    %5637 = vmatprep.subr.bf16.mxu0 0
    %5638 = vmatpush1.bf16.msra.mxu0 0
    %5639 = vmatprep.subr.bf16.mxu0 0
    %5640 = vmatpush1.bf16.msra.mxu0 0
    %5641 = vmatprep.subr.bf16.mxu0 0
    %5642 = vmatpush1.bf16.msra.mxu0 0
    %5643 = vmatprep.mubr.bf16.mxu0 0
    %5644 = vmatmul.mubr.bf16.gmra.mrb[0].mxu0 %v5609
    %v5645 = vpop.f32.mrb[0].mxu0
    %v5646 = vadd.f32 0.0, %v5645
    %v5647 = vpop.f32.mrb[0].mxu0
    %v5648 = vpop.f32.mrb[0].mxu0
    %v5649 = vadd.f32 0.0, %v5648
    %v5650 = vpop.f32.mrb[0].mxu0
    %5651 = vdwg.mxu0
    %v5652 = vadd.f32 %v5606, %v5646
    %v5653 = vadd.f32 %v5607, %v5649
    %v5654 = vxor.u32 %v5652, 2147483648
    %v5655 = vxor.u32 %v5653, 2147483648
    %v5656 = vmul.f32 %v5654, 1.442695
    %v5657 = vpow.pop %v5656
    %v5658 = vmul.f32 %v5655, 1.442695
    %v5659 = vpow.pop %v5658
    %v5660 = vadd.f32 %v5657, 1.0
    %v5661 = vadd.f32 %v5659, 1.0
    %v5662 = vrcp.pop %v5660
    %v5663 = vmul.f32 1.0, %v5662
    %v5664 = vrcp.pop %v5661
    %v5665 = vmul.f32 1.0, %v5664
    %v5666 = vtanh.pop %v5652
    %v5667 = vtanh.pop %v5653
    %v5668 = vmul.f32 %v5663, %v5584
    %v5669 = vmul.f32 %v5665, %v5585
    %5672 = vrot.lane.b32.xlu0 %v5666, 32
    %v5673 = vpop.permute.xlu0 %5672
    %5674 = vrot.lane.b32.xlu0 %v5667, 32
    %v5675 = vpop.permute.xlu0 %5674
    %v5678 = vmul.f32 %v5663, %v5673
    %v5679 = vmul.f32 %v5665, %v5675
    %5682 = vrot.lane.b32.xlu0 %v5678, 32
    %v5683 = vpop.permute.xlu0 %5682
    %5684 = vrot.lane.b32.xlu0 %v5679, 32
    %v5685 = vpop.permute.xlu0 %5684
    %v5688 = vadd.f32 %v5668, %v5683
    %v5689 = vadd.f32 %v5669, %v5685
    %v5690 = vtanh.pop %v5688
    %v5691 = vtanh.pop %v5689
    %5694 = vrot.lane.b32.xlu0 %v5690, 32
    %v5695 = vpop.permute.xlu0 %5694
    %5696 = vrot.lane.b32.xlu0 %v5691, 32
    %v5697 = vpop.permute.xlu0 %5696
    %v5700 = vmul.f32 %v5663, %v5695
    %v5701 = vmul.f32 %v5665, %v5697
    %v5702 = vpack.c.bf16 %v5701, %v5700
    %5704 = vrot.lane.b32.xlu0 %v5702, 64
    %v5705 = vpop.permute.xlu0 %5704
    %s5707 = scalar_lea.vmem [#allocation10], 24
    %5708 = vst.msk [vmem:[%s5707] sm:$0xff] %vm514, %v5705
    %s5709 = scalar_lea.vmem [#allocation4], 64
    %v5710 = vld [vmem:[%s5709] sm:$0xff]
    %v5711 = vld [vmem:[%s5709 + $0x8] sm:$0xff]
    %v5713 = vsel %vm514, %v5705, 0
    %5715 = vmatprep.subr.bf16.mxu0 0
    %5716 = vmatpush1.bf16.msra.mxu0 %v5293
    %5717 = vmatprep.subr.bf16.mxu0 0
    %5718 = vmatpush1.bf16.msra.mxu0 %v5294
    %5719 = vmatprep.subr.bf16.mxu0 0
    %5720 = vmatpush1.bf16.msra.mxu0 0
    %5721 = vmatprep.subr.bf16.mxu0 0
    %5722 = vmatpush1.bf16.msra.mxu0 0
    %5723 = vmatprep.subr.bf16.mxu0 0
    %5724 = vmatpush1.bf16.msra.mxu0 0
    %5725 = vmatprep.subr.bf16.mxu0 0
    %5726 = vmatpush1.bf16.msra.mxu0 0
    %5727 = vmatprep.subr.bf16.mxu0 0
    %5728 = vmatpush1.bf16.msra.mxu0 0
    %5729 = vmatprep.subr.bf16.mxu0 0
    %5730 = vmatpush1.bf16.msra.mxu0 0
    %5731 = vmatprep.subr.bf16.mxu0 0
    %5732 = vmatpush1.bf16.msra.mxu0 0
    %5733 = vmatprep.subr.bf16.mxu0 0
    %5734 = vmatpush1.bf16.msra.mxu0 0
    %5735 = vmatprep.subr.bf16.mxu0 0
    %5736 = vmatpush1.bf16.msra.mxu0 0
    %5737 = vmatprep.subr.bf16.mxu0 0
    %5738 = vmatpush1.bf16.msra.mxu0 0
    %5739 = vmatprep.subr.bf16.mxu0 0
    %5740 = vmatpush1.bf16.msra.mxu0 0
    %5741 = vmatprep.subr.bf16.mxu0 0
    %5742 = vmatpush1.bf16.msra.mxu0 0
    %5743 = vmatprep.subr.bf16.mxu0 0
    %5744 = vmatpush1.bf16.msra.mxu0 0
    %5745 = vmatprep.subr.bf16.mxu0 0
    %5746 = vmatpush1.bf16.msra.mxu0 0
    %5747 = vmatprep.mubr.bf16.mxu0 0
    %5748 = vmatmul.mubr.bf16.gmra.mrb[0].mxu0 %v5713
    %v5749 = vpop.f32.mrb[0].mxu0
    %v5750 = vadd.f32 0.0, %v5749
    %v5751 = vpop.f32.mrb[0].mxu0
    %v5752 = vpop.f32.mrb[0].mxu0
    %v5753 = vadd.f32 0.0, %v5752
    %v5754 = vpop.f32.mrb[0].mxu0
    %5755 = vdwg.mxu0
    %v5756 = vadd.f32 %v5710, %v5750
    %v5757 = vadd.f32 %v5711, %v5753
    %v5758 = vxor.u32 %v5756, 2147483648
    %v5759 = vxor.u32 %v5757, 2147483648
    %v5760 = vmul.f32 %v5758, 1.442695
    %v5761 = vpow.pop %v5760
    %v5762 = vmul.f32 %v5759, 1.442695
    %v5763 = vpow.pop %v5762
    %v5764 = vadd.f32 %v5761, 1.0
    %v5765 = vadd.f32 %v5763, 1.0
    %v5766 = vrcp.pop %v5764
    %v5767 = vmul.f32 1.0, %v5766
    %v5768 = vrcp.pop %v5765
    %v5769 = vmul.f32 1.0, %v5768
    %v5770 = vtanh.pop %v5756
    %v5771 = vtanh.pop %v5757
    %v5772 = vmul.f32 %v5767, %v5688
    %v5773 = vmul.f32 %v5769, %v5689
    %5776 = vrot.lane.b32.xlu0 %v5770, 32
    %v5777 = vpop.permute.xlu0 %5776
    %5778 = vrot.lane.b32.xlu0 %v5771, 32
    %v5779 = vpop.permute.xlu0 %5778
    %v5782 = vmul.f32 %v5767, %v5777
    %v5783 = vmul.f32 %v5769, %v5779
    %5786 = vrot.lane.b32.xlu0 %v5782, 32
    %v5787 = vpop.permute.xlu0 %5786
    %5788 = vrot.lane.b32.xlu0 %v5783, 32
    %v5789 = vpop.permute.xlu0 %5788
    %v5792 = vadd.f32 %v5772, %v5787
    %v5793 = vadd.f32 %v5773, %v5789
    %v5794 = vtanh.pop %v5792
    %v5795 = vtanh.pop %v5793
    %5798 = vrot.lane.b32.xlu0 %v5794, 32
    %v5799 = vpop.permute.xlu0 %5798
    %5800 = vrot.lane.b32.xlu0 %v5795, 32
    %v5801 = vpop.permute.xlu0 %5800
    %v5804 = vmul.f32 %v5767, %v5799
    %v5805 = vmul.f32 %v5769, %v5801
    %v5806 = vpack.c.bf16 %v5805, %v5804
    %5808 = vrot.lane.b32.xlu0 %v5806, 64
    %v5809 = vpop.permute.xlu0 %5808
    %s5811 = scalar_lea.vmem [#allocation10], 32
    %5812 = vst.msk [vmem:[%s5811] sm:$0xff] %vm514, %v5809
    %s5813 = scalar_lea.vmem [#allocation4], 80
    %v5814 = vld [vmem:[%s5813] sm:$0xff]
    %v5815 = vld [vmem:[%s5813 + $0x8] sm:$0xff]
    %v5817 = vsel %vm514, %v5809, 0
    %5819 = vmatprep.subr.bf16.mxu0 0
    %5820 = vmatpush1.bf16.msra.mxu0 %v5293
    %5821 = vmatprep.subr.bf16.mxu0 0
    %5822 = vmatpush1.bf16.msra.mxu0 %v5294
    %5823 = vmatprep.subr.bf16.mxu0 0
    %5824 = vmatpush1.bf16.msra.mxu0 0
    %5825 = vmatprep.subr.bf16.mxu0 0
    %5826 = vmatpush1.bf16.msra.mxu0 0
    %5827 = vmatprep.subr.bf16.mxu0 0
    %5828 = vmatpush1.bf16.msra.mxu0 0
    %5829 = vmatprep.subr.bf16.mxu0 0
    %5830 = vmatpush1.bf16.msra.mxu0 0
    %5831 = vmatprep.subr.bf16.mxu0 0
    %5832 = vmatpush1.bf16.msra.mxu0 0
    %5833 = vmatprep.subr.bf16.mxu0 0
    %5834 = vmatpush1.bf16.msra.mxu0 0
    %5835 = vmatprep.subr.bf16.mxu0 0
    %5836 = vmatpush1.bf16.msra.mxu0 0
    %5837 = vmatprep.subr.bf16.mxu0 0
    %5838 = vmatpush1.bf16.msra.mxu0 0
    %5839 = vmatprep.subr.bf16.mxu0 0
    %5840 = vmatpush1.bf16.msra.mxu0 0
    %5841 = vmatprep.subr.bf16.mxu0 0
    %5842 = vmatpush1.bf16.msra.mxu0 0
    %5843 = vmatprep.subr.bf16.mxu0 0
    %5844 = vmatpush1.bf16.msra.mxu0 0
    %5845 = vmatprep.subr.bf16.mxu0 0
    %5846 = vmatpush1.bf16.msra.mxu0 0
    %5847 = vmatprep.subr.bf16.mxu0 0
    %5848 = vmatpush1.bf16.msra.mxu0 0
    %5849 = vmatprep.subr.bf16.mxu0 0
    %5850 = vmatpush1.bf16.msra.mxu0 0
    %5851 = vmatprep.mubr.bf16.mxu0 0
    %5852 = vmatmul.mubr.bf16.gmra.mrb[0].mxu0 %v5817
    %v5853 = vpop.f32.mrb[0].mxu0
    %v5854 = vadd.f32 0.0, %v5853
    %v5855 = vpop.f32.mrb[0].mxu0
    %v5856 = vpop.f32.mrb[0].mxu0
    %v5857 = vadd.f32 0.0, %v5856
    %v5858 = vpop.f32.mrb[0].mxu0
    %5859 = vdwg.mxu0
    %v5860 = vadd.f32 %v5814, %v5854
    %v5861 = vadd.f32 %v5815, %v5857
    %v5862 = vxor.u32 %v5860, 2147483648
    %v5863 = vxor.u32 %v5861, 2147483648
    %v5864 = vmul.f32 %v5862, 1.442695
    %v5865 = vpow.pop %v5864
    %v5866 = vmul.f32 %v5863, 1.442695
    %v5867 = vpow.pop %v5866
    %v5868 = vadd.f32 %v5865, 1.0
    %v5869 = vadd.f32 %v5867, 1.0
    %v5870 = vrcp.pop %v5868
    %v5871 = vmul.f32 1.0, %v5870
    %v5872 = vrcp.pop %v5869
    %v5873 = vmul.f32 1.0, %v5872
    %v5874 = vtanh.pop %v5860
    %v5875 = vtanh.pop %v5861
    %v5876 = vmul.f32 %v5871, %v5792
    %v5877 = vmul.f32 %v5873, %v5793
    %5880 = vrot.lane.b32.xlu0 %v5874, 32
    %v5881 = vpop.permute.xlu0 %5880
    %5882 = vrot.lane.b32.xlu0 %v5875, 32
    %v5883 = vpop.permute.xlu0 %5882
    %v5886 = vmul.f32 %v5871, %v5881
    %v5887 = vmul.f32 %v5873, %v5883
    %5890 = vrot.lane.b32.xlu0 %v5886, 32
    %v5891 = vpop.permute.xlu0 %5890
    %5892 = vrot.lane.b32.xlu0 %v5887, 32
    %v5893 = vpop.permute.xlu0 %5892
    %v5896 = vadd.f32 %v5876, %v5891
    %v5897 = vadd.f32 %v5877, %v5893
    %v5898 = vtanh.pop %v5896
    %v5899 = vtanh.pop %v5897
    %5902 = vrot.lane.b32.xlu0 %v5898, 32
    %v5903 = vpop.permute.xlu0 %5902
    %5904 = vrot.lane.b32.xlu0 %v5899, 32
    %v5905 = vpop.permute.xlu0 %5904
    %v5908 = vmul.f32 %v5871, %v5903
    %v5909 = vmul.f32 %v5873, %v5905
    %v5910 = vpack.c.bf16 %v5909, %v5908
    %5912 = vrot.lane.b32.xlu0 %v5910, 64
    %v5913 = vpop.permute.xlu0 %5912
    %s5915 = scalar_lea.vmem [#allocation10], 40
    %5916 = vst.msk [vmem:[%s5915] sm:$0xff] %vm514, %v5913
    %s5917 = scalar_lea.vmem [#allocation4], 96
    %v5918 = vld [vmem:[%s5917] sm:$0xff]
    %v5919 = vld [vmem:[%s5917 + $0x8] sm:$0xff]
    %v5921 = vsel %vm514, %v5913, 0
    %5923 = vmatprep.subr.bf16.mxu0 0
    %5924 = vmatpush1.bf16.msra.mxu0 %v5293
    %5925 = vmatprep.subr.bf16.mxu0 0
    %5926 = vmatpush1.bf16.msra.mxu0 %v5294
    %5927 = vmatprep.subr.bf16.mxu0 0
    %5928 = vmatpush1.bf16.msra.mxu0 0
    %5929 = vmatprep.subr.bf16.mxu0 0
    %5930 = vmatpush1.bf16.msra.mxu0 0
    %5931 = vmatprep.subr.bf16.mxu0 0
    %5932 = vmatpush1.bf16.msra.mxu0 0
    %5933 = vmatprep.subr.bf16.mxu0 0
    %5934 = vmatpush1.bf16.msra.mxu0 0
    %5935 = vmatprep.subr.bf16.mxu0 0
    %5936 = vmatpush1.bf16.msra.mxu0 0
    %5937 = vmatprep.subr.bf16.mxu0 0
    %5938 = vmatpush1.bf16.msra.mxu0 0
    %5939 = vmatprep.subr.bf16.mxu0 0
    %5940 = vmatpush1.bf16.msra.mxu0 0
    %5941 = vmatprep.subr.bf16.mxu0 0
    %5942 = vmatpush1.bf16.msra.mxu0 0
    %5943 = vmatprep.subr.bf16.mxu0 0
    %5944 = vmatpush1.bf16.msra.mxu0 0
    %5945 = vmatprep.subr.bf16.mxu0 0
    %5946 = vmatpush1.bf16.msra.mxu0 0
    %5947 = vmatprep.subr.bf16.mxu0 0
    %5948 = vmatpush1.bf16.msra.mxu0 0
    %5949 = vmatprep.subr.bf16.mxu0 0
    %5950 = vmatpush1.bf16.msra.mxu0 0
    %5951 = vmatprep.subr.bf16.mxu0 0
    %5952 = vmatpush1.bf16.msra.mxu0 0
    %5953 = vmatprep.subr.bf16.mxu0 0
    %5954 = vmatpush1.bf16.msra.mxu0 0
    %5955 = vmatprep.mubr.bf16.mxu0 0
    %5956 = vmatmul.mubr.bf16.gmra.mrb[0].mxu0 %v5921
    %v5957 = vpop.f32.mrb[0].mxu0
    %v5958 = vadd.f32 0.0, %v5957
    %v5959 = vpop.f32.mrb[0].mxu0
    %v5960 = vpop.f32.mrb[0].mxu0
    %v5961 = vadd.f32 0.0, %v5960
    %v5962 = vpop.f32.mrb[0].mxu0
    %5963 = vdwg.mxu0
    %v5964 = vadd.f32 %v5918, %v5958
    %v5965 = vadd.f32 %v5919, %v5961
    %v5966 = vxor.u32 %v5964, 2147483648
    %v5967 = vxor.u32 %v5965, 2147483648
    %v5968 = vmul.f32 %v5966, 1.442695
    %v5969 = vpow.pop %v5968
    %v5970 = vmul.f32 %v5967, 1.442695
    %v5971 = vpow.pop %v5970
    %v5972 = vadd.f32 %v5969, 1.0
    %v5973 = vadd.f32 %v5971, 1.0
    %v5974 = vrcp.pop %v5972
    %v5975 = vmul.f32 1.0, %v5974
    %v5976 = vrcp.pop %v5973
    %v5977 = vmul.f32 1.0, %v5976
    %v5978 = vtanh.pop %v5964
    %v5979 = vtanh.pop %v5965
    %v5980 = vmul.f32 %v5975, %v5896
    %v5981 = vmul.f32 %v5977, %v5897
    %5984 = vrot.lane.b32.xlu0 %v5978, 32
    %v5985 = vpop.permute.xlu0 %5984
    %5986 = vrot.lane.b32.xlu0 %v5979, 32
    %v5987 = vpop.permute.xlu0 %5986
    %v5990 = vmul.f32 %v5975, %v5985
    %v5991 = vmul.f32 %v5977, %v5987
    %5994 = vrot.lane.b32.xlu0 %v5990, 32
    %v5995 = vpop.permute.xlu0 %5994
    %5996 = vrot.lane.b32.xlu0 %v5991, 32
    %v5997 = vpop.permute.xlu0 %5996
    %v6000 = vadd.f32 %v5980, %v5995
    %v6001 = vadd.f32 %v5981, %v5997
    %v6002 = vtanh.pop %v6000
    %v6003 = vtanh.pop %v6001
    %6006 = vrot.lane.b32.xlu0 %v6002, 32
    %v6007 = vpop.permute.xlu0 %6006
    %6008 = vrot.lane.b32.xlu0 %v6003, 32
    %v6009 = vpop.permute.xlu0 %6008
    %v6012 = vmul.f32 %v5975, %v6007
    %v6013 = vmul.f32 %v5977, %v6009
    %v6014 = vpack.c.bf16 %v6013, %v6012
    %6016 = vrot.lane.b32.xlu0 %v6014, 64
    %v6017 = vpop.permute.xlu0 %6016
    %s6019 = scalar_lea.vmem [#allocation10], 48
    %6020 = vst.msk [vmem:[%s6019] sm:$0xff] %vm514, %v6017
    %s6021 = scalar_lea.vmem [#allocation4], 112
    %v6022 = vld [vmem:[%s6021] sm:$0xff]
    %v6023 = vld [vmem:[%s6021 + $0x8] sm:$0xff]
    %v6025 = vsel %vm514, %v6017, 0
    %6027 = vmatprep.subr.bf16.mxu0 0
    %6028 = vmatpush1.bf16.msra.mxu0 %v5293
    %6029 = vmatprep.subr.bf16.mxu0 0
    %6030 = vmatpush1.bf16.msra.mxu0 %v5294
    %6031 = vmatprep.subr.bf16.mxu0 0
    %6032 = vmatpush1.bf16.msra.mxu0 0
    %6033 = vmatprep.subr.bf16.mxu0 0
    %6034 = vmatpush1.bf16.msra.mxu0 0
    %6035 = vmatprep.subr.bf16.mxu0 0
    %6036 = vmatpush1.bf16.msra.mxu0 0
    %6037 = vmatprep.subr.bf16.mxu0 0
    %6038 = vmatpush1.bf16.msra.mxu0 0
    %6039 = vmatprep.subr.bf16.mxu0 0
    %6040 = vmatpush1.bf16.msra.mxu0 0
    %6041 = vmatprep.subr.bf16.mxu0 0
    %6042 = vmatpush1.bf16.msra.mxu0 0
    %6043 = vmatprep.subr.bf16.mxu0 0
    %6044 = vmatpush1.bf16.msra.mxu0 0
    %6045 = vmatprep.subr.bf16.mxu0 0
    %6046 = vmatpush1.bf16.msra.mxu0 0
    %6047 = vmatprep.subr.bf16.mxu0 0
    %6048 = vmatpush1.bf16.msra.mxu0 0
    %6049 = vmatprep.subr.bf16.mxu0 0
    %6050 = vmatpush1.bf16.msra.mxu0 0
    %6051 = vmatprep.subr.bf16.mxu0 0
    %6052 = vmatpush1.bf16.msra.mxu0 0
    %6053 = vmatprep.subr.bf16.mxu0 0
    %6054 = vmatpush1.bf16.msra.mxu0 0
    %6055 = vmatprep.subr.bf16.mxu0 0
    %6056 = vmatpush1.bf16.msra.mxu0 0
    %6057 = vmatprep.subr.bf16.mxu0 0
    %6058 = vmatpush1.bf16.msra.mxu0 0
    %6059 = vmatprep.mubr.bf16.mxu0 0
    %6060 = vmatmul.mubr.bf16.gmra.mrb[0].mxu0 %v6025
    %v6061 = vpop.f32.mrb[0].mxu0
    %v6062 = vadd.f32 0.0, %v6061
    %v6063 = vpop.f32.mrb[0].mxu0
    %v6064 = vpop.f32.mrb[0].mxu0
    %v6065 = vadd.f32 0.0, %v6064
    %v6066 = vpop.f32.mrb[0].mxu0
    %6067 = vdwg.mxu0
    %v6068 = vadd.f32 %v6022, %v6062
    %v6069 = vadd.f32 %v6023, %v6065
    %v6070 = vxor.u32 %v6068, 2147483648
    %v6071 = vxor.u32 %v6069, 2147483648
    %v6072 = vmul.f32 %v6070, 1.442695
    %v6073 = vpow.pop %v6072
    %v6074 = vmul.f32 %v6071, 1.442695
    %v6075 = vpow.pop %v6074
    %v6076 = vadd.f32 %v6073, 1.0
    %v6077 = vadd.f32 %v6075, 1.0
    %v6078 = vrcp.pop %v6076
    %v6079 = vmul.f32 1.0, %v6078
    %v6080 = vrcp.pop %v6077
    %v6081 = vmul.f32 1.0, %v6080
    %v6082 = vtanh.pop %v6068
    %v6083 = vtanh.pop %v6069
    %v6084 = vmul.f32 %v6079, %v6000
    %v6085 = vmul.f32 %v6081, %v6001
    %6088 = vrot.lane.b32.xlu0 %v6082, 32
    %v6089 = vpop.permute.xlu0 %6088
    %6090 = vrot.lane.b32.xlu0 %v6083, 32
    %v6091 = vpop.permute.xlu0 %6090
    %v6094 = vmul.f32 %v6079, %v6089
    %v6095 = vmul.f32 %v6081, %v6091
    %6098 = vrot.lane.b32.xlu0 %v6094, 32
    %v6099 = vpop.permute.xlu0 %6098
    %6100 = vrot.lane.b32.xlu0 %v6095, 32
    %v6101 = vpop.permute.xlu0 %6100
    %v6104 = vadd.f32 %v6084, %v6099
    %v6105 = vadd.f32 %v6085, %v6101
    %v6106 = vtanh.pop %v6104
    %v6107 = vtanh.pop %v6105
    %6110 = vrot.lane.b32.xlu0 %v6106, 32
    %v6111 = vpop.permute.xlu0 %6110
    %6112 = vrot.lane.b32.xlu0 %v6107, 32
    %v6113 = vpop.permute.xlu0 %6112
    %v6116 = vmul.f32 %v6079, %v6111
    %v6117 = vmul.f32 %v6081, %v6113
    %v6118 = vpack.c.bf16 %v6117, %v6116
    %6120 = vrot.lane.b32.xlu0 %v6118, 64
    %v6121 = vpop.permute.xlu0 %6120
    %s6123 = scalar_lea.vmem [#allocation10], 56
    %6124 = vst.msk [vmem:[%s6123] sm:$0xff] %vm514, %v6121
    %v6125 = vld [vmem:[#allocation10] sm:$0xff]
    %v6126 = vld [vmem:[#allocation10 + $0x8] sm:$0xff]
    %v6127 = vld [vmem:[#allocation10 + $0x10] sm:$0xff]
    %v6128 = vld [vmem:[#allocation10 + $0x18] sm:$0xff]
    %v6129 = vld [vmem:[#allocation10 + $0x20] sm:$0xff]
    %v6130 = vld [vmem:[#allocation10 + $0x28] sm:$0xff]
    %v6131 = vld [vmem:[#allocation10 + $0x30] sm:$0xff]
    %v6132 = vld [vmem:[#allocation10 + $0x38] sm:$0xff]
    %v6133 = vld [vmem:[#allocation11 + $0x140] sm:$0xf]
    %v6134 = vld [vmem:[#allocation11 + $0x148] sm:$0xf]
    %v6135 = vld [vmem:[#allocation11 + $0x150] sm:$0xf]
    %v6136 = vld [vmem:[#allocation11 + $0x158] sm:$0xf]
    %v6137 = vld [vmem:[%s3 + $0x40] ss:$0 sm:$0xff]
    %v6142 = vunpack.c.l.b16 %v6133
    %v6143 = vunpack.c.l.b16 %v6134
    %v6144 = vunpack.c.l.b16 %v6135
    %v6145 = vunpack.c.l.b16 %v6136
    %v6146 = vpack.c.b16 %v6143, %v6142
    %v6147 = vpack.c.b16 %v6145, %v6144
    %v6151 = vsel %vm514, %v6125, 0
    %v6154 = vsel %vm514, %v6126, 0
    %v6157 = vsel %vm514, %v6127, 0
    %v6160 = vsel %vm514, %v6128, 0
    %v6163 = vsel %vm514, %v6129, 0
    %v6166 = vsel %vm514, %v6130, 0
    %v6169 = vsel %vm514, %v6131, 0
    %v6172 = vsel %vm514, %v6132, 0
    %6174 = vmatprep.subr.bf16.mxu0 0
    %6175 = vmatpush1.bf16.msra.mxu0 %v6146
    %6176 = vmatprep.subr.bf16.mxu0 0
    %6177 = vmatpush1.bf16.msra.mxu0 %v6147
    %6178 = vmatprep.subr.bf16.mxu0 0
    %6179 = vmatpush1.bf16.msra.mxu0 0
    %6180 = vmatprep.subr.bf16.mxu0 0
    %6181 = vmatpush1.bf16.msra.mxu0 0
    %6182 = vmatprep.subr.bf16.mxu0 0
    %6183 = vmatpush1.bf16.msra.mxu0 0
    %6184 = vmatprep.subr.bf16.mxu0 0
    %6185 = vmatpush1.bf16.msra.mxu0 0
    %6186 = vmatprep.subr.bf16.mxu0 0
    %6187 = vmatpush1.bf16.msra.mxu0 0
    %6188 = vmatprep.subr.bf16.mxu0 0
    %6189 = vmatpush1.bf16.msra.mxu0 0
    %6190 = vmatprep.subr.bf16.mxu0 0
    %6191 = vmatpush1.bf16.msra.mxu0 0
    %6192 = vmatprep.subr.bf16.mxu0 0
    %6193 = vmatpush1.bf16.msra.mxu0 0
    %6194 = vmatprep.subr.bf16.mxu0 0
    %6195 = vmatpush1.bf16.msra.mxu0 0
    %6196 = vmatprep.subr.bf16.mxu0 0
    %6197 = vmatpush1.bf16.msra.mxu0 0
    %6198 = vmatprep.subr.bf16.mxu0 0
    %6199 = vmatpush1.bf16.msra.mxu0 0
    %6200 = vmatprep.subr.bf16.mxu0 0
    %6201 = vmatpush1.bf16.msra.mxu0 0
    %6202 = vmatprep.subr.bf16.mxu0 0
    %6203 = vmatpush1.bf16.msra.mxu0 0
    %6204 = vmatprep.subr.bf16.mxu0 0
    %6205 = vmatpush1.bf16.msra.mxu0 0
    %6206 = vmatprep.mubr.bf16.mxu0 0
    %6207 = vmatmul.mubr.bf16.gmra.mrb[0].mxu0 %v6151
    %v6208 = vpop.f32.mrb[0].mxu0
    %v6209 = vadd.f32 %v6137, %v6208
    %v6210 = vpop.f32.mrb[0].mxu0
    %v6211 = vpop.f32.mrb[0].mxu0
    %v6212 = vadd.f32 %v6137, %v6211
    %v6213 = vpop.f32.mrb[0].mxu0
    %6214 = vmatprep.mubr.bf16.mxu0 0
    %6215 = vmatmul.mubr.bf16.gmra.mrb[0].mxu0 %v6154
    %v6216 = vpop.f32.mrb[0].mxu0
    %v6217 = vadd.f32 %v6137, %v6216
    %v6218 = vpop.f32.mrb[0].mxu0
    %v6219 = vpop.f32.mrb[0].mxu0
    %v6220 = vadd.f32 %v6137, %v6219
    %v6221 = vpop.f32.mrb[0].mxu0
    %6222 = vmatprep.mubr.bf16.mxu0 0
    %6223 = vmatmul.mubr.bf16.gmra.mrb[0].mxu0 %v6157
    %v6224 = vpop.f32.mrb[0].mxu0
    %v6225 = vadd.f32 %v6137, %v6224
    %v6226 = vpop.f32.mrb[0].mxu0
    %v6227 = vpop.f32.mrb[0].mxu0
    %v6228 = vadd.f32 %v6137, %v6227
    %v6229 = vpop.f32.mrb[0].mxu0
    %6230 = vmatprep.mubr.bf16.mxu0 0
    %6231 = vmatmul.mubr.bf16.gmra.mrb[0].mxu0 %v6160
    %v6232 = vpop.f32.mrb[0].mxu0
    %v6233 = vadd.f32 %v6137, %v6232
    %v6234 = vpop.f32.mrb[0].mxu0
    %v6235 = vpop.f32.mrb[0].mxu0
    %v6236 = vadd.f32 %v6137, %v6235
    %v6237 = vpop.f32.mrb[0].mxu0
    %6238 = vmatprep.mubr.bf16.mxu0 0
    %6239 = vmatmul.mubr.bf16.gmra.mrb[0].mxu0 %v6163
    %v6240 = vpop.f32.mrb[0].mxu0
    %v6241 = vadd.f32 %v6137, %v6240
    %v6242 = vpop.f32.mrb[0].mxu0
    %v6243 = vpop.f32.mrb[0].mxu0
    %v6244 = vadd.f32 %v6137, %v6243
    %v6245 = vpop.f32.mrb[0].mxu0
    %6246 = vmatprep.mubr.bf16.mxu0 0
    %6247 = vmatmul.mubr.bf16.gmra.mrb[0].mxu0 %v6166
    %v6248 = vpop.f32.mrb[0].mxu0
    %v6249 = vadd.f32 %v6137, %v6248
    %v6250 = vpop.f32.mrb[0].mxu0
    %v6251 = vpop.f32.mrb[0].mxu0
    %v6252 = vadd.f32 %v6137, %v6251
    %v6253 = vpop.f32.mrb[0].mxu0
    %6254 = vmatprep.mubr.bf16.mxu0 0
    %6255 = vmatmul.mubr.bf16.gmra.mrb[0].mxu0 %v6169
    %v6256 = vpop.f32.mrb[0].mxu0
    %v6257 = vadd.f32 %v6137, %v6256
    %v6258 = vpop.f32.mrb[0].mxu0
    %v6259 = vpop.f32.mrb[0].mxu0
    %v6260 = vadd.f32 %v6137, %v6259
    %v6261 = vpop.f32.mrb[0].mxu0
    %6262 = vmatprep.mubr.bf16.mxu0 0
    %6263 = vmatmul.mubr.bf16.gmra.mrb[0].mxu0 %v6172
    %v6264 = vpop.f32.mrb[0].mxu0
    %v6265 = vadd.f32 %v6137, %v6264
    %v6266 = vpop.f32.mrb[0].mxu0
    %v6267 = vpop.f32.mrb[0].mxu0
    %v6268 = vadd.f32 %v6137, %v6267
    %v6269 = vpop.f32.mrb[0].mxu0
    %6270 = vdwg.mxu0
    %6271 = vst [vmem:[#allocation3] sm:$0xff] %v6209
    %6272 = vst [vmem:[#allocation3 + $0x8] sm:$0xff] %v6212
    %6273 = vst [vmem:[#allocation3 + $0x10] sm:$0xff] %v6217
    %6274 = vst [vmem:[#allocation3 + $0x18] sm:$0xff] %v6220
    %6275 = vst [vmem:[#allocation3 + $0x20] sm:$0xff] %v6225
    %6276 = vst [vmem:[#allocation3 + $0x28] sm:$0xff] %v6228
    %6277 = vst [vmem:[#allocation3 + $0x30] sm:$0xff] %v6233
    %6278 = vst [vmem:[#allocation3 + $0x38] sm:$0xff] %v6236
    %6279 = vst [vmem:[#allocation3 + $0x40] sm:$0xff] %v6241
    %6280 = vst [vmem:[#allocation3 + $0x48] sm:$0xff] %v6244
    %6281 = vst [vmem:[#allocation3 + $0x50] sm:$0xff] %v6249
    %6282 = vst [vmem:[#allocation3 + $0x58] sm:$0xff] %v6252
    %6283 = vst [vmem:[#allocation3 + $0x60] sm:$0xff] %v6257
    %6284 = vst [vmem:[#allocation3 + $0x68] sm:$0xff] %v6260
    %6285 = vst [vmem:[#allocation3 + $0x70] sm:$0xff] %v6265
    %6286 = vst [vmem:[#allocation3 + $0x78] sm:$0xff] %v6268
    %v6287 = vld [vmem:[#allocation11 + $0x160] sm:$0xf]
    %v6288 = vld [vmem:[#allocation11 + $0x168] sm:$0xf]
    %v6289 = vld [vmem:[#allocation11 + $0x170] sm:$0xf]
    %v6290 = vld [vmem:[#allocation11 + $0x178] sm:$0xf]
    %v6291 = vld [vmem:[#allocation3] sm:$0xff]
    %v6292 = vld [vmem:[#allocation3 + $0x8] sm:$0xff]
    %v6297 = vunpack.c.l.b16 %v6287
    %v6298 = vunpack.c.l.b16 %v6288
    %v6299 = vunpack.c.l.b16 %v6289
    %v6300 = vunpack.c.l.b16 %v6290
    %v6301 = vpack.c.b16 %v6298, %v6297
    %v6302 = vpack.c.b16 %v6300, %v6299
    %v6306 = vsel %vm514, %v4261, 0
    %6308 = vmatprep.subr.bf16.mxu0 0
    %6309 = vmatpush1.bf16.msra.mxu0 %v6301
    %6310 = vmatprep.subr.bf16.mxu0 0
    %6311 = vmatpush1.bf16.msra.mxu0 %v6302
    %6312 = vmatprep.subr.bf16.mxu0 0
    %6313 = vmatpush1.bf16.msra.mxu0 0
    %6314 = vmatprep.subr.bf16.mxu0 0
    %6315 = vmatpush1.bf16.msra.mxu0 0
    %6316 = vmatprep.subr.bf16.mxu0 0
    %6317 = vmatpush1.bf16.msra.mxu0 0
    %6318 = vmatprep.subr.bf16.mxu0 0
    %6319 = vmatpush1.bf16.msra.mxu0 0
    %6320 = vmatprep.subr.bf16.mxu0 0
    %6321 = vmatpush1.bf16.msra.mxu0 0
    %6322 = vmatprep.subr.bf16.mxu0 0
    %6323 = vmatpush1.bf16.msra.mxu0 0
    %6324 = vmatprep.subr.bf16.mxu0 0
    %6325 = vmatpush1.bf16.msra.mxu0 0
    %6326 = vmatprep.subr.bf16.mxu0 0
    %6327 = vmatpush1.bf16.msra.mxu0 0
    %6328 = vmatprep.subr.bf16.mxu0 0
    %6329 = vmatpush1.bf16.msra.mxu0 0
    %6330 = vmatprep.subr.bf16.mxu0 0
    %6331 = vmatpush1.bf16.msra.mxu0 0
    %6332 = vmatprep.subr.bf16.mxu0 0
    %6333 = vmatpush1.bf16.msra.mxu0 0
    %6334 = vmatprep.subr.bf16.mxu0 0
    %6335 = vmatpush1.bf16.msra.mxu0 0
    %6336 = vmatprep.subr.bf16.mxu0 0
    %6337 = vmatpush1.bf16.msra.mxu0 0
    %6338 = vmatprep.subr.bf16.mxu0 0
    %6339 = vmatpush1.bf16.msra.mxu0 0
    %6340 = vmatprep.mubr.bf16.mxu0 0
    %6341 = vmatmul.mubr.bf16.gmra.mrb[0].mxu0 %v6306
    %v6342 = vpop.f32.mrb[0].mxu0
    %v6343 = vadd.f32 0.0, %v6342
    %v6344 = vpop.f32.mrb[0].mxu0
    %v6345 = vpop.f32.mrb[0].mxu0
    %v6346 = vadd.f32 0.0, %v6345
    %v6347 = vpop.f32.mrb[0].mxu0
    %6348 = vdwg.mxu0
    %v6349 = vadd.f32 %v6291, %v6343
    %v6350 = vadd.f32 %v6292, %v6346
    %v6351 = vxor.u32 %v6349, 2147483648
    %v6352 = vxor.u32 %v6350, 2147483648
    %v6353 = vmul.f32 %v6351, 1.442695
    %v6354 = vpow.pop %v6353
    %v6355 = vmul.f32 %v6352, 1.442695
    %v6356 = vpow.pop %v6355
    %v6357 = vadd.f32 %v6354, 1.0
    %v6358 = vadd.f32 %v6356, 1.0
    %v6359 = vrcp.pop %v6357
    %v6360 = vmul.f32 1.0, %v6359
    %v6361 = vrcp.pop %v6358
    %v6362 = vmul.f32 1.0, %v6361
    %v6363 = vtanh.pop %v6349
    %v6364 = vtanh.pop %v6350
    %v6365 = vmul.f32 %v6360, %v4150
    %v6366 = vmul.f32 %v6362, %v4151
    %6369 = vrot.lane.b32.xlu0 %v6363, 32
    %v6370 = vpop.permute.xlu0 %6369
    %6371 = vrot.lane.b32.xlu0 %v6364, 32
    %v6372 = vpop.permute.xlu0 %6371
    %v6375 = vmul.f32 %v6360, %v6370
    %v6376 = vmul.f32 %v6362, %v6372
    %6379 = vrot.lane.b32.xlu0 %v6375, 32
    %v6380 = vpop.permute.xlu0 %6379
    %6381 = vrot.lane.b32.xlu0 %v6376, 32
    %v6382 = vpop.permute.xlu0 %6381
    %v6385 = vadd.f32 %v6365, %v6380
    %v6386 = vadd.f32 %v6366, %v6382
    %v6387 = vtanh.pop %v6385
    %v6388 = vtanh.pop %v6386
    %6391 = vrot.lane.b32.xlu0 %v6387, 32
    %v6392 = vpop.permute.xlu0 %6391
    %6393 = vrot.lane.b32.xlu0 %v6388, 32
    %v6394 = vpop.permute.xlu0 %6393
    %v6397 = vmul.f32 %v6360, %v6392
    %v6398 = vmul.f32 %v6362, %v6394
    %v6399 = vpack.c.bf16 %v6398, %v6397
    %6401 = vrot.lane.b32.xlu0 %v6399, 64
    %v6402 = vpop.permute.xlu0 %6401
    %6404 = vst.msk [vmem:[#allocation9] sm:$0xff] %vm514, %v6402
    %v6405 = vld [vmem:[%s4389] sm:$0xff]
    %v6406 = vld [vmem:[%s4389 + $0x8] sm:$0xff]
    %v6408 = vsel %vm514, %v6402, 0
    %6410 = vmatprep.subr.bf16.mxu0 0
    %6411 = vmatpush1.bf16.msra.mxu0 %v6301
    %6412 = vmatprep.subr.bf16.mxu0 0
    %6413 = vmatpush1.bf16.msra.mxu0 %v6302
    %6414 = vmatprep.subr.bf16.mxu0 0
    %6415 = vmatpush1.bf16.msra.mxu0 0
    %6416 = vmatprep.subr.bf16.mxu0 0
    %6417 = vmatpush1.bf16.msra.mxu0 0
    %6418 = vmatprep.subr.bf16.mxu0 0
    %6419 = vmatpush1.bf16.msra.mxu0 0
    %6420 = vmatprep.subr.bf16.mxu0 0
    %6421 = vmatpush1.bf16.msra.mxu0 0
    %6422 = vmatprep.subr.bf16.mxu0 0
    %6423 = vmatpush1.bf16.msra.mxu0 0
    %6424 = vmatprep.subr.bf16.mxu0 0
    %6425 = vmatpush1.bf16.msra.mxu0 0
    %6426 = vmatprep.subr.bf16.mxu0 0
    %6427 = vmatpush1.bf16.msra.mxu0 0
    %6428 = vmatprep.subr.bf16.mxu0 0
    %6429 = vmatpush1.bf16.msra.mxu0 0
    %6430 = vmatprep.subr.bf16.mxu0 0
    %6431 = vmatpush1.bf16.msra.mxu0 0
    %6432 = vmatprep.subr.bf16.mxu0 0
    %6433 = vmatpush1.bf16.msra.mxu0 0
    %6434 = vmatprep.subr.bf16.mxu0 0
    %6435 = vmatpush1.bf16.msra.mxu0 0
    %6436 = vmatprep.subr.bf16.mxu0 0
    %6437 = vmatpush1.bf16.msra.mxu0 0
    %6438 = vmatprep.subr.bf16.mxu0 0
    %6439 = vmatpush1.bf16.msra.mxu0 0
    %6440 = vmatprep.subr.bf16.mxu0 0
    %6441 = vmatpush1.bf16.msra.mxu0 0
    %6442 = vmatprep.mubr.bf16.mxu0 0
    %6443 = vmatmul.mubr.bf16.gmra.mrb[0].mxu0 %v6408
    %v6444 = vpop.f32.mrb[0].mxu0
    %v6445 = vadd.f32 0.0, %v6444
    %v6446 = vpop.f32.mrb[0].mxu0
    %v6447 = vpop.f32.mrb[0].mxu0
    %v6448 = vadd.f32 0.0, %v6447
    %v6449 = vpop.f32.mrb[0].mxu0
    %6450 = vdwg.mxu0
    %v6451 = vadd.f32 %v6405, %v6445
    %v6452 = vadd.f32 %v6406, %v6448
    %v6453 = vxor.u32 %v6451, 2147483648
    %v6454 = vxor.u32 %v6452, 2147483648
    %v6455 = vmul.f32 %v6453, 1.442695
    %v6456 = vpow.pop %v6455
    %v6457 = vmul.f32 %v6454, 1.442695
    %v6458 = vpow.pop %v6457
    %v6459 = vadd.f32 %v6456, 1.0
    %v6460 = vadd.f32 %v6458, 1.0
    %v6461 = vrcp.pop %v6459
    %v6462 = vmul.f32 1.0, %v6461
    %v6463 = vrcp.pop %v6460
    %v6464 = vmul.f32 1.0, %v6463
    %v6465 = vtanh.pop %v6451
    %v6466 = vtanh.pop %v6452
    %v6467 = vmul.f32 %v6462, %v6385
    %v6468 = vmul.f32 %v6464, %v6386
    %6471 = vrot.lane.b32.xlu0 %v6465, 32
    %v6472 = vpop.permute.xlu0 %6471
    %6473 = vrot.lane.b32.xlu0 %v6466, 32
    %v6474 = vpop.permute.xlu0 %6473
    %v6477 = vmul.f32 %v6462, %v6472
    %v6478 = vmul.f32 %v6464, %v6474
    %6481 = vrot.lane.b32.xlu0 %v6477, 32
    %v6482 = vpop.permute.xlu0 %6481
    %6483 = vrot.lane.b32.xlu0 %v6478, 32
    %v6484 = vpop.permute.xlu0 %6483
    %v6487 = vadd.f32 %v6467, %v6482
    %v6488 = vadd.f32 %v6468, %v6484
    %v6489 = vtanh.pop %v6487
    %v6490 = vtanh.pop %v6488
    %6493 = vrot.lane.b32.xlu0 %v6489, 32
    %v6494 = vpop.permute.xlu0 %6493
    %6495 = vrot.lane.b32.xlu0 %v6490, 32
    %v6496 = vpop.permute.xlu0 %6495
    %v6499 = vmul.f32 %v6462, %v6494
    %v6500 = vmul.f32 %v6464, %v6496
    %v6501 = vpack.c.bf16 %v6500, %v6499
    %6503 = vrot.lane.b32.xlu0 %v6501, 64
    %v6504 = vpop.permute.xlu0 %6503
    %6506 = vst.msk [vmem:[%s4491] sm:$0xff] %vm514, %v6504
    %v6507 = vld [vmem:[%s4493] sm:$0xff]
    %v6508 = vld [vmem:[%s4493 + $0x8] sm:$0xff]
    %v6510 = vsel %vm514, %v6504, 0
    %6512 = vmatprep.subr.bf16.mxu0 0
    %6513 = vmatpush1.bf16.msra.mxu0 %v6301
    %6514 = vmatprep.subr.bf16.mxu0 0
    %6515 = vmatpush1.bf16.msra.mxu0 %v6302
    %6516 = vmatprep.subr.bf16.mxu0 0
    %6517 = vmatpush1.bf16.msra.mxu0 0
    %6518 = vmatprep.subr.bf16.mxu0 0
    %6519 = vmatpush1.bf16.msra.mxu0 0
    %6520 = vmatprep.subr.bf16.mxu0 0
    %6521 = vmatpush1.bf16.msra.mxu0 0
    %6522 = vmatprep.subr.bf16.mxu0 0
    %6523 = vmatpush1.bf16.msra.mxu0 0
    %6524 = vmatprep.subr.bf16.mxu0 0
    %6525 = vmatpush1.bf16.msra.mxu0 0
    %6526 = vmatprep.subr.bf16.mxu0 0
    %6527 = vmatpush1.bf16.msra.mxu0 0
    %6528 = vmatprep.subr.bf16.mxu0 0
    %6529 = vmatpush1.bf16.msra.mxu0 0
    %6530 = vmatprep.subr.bf16.mxu0 0
    %6531 = vmatpush1.bf16.msra.mxu0 0
    %6532 = vmatprep.subr.bf16.mxu0 0
    %6533 = vmatpush1.bf16.msra.mxu0 0
    %6534 = vmatprep.subr.bf16.mxu0 0
    %6535 = vmatpush1.bf16.msra.mxu0 0
    %6536 = vmatprep.subr.bf16.mxu0 0
    %6537 = vmatpush1.bf16.msra.mxu0 0
    %6538 = vmatprep.subr.bf16.mxu0 0
    %6539 = vmatpush1.bf16.msra.mxu0 0
    %6540 = vmatprep.subr.bf16.mxu0 0
    %6541 = vmatpush1.bf16.msra.mxu0 0
    %6542 = vmatprep.subr.bf16.mxu0 0
    %6543 = vmatpush1.bf16.msra.mxu0 0
    %6544 = vmatprep.mubr.bf16.mxu0 0
    %6545 = vmatmul.mubr.bf16.gmra.mrb[0].mxu0 %v6510
    %v6546 = vpop.f32.mrb[0].mxu0
    %v6547 = vadd.f32 0.0, %v6546
    %v6548 = vpop.f32.mrb[0].mxu0
    %v6549 = vpop.f32.mrb[0].mxu0
    %v6550 = vadd.f32 0.0, %v6549
    %v6551 = vpop.f32.mrb[0].mxu0
    %6552 = vdwg.mxu0
    %v6553 = vadd.f32 %v6507, %v6547
    %v6554 = vadd.f32 %v6508, %v6550
    %v6555 = vxor.u32 %v6553, 2147483648
    %v6556 = vxor.u32 %v6554, 2147483648
    %v6557 = vmul.f32 %v6555, 1.442695
    %v6558 = vpow.pop %v6557
    %v6559 = vmul.f32 %v6556, 1.442695
    %v6560 = vpow.pop %v6559
    %v6561 = vadd.f32 %v6558, 1.0
    %v6562 = vadd.f32 %v6560, 1.0
    %v6563 = vrcp.pop %v6561
    %v6564 = vmul.f32 1.0, %v6563
    %v6565 = vrcp.pop %v6562
    %v6566 = vmul.f32 1.0, %v6565
    %v6567 = vtanh.pop %v6553
    %v6568 = vtanh.pop %v6554
    %v6569 = vmul.f32 %v6564, %v6487
    %v6570 = vmul.f32 %v6566, %v6488
    %6573 = vrot.lane.b32.xlu0 %v6567, 32
    %v6574 = vpop.permute.xlu0 %6573
    %6575 = vrot.lane.b32.xlu0 %v6568, 32
    %v6576 = vpop.permute.xlu0 %6575
    %v6579 = vmul.f32 %v6564, %v6574
    %v6580 = vmul.f32 %v6566, %v6576
    %6583 = vrot.lane.b32.xlu0 %v6579, 32
    %v6584 = vpop.permute.xlu0 %6583
    %6585 = vrot.lane.b32.xlu0 %v6580, 32
    %v6586 = vpop.permute.xlu0 %6585
    %v6589 = vadd.f32 %v6569, %v6584
    %v6590 = vadd.f32 %v6570, %v6586
    %v6591 = vtanh.pop %v6589
    %v6592 = vtanh.pop %v6590
    %6595 = vrot.lane.b32.xlu0 %v6591, 32
    %v6596 = vpop.permute.xlu0 %6595
    %6597 = vrot.lane.b32.xlu0 %v6592, 32
    %v6598 = vpop.permute.xlu0 %6597
    %v6601 = vmul.f32 %v6564, %v6596
    %v6602 = vmul.f32 %v6566, %v6598
    %v6603 = vpack.c.bf16 %v6602, %v6601
    %6605 = vrot.lane.b32.xlu0 %v6603, 64
    %v6606 = vpop.permute.xlu0 %6605
    %6608 = vst.msk [vmem:[%s4595] sm:$0xff] %vm514, %v6606
    %v6609 = vld [vmem:[%s4597] sm:$0xff]
    %v6610 = vld [vmem:[%s4597 + $0x8] sm:$0xff]
    %v6612 = vsel %vm514, %v6606, 0
    %6614 = vmatprep.subr.bf16.mxu0 0
    %6615 = vmatpush1.bf16.msra.mxu0 %v6301
    %6616 = vmatprep.subr.bf16.mxu0 0
    %6617 = vmatpush1.bf16.msra.mxu0 %v6302
    %6618 = vmatprep.subr.bf16.mxu0 0
    %6619 = vmatpush1.bf16.msra.mxu0 0
    %6620 = vmatprep.subr.bf16.mxu0 0
    %6621 = vmatpush1.bf16.msra.mxu0 0
    %6622 = vmatprep.subr.bf16.mxu0 0
    %6623 = vmatpush1.bf16.msra.mxu0 0
    %6624 = vmatprep.subr.bf16.mxu0 0
    %6625 = vmatpush1.bf16.msra.mxu0 0
    %6626 = vmatprep.subr.bf16.mxu0 0
    %6627 = vmatpush1.bf16.msra.mxu0 0
    %6628 = vmatprep.subr.bf16.mxu0 0
    %6629 = vmatpush1.bf16.msra.mxu0 0
    %6630 = vmatprep.subr.bf16.mxu0 0
    %6631 = vmatpush1.bf16.msra.mxu0 0
    %6632 = vmatprep.subr.bf16.mxu0 0
    %6633 = vmatpush1.bf16.msra.mxu0 0
    %6634 = vmatprep.subr.bf16.mxu0 0
    %6635 = vmatpush1.bf16.msra.mxu0 0
    %6636 = vmatprep.subr.bf16.mxu0 0
    %6637 = vmatpush1.bf16.msra.mxu0 0
    %6638 = vmatprep.subr.bf16.mxu0 0
    %6639 = vmatpush1.bf16.msra.mxu0 0
    %6640 = vmatprep.subr.bf16.mxu0 0
    %6641 = vmatpush1.bf16.msra.mxu0 0
    %6642 = vmatprep.subr.bf16.mxu0 0
    %6643 = vmatpush1.bf16.msra.mxu0 0
    %6644 = vmatprep.subr.bf16.mxu0 0
    %6645 = vmatpush1.bf16.msra.mxu0 0
    %6646 = vmatprep.mubr.bf16.mxu0 0
    %6647 = vmatmul.mubr.bf16.gmra.mrb[0].mxu0 %v6612
    %v6648 = vpop.f32.mrb[0].mxu0
    %v6649 = vadd.f32 0.0, %v6648
    %v6650 = vpop.f32.mrb[0].mxu0
    %v6651 = vpop.f32.mrb[0].mxu0
    %v6652 = vadd.f32 0.0, %v6651
    %v6653 = vpop.f32.mrb[0].mxu0
    %6654 = vdwg.mxu0
    %v6655 = vadd.f32 %v6609, %v6649
    %v6656 = vadd.f32 %v6610, %v6652
    %v6657 = vxor.u32 %v6655, 2147483648
    %v6658 = vxor.u32 %v6656, 2147483648
    %v6659 = vmul.f32 %v6657, 1.442695
    %v6660 = vpow.pop %v6659
    %v6661 = vmul.f32 %v6658, 1.442695
    %v6662 = vpow.pop %v6661
    %v6663 = vadd.f32 %v6660, 1.0
    %v6664 = vadd.f32 %v6662, 1.0
    %v6665 = vrcp.pop %v6663
    %v6666 = vmul.f32 1.0, %v6665
    %v6667 = vrcp.pop %v6664
    %v6668 = vmul.f32 1.0, %v6667
    %v6669 = vtanh.pop %v6655
    %v6670 = vtanh.pop %v6656
    %v6671 = vmul.f32 %v6666, %v6589
    %v6672 = vmul.f32 %v6668, %v6590
    %6675 = vrot.lane.b32.xlu0 %v6669, 32
    %v6676 = vpop.permute.xlu0 %6675
    %6677 = vrot.lane.b32.xlu0 %v6670, 32
    %v6678 = vpop.permute.xlu0 %6677
    %v6681 = vmul.f32 %v6666, %v6676
    %v6682 = vmul.f32 %v6668, %v6678
    %6685 = vrot.lane.b32.xlu0 %v6681, 32
    %v6686 = vpop.permute.xlu0 %6685
    %6687 = vrot.lane.b32.xlu0 %v6682, 32
    %v6688 = vpop.permute.xlu0 %6687
    %v6691 = vadd.f32 %v6671, %v6686
    %v6692 = vadd.f32 %v6672, %v6688
    %v6693 = vtanh.pop %v6691
    %v6694 = vtanh.pop %v6692
    %6697 = vrot.lane.b32.xlu0 %v6693, 32
    %v6698 = vpop.permute.xlu0 %6697
    %6699 = vrot.lane.b32.xlu0 %v6694, 32
    %v6700 = vpop.permute.xlu0 %6699
    %v6703 = vmul.f32 %v6666, %v6698
    %v6704 = vmul.f32 %v6668, %v6700
    %v6705 = vpack.c.bf16 %v6704, %v6703
    %6707 = vrot.lane.b32.xlu0 %v6705, 64
    %v6708 = vpop.permute.xlu0 %6707
    %6710 = vst.msk [vmem:[%s4699] sm:$0xff] %vm514, %v6708
    %v6711 = vld [vmem:[%s4701] sm:$0xff]
    %v6712 = vld [vmem:[%s4701 + $0x8] sm:$0xff]
    %v6714 = vsel %vm514, %v6708, 0
    %6716 = vmatprep.subr.bf16.mxu0 0
    %6717 = vmatpush1.bf16.msra.mxu0 %v6301
    %6718 = vmatprep.subr.bf16.mxu0 0
    %6719 = vmatpush1.bf16.msra.mxu0 %v6302
    %6720 = vmatprep.subr.bf16.mxu0 0
    %6721 = vmatpush1.bf16.msra.mxu0 0
    %6722 = vmatprep.subr.bf16.mxu0 0
    %6723 = vmatpush1.bf16.msra.mxu0 0
    %6724 = vmatprep.subr.bf16.mxu0 0
    %6725 = vmatpush1.bf16.msra.mxu0 0
    %6726 = vmatprep.subr.bf16.mxu0 0
    %6727 = vmatpush1.bf16.msra.mxu0 0
    %6728 = vmatprep.subr.bf16.mxu0 0
    %6729 = vmatpush1.bf16.msra.mxu0 0
    %6730 = vmatprep.subr.bf16.mxu0 0
    %6731 = vmatpush1.bf16.msra.mxu0 0
    %6732 = vmatprep.subr.bf16.mxu0 0
    %6733 = vmatpush1.bf16.msra.mxu0 0
    %6734 = vmatprep.subr.bf16.mxu0 0
    %6735 = vmatpush1.bf16.msra.mxu0 0
    %6736 = vmatprep.subr.bf16.mxu0 0
    %6737 = vmatpush1.bf16.msra.mxu0 0
    %6738 = vmatprep.subr.bf16.mxu0 0
    %6739 = vmatpush1.bf16.msra.mxu0 0
    %6740 = vmatprep.subr.bf16.mxu0 0
    %6741 = vmatpush1.bf16.msra.mxu0 0
    %6742 = vmatprep.subr.bf16.mxu0 0
    %6743 = vmatpush1.bf16.msra.mxu0 0
    %6744 = vmatprep.subr.bf16.mxu0 0
    %6745 = vmatpush1.bf16.msra.mxu0 0
    %6746 = vmatprep.subr.bf16.mxu0 0
    %6747 = vmatpush1.bf16.msra.mxu0 0
    %6748 = vmatprep.mubr.bf16.mxu0 0
    %6749 = vmatmul.mubr.bf16.gmra.mrb[0].mxu0 %v6714
    %v6750 = vpop.f32.mrb[0].mxu0
    %v6751 = vadd.f32 0.0, %v6750
    %v6752 = vpop.f32.mrb[0].mxu0
    %v6753 = vpop.f32.mrb[0].mxu0
    %v6754 = vadd.f32 0.0, %v6753
    %v6755 = vpop.f32.mrb[0].mxu0
    %6756 = vdwg.mxu0
    %v6757 = vadd.f32 %v6711, %v6751
    %v6758 = vadd.f32 %v6712, %v6754
    %v6759 = vxor.u32 %v6757, 2147483648
    %v6760 = vxor.u32 %v6758, 2147483648
    %v6761 = vmul.f32 %v6759, 1.442695
    %v6762 = vpow.pop %v6761
    %v6763 = vmul.f32 %v6760, 1.442695
    %v6764 = vpow.pop %v6763
    %v6765 = vadd.f32 %v6762, 1.0
    %v6766 = vadd.f32 %v6764, 1.0
    %v6767 = vrcp.pop %v6765
    %v6768 = vmul.f32 1.0, %v6767
    %v6769 = vrcp.pop %v6766
    %v6770 = vmul.f32 1.0, %v6769
    %v6771 = vtanh.pop %v6757
    %v6772 = vtanh.pop %v6758
    %v6773 = vmul.f32 %v6768, %v6691
    %v6774 = vmul.f32 %v6770, %v6692
    %6777 = vrot.lane.b32.xlu0 %v6771, 32
    %v6778 = vpop.permute.xlu0 %6777
    %6779 = vrot.lane.b32.xlu0 %v6772, 32
    %v6780 = vpop.permute.xlu0 %6779
    %v6783 = vmul.f32 %v6768, %v6778
    %v6784 = vmul.f32 %v6770, %v6780
    %6787 = vrot.lane.b32.xlu0 %v6783, 32
    %v6788 = vpop.permute.xlu0 %6787
    %6789 = vrot.lane.b32.xlu0 %v6784, 32
    %v6790 = vpop.permute.xlu0 %6789
    %v6793 = vadd.f32 %v6773, %v6788
    %v6794 = vadd.f32 %v6774, %v6790
    %v6795 = vtanh.pop %v6793
    %v6796 = vtanh.pop %v6794
    %6799 = vrot.lane.b32.xlu0 %v6795, 32
    %v6800 = vpop.permute.xlu0 %6799
    %6801 = vrot.lane.b32.xlu0 %v6796, 32
    %v6802 = vpop.permute.xlu0 %6801
    %v6805 = vmul.f32 %v6768, %v6800
    %v6806 = vmul.f32 %v6770, %v6802
    %v6807 = vpack.c.bf16 %v6806, %v6805
    %6809 = vrot.lane.b32.xlu0 %v6807, 64
    %v6810 = vpop.permute.xlu0 %6809
    %6812 = vst.msk [vmem:[%s4803] sm:$0xff] %vm514, %v6810
    %v6813 = vld [vmem:[%s4805] sm:$0xff]
    %v6814 = vld [vmem:[%s4805 + $0x8] sm:$0xff]
    %v6816 = vsel %vm514, %v6810, 0
    %6818 = vmatprep.subr.bf16.mxu0 0
    %6819 = vmatpush1.bf16.msra.mxu0 %v6301
    %6820 = vmatprep.subr.bf16.mxu0 0
    %6821 = vmatpush1.bf16.msra.mxu0 %v6302
    %6822 = vmatprep.subr.bf16.mxu0 0
    %6823 = vmatpush1.bf16.msra.mxu0 0
    %6824 = vmatprep.subr.bf16.mxu0 0
    %6825 = vmatpush1.bf16.msra.mxu0 0
    %6826 = vmatprep.subr.bf16.mxu0 0
    %6827 = vmatpush1.bf16.msra.mxu0 0
    %6828 = vmatprep.subr.bf16.mxu0 0
    %6829 = vmatpush1.bf16.msra.mxu0 0
    %6830 = vmatprep.subr.bf16.mxu0 0
    %6831 = vmatpush1.bf16.msra.mxu0 0
    %6832 = vmatprep.subr.bf16.mxu0 0
    %6833 = vmatpush1.bf16.msra.mxu0 0
    %6834 = vmatprep.subr.bf16.mxu0 0
    %6835 = vmatpush1.bf16.msra.mxu0 0
    %6836 = vmatprep.subr.bf16.mxu0 0
    %6837 = vmatpush1.bf16.msra.mxu0 0
    %6838 = vmatprep.subr.bf16.mxu0 0
    %6839 = vmatpush1.bf16.msra.mxu0 0
    %6840 = vmatprep.subr.bf16.mxu0 0
    %6841 = vmatpush1.bf16.msra.mxu0 0
    %6842 = vmatprep.subr.bf16.mxu0 0
    %6843 = vmatpush1.bf16.msra.mxu0 0
    %6844 = vmatprep.subr.bf16.mxu0 0
    %6845 = vmatpush1.bf16.msra.mxu0 0
    %6846 = vmatprep.subr.bf16.mxu0 0
    %6847 = vmatpush1.bf16.msra.mxu0 0
    %6848 = vmatprep.subr.bf16.mxu0 0
    %6849 = vmatpush1.bf16.msra.mxu0 0
    %6850 = vmatprep.mubr.bf16.mxu0 0
    %6851 = vmatmul.mubr.bf16.gmra.mrb[0].mxu0 %v6816
    %v6852 = vpop.f32.mrb[0].mxu0
    %v6853 = vadd.f32 0.0, %v6852
    %v6854 = vpop.f32.mrb[0].mxu0
    %v6855 = vpop.f32.mrb[0].mxu0
    %v6856 = vadd.f32 0.0, %v6855
    %v6857 = vpop.f32.mrb[0].mxu0
    %6858 = vdwg.mxu0
    %v6859 = vadd.f32 %v6813, %v6853
    %v6860 = vadd.f32 %v6814, %v6856
    %v6861 = vxor.u32 %v6859, 2147483648
    %v6862 = vxor.u32 %v6860, 2147483648
    %v6863 = vmul.f32 %v6861, 1.442695
    %v6864 = vpow.pop %v6863
    %v6865 = vmul.f32 %v6862, 1.442695
    %v6866 = vpow.pop %v6865
    %v6867 = vadd.f32 %v6864, 1.0
    %v6868 = vadd.f32 %v6866, 1.0
    %v6869 = vrcp.pop %v6867
    %v6870 = vmul.f32 1.0, %v6869
    %v6871 = vrcp.pop %v6868
    %v6872 = vmul.f32 1.0, %v6871
    %v6873 = vtanh.pop %v6859
    %v6874 = vtanh.pop %v6860
    %v6875 = vmul.f32 %v6870, %v6793
    %v6876 = vmul.f32 %v6872, %v6794
    %6879 = vrot.lane.b32.xlu0 %v6873, 32
    %v6880 = vpop.permute.xlu0 %6879
    %6881 = vrot.lane.b32.xlu0 %v6874, 32
    %v6882 = vpop.permute.xlu0 %6881
    %v6885 = vmul.f32 %v6870, %v6880
    %v6886 = vmul.f32 %v6872, %v6882
    %6889 = vrot.lane.b32.xlu0 %v6885, 32
    %v6890 = vpop.permute.xlu0 %6889
    %6891 = vrot.lane.b32.xlu0 %v6886, 32
    %v6892 = vpop.permute.xlu0 %6891
    %v6895 = vadd.f32 %v6875, %v6890
    %v6896 = vadd.f32 %v6876, %v6892
    %v6897 = vtanh.pop %v6895
    %v6898 = vtanh.pop %v6896
    %6901 = vrot.lane.b32.xlu0 %v6897, 32
    %v6902 = vpop.permute.xlu0 %6901
    %6903 = vrot.lane.b32.xlu0 %v6898, 32
    %v6904 = vpop.permute.xlu0 %6903
    %v6907 = vmul.f32 %v6870, %v6902
    %v6908 = vmul.f32 %v6872, %v6904
    %v6909 = vpack.c.bf16 %v6908, %v6907
    %6911 = vrot.lane.b32.xlu0 %v6909, 64
    %v6912 = vpop.permute.xlu0 %6911
    %6914 = vst.msk [vmem:[%s4907] sm:$0xff] %vm514, %v6912
    %v6915 = vld [vmem:[%s4909] sm:$0xff]
    %v6916 = vld [vmem:[%s4909 + $0x8] sm:$0xff]
    %v6918 = vsel %vm514, %v6912, 0
    %6920 = vmatprep.subr.bf16.mxu0 0
    %6921 = vmatpush1.bf16.msra.mxu0 %v6301
    %6922 = vmatprep.subr.bf16.mxu0 0
    %6923 = vmatpush1.bf16.msra.mxu0 %v6302
    %6924 = vmatprep.subr.bf16.mxu0 0
    %6925 = vmatpush1.bf16.msra.mxu0 0
    %6926 = vmatprep.subr.bf16.mxu0 0
    %6927 = vmatpush1.bf16.msra.mxu0 0
    %6928 = vmatprep.subr.bf16.mxu0 0
    %6929 = vmatpush1.bf16.msra.mxu0 0
    %6930 = vmatprep.subr.bf16.mxu0 0
    %6931 = vmatpush1.bf16.msra.mxu0 0
    %6932 = vmatprep.subr.bf16.mxu0 0
    %6933 = vmatpush1.bf16.msra.mxu0 0
    %6934 = vmatprep.subr.bf16.mxu0 0
    %6935 = vmatpush1.bf16.msra.mxu0 0
    %6936 = vmatprep.subr.bf16.mxu0 0
    %6937 = vmatpush1.bf16.msra.mxu0 0
    %6938 = vmatprep.subr.bf16.mxu0 0
    %6939 = vmatpush1.bf16.msra.mxu0 0
    %6940 = vmatprep.subr.bf16.mxu0 0
    %6941 = vmatpush1.bf16.msra.mxu0 0
    %6942 = vmatprep.subr.bf16.mxu0 0
    %6943 = vmatpush1.bf16.msra.mxu0 0
    %6944 = vmatprep.subr.bf16.mxu0 0
    %6945 = vmatpush1.bf16.msra.mxu0 0
    %6946 = vmatprep.subr.bf16.mxu0 0
    %6947 = vmatpush1.bf16.msra.mxu0 0
    %6948 = vmatprep.subr.bf16.mxu0 0
    %6949 = vmatpush1.bf16.msra.mxu0 0
    %6950 = vmatprep.subr.bf16.mxu0 0
    %6951 = vmatpush1.bf16.msra.mxu0 0
    %6952 = vmatprep.mubr.bf16.mxu0 0
    %6953 = vmatmul.mubr.bf16.gmra.mrb[0].mxu0 %v6918
    %v6954 = vpop.f32.mrb[0].mxu0
    %v6955 = vadd.f32 0.0, %v6954
    %v6956 = vpop.f32.mrb[0].mxu0
    %v6957 = vpop.f32.mrb[0].mxu0
    %v6958 = vadd.f32 0.0, %v6957
    %v6959 = vpop.f32.mrb[0].mxu0
    %6960 = vdwg.mxu0
    %v6961 = vadd.f32 %v6915, %v6955
    %v6962 = vadd.f32 %v6916, %v6958
    %v6963 = vxor.u32 %v6961, 2147483648
    %v6964 = vxor.u32 %v6962, 2147483648
    %v6965 = vmul.f32 %v6963, 1.442695
    %v6966 = vpow.pop %v6965
    %v6967 = vmul.f32 %v6964, 1.442695
    %v6968 = vpow.pop %v6967
    %v6969 = vadd.f32 %v6966, 1.0
    %v6970 = vadd.f32 %v6968, 1.0
    %v6971 = vrcp.pop %v6969
    %v6972 = vmul.f32 1.0, %v6971
    %v6973 = vrcp.pop %v6970
    %v6974 = vmul.f32 1.0, %v6973
    %v6975 = vtanh.pop %v6961
    %v6976 = vtanh.pop %v6962
    %v6977 = vmul.f32 %v6972, %v6895
    %v6978 = vmul.f32 %v6974, %v6896
    %6981 = vrot.lane.b32.xlu0 %v6975, 32
    %v6982 = vpop.permute.xlu0 %6981
    %6983 = vrot.lane.b32.xlu0 %v6976, 32
    %v6984 = vpop.permute.xlu0 %6983
    %v6987 = vmul.f32 %v6972, %v6982
    %v6988 = vmul.f32 %v6974, %v6984
    %6991 = vrot.lane.b32.xlu0 %v6987, 32
    %v6992 = vpop.permute.xlu0 %6991
    %6993 = vrot.lane.b32.xlu0 %v6988, 32
    %v6994 = vpop.permute.xlu0 %6993
    %v6997 = vadd.f32 %v6977, %v6992
    %v6998 = vadd.f32 %v6978, %v6994
    %v6999 = vtanh.pop %v6997
    %v7000 = vtanh.pop %v6998
    %7003 = vrot.lane.b32.xlu0 %v6999, 32
    %v7004 = vpop.permute.xlu0 %7003
    %7005 = vrot.lane.b32.xlu0 %v7000, 32
    %v7006 = vpop.permute.xlu0 %7005
    %v7009 = vmul.f32 %v6972, %v7004
    %v7010 = vmul.f32 %v6974, %v7006
    %v7011 = vpack.c.bf16 %v7010, %v7009
    %7013 = vrot.lane.b32.xlu0 %v7011, 64
    %v7014 = vpop.permute.xlu0 %7013
    %7016 = vst.msk [vmem:[%s5011] sm:$0xff] %vm514, %v7014
    %v7017 = vld [vmem:[%s5013] sm:$0xff]
    %v7018 = vld [vmem:[%s5013 + $0x8] sm:$0xff]
    %v7020 = vsel %vm514, %v7014, 0
    %7022 = vmatprep.subr.bf16.mxu0 0
    %7023 = vmatpush1.bf16.msra.mxu0 %v6301
    %7024 = vmatprep.subr.bf16.mxu0 0
    %7025 = vmatpush1.bf16.msra.mxu0 %v6302
    %7026 = vmatprep.subr.bf16.mxu0 0
    %7027 = vmatpush1.bf16.msra.mxu0 0
    %7028 = vmatprep.subr.bf16.mxu0 0
    %7029 = vmatpush1.bf16.msra.mxu0 0
    %7030 = vmatprep.subr.bf16.mxu0 0
    %7031 = vmatpush1.bf16.msra.mxu0 0
    %7032 = vmatprep.subr.bf16.mxu0 0
    %7033 = vmatpush1.bf16.msra.mxu0 0
    %7034 = vmatprep.subr.bf16.mxu0 0
    %7035 = vmatpush1.bf16.msra.mxu0 0
    %7036 = vmatprep.subr.bf16.mxu0 0
    %7037 = vmatpush1.bf16.msra.mxu0 0
    %7038 = vmatprep.subr.bf16.mxu0 0
    %7039 = vmatpush1.bf16.msra.mxu0 0
    %7040 = vmatprep.subr.bf16.mxu0 0
    %7041 = vmatpush1.bf16.msra.mxu0 0
    %7042 = vmatprep.subr.bf16.mxu0 0
    %7043 = vmatpush1.bf16.msra.mxu0 0
    %7044 = vmatprep.subr.bf16.mxu0 0
    %7045 = vmatpush1.bf16.msra.mxu0 0
    %7046 = vmatprep.subr.bf16.mxu0 0
    %7047 = vmatpush1.bf16.msra.mxu0 0
    %7048 = vmatprep.subr.bf16.mxu0 0
    %7049 = vmatpush1.bf16.msra.mxu0 0
    %7050 = vmatprep.subr.bf16.mxu0 0
    %7051 = vmatpush1.bf16.msra.mxu0 0
    %7052 = vmatprep.subr.bf16.mxu0 0
    %7053 = vmatpush1.bf16.msra.mxu0 0
    %7054 = vmatprep.mubr.bf16.mxu0 0
    %7055 = vmatmul.mubr.bf16.gmra.mrb[0].mxu0 %v7020
    %v7056 = vpop.f32.mrb[0].mxu0
    %v7057 = vadd.f32 0.0, %v7056
    %v7058 = vpop.f32.mrb[0].mxu0
    %v7059 = vpop.f32.mrb[0].mxu0
    %v7060 = vadd.f32 0.0, %v7059
    %v7061 = vpop.f32.mrb[0].mxu0
    %7062 = vdwg.mxu0
    %v7063 = vadd.f32 %v7017, %v7057
    %v7064 = vadd.f32 %v7018, %v7060
    %v7065 = vxor.u32 %v7063, 2147483648
    %v7066 = vxor.u32 %v7064, 2147483648
    %v7067 = vmul.f32 %v7065, 1.442695
    %v7068 = vpow.pop %v7067
    %v7069 = vmul.f32 %v7066, 1.442695
    %v7070 = vpow.pop %v7069
    %v7071 = vadd.f32 %v7068, 1.0
    %v7072 = vadd.f32 %v7070, 1.0
    %v7073 = vrcp.pop %v7071
    %v7074 = vmul.f32 1.0, %v7073
    %v7075 = vrcp.pop %v7072
    %v7076 = vmul.f32 1.0, %v7075
    %v7077 = vtanh.pop %v7063
    %v7078 = vtanh.pop %v7064
    %v7079 = vmul.f32 %v7074, %v6997
    %v7080 = vmul.f32 %v7076, %v6998
    %7083 = vrot.lane.b32.xlu0 %v7077, 32
    %v7084 = vpop.permute.xlu0 %7083
    %7085 = vrot.lane.b32.xlu0 %v7078, 32
    %v7086 = vpop.permute.xlu0 %7085
    %v7089 = vmul.f32 %v7074, %v7084
    %v7090 = vmul.f32 %v7076, %v7086
    %7093 = vrot.lane.b32.xlu0 %v7089, 32
    %v7094 = vpop.permute.xlu0 %7093
    %7095 = vrot.lane.b32.xlu0 %v7090, 32
    %v7096 = vpop.permute.xlu0 %7095
    %v7099 = vadd.f32 %v7079, %v7094
    %v7100 = vadd.f32 %v7080, %v7096
    %v7101 = vtanh.pop %v7099
    %v7102 = vtanh.pop %v7100
    %7105 = vrot.lane.b32.xlu0 %v7101, 32
    %v7106 = vpop.permute.xlu0 %7105
    %7107 = vrot.lane.b32.xlu0 %v7102, 32
    %v7108 = vpop.permute.xlu0 %7107
    %v7111 = vmul.f32 %v7074, %v7106
    %v7112 = vmul.f32 %v7076, %v7108
    %v7113 = vpack.c.bf16 %v7112, %v7111
    %7115 = vrot.lane.b32.xlu0 %v7113, 64
    %v7116 = vpop.permute.xlu0 %7115
    %7118 = vst.msk [vmem:[%s5115] sm:$0xff] %vm514, %v7116
    %v7119 = vld [vmem:[#allocation9] sm:$0xff]
    %v7120 = vld [vmem:[#allocation9 + $0x8] sm:$0xff]
    %v7121 = vld [vmem:[#allocation9 + $0x10] sm:$0xff]
    %v7122 = vld [vmem:[#allocation9 + $0x18] sm:$0xff]
    %v7123 = vld [vmem:[#allocation9 + $0x20] sm:$0xff]
    %v7124 = vld [vmem:[#allocation9 + $0x28] sm:$0xff]
    %v7125 = vld [vmem:[#allocation9 + $0x30] sm:$0xff]
    %v7126 = vld [vmem:[#allocation9 + $0x38] sm:$0xff]
    %v7127 = vld [vmem:[#allocation11 + $0x180] sm:$0xf]
    %v7128 = vld [vmem:[#allocation11 + $0x188] sm:$0xf]
    %v7129 = vld [vmem:[#allocation11 + $0x190] sm:$0xf]
    %v7130 = vld [vmem:[#allocation11 + $0x198] sm:$0xf]
    %v7131 = vld [vmem:[%s3 + $0x50] ss:$0 sm:$0xff]
    %v7136 = vunpack.c.l.b16 %v7127
    %v7137 = vunpack.c.l.b16 %v7128
    %v7138 = vunpack.c.l.b16 %v7129
    %v7139 = vunpack.c.l.b16 %v7130
    %v7140 = vpack.c.b16 %v7137, %v7136
    %v7141 = vpack.c.b16 %v7139, %v7138
    %v7145 = vsel %vm514, %v7119, 0
    %v7148 = vsel %vm514, %v7120, 0
    %v7151 = vsel %vm514, %v7121, 0
    %v7154 = vsel %vm514, %v7122, 0
    %v7157 = vsel %vm514, %v7123, 0
    %v7160 = vsel %vm514, %v7124, 0
    %v7163 = vsel %vm514, %v7125, 0
    %v7166 = vsel %vm514, %v7126, 0
    %7168 = vmatprep.subr.bf16.mxu0 0
    %7169 = vmatpush1.bf16.msra.mxu0 %v7140
    %7170 = vmatprep.subr.bf16.mxu0 0
    %7171 = vmatpush1.bf16.msra.mxu0 %v7141
    %7172 = vmatprep.subr.bf16.mxu0 0
    %7173 = vmatpush1.bf16.msra.mxu0 0
    %7174 = vmatprep.subr.bf16.mxu0 0
    %7175 = vmatpush1.bf16.msra.mxu0 0
    %7176 = vmatprep.subr.bf16.mxu0 0
    %7177 = vmatpush1.bf16.msra.mxu0 0
    %7178 = vmatprep.subr.bf16.mxu0 0
    %7179 = vmatpush1.bf16.msra.mxu0 0
    %7180 = vmatprep.subr.bf16.mxu0 0
    %7181 = vmatpush1.bf16.msra.mxu0 0
    %7182 = vmatprep.subr.bf16.mxu0 0
    %7183 = vmatpush1.bf16.msra.mxu0 0
    %7184 = vmatprep.subr.bf16.mxu0 0
    %7185 = vmatpush1.bf16.msra.mxu0 0
    %7186 = vmatprep.subr.bf16.mxu0 0
    %7187 = vmatpush1.bf16.msra.mxu0 0
    %7188 = vmatprep.subr.bf16.mxu0 0
    %7189 = vmatpush1.bf16.msra.mxu0 0
    %7190 = vmatprep.subr.bf16.mxu0 0
    %7191 = vmatpush1.bf16.msra.mxu0 0
    %7192 = vmatprep.subr.bf16.mxu0 0
    %7193 = vmatpush1.bf16.msra.mxu0 0
    %7194 = vmatprep.subr.bf16.mxu0 0
    %7195 = vmatpush1.bf16.msra.mxu0 0
    %7196 = vmatprep.subr.bf16.mxu0 0
    %7197 = vmatpush1.bf16.msra.mxu0 0
    %7198 = vmatprep.subr.bf16.mxu0 0
    %7199 = vmatpush1.bf16.msra.mxu0 0
    %7200 = vmatprep.mubr.bf16.mxu0 0
    %7201 = vmatmul.mubr.bf16.gmra.mrb[0].mxu0 %v7145
    %v7202 = vpop.f32.mrb[0].mxu0
    %v7203 = vadd.f32 %v7131, %v7202
    %v7204 = vpop.f32.mrb[0].mxu0
    %v7205 = vpop.f32.mrb[0].mxu0
    %v7206 = vadd.f32 %v7131, %v7205
    %v7207 = vpop.f32.mrb[0].mxu0
    %7208 = vmatprep.mubr.bf16.mxu0 0
    %7209 = vmatmul.mubr.bf16.gmra.mrb[0].mxu0 %v7148
    %v7210 = vpop.f32.mrb[0].mxu0
    %v7211 = vadd.f32 %v7131, %v7210
    %v7212 = vpop.f32.mrb[0].mxu0
    %v7213 = vpop.f32.mrb[0].mxu0
    %v7214 = vadd.f32 %v7131, %v7213
    %v7215 = vpop.f32.mrb[0].mxu0
    %7216 = vmatprep.mubr.bf16.mxu0 0
    %7217 = vmatmul.mubr.bf16.gmra.mrb[0].mxu0 %v7151
    %v7218 = vpop.f32.mrb[0].mxu0
    %v7219 = vadd.f32 %v7131, %v7218
    %v7220 = vpop.f32.mrb[0].mxu0
    %v7221 = vpop.f32.mrb[0].mxu0
    %v7222 = vadd.f32 %v7131, %v7221
    %v7223 = vpop.f32.mrb[0].mxu0
    %7224 = vmatprep.mubr.bf16.mxu0 0
    %7225 = vmatmul.mubr.bf16.gmra.mrb[0].mxu0 %v7154
    %v7226 = vpop.f32.mrb[0].mxu0
    %v7227 = vadd.f32 %v7131, %v7226
    %v7228 = vpop.f32.mrb[0].mxu0
    %v7229 = vpop.f32.mrb[0].mxu0
    %v7230 = vadd.f32 %v7131, %v7229
    %v7231 = vpop.f32.mrb[0].mxu0
    %7232 = vmatprep.mubr.bf16.mxu0 0
    %7233 = vmatmul.mubr.bf16.gmra.mrb[0].mxu0 %v7157
    %v7234 = vpop.f32.mrb[0].mxu0
    %v7235 = vadd.f32 %v7131, %v7234
    %v7236 = vpop.f32.mrb[0].mxu0
    %v7237 = vpop.f32.mrb[0].mxu0
    %v7238 = vadd.f32 %v7131, %v7237
    %v7239 = vpop.f32.mrb[0].mxu0
    %7240 = vmatprep.mubr.bf16.mxu0 0
    %7241 = vmatmul.mubr.bf16.gmra.mrb[0].mxu0 %v7160
    %v7242 = vpop.f32.mrb[0].mxu0
    %v7243 = vadd.f32 %v7131, %v7242
    %v7244 = vpop.f32.mrb[0].mxu0
    %v7245 = vpop.f32.mrb[0].mxu0
    %v7246 = vadd.f32 %v7131, %v7245
    %v7247 = vpop.f32.mrb[0].mxu0
    %7248 = vmatprep.mubr.bf16.mxu0 0
    %7249 = vmatmul.mubr.bf16.gmra.mrb[0].mxu0 %v7163
    %v7250 = vpop.f32.mrb[0].mxu0
    %v7251 = vadd.f32 %v7131, %v7250
    %v7252 = vpop.f32.mrb[0].mxu0
    %v7253 = vpop.f32.mrb[0].mxu0
    %v7254 = vadd.f32 %v7131, %v7253
    %v7255 = vpop.f32.mrb[0].mxu0
    %7256 = vmatprep.mubr.bf16.mxu0 0
    %7257 = vmatmul.mubr.bf16.gmra.mrb[0].mxu0 %v7166
    %v7258 = vpop.f32.mrb[0].mxu0
    %v7259 = vadd.f32 %v7131, %v7258
    %v7260 = vpop.f32.mrb[0].mxu0
    %v7261 = vpop.f32.mrb[0].mxu0
    %v7262 = vadd.f32 %v7131, %v7261
    %v7263 = vpop.f32.mrb[0].mxu0
    %7264 = vdwg.mxu0
    %7265 = vst [vmem:[#allocation4] sm:$0xff] %v7203
    %7266 = vst [vmem:[#allocation4 + $0x8] sm:$0xff] %v7206
    %7267 = vst [vmem:[#allocation4 + $0x10] sm:$0xff] %v7211
    %7268 = vst [vmem:[#allocation4 + $0x18] sm:$0xff] %v7214
    %7269 = vst [vmem:[#allocation4 + $0x20] sm:$0xff] %v7219
    %7270 = vst [vmem:[#allocation4 + $0x28] sm:$0xff] %v7222
    %7271 = vst [vmem:[#allocation4 + $0x30] sm:$0xff] %v7227
    %7272 = vst [vmem:[#allocation4 + $0x38] sm:$0xff] %v7230
    %7273 = vst [vmem:[#allocation4 + $0x40] sm:$0xff] %v7235
    %7274 = vst [vmem:[#allocation4 + $0x48] sm:$0xff] %v7238
    %7275 = vst [vmem:[#allocation4 + $0x50] sm:$0xff] %v7243
    %7276 = vst [vmem:[#allocation4 + $0x58] sm:$0xff] %v7246
    %7277 = vst [vmem:[#allocation4 + $0x60] sm:$0xff] %v7251
    %7278 = vst [vmem:[#allocation4 + $0x68] sm:$0xff] %v7254
    %7279 = vst [vmem:[#allocation4 + $0x70] sm:$0xff] %v7259
    %7280 = vst [vmem:[#allocation4 + $0x78] sm:$0xff] %v7262
    %v7281 = vld [vmem:[#allocation11 + $0x1a0] sm:$0xf]
    %v7282 = vld [vmem:[#allocation11 + $0x1a8] sm:$0xf]
    %v7283 = vld [vmem:[#allocation11 + $0x1b0] sm:$0xf]
    %v7284 = vld [vmem:[#allocation11 + $0x1b8] sm:$0xf]
    %v7285 = vld [vmem:[#allocation4] sm:$0xff]
    %v7286 = vld [vmem:[#allocation4 + $0x8] sm:$0xff]
    %v7291 = vunpack.c.l.b16 %v7281
    %v7292 = vunpack.c.l.b16 %v7282
    %v7293 = vunpack.c.l.b16 %v7283
    %v7294 = vunpack.c.l.b16 %v7284
    %v7295 = vpack.c.b16 %v7292, %v7291
    %v7296 = vpack.c.b16 %v7294, %v7293
    %v7300 = vsel %vm514, %v4268, 0
    %7302 = vmatprep.subr.bf16.mxu0 0
    %7303 = vmatpush1.bf16.msra.mxu0 %v7295
    %7304 = vmatprep.subr.bf16.mxu0 0
    %7305 = vmatpush1.bf16.msra.mxu0 %v7296
    %7306 = vmatprep.subr.bf16.mxu0 0
    %7307 = vmatpush1.bf16.msra.mxu0 0
    %7308 = vmatprep.subr.bf16.mxu0 0
    %7309 = vmatpush1.bf16.msra.mxu0 0
    %7310 = vmatprep.subr.bf16.mxu0 0
    %7311 = vmatpush1.bf16.msra.mxu0 0
    %7312 = vmatprep.subr.bf16.mxu0 0
    %7313 = vmatpush1.bf16.msra.mxu0 0
    %7314 = vmatprep.subr.bf16.mxu0 0
    %7315 = vmatpush1.bf16.msra.mxu0 0
    %7316 = vmatprep.subr.bf16.mxu0 0
    %7317 = vmatpush1.bf16.msra.mxu0 0
    %7318 = vmatprep.subr.bf16.mxu0 0
    %7319 = vmatpush1.bf16.msra.mxu0 0
    %7320 = vmatprep.subr.bf16.mxu0 0
    %7321 = vmatpush1.bf16.msra.mxu0 0
    %7322 = vmatprep.subr.bf16.mxu0 0
    %7323 = vmatpush1.bf16.msra.mxu0 0
    %7324 = vmatprep.subr.bf16.mxu0 0
    %7325 = vmatpush1.bf16.msra.mxu0 0
    %7326 = vmatprep.subr.bf16.mxu0 0
    %7327 = vmatpush1.bf16.msra.mxu0 0
    %7328 = vmatprep.subr.bf16.mxu0 0
    %7329 = vmatpush1.bf16.msra.mxu0 0
    %7330 = vmatprep.subr.bf16.mxu0 0
    %7331 = vmatpush1.bf16.msra.mxu0 0
    %7332 = vmatprep.subr.bf16.mxu0 0
    %7333 = vmatpush1.bf16.msra.mxu0 0
    %7334 = vmatprep.mubr.bf16.mxu0 0
    %7335 = vmatmul.mubr.bf16.gmra.mrb[0].mxu0 %v7300
    %v7336 = vpop.f32.mrb[0].mxu0
    %v7337 = vadd.f32 0.0, %v7336
    %v7338 = vpop.f32.mrb[0].mxu0
    %v7339 = vpop.f32.mrb[0].mxu0
    %v7340 = vadd.f32 0.0, %v7339
    %v7341 = vpop.f32.mrb[0].mxu0
    %7342 = vdwg.mxu0
    %v7343 = vadd.f32 %v7285, %v7337
    %v7344 = vadd.f32 %v7286, %v7340
    %v7345 = vxor.u32 %v7343, 2147483648
    %v7346 = vxor.u32 %v7344, 2147483648
    %v7347 = vmul.f32 %v7345, 1.442695
    %v7348 = vpow.pop %v7347
    %v7349 = vmul.f32 %v7346, 1.442695
    %v7350 = vpow.pop %v7349
    %v7351 = vadd.f32 %v7348, 1.0
    %v7352 = vadd.f32 %v7350, 1.0
    %v7353 = vrcp.pop %v7351
    %v7354 = vmul.f32 1.0, %v7353
    %v7355 = vrcp.pop %v7352
    %v7356 = vmul.f32 1.0, %v7355
    %v7357 = vtanh.pop %v7343
    %v7358 = vtanh.pop %v7344
    %v7359 = vmul.f32 %v7354, %v4244
    %v7360 = vmul.f32 %v7356, %v4245
    %7363 = vrot.lane.b32.xlu0 %v7357, 32
    %v7364 = vpop.permute.xlu0 %7363
    %7365 = vrot.lane.b32.xlu0 %v7358, 32
    %v7366 = vpop.permute.xlu0 %7365
    %v7369 = vmul.f32 %v7354, %v7364
    %v7370 = vmul.f32 %v7356, %v7366
    %7373 = vrot.lane.b32.xlu0 %v7369, 32
    %v7374 = vpop.permute.xlu0 %7373
    %7375 = vrot.lane.b32.xlu0 %v7370, 32
    %v7376 = vpop.permute.xlu0 %7375
    %v7379 = vadd.f32 %v7359, %v7374
    %v7380 = vadd.f32 %v7360, %v7376
    %v7381 = vtanh.pop %v7379
    %v7382 = vtanh.pop %v7380
    %7385 = vrot.lane.b32.xlu0 %v7381, 32
    %v7386 = vpop.permute.xlu0 %7385
    %7387 = vrot.lane.b32.xlu0 %v7382, 32
    %v7388 = vpop.permute.xlu0 %7387
    %v7391 = vmul.f32 %v7354, %v7386
    %v7392 = vmul.f32 %v7356, %v7388
    %v7393 = vpack.c.bf16 %v7392, %v7391
    %7395 = vrot.lane.b32.xlu0 %v7393, 64
    %v7396 = vpop.permute.xlu0 %7395
    %7398 = vst.msk [vmem:[#allocation10] sm:$0xff] %vm514, %v7396
    %v7399 = vld [vmem:[%s5397] sm:$0xff]
    %v7400 = vld [vmem:[%s5397 + $0x8] sm:$0xff]
    %v7402 = vsel %vm514, %v7396, 0
    %7404 = vmatprep.subr.bf16.mxu0 0
    %7405 = vmatpush1.bf16.msra.mxu0 %v7295
    %7406 = vmatprep.subr.bf16.mxu0 0
    %7407 = vmatpush1.bf16.msra.mxu0 %v7296
    %7408 = vmatprep.subr.bf16.mxu0 0
    %7409 = vmatpush1.bf16.msra.mxu0 0
    %7410 = vmatprep.subr.bf16.mxu0 0
    %7411 = vmatpush1.bf16.msra.mxu0 0
    %7412 = vmatprep.subr.bf16.mxu0 0
    %7413 = vmatpush1.bf16.msra.mxu0 0
    %7414 = vmatprep.subr.bf16.mxu0 0
    %7415 = vmatpush1.bf16.msra.mxu0 0
    %7416 = vmatprep.subr.bf16.mxu0 0
    %7417 = vmatpush1.bf16.msra.mxu0 0
    %7418 = vmatprep.subr.bf16.mxu0 0
    %7419 = vmatpush1.bf16.msra.mxu0 0
    %7420 = vmatprep.subr.bf16.mxu0 0
    %7421 = vmatpush1.bf16.msra.mxu0 0
    %7422 = vmatprep.subr.bf16.mxu0 0
    %7423 = vmatpush1.bf16.msra.mxu0 0
    %7424 = vmatprep.subr.bf16.mxu0 0
    %7425 = vmatpush1.bf16.msra.mxu0 0
    %7426 = vmatprep.subr.bf16.mxu0 0
    %7427 = vmatpush1.bf16.msra.mxu0 0
    %7428 = vmatprep.subr.bf16.mxu0 0
    %7429 = vmatpush1.bf16.msra.mxu0 0
    %7430 = vmatprep.subr.bf16.mxu0 0
    %7431 = vmatpush1.bf16.msra.mxu0 0
    %7432 = vmatprep.subr.bf16.mxu0 0
    %7433 = vmatpush1.bf16.msra.mxu0 0
    %7434 = vmatprep.subr.bf16.mxu0 0
    %7435 = vmatpush1.bf16.msra.mxu0 0
    %7436 = vmatprep.mubr.bf16.mxu0 0
    %7437 = vmatmul.mubr.bf16.gmra.mrb[0].mxu0 %v7402
    %v7438 = vpop.f32.mrb[0].mxu0
    %v7439 = vadd.f32 0.0, %v7438
    %v7440 = vpop.f32.mrb[0].mxu0
    %v7441 = vpop.f32.mrb[0].mxu0
    %v7442 = vadd.f32 0.0, %v7441
    %v7443 = vpop.f32.mrb[0].mxu0
    %7444 = vdwg.mxu0
    %v7445 = vadd.f32 %v7399, %v7439
    %v7446 = vadd.f32 %v7400, %v7442
    %v7447 = vxor.u32 %v7445, 2147483648
    %v7448 = vxor.u32 %v7446, 2147483648
    %v7449 = vmul.f32 %v7447, 1.442695
    %v7450 = vpow.pop %v7449
    %v7451 = vmul.f32 %v7448, 1.442695
    %v7452 = vpow.pop %v7451
    %v7453 = vadd.f32 %v7450, 1.0
    %v7454 = vadd.f32 %v7452, 1.0
    %v7455 = vrcp.pop %v7453
    %v7456 = vmul.f32 1.0, %v7455
    %v7457 = vrcp.pop %v7454
    %v7458 = vmul.f32 1.0, %v7457
    %v7459 = vtanh.pop %v7445
    %v7460 = vtanh.pop %v7446
    %v7461 = vmul.f32 %v7456, %v7379
    %v7462 = vmul.f32 %v7458, %v7380
    %7465 = vrot.lane.b32.xlu0 %v7459, 32
    %v7466 = vpop.permute.xlu0 %7465
    %7467 = vrot.lane.b32.xlu0 %v7460, 32
    %v7468 = vpop.permute.xlu0 %7467
    %v7471 = vmul.f32 %v7456, %v7466
    %v7472 = vmul.f32 %v7458, %v7468
    %7475 = vrot.lane.b32.xlu0 %v7471, 32
    %v7476 = vpop.permute.xlu0 %7475
    %7477 = vrot.lane.b32.xlu0 %v7472, 32
    %v7478 = vpop.permute.xlu0 %7477
    %v7481 = vadd.f32 %v7461, %v7476
    %v7482 = vadd.f32 %v7462, %v7478
    %v7483 = vtanh.pop %v7481
    %v7484 = vtanh.pop %v7482
    %7487 = vrot.lane.b32.xlu0 %v7483, 32
    %v7488 = vpop.permute.xlu0 %7487
    %7489 = vrot.lane.b32.xlu0 %v7484, 32
    %v7490 = vpop.permute.xlu0 %7489
    %v7493 = vmul.f32 %v7456, %v7488
    %v7494 = vmul.f32 %v7458, %v7490
    %v7495 = vpack.c.bf16 %v7494, %v7493
    %7497 = vrot.lane.b32.xlu0 %v7495, 64
    %v7498 = vpop.permute.xlu0 %7497
    %7500 = vst.msk [vmem:[%s5499] sm:$0xff] %vm514, %v7498
    %v7501 = vld [vmem:[%s5501] sm:$0xff]
    %v7502 = vld [vmem:[%s5501 + $0x8] sm:$0xff]
    %v7504 = vsel %vm514, %v7498, 0
    %7506 = vmatprep.subr.bf16.mxu0 0
    %7507 = vmatpush1.bf16.msra.mxu0 %v7295
    %7508 = vmatprep.subr.bf16.mxu0 0
    %7509 = vmatpush1.bf16.msra.mxu0 %v7296
    %7510 = vmatprep.subr.bf16.mxu0 0
    %7511 = vmatpush1.bf16.msra.mxu0 0
    %7512 = vmatprep.subr.bf16.mxu0 0
    %7513 = vmatpush1.bf16.msra.mxu0 0
    %7514 = vmatprep.subr.bf16.mxu0 0
    %7515 = vmatpush1.bf16.msra.mxu0 0
    %7516 = vmatprep.subr.bf16.mxu0 0
    %7517 = vmatpush1.bf16.msra.mxu0 0
    %7518 = vmatprep.subr.bf16.mxu0 0
    %7519 = vmatpush1.bf16.msra.mxu0 0
    %7520 = vmatprep.subr.bf16.mxu0 0
    %7521 = vmatpush1.bf16.msra.mxu0 0
    %7522 = vmatprep.subr.bf16.mxu0 0
    %7523 = vmatpush1.bf16.msra.mxu0 0
    %7524 = vmatprep.subr.bf16.mxu0 0
    %7525 = vmatpush1.bf16.msra.mxu0 0
    %7526 = vmatprep.subr.bf16.mxu0 0
    %7527 = vmatpush1.bf16.msra.mxu0 0
    %7528 = vmatprep.subr.bf16.mxu0 0
    %7529 = vmatpush1.bf16.msra.mxu0 0
    %7530 = vmatprep.subr.bf16.mxu0 0
    %7531 = vmatpush1.bf16.msra.mxu0 0
    %7532 = vmatprep.subr.bf16.mxu0 0
    %7533 = vmatpush1.bf16.msra.mxu0 0
    %7534 = vmatprep.subr.bf16.mxu0 0
    %7535 = vmatpush1.bf16.msra.mxu0 0
    %7536 = vmatprep.subr.bf16.mxu0 0
    %7537 = vmatpush1.bf16.msra.mxu0 0
    %7538 = vmatprep.mubr.bf16.mxu0 0
    %7539 = vmatmul.mubr.bf16.gmra.mrb[0].mxu0 %v7504
    %v7540 = vpop.f32.mrb[0].mxu0
    %v7541 = vadd.f32 0.0, %v7540
    %v7542 = vpop.f32.mrb[0].mxu0
    %v7543 = vpop.f32.mrb[0].mxu0
    %v7544 = vadd.f32 0.0, %v7543
    %v7545 = vpop.f32.mrb[0].mxu0
    %7546 = vdwg.mxu0
    %v7547 = vadd.f32 %v7501, %v7541
    %v7548 = vadd.f32 %v7502, %v7544
    %v7549 = vxor.u32 %v7547, 2147483648
    %v7550 = vxor.u32 %v7548, 2147483648
    %v7551 = vmul.f32 %v7549, 1.442695
    %v7552 = vpow.pop %v7551
    %v7553 = vmul.f32 %v7550, 1.442695
    %v7554 = vpow.pop %v7553
    %v7555 = vadd.f32 %v7552, 1.0
    %v7556 = vadd.f32 %v7554, 1.0
    %v7557 = vrcp.pop %v7555
    %v7558 = vmul.f32 1.0, %v7557
    %v7559 = vrcp.pop %v7556
    %v7560 = vmul.f32 1.0, %v7559
    %v7561 = vtanh.pop %v7547
    %v7562 = vtanh.pop %v7548
    %v7563 = vmul.f32 %v7558, %v7481
    %v7564 = vmul.f32 %v7560, %v7482
    %7567 = vrot.lane.b32.xlu0 %v7561, 32
    %v7568 = vpop.permute.xlu0 %7567
    %7569 = vrot.lane.b32.xlu0 %v7562, 32
    %v7570 = vpop.permute.xlu0 %7569
    %v7573 = vmul.f32 %v7558, %v7568
    %v7574 = vmul.f32 %v7560, %v7570
    %7577 = vrot.lane.b32.xlu0 %v7573, 32
    %v7578 = vpop.permute.xlu0 %7577
    %7579 = vrot.lane.b32.xlu0 %v7574, 32
    %v7580 = vpop.permute.xlu0 %7579
    %v7583 = vadd.f32 %v7563, %v7578
    %v7584 = vadd.f32 %v7564, %v7580
    %v7585 = vtanh.pop %v7583
    %v7586 = vtanh.pop %v7584
    %7589 = vrot.lane.b32.xlu0 %v7585, 32
    %v7590 = vpop.permute.xlu0 %7589
    %7591 = vrot.lane.b32.xlu0 %v7586, 32
    %v7592 = vpop.permute.xlu0 %7591
    %v7595 = vmul.f32 %v7558, %v7590
    %v7596 = vmul.f32 %v7560, %v7592
    %v7597 = vpack.c.bf16 %v7596, %v7595
    %7599 = vrot.lane.b32.xlu0 %v7597, 64
    %v7600 = vpop.permute.xlu0 %7599
    %7602 = vst.msk [vmem:[%s5603] sm:$0xff] %vm514, %v7600
    %v7603 = vld [vmem:[%s5605] sm:$0xff]
    %v7604 = vld [vmem:[%s5605 + $0x8] sm:$0xff]
    %v7606 = vsel %vm514, %v7600, 0
    %7608 = vmatprep.subr.bf16.mxu0 0
    %7609 = vmatpush1.bf16.msra.mxu0 %v7295
    %7610 = vmatprep.subr.bf16.mxu0 0
    %7611 = vmatpush1.bf16.msra.mxu0 %v7296
    %7612 = vmatprep.subr.bf16.mxu0 0
    %7613 = vmatpush1.bf16.msra.mxu0 0
    %7614 = vmatprep.subr.bf16.mxu0 0
    %7615 = vmatpush1.bf16.msra.mxu0 0
    %7616 = vmatprep.subr.bf16.mxu0 0
    %7617 = vmatpush1.bf16.msra.mxu0 0
    %7618 = vmatprep.subr.bf16.mxu0 0
    %7619 = vmatpush1.bf16.msra.mxu0 0
    %7620 = vmatprep.subr.bf16.mxu0 0
    %7621 = vmatpush1.bf16.msra.mxu0 0
    %7622 = vmatprep.subr.bf16.mxu0 0
    %7623 = vmatpush1.bf16.msra.mxu0 0
    %7624 = vmatprep.subr.bf16.mxu0 0
    %7625 = vmatpush1.bf16.msra.mxu0 0
    %7626 = vmatprep.subr.bf16.mxu0 0
    %7627 = vmatpush1.bf16.msra.mxu0 0
    %7628 = vmatprep.subr.bf16.mxu0 0
    %7629 = vmatpush1.bf16.msra.mxu0 0
    %7630 = vmatprep.subr.bf16.mxu0 0
    %7631 = vmatpush1.bf16.msra.mxu0 0
    %7632 = vmatprep.subr.bf16.mxu0 0
    %7633 = vmatpush1.bf16.msra.mxu0 0
    %7634 = vmatprep.subr.bf16.mxu0 0
    %7635 = vmatpush1.bf16.msra.mxu0 0
    %7636 = vmatprep.subr.bf16.mxu0 0
    %7637 = vmatpush1.bf16.msra.mxu0 0
    %7638 = vmatprep.subr.bf16.mxu0 0
    %7639 = vmatpush1.bf16.msra.mxu0 0
    %7640 = vmatprep.mubr.bf16.mxu0 0
    %7641 = vmatmul.mubr.bf16.gmra.mrb[0].mxu0 %v7606
    %v7642 = vpop.f32.mrb[0].mxu0
    %v7643 = vadd.f32 0.0, %v7642
    %v7644 = vpop.f32.mrb[0].mxu0
    %v7645 = vpop.f32.mrb[0].mxu0
    %v7646 = vadd.f32 0.0, %v7645
    %v7647 = vpop.f32.mrb[0].mxu0
    %7648 = vdwg.mxu0
    %v7649 = vadd.f32 %v7603, %v7643
    %v7650 = vadd.f32 %v7604, %v7646
    %v7651 = vxor.u32 %v7649, 2147483648
    %v7652 = vxor.u32 %v7650, 2147483648
    %v7653 = vmul.f32 %v7651, 1.442695
    %v7654 = vpow.pop %v7653
    %v7655 = vmul.f32 %v7652, 1.442695
    %v7656 = vpow.pop %v7655
    %v7657 = vadd.f32 %v7654, 1.0
    %v7658 = vadd.f32 %v7656, 1.0
    %v7659 = vrcp.pop %v7657
    %v7660 = vmul.f32 1.0, %v7659
    %v7661 = vrcp.pop %v7658
    %v7662 = vmul.f32 1.0, %v7661
    %v7663 = vtanh.pop %v7649
    %v7664 = vtanh.pop %v7650
    %v7665 = vmul.f32 %v7660, %v7583
    %v7666 = vmul.f32 %v7662, %v7584
    %7669 = vrot.lane.b32.xlu0 %v7663, 32
    %v7670 = vpop.permute.xlu0 %7669
    %7671 = vrot.lane.b32.xlu0 %v7664, 32
    %v7672 = vpop.permute.xlu0 %7671
    %v7675 = vmul.f32 %v7660, %v7670
    %v7676 = vmul.f32 %v7662, %v7672
    %7679 = vrot.lane.b32.xlu0 %v7675, 32
    %v7680 = vpop.permute.xlu0 %7679
    %7681 = vrot.lane.b32.xlu0 %v7676, 32
    %v7682 = vpop.permute.xlu0 %7681
    %v7685 = vadd.f32 %v7665, %v7680
    %v7686 = vadd.f32 %v7666, %v7682
    %v7687 = vtanh.pop %v7685
    %v7688 = vtanh.pop %v7686
    %7691 = vrot.lane.b32.xlu0 %v7687, 32
    %v7692 = vpop.permute.xlu0 %7691
    %7693 = vrot.lane.b32.xlu0 %v7688, 32
    %v7694 = vpop.permute.xlu0 %7693
    %v7697 = vmul.f32 %v7660, %v7692
    %v7698 = vmul.f32 %v7662, %v7694
    %v7699 = vpack.c.bf16 %v7698, %v7697
    %7701 = vrot.lane.b32.xlu0 %v7699, 64
    %v7702 = vpop.permute.xlu0 %7701
    %7704 = vst.msk [vmem:[%s5707] sm:$0xff] %vm514, %v7702
    %v7705 = vld [vmem:[%s5709] sm:$0xff]
    %v7706 = vld [vmem:[%s5709 + $0x8] sm:$0xff]
    %v7708 = vsel %vm514, %v7702, 0
    %7710 = vmatprep.subr.bf16.mxu0 0
    %7711 = vmatpush1.bf16.msra.mxu0 %v7295
    %7712 = vmatprep.subr.bf16.mxu0 0
    %7713 = vmatpush1.bf16.msra.mxu0 %v7296
    %7714 = vmatprep.subr.bf16.mxu0 0
    %7715 = vmatpush1.bf16.msra.mxu0 0
    %7716 = vmatprep.subr.bf16.mxu0 0
    %7717 = vmatpush1.bf16.msra.mxu0 0
    %7718 = vmatprep.subr.bf16.mxu0 0
    %7719 = vmatpush1.bf16.msra.mxu0 0
    %7720 = vmatprep.subr.bf16.mxu0 0
    %7721 = vmatpush1.bf16.msra.mxu0 0
    %7722 = vmatprep.subr.bf16.mxu0 0
    %7723 = vmatpush1.bf16.msra.mxu0 0
    %7724 = vmatprep.subr.bf16.mxu0 0
    %7725 = vmatpush1.bf16.msra.mxu0 0
    %7726 = vmatprep.subr.bf16.mxu0 0
    %7727 = vmatpush1.bf16.msra.mxu0 0
    %7728 = vmatprep.subr.bf16.mxu0 0
    %7729 = vmatpush1.bf16.msra.mxu0 0
    %7730 = vmatprep.subr.bf16.mxu0 0
    %7731 = vmatpush1.bf16.msra.mxu0 0
    %7732 = vmatprep.subr.bf16.mxu0 0
    %7733 = vmatpush1.bf16.msra.mxu0 0
    %7734 = vmatprep.subr.bf16.mxu0 0
    %7735 = vmatpush1.bf16.msra.mxu0 0
    %7736 = vmatprep.subr.bf16.mxu0 0
    %7737 = vmatpush1.bf16.msra.mxu0 0
    %7738 = vmatprep.subr.bf16.mxu0 0
    %7739 = vmatpush1.bf16.msra.mxu0 0
    %7740 = vmatprep.subr.bf16.mxu0 0
    %7741 = vmatpush1.bf16.msra.mxu0 0
    %7742 = vmatprep.mubr.bf16.mxu0 0
    %7743 = vmatmul.mubr.bf16.gmra.mrb[0].mxu0 %v7708
    %v7744 = vpop.f32.mrb[0].mxu0
    %v7745 = vadd.f32 0.0, %v7744
    %v7746 = vpop.f32.mrb[0].mxu0
    %v7747 = vpop.f32.mrb[0].mxu0
    %v7748 = vadd.f32 0.0, %v7747
    %v7749 = vpop.f32.mrb[0].mxu0
    %7750 = vdwg.mxu0
    %v7751 = vadd.f32 %v7705, %v7745
    %v7752 = vadd.f32 %v7706, %v7748
    %v7753 = vxor.u32 %v7751, 2147483648
    %v7754 = vxor.u32 %v7752, 2147483648
    %v7755 = vmul.f32 %v7753, 1.442695
    %v7756 = vpow.pop %v7755
    %v7757 = vmul.f32 %v7754, 1.442695
    %v7758 = vpow.pop %v7757
    %v7759 = vadd.f32 %v7756, 1.0
    %v7760 = vadd.f32 %v7758, 1.0
    %v7761 = vrcp.pop %v7759
    %v7762 = vmul.f32 1.0, %v7761
    %v7763 = vrcp.pop %v7760
    %v7764 = vmul.f32 1.0, %v7763
    %v7765 = vtanh.pop %v7751
    %v7766 = vtanh.pop %v7752
    %v7767 = vmul.f32 %v7762, %v7685
    %v7768 = vmul.f32 %v7764, %v7686
    %7771 = vrot.lane.b32.xlu0 %v7765, 32
    %v7772 = vpop.permute.xlu0 %7771
    %7773 = vrot.lane.b32.xlu0 %v7766, 32
    %v7774 = vpop.permute.xlu0 %7773
    %v7777 = vmul.f32 %v7762, %v7772
    %v7778 = vmul.f32 %v7764, %v7774
    %7781 = vrot.lane.b32.xlu0 %v7777, 32
    %v7782 = vpop.permute.xlu0 %7781
    %7783 = vrot.lane.b32.xlu0 %v7778, 32
    %v7784 = vpop.permute.xlu0 %7783
    %v7787 = vadd.f32 %v7767, %v7782
    %v7788 = vadd.f32 %v7768, %v7784
    %v7789 = vtanh.pop %v7787
    %v7790 = vtanh.pop %v7788
    %7793 = vrot.lane.b32.xlu0 %v7789, 32
    %v7794 = vpop.permute.xlu0 %7793
    %7795 = vrot.lane.b32.xlu0 %v7790, 32
    %v7796 = vpop.permute.xlu0 %7795
    %v7799 = vmul.f32 %v7762, %v7794
    %v7800 = vmul.f32 %v7764, %v7796
    %v7801 = vpack.c.bf16 %v7800, %v7799
    %7803 = vrot.lane.b32.xlu0 %v7801, 64
    %v7804 = vpop.permute.xlu0 %7803
    %7806 = vst.msk [vmem:[%s5811] sm:$0xff] %vm514, %v7804
    %v7807 = vld [vmem:[%s5813] sm:$0xff]
    %v7808 = vld [vmem:[%s5813 + $0x8] sm:$0xff]
    %v7810 = vsel %vm514, %v7804, 0
    %7812 = vmatprep.subr.bf16.mxu0 0
    %7813 = vmatpush1.bf16.msra.mxu0 %v7295
    %7814 = vmatprep.subr.bf16.mxu0 0
    %7815 = vmatpush1.bf16.msra.mxu0 %v7296
    %7816 = vmatprep.subr.bf16.mxu0 0
    %7817 = vmatpush1.bf16.msra.mxu0 0
    %7818 = vmatprep.subr.bf16.mxu0 0
    %7819 = vmatpush1.bf16.msra.mxu0 0
    %7820 = vmatprep.subr.bf16.mxu0 0
    %7821 = vmatpush1.bf16.msra.mxu0 0
    %7822 = vmatprep.subr.bf16.mxu0 0
    %7823 = vmatpush1.bf16.msra.mxu0 0
    %7824 = vmatprep.subr.bf16.mxu0 0
    %7825 = vmatpush1.bf16.msra.mxu0 0
    %7826 = vmatprep.subr.bf16.mxu0 0
    %7827 = vmatpush1.bf16.msra.mxu0 0
    %7828 = vmatprep.subr.bf16.mxu0 0
    %7829 = vmatpush1.bf16.msra.mxu0 0
    %7830 = vmatprep.subr.bf16.mxu0 0
    %7831 = vmatpush1.bf16.msra.mxu0 0
    %7832 = vmatprep.subr.bf16.mxu0 0
    %7833 = vmatpush1.bf16.msra.mxu0 0
    %7834 = vmatprep.subr.bf16.mxu0 0
    %7835 = vmatpush1.bf16.msra.mxu0 0
    %7836 = vmatprep.subr.bf16.mxu0 0
    %7837 = vmatpush1.bf16.msra.mxu0 0
    %7838 = vmatprep.subr.bf16.mxu0 0
    %7839 = vmatpush1.bf16.msra.mxu0 0
    %7840 = vmatprep.subr.bf16.mxu0 0
    %7841 = vmatpush1.bf16.msra.mxu0 0
    %7842 = vmatprep.subr.bf16.mxu0 0
    %7843 = vmatpush1.bf16.msra.mxu0 0
    %7844 = vmatprep.mubr.bf16.mxu0 0
    %7845 = vmatmul.mubr.bf16.gmra.mrb[0].mxu0 %v7810
    %v7846 = vpop.f32.mrb[0].mxu0
    %v7847 = vadd.f32 0.0, %v7846
    %v7848 = vpop.f32.mrb[0].mxu0
    %v7849 = vpop.f32.mrb[0].mxu0
    %v7850 = vadd.f32 0.0, %v7849
    %v7851 = vpop.f32.mrb[0].mxu0
    %7852 = vdwg.mxu0
    %v7853 = vadd.f32 %v7807, %v7847
    %v7854 = vadd.f32 %v7808, %v7850
    %v7855 = vxor.u32 %v7853, 2147483648
    %v7856 = vxor.u32 %v7854, 2147483648
    %v7857 = vmul.f32 %v7855, 1.442695
    %v7858 = vpow.pop %v7857
    %v7859 = vmul.f32 %v7856, 1.442695
    %v7860 = vpow.pop %v7859
    %v7861 = vadd.f32 %v7858, 1.0
    %v7862 = vadd.f32 %v7860, 1.0
    %v7863 = vrcp.pop %v7861
    %v7864 = vmul.f32 1.0, %v7863
    %v7865 = vrcp.pop %v7862
    %v7866 = vmul.f32 1.0, %v7865
    %v7867 = vtanh.pop %v7853
    %v7868 = vtanh.pop %v7854
    %v7869 = vmul.f32 %v7864, %v7787
    %v7870 = vmul.f32 %v7866, %v7788
    %7873 = vrot.lane.b32.xlu0 %v7867, 32
    %v7874 = vpop.permute.xlu0 %7873
    %7875 = vrot.lane.b32.xlu0 %v7868, 32
    %v7876 = vpop.permute.xlu0 %7875
    %v7879 = vmul.f32 %v7864, %v7874
    %v7880 = vmul.f32 %v7866, %v7876
    %7883 = vrot.lane.b32.xlu0 %v7879, 32
    %v7884 = vpop.permute.xlu0 %7883
    %7885 = vrot.lane.b32.xlu0 %v7880, 32
    %v7886 = vpop.permute.xlu0 %7885
    %v7889 = vadd.f32 %v7869, %v7884
    %v7890 = vadd.f32 %v7870, %v7886
    %v7891 = vtanh.pop %v7889
    %v7892 = vtanh.pop %v7890
    %7895 = vrot.lane.b32.xlu0 %v7891, 32
    %v7896 = vpop.permute.xlu0 %7895
    %7897 = vrot.lane.b32.xlu0 %v7892, 32
    %v7898 = vpop.permute.xlu0 %7897
    %v7901 = vmul.f32 %v7864, %v7896
    %v7902 = vmul.f32 %v7866, %v7898
    %v7903 = vpack.c.bf16 %v7902, %v7901
    %7905 = vrot.lane.b32.xlu0 %v7903, 64
    %v7906 = vpop.permute.xlu0 %7905
    %7908 = vst.msk [vmem:[%s5915] sm:$0xff] %vm514, %v7906
    %v7909 = vld [vmem:[%s5917] sm:$0xff]
    %v7910 = vld [vmem:[%s5917 + $0x8] sm:$0xff]
    %v7912 = vsel %vm514, %v7906, 0
    %7914 = vmatprep.subr.bf16.mxu0 0
    %7915 = vmatpush1.bf16.msra.mxu0 %v7295
    %7916 = vmatprep.subr.bf16.mxu0 0
    %7917 = vmatpush1.bf16.msra.mxu0 %v7296
    %7918 = vmatprep.subr.bf16.mxu0 0
    %7919 = vmatpush1.bf16.msra.mxu0 0
    %7920 = vmatprep.subr.bf16.mxu0 0
    %7921 = vmatpush1.bf16.msra.mxu0 0
    %7922 = vmatprep.subr.bf16.mxu0 0
    %7923 = vmatpush1.bf16.msra.mxu0 0
    %7924 = vmatprep.subr.bf16.mxu0 0
    %7925 = vmatpush1.bf16.msra.mxu0 0
    %7926 = vmatprep.subr.bf16.mxu0 0
    %7927 = vmatpush1.bf16.msra.mxu0 0
    %7928 = vmatprep.subr.bf16.mxu0 0
    %7929 = vmatpush1.bf16.msra.mxu0 0
    %7930 = vmatprep.subr.bf16.mxu0 0
    %7931 = vmatpush1.bf16.msra.mxu0 0
    %7932 = vmatprep.subr.bf16.mxu0 0
    %7933 = vmatpush1.bf16.msra.mxu0 0
    %7934 = vmatprep.subr.bf16.mxu0 0
    %7935 = vmatpush1.bf16.msra.mxu0 0
    %7936 = vmatprep.subr.bf16.mxu0 0
    %7937 = vmatpush1.bf16.msra.mxu0 0
    %7938 = vmatprep.subr.bf16.mxu0 0
    %7939 = vmatpush1.bf16.msra.mxu0 0
    %7940 = vmatprep.subr.bf16.mxu0 0
    %7941 = vmatpush1.bf16.msra.mxu0 0
    %7942 = vmatprep.subr.bf16.mxu0 0
    %7943 = vmatpush1.bf16.msra.mxu0 0
    %7944 = vmatprep.subr.bf16.mxu0 0
    %7945 = vmatpush1.bf16.msra.mxu0 0
    %7946 = vmatprep.mubr.bf16.mxu0 0
    %7947 = vmatmul.mubr.bf16.gmra.mrb[0].mxu0 %v7912
    %v7948 = vpop.f32.mrb[0].mxu0
    %v7949 = vadd.f32 0.0, %v7948
    %v7950 = vpop.f32.mrb[0].mxu0
    %v7951 = vpop.f32.mrb[0].mxu0
    %v7952 = vadd.f32 0.0, %v7951
    %v7953 = vpop.f32.mrb[0].mxu0
    %7954 = vdwg.mxu0
    %v7955 = vadd.f32 %v7909, %v7949
    %v7956 = vadd.f32 %v7910, %v7952
    %v7957 = vxor.u32 %v7955, 2147483648
    %v7958 = vxor.u32 %v7956, 2147483648
    %v7959 = vmul.f32 %v7957, 1.442695
    %v7960 = vpow.pop %v7959
    %v7961 = vmul.f32 %v7958, 1.442695
    %v7962 = vpow.pop %v7961
    %v7963 = vadd.f32 %v7960, 1.0
    %v7964 = vadd.f32 %v7962, 1.0
    %v7965 = vrcp.pop %v7963
    %v7966 = vmul.f32 1.0, %v7965
    %v7967 = vrcp.pop %v7964
    %v7968 = vmul.f32 1.0, %v7967
    %v7969 = vtanh.pop %v7955
    %v7970 = vtanh.pop %v7956
    %v7971 = vmul.f32 %v7966, %v7889
    %v7972 = vmul.f32 %v7968, %v7890
    %7975 = vrot.lane.b32.xlu0 %v7969, 32
    %v7976 = vpop.permute.xlu0 %7975
    %7977 = vrot.lane.b32.xlu0 %v7970, 32
    %v7978 = vpop.permute.xlu0 %7977
    %v7981 = vmul.f32 %v7966, %v7976
    %v7982 = vmul.f32 %v7968, %v7978
    %7985 = vrot.lane.b32.xlu0 %v7981, 32
    %v7986 = vpop.permute.xlu0 %7985
    %7987 = vrot.lane.b32.xlu0 %v7982, 32
    %v7988 = vpop.permute.xlu0 %7987
    %v7991 = vadd.f32 %v7971, %v7986
    %v7992 = vadd.f32 %v7972, %v7988
    %v7993 = vtanh.pop %v7991
    %v7994 = vtanh.pop %v7992
    %7997 = vrot.lane.b32.xlu0 %v7993, 32
    %v7998 = vpop.permute.xlu0 %7997
    %7999 = vrot.lane.b32.xlu0 %v7994, 32
    %v8000 = vpop.permute.xlu0 %7999
    %v8003 = vmul.f32 %v7966, %v7998
    %v8004 = vmul.f32 %v7968, %v8000
    %v8005 = vpack.c.bf16 %v8004, %v8003
    %8007 = vrot.lane.b32.xlu0 %v8005, 64
    %v8008 = vpop.permute.xlu0 %8007
    %8010 = vst.msk [vmem:[%s6019] sm:$0xff] %vm514, %v8008
    %v8011 = vld [vmem:[%s6021] sm:$0xff]
    %v8012 = vld [vmem:[%s6021 + $0x8] sm:$0xff]
    %v8014 = vsel %vm514, %v8008, 0
    %8016 = vmatprep.subr.bf16.mxu0 0
    %8017 = vmatpush1.bf16.msra.mxu0 %v7295
    %8018 = vmatprep.subr.bf16.mxu0 0
    %8019 = vmatpush1.bf16.msra.mxu0 %v7296
    %8020 = vmatprep.subr.bf16.mxu0 0
    %8021 = vmatpush1.bf16.msra.mxu0 0
    %8022 = vmatprep.subr.bf16.mxu0 0
    %8023 = vmatpush1.bf16.msra.mxu0 0
    %8024 = vmatprep.subr.bf16.mxu0 0
    %8025 = vmatpush1.bf16.msra.mxu0 0
    %8026 = vmatprep.subr.bf16.mxu0 0
    %8027 = vmatpush1.bf16.msra.mxu0 0
    %8028 = vmatprep.subr.bf16.mxu0 0
    %8029 = vmatpush1.bf16.msra.mxu0 0
    %8030 = vmatprep.subr.bf16.mxu0 0
    %8031 = vmatpush1.bf16.msra.mxu0 0
    %8032 = vmatprep.subr.bf16.mxu0 0
    %8033 = vmatpush1.bf16.msra.mxu0 0
    %8034 = vmatprep.subr.bf16.mxu0 0
    %8035 = vmatpush1.bf16.msra.mxu0 0
    %8036 = vmatprep.subr.bf16.mxu0 0
    %8037 = vmatpush1.bf16.msra.mxu0 0
    %8038 = vmatprep.subr.bf16.mxu0 0
    %8039 = vmatpush1.bf16.msra.mxu0 0
    %8040 = vmatprep.subr.bf16.mxu0 0
    %8041 = vmatpush1.bf16.msra.mxu0 0
    %8042 = vmatprep.subr.bf16.mxu0 0
    %8043 = vmatpush1.bf16.msra.mxu0 0
    %8044 = vmatprep.subr.bf16.mxu0 0
    %8045 = vmatpush1.bf16.msra.mxu0 0
    %8046 = vmatprep.subr.bf16.mxu0 0
    %8047 = vmatpush1.bf16.msra.mxu0 0
    %8048 = vmatprep.mubr.bf16.mxu0 0
    %8049 = vmatmul.mubr.bf16.gmra.mrb[0].mxu0 %v8014
    %v8050 = vpop.f32.mrb[0].mxu0
    %v8051 = vadd.f32 0.0, %v8050
    %v8052 = vpop.f32.mrb[0].mxu0
    %v8053 = vpop.f32.mrb[0].mxu0
    %v8054 = vadd.f32 0.0, %v8053
    %v8055 = vpop.f32.mrb[0].mxu0
    %8056 = vdwg.mxu0
    %v8057 = vadd.f32 %v8011, %v8051
    %v8058 = vadd.f32 %v8012, %v8054
    %v8059 = vxor.u32 %v8057, 2147483648
    %v8060 = vxor.u32 %v8058, 2147483648
    %v8061 = vmul.f32 %v8059, 1.442695
    %v8062 = vpow.pop %v8061
    %v8063 = vmul.f32 %v8060, 1.442695
    %v8064 = vpow.pop %v8063
    %v8065 = vadd.f32 %v8062, 1.0
    %v8066 = vadd.f32 %v8064, 1.0
    %v8067 = vrcp.pop %v8065
    %v8068 = vmul.f32 1.0, %v8067
    %v8069 = vrcp.pop %v8066
    %v8070 = vmul.f32 1.0, %v8069
    %v8071 = vtanh.pop %v8057
    %v8072 = vtanh.pop %v8058
    %v8073 = vmul.f32 %v8068, %v7991
    %v8074 = vmul.f32 %v8070, %v7992
    %8077 = vrot.lane.b32.xlu0 %v8071, 32
    %v8078 = vpop.permute.xlu0 %8077
    %8079 = vrot.lane.b32.xlu0 %v8072, 32
    %v8080 = vpop.permute.xlu0 %8079
    %v8083 = vmul.f32 %v8068, %v8078
    %v8084 = vmul.f32 %v8070, %v8080
    %8087 = vrot.lane.b32.xlu0 %v8083, 32
    %v8088 = vpop.permute.xlu0 %8087
    %8089 = vrot.lane.b32.xlu0 %v8084, 32
    %v8090 = vpop.permute.xlu0 %8089
    %v8093 = vadd.f32 %v8073, %v8088
    %v8094 = vadd.f32 %v8074, %v8090
    %v8095 = vtanh.pop %v8093
    %v8096 = vtanh.pop %v8094
    %8099 = vrot.lane.b32.xlu0 %v8095, 32
    %v8100 = vpop.permute.xlu0 %8099
    %8101 = vrot.lane.b32.xlu0 %v8096, 32
    %v8102 = vpop.permute.xlu0 %8101
    %v8105 = vmul.f32 %v8068, %v8100
    %v8106 = vmul.f32 %v8070, %v8102
    %v8107 = vpack.c.bf16 %v8106, %v8105
    %8109 = vrot.lane.b32.xlu0 %v8107, 64
    %v8110 = vpop.permute.xlu0 %8109
    %8112 = vst.msk [vmem:[%s6123] sm:$0xff] %vm514, %v8110
    %v8113 = vld [vmem:[#allocation10] sm:$0xff]
    %v8114 = vld [vmem:[#allocation10 + $0x8] sm:$0xff]
    %v8115 = vld [vmem:[#allocation10 + $0x10] sm:$0xff]
    %v8116 = vld [vmem:[#allocation10 + $0x18] sm:$0xff]
    %v8117 = vld [vmem:[#allocation10 + $0x20] sm:$0xff]
    %v8118 = vld [vmem:[#allocation10 + $0x28] sm:$0xff]
    %v8119 = vld [vmem:[#allocation10 + $0x30] sm:$0xff]
    %v8120 = vld [vmem:[#allocation10 + $0x38] sm:$0xff]
    %v8121 = vmax.bf16 %v8113, 0
    %v8122 = vmax.bf16 %v8114, 0
    %v8123 = vmax.bf16 %v8115, 0
    %v8124 = vmax.bf16 %v8116, 0
    %v8125 = vmax.bf16 %v8117, 0
    %v8126 = vmax.bf16 %v8118, 0
    %v8127 = vmax.bf16 %v8119, 0
    %v8128 = vmax.bf16 %v8120, 0
    %v8129 = vld [vmem:[#allocation11 + $0x1c0] sm:$0xf]
    %v8130 = vld [vmem:[#allocation11 + $0x1c8] sm:$0xf]
    %v8131 = vld [vmem:[#allocation11 + $0x1d0] sm:$0xf]
    %v8132 = vld [vmem:[#allocation11 + $0x1d8] sm:$0xf]
    %v8133 = vld [vmem:[%s3 + $0x60] ss:$0 sm:$0xff]
    %v8138 = vunpack.c.l.b16 %v8129
    %v8139 = vunpack.c.l.b16 %v8130
    %v8140 = vunpack.c.l.b16 %v8131
    %v8141 = vunpack.c.l.b16 %v8132
    %v8142 = vpack.c.b16 %v8139, %v8138
    %v8143 = vpack.c.b16 %v8141, %v8140
    %v8147 = vsel %vm514, %v8121, 0
    %v8150 = vsel %vm514, %v8122, 0
    %v8153 = vsel %vm514, %v8123, 0
    %v8156 = vsel %vm514, %v8124, 0
    %v8159 = vsel %vm514, %v8125, 0
    %v8162 = vsel %vm514, %v8126, 0
    %v8165 = vsel %vm514, %v8127, 0
    %v8168 = vsel %vm514, %v8128, 0
    %8170 = vmatprep.subr.bf16.mxu0 0
    %8171 = vmatpush1.bf16.msra.mxu0 %v8142
    %8172 = vmatprep.subr.bf16.mxu0 0
    %8173 = vmatpush1.bf16.msra.mxu0 %v8143
    %8174 = vmatprep.subr.bf16.mxu0 0
    %8175 = vmatpush1.bf16.msra.mxu0 0
    %8176 = vmatprep.subr.bf16.mxu0 0
    %8177 = vmatpush1.bf16.msra.mxu0 0
    %8178 = vmatprep.subr.bf16.mxu0 0
    %8179 = vmatpush1.bf16.msra.mxu0 0
    %8180 = vmatprep.subr.bf16.mxu0 0
    %8181 = vmatpush1.bf16.msra.mxu0 0
    %8182 = vmatprep.subr.bf16.mxu0 0
    %8183 = vmatpush1.bf16.msra.mxu0 0
    %8184 = vmatprep.subr.bf16.mxu0 0
    %8185 = vmatpush1.bf16.msra.mxu0 0
    %8186 = vmatprep.subr.bf16.mxu0 0
    %8187 = vmatpush1.bf16.msra.mxu0 0
    %8188 = vmatprep.subr.bf16.mxu0 0
    %8189 = vmatpush1.bf16.msra.mxu0 0
    %8190 = vmatprep.subr.bf16.mxu0 0
    %8191 = vmatpush1.bf16.msra.mxu0 0
    %8192 = vmatprep.subr.bf16.mxu0 0
    %8193 = vmatpush1.bf16.msra.mxu0 0
    %8194 = vmatprep.subr.bf16.mxu0 0
    %8195 = vmatpush1.bf16.msra.mxu0 0
    %8196 = vmatprep.subr.bf16.mxu0 0
    %8197 = vmatpush1.bf16.msra.mxu0 0
    %8198 = vmatprep.subr.bf16.mxu0 0
    %8199 = vmatpush1.bf16.msra.mxu0 0
    %8200 = vmatprep.subr.bf16.mxu0 0
    %8201 = vmatpush1.bf16.msra.mxu0 0
    %8202 = vmatprep.mubr.bf16.mxu0 0
    %8203 = vmatmul.mubr.bf16.gmra.mrb[0].mxu0 %v8147
    %v8204 = vpop.f32.mrb[0].mxu0
    %v8205 = vadd.f32 %v8133, %v8204
    %v8206 = vpop.f32.mrb[0].mxu0
    %v8207 = vpop.f32.mrb[0].mxu0
    %v8208 = vadd.f32 %v8133, %v8207
    %v8209 = vpop.f32.mrb[0].mxu0
    %8210 = vmatprep.mubr.bf16.mxu0 0
    %8211 = vmatmul.mubr.bf16.gmra.mrb[0].mxu0 %v8150
    %v8212 = vpop.f32.mrb[0].mxu0
    %v8213 = vadd.f32 %v8133, %v8212
    %v8214 = vpop.f32.mrb[0].mxu0
    %v8215 = vpop.f32.mrb[0].mxu0
    %v8216 = vadd.f32 %v8133, %v8215
    %v8217 = vpop.f32.mrb[0].mxu0
    %8218 = vmatprep.mubr.bf16.mxu0 0
    %8219 = vmatmul.mubr.bf16.gmra.mrb[0].mxu0 %v8153
    %v8220 = vpop.f32.mrb[0].mxu0
    %v8221 = vadd.f32 %v8133, %v8220
    %v8222 = vpop.f32.mrb[0].mxu0
    %v8223 = vpop.f32.mrb[0].mxu0
    %v8224 = vadd.f32 %v8133, %v8223
    %v8225 = vpop.f32.mrb[0].mxu0
    %8226 = vmatprep.mubr.bf16.mxu0 0
    %8227 = vmatmul.mubr.bf16.gmra.mrb[0].mxu0 %v8156
    %v8228 = vpop.f32.mrb[0].mxu0
    %v8229 = vadd.f32 %v8133, %v8228
    %v8230 = vpop.f32.mrb[0].mxu0
    %v8231 = vpop.f32.mrb[0].mxu0
    %v8232 = vadd.f32 %v8133, %v8231
    %v8233 = vpop.f32.mrb[0].mxu0
    %8234 = vmatprep.mubr.bf16.mxu0 0
    %8235 = vmatmul.mubr.bf16.gmra.mrb[0].mxu0 %v8159
    %v8236 = vpop.f32.mrb[0].mxu0
    %v8237 = vadd.f32 %v8133, %v8236
    %v8238 = vpop.f32.mrb[0].mxu0
    %v8239 = vpop.f32.mrb[0].mxu0
    %v8240 = vadd.f32 %v8133, %v8239
    %v8241 = vpop.f32.mrb[0].mxu0
    %8242 = vmatprep.mubr.bf16.mxu0 0
    %8243 = vmatmul.mubr.bf16.gmra.mrb[0].mxu0 %v8162
    %v8244 = vpop.f32.mrb[0].mxu0
    %v8245 = vadd.f32 %v8133, %v8244
    %v8246 = vpop.f32.mrb[0].mxu0
    %v8247 = vpop.f32.mrb[0].mxu0
    %v8248 = vadd.f32 %v8133, %v8247
    %v8249 = vpop.f32.mrb[0].mxu0
    %8250 = vmatprep.mubr.bf16.mxu0 0
    %8251 = vmatmul.mubr.bf16.gmra.mrb[0].mxu0 %v8165
    %v8252 = vpop.f32.mrb[0].mxu0
    %v8253 = vadd.f32 %v8133, %v8252
    %v8254 = vpop.f32.mrb[0].mxu0
    %v8255 = vpop.f32.mrb[0].mxu0
    %v8256 = vadd.f32 %v8133, %v8255
    %v8257 = vpop.f32.mrb[0].mxu0
    %8258 = vmatprep.mubr.bf16.mxu0 0
    %8259 = vmatmul.mubr.bf16.gmra.mrb[0].mxu0 %v8168
    %v8260 = vpop.f32.mrb[0].mxu0
    %v8261 = vadd.f32 %v8133, %v8260
    %v8262 = vpop.f32.mrb[0].mxu0
    %v8263 = vpop.f32.mrb[0].mxu0
    %v8264 = vadd.f32 %v8133, %v8263
    %v8265 = vpop.f32.mrb[0].mxu0
    %8266 = vdwg.mxu0
    %v8267 = vmax.f32 %v8205, 0.0
    %v8268 = vmax.f32 %v8208, 0.0
    %v8269 = vmax.f32 %v8213, 0.0
    %v8270 = vmax.f32 %v8216, 0.0
    %v8271 = vmax.f32 %v8221, 0.0
    %v8272 = vmax.f32 %v8224, 0.0
    %v8273 = vmax.f32 %v8229, 0.0
    %v8274 = vmax.f32 %v8232, 0.0
    %v8275 = vmax.f32 %v8237, 0.0
    %v8276 = vmax.f32 %v8240, 0.0
    %v8277 = vmax.f32 %v8245, 0.0
    %v8278 = vmax.f32 %v8248, 0.0
    %v8279 = vmax.f32 %v8253, 0.0
    %v8280 = vmax.f32 %v8256, 0.0
    %v8281 = vmax.f32 %v8261, 0.0
    %v8282 = vmax.f32 %v8264, 0.0
    %v8283 = vpack.c.bf16 %v8268, %v8267
    %v8284 = vpack.c.bf16 %v8270, %v8269
    %v8285 = vpack.c.bf16 %v8272, %v8271
    %v8286 = vpack.c.bf16 %v8274, %v8273
    %v8287 = vpack.c.bf16 %v8276, %v8275
    %v8288 = vpack.c.bf16 %v8278, %v8277
    %v8289 = vpack.c.bf16 %v8280, %v8279
    %v8290 = vpack.c.bf16 %v8282, %v8281
    %v8291 = vld [vmem:[#allocation11 + $0x1e0] sm:$0xf]
    %v8292 = vld [vmem:[#allocation11 + $0x1e8] sm:$0xf]
    %v8293 = vld [vmem:[#allocation11 + $0x1f0] sm:$0xf]
    %v8294 = vld [vmem:[#allocation11 + $0x1f8] sm:$0xf]
    %v8295 = vld [vmem:[%s3 + $0x70] ss:$0 sm:$0xff]
    %v8300 = vunpack.c.l.b16 %v8291
    %v8301 = vunpack.c.l.b16 %v8292
    %v8302 = vunpack.c.l.b16 %v8293
    %v8303 = vunpack.c.l.b16 %v8294
    %v8304 = vpack.c.b16 %v8301, %v8300
    %v8305 = vpack.c.b16 %v8303, %v8302
    %v8309 = vsel %vm514, %v8283, 0
    %v8312 = vsel %vm514, %v8284, 0
    %v8315 = vsel %vm514, %v8285, 0
    %v8318 = vsel %vm514, %v8286, 0
    %v8321 = vsel %vm514, %v8287, 0
    %v8324 = vsel %vm514, %v8288, 0
    %v8327 = vsel %vm514, %v8289, 0
    %v8330 = vsel %vm514, %v8290, 0
    %8332 = vmatprep.subr.bf16.mxu0 0
    %8333 = vmatpush1.bf16.msra.mxu0 %v8304
    %8334 = vmatprep.subr.bf16.mxu0 0
    %8335 = vmatpush1.bf16.msra.mxu0 %v8305
    %8336 = vmatprep.subr.bf16.mxu0 0
    %8337 = vmatpush1.bf16.msra.mxu0 0
    %8338 = vmatprep.subr.bf16.mxu0 0
    %8339 = vmatpush1.bf16.msra.mxu0 0
    %8340 = vmatprep.subr.bf16.mxu0 0
    %8341 = vmatpush1.bf16.msra.mxu0 0
    %8342 = vmatprep.subr.bf16.mxu0 0
    %8343 = vmatpush1.bf16.msra.mxu0 0
    %8344 = vmatprep.subr.bf16.mxu0 0
    %8345 = vmatpush1.bf16.msra.mxu0 0
    %8346 = vmatprep.subr.bf16.mxu0 0
    %8347 = vmatpush1.bf16.msra.mxu0 0
    %8348 = vmatprep.subr.bf16.mxu0 0
    %8349 = vmatpush1.bf16.msra.mxu0 0
    %8350 = vmatprep.subr.bf16.mxu0 0
    %8351 = vmatpush1.bf16.msra.mxu0 0
    %8352 = vmatprep.subr.bf16.mxu0 0
    %8353 = vmatpush1.bf16.msra.mxu0 0
    %8354 = vmatprep.subr.bf16.mxu0 0
    %8355 = vmatpush1.bf16.msra.mxu0 0
    %8356 = vmatprep.subr.bf16.mxu0 0
    %8357 = vmatpush1.bf16.msra.mxu0 0
    %8358 = vmatprep.subr.bf16.mxu0 0
    %8359 = vmatpush1.bf16.msra.mxu0 0
    %8360 = vmatprep.subr.bf16.mxu0 0
    %8361 = vmatpush1.bf16.msra.mxu0 0
    %8362 = vmatprep.subr.bf16.mxu0 0
    %8363 = vmatpush1.bf16.msra.mxu0 0
    %8364 = vmatprep.mubr.bf16.mxu0 0
    %8365 = vmatmul.mubr.bf16.gmra.mrb[0].mxu0 %v8309
    %v8366 = vpop.f32.mrb[0].mxu0
    %v8367 = vadd.f32 %v8295, %v8366
    %v8368 = vpop.f32.mrb[0].mxu0
    %v8369 = vpop.f32.mrb[0].mxu0
    %v8370 = vadd.f32 %v8295, %v8369
    %v8371 = vpop.f32.mrb[0].mxu0
    %8372 = vmatprep.mubr.bf16.mxu0 0
    %8373 = vmatmul.mubr.bf16.gmra.mrb[0].mxu0 %v8312
    %v8374 = vpop.f32.mrb[0].mxu0
    %v8375 = vadd.f32 %v8295, %v8374
    %v8376 = vpop.f32.mrb[0].mxu0
    %v8377 = vpop.f32.mrb[0].mxu0
    %v8378 = vadd.f32 %v8295, %v8377
    %v8379 = vpop.f32.mrb[0].mxu0
    %8380 = vmatprep.mubr.bf16.mxu0 0
    %8381 = vmatmul.mubr.bf16.gmra.mrb[0].mxu0 %v8315
    %v8382 = vpop.f32.mrb[0].mxu0
    %v8383 = vadd.f32 %v8295, %v8382
    %v8384 = vpop.f32.mrb[0].mxu0
    %v8385 = vpop.f32.mrb[0].mxu0
    %v8386 = vadd.f32 %v8295, %v8385
    %v8387 = vpop.f32.mrb[0].mxu0
    %8388 = vmatprep.mubr.bf16.mxu0 0
    %8389 = vmatmul.mubr.bf16.gmra.mrb[0].mxu0 %v8318
    %v8390 = vpop.f32.mrb[0].mxu0
    %v8391 = vadd.f32 %v8295, %v8390
    %v8392 = vpop.f32.mrb[0].mxu0
    %v8393 = vpop.f32.mrb[0].mxu0
    %v8394 = vadd.f32 %v8295, %v8393
    %v8395 = vpop.f32.mrb[0].mxu0
    %8396 = vmatprep.mubr.bf16.mxu0 0
    %8397 = vmatmul.mubr.bf16.gmra.mrb[0].mxu0 %v8321
    %v8398 = vpop.f32.mrb[0].mxu0
    %v8399 = vadd.f32 %v8295, %v8398
    %v8400 = vpop.f32.mrb[0].mxu0
    %v8401 = vpop.f32.mrb[0].mxu0
    %v8402 = vadd.f32 %v8295, %v8401
    %v8403 = vpop.f32.mrb[0].mxu0
    %8404 = vmatprep.mubr.bf16.mxu0 0
    %8405 = vmatmul.mubr.bf16.gmra.mrb[0].mxu0 %v8324
    %v8406 = vpop.f32.mrb[0].mxu0
    %v8407 = vadd.f32 %v8295, %v8406
    %v8408 = vpop.f32.mrb[0].mxu0
    %v8409 = vpop.f32.mrb[0].mxu0
    %v8410 = vadd.f32 %v8295, %v8409
    %v8411 = vpop.f32.mrb[0].mxu0
    %8412 = vmatprep.mubr.bf16.mxu0 0
    %8413 = vmatmul.mubr.bf16.gmra.mrb[0].mxu0 %v8327
    %v8414 = vpop.f32.mrb[0].mxu0
    %v8415 = vadd.f32 %v8295, %v8414
    %v8416 = vpop.f32.mrb[0].mxu0
    %v8417 = vpop.f32.mrb[0].mxu0
    %v8418 = vadd.f32 %v8295, %v8417
    %v8419 = vpop.f32.mrb[0].mxu0
    %8420 = vmatprep.mubr.bf16.mxu0 0
    %8421 = vmatmul.mubr.bf16.gmra.mrb[0].mxu0 %v8330
    %v8422 = vpop.f32.mrb[0].mxu0
    %v8423 = vadd.f32 %v8295, %v8422
    %v8424 = vpop.f32.mrb[0].mxu0
    %v8425 = vpop.f32.mrb[0].mxu0
    %v8426 = vadd.f32 %v8295, %v8425
    %v8427 = vpop.f32.mrb[0].mxu0
    %8428 = vdwg.mxu0
    %8429 = vst [vmem:[%s4] sm:$0xff] %v8367
    %8430 = vst [vmem:[%s4 + $0x8] sm:$0xff] %v8370
    %8431 = vst [vmem:[%s4 + $0x10] sm:$0xff] %v8375
    %8432 = vst [vmem:[%s4 + $0x18] sm:$0xff] %v8378
    %8433 = vst [vmem:[%s4 + $0x20] sm:$0xff] %v8383
    %8434 = vst [vmem:[%s4 + $0x28] sm:$0xff] %v8386
    %8435 = vst [vmem:[%s4 + $0x30] sm:$0xff] %v8391
    %8436 = vst [vmem:[%s4 + $0x38] sm:$0xff] %v8394
    %8437 = vst [vmem:[%s4 + $0x40] sm:$0xff] %v8399
    %8438 = vst [vmem:[%s4 + $0x48] sm:$0xff] %v8402
    %8439 = vst [vmem:[%s4 + $0x50] sm:$0xff] %v8407
    %8440 = vst [vmem:[%s4 + $0x58] sm:$0xff] %v8410
    %8441 = vst [vmem:[%s4 + $0x60] sm:$0xff] %v8415
    %8442 = vst [vmem:[%s4 + $0x68] sm:$0xff] %v8418
    %8443 = vst [vmem:[%s4 + $0x70] sm:$0xff] %v8423
    %8444 = vst [vmem:[%s4 + $0x78] sm:$0xff] %v8426
    // Predicated region
    $region22: #{forward.1} parent=1 // pred_check
      _
    $region23: #{forward.1} parent=1 // pred_check_branch
      %8446 = sbr.rel (0) target = $region25
    $region24: #{forward.1} parent=1 // pred_region
      _
    $region25: #{forward.1} parent=1 // pred_fallthru
      _
    // Predicated region
    $region26: #{forward.1} parent=1 // pred_check
      _
    $region27: #{forward.1} parent=1 // pred_check_branch
      %8448 = sbr.rel (0) target = $region29
    $region28: #{forward.1} parent=1 // pred_region
      _
    $region29: #{forward.1} parent=1 // pred_fallthru
      _
    %8449 = vsyncpa [#allocation12], 1

</llo_original>
